<compile_context>
chip_gen: v7x
topology: tpu7x:2x2x1
jax: 0.10.0
libtpu: 0.0.40
codegen_flags: <defaults>
</compile_context>

<pallas_src>
import jax
import jax.numpy as jnp
from jax.experimental import pallas as pl
from jax.experimental.pallas import tpu as pltpu

# ------------------------- small ViT config -------------------------
B = 2                    # batch
C = 3                    # image channels
IMG = 16                 # image side
PATCH = 4                # patch side
GRID = IMG // PATCH      # 4
N_PATCH = GRID * GRID    # 16 patches
S = N_PATCH + 1          # 17 tokens (cls + patches)
D = 32                   # embed dim
HEADS = 4
DH = D // HEADS          # 8
DEPTH = 2
MLP = 4 * D              # 128
NUM_CLASSES = 8
DROPOUT_RATE = 0.5
KEEP = int(N_PATCH * (1.0 - DROPOUT_RATE))   # 8 patch tokens kept (plus cls)
SK = 1 + KEEP                                 # tokens in the masked second pass
LN_EPS = 1e-6
ATTN_SCALE = DH ** -0.5

MXU_DTYPE = jnp.bfloat16   # MXU-native operand dtype on all generations; accumulate in f32.

BLOCK_KEYS = ("ln1", "qkv_w", "qkv_b", "proj_w", "proj_b",
              "ln2", "fc1_w", "fc1_b", "fc2_w", "fc2_b")


# ------------------------- in-kernel helpers -------------------------
def _mm(a, b):
    # bf16 operands, f32 accumulation on the MXU
    return jnp.dot(a.astype(MXU_DTYPE), b.astype(MXU_DTYPE),
                   preferred_element_type=jnp.float32)


def _ln(x, gb):
    # gb: (2, D) -> row 0 = gamma, row 1 = beta ; f32 VPU math
    g = gb[0:1, :]
    b = gb[1:2, :]
    mu = jnp.mean(x, axis=-1, keepdims=True)
    xc = x - mu
    var = jnp.mean(xc * xc, axis=-1, keepdims=True)
    return xc * jax.lax.rsqrt(var + LN_EPS) * g + b


def _blocks_body(x, blk, want_rollout):
    """Run all DEPTH transformer blocks on one (Ss, D) sequence kept in VMEM/vregs."""
    (ln1, qkv_w, qkv_b, proj_w, proj_b, ln2, fc1_w, fc1_b, fc2_w, fc2_b) = blk
    Ss = x.shape[0]

    rollout = None
    eye = None
    if want_rollout:
        rows = jax.lax.broadcasted_iota(jnp.int32, (Ss, Ss), 0)
        cols = jax.lax.broadcasted_iota(jnp.int32, (Ss, Ss), 1)
        eye = (rows == cols).astype(jnp.float32)
        rollout = eye                                           # initial result = I

    for l in range(DEPTH):
        # ---------------- attention ----------------
        h_bf = _ln(x, ln1[l]).astype(MXU_DTYPE)                 # cast once per layer
        # single fused qkv projection (ATTN_SCALE pre-folded into the q columns at pack time)
        qkv = jnp.dot(h_bf, qkv_w[l], preferred_element_type=jnp.float32) + qkv_b[l]   # (Ss, 3D) f32
        qkv_bf = qkv.astype(MXU_DTYPE)                          # cast once, slice in bf16

        attn_acc = None
        o_heads = []
        for hd in range(HEADS):
            q = qkv_bf[:, hd * DH:(hd + 1) * DH]                        # (Ss, DH), already scaled
            k = qkv_bf[:, D + hd * DH:D + (hd + 1) * DH]
            v = qkv_bf[:, 2 * D + hd * DH:2 * D + (hd + 1) * DH]
            # contract DH axes of q and k directly -> no explicit k.T value
            s = jax.lax.dot_general(q, k, (((1,), (1,)), ((), ())),
                                    preferred_element_type=jnp.float32)  # (Ss, Ss)
            s = s - jnp.max(s, axis=-1, keepdims=True)
            e = jnp.exp(s)
            p = e * pl.reciprocal(jnp.sum(e, axis=-1, keepdims=True), approx=True)
            if want_rollout:
                attn_acc = p if attn_acc is None else attn_acc + p
            o_heads.append(jnp.dot(p.astype(MXU_DTYPE), v,
                                   preferred_element_type=jnp.float32))  # (Ss, DH)
        # fused output projection: lane-concat heads, one K=D matmul against proj_w
        o = jnp.concatenate(o_heads, axis=-1)                   # (Ss, D) f32
        x = x + jnp.dot(o.astype(MXU_DTYPE), proj_w[l],
                        preferred_element_type=jnp.float32) + proj_b[l]

        if want_rollout:
            a = attn_acc * (1.0 / HEADS)                        # head mean
            a = (a + eye) * 0.5
            # exact row normalization (protects top-k ordering of near-tied saliencies)
            a = a / jnp.sum(a, axis=-1, keepdims=True)
            rollout = jnp.dot(a.astype(MXU_DTYPE), rollout.astype(MXU_DTYPE),
                              preferred_element_type=jnp.float32)

        # ---------------- mlp ----------------
        h = _ln(x, ln2[l]).astype(MXU_DTYPE)
        h = jnp.dot(h, fc1_w[l], preferred_element_type=jnp.float32) + fc1_b[l]
        h = jax.nn.gelu(h, approximate=True)   # TODO(synk): PyTorch nn.GELU default is exact erf (~1e-3 diff)
        h = jnp.dot(h.astype(MXU_DTYPE), fc2_w[l], preferred_element_type=jnp.float32) + fc2_b[l]
        x = x + h

    return x, rollout


# ------------------------- fused pass kernels -------------------------
def _pass1_kernel(p_ref, patch_w, patch_b, cls, pos,
                  ln1, qkv_w, qkv_b, proj_w, proj_b,
                  ln2, fc1_w, fc1_b, fc2_w, fc2_b,
                  sal_ref, seq_ref):
    # fused patch embedding (conv stride=patch == flattened-patch matmul) + cls/pos add
    tok = _mm(p_ref[0], patch_w[...]) + patch_b[...]            # (N_PATCH, D) f32
    seq_ref[0, 0:1, :] = cls[...] + pos[0:1, :]
    seq_ref[0, 1:, :] = tok + pos[1:, :]
    x = seq_ref[0]                                              # (S, D) -- also reused by pass 2

    blk = (ln1, qkv_w, qkv_b, proj_w, proj_b, ln2, fc1_w, fc1_b, fc2_w, fc2_b)
    _, rollout = _blocks_body(x, blk, want_rollout=True)
    sal_ref[0] = rollout[0:1, :]                                # cls row of rollout (1, S)


def _pass2_kernel(idx_ref,                                      # scalar-prefetch: (B, KEEP) int32 in SMEM
                  seq_ref, ln1, qkv_w, qkv_b, proj_w, proj_b,
                  ln2, fc1_w, fc1_b, fc2_w, fc2_b,
                  norm, head_w, head_b, logit_ref):
    b = pl.program_id(0)
    seq = seq_ref[0]                                            # (S, D)

    # in-kernel token gather: exact one-hot selection matrix (SK, S) @ seq (f32, exact row copy)
    rows = jax.lax.broadcasted_iota(jnp.int32, (SK, S), 0)
    cols = jax.lax.broadcasted_iota(jnp.int32, (SK, S), 1)
    sel = (rows == 0) & (cols == 0)                             # cls token stays in row 0
    for j in range(KEEP):
        sel = sel | ((rows == j + 1) & (cols == idx_ref[b, j] + 1))
    x = jnp.dot(sel.astype(jnp.float32), seq,
                preferred_element_type=jnp.float32)             # (SK, D)

    blk = (ln1, qkv_w, qkv_b, proj_w, proj_b, ln2, fc1_w, fc1_b, fc2_w, fc2_b)
    x, _ = _blocks_body(x, blk, want_rollout=False)
    cls_tok = _ln(x[0:1, :], norm[...])                         # token pooling + final norm
    logit_ref[0] = _mm(cls_tok, head_w[...]) + head_b[...]      # (1, NUM_CLASSES)


def _full_spec(a):
    nd = a.ndim
    return pl.BlockSpec(a.shape, lambda *_, _nd=nd: (0,) * _nd)


def vit_pass1(p_mat, packed):
    Bb = p_mat.shape[0]
    embed = [packed["patch_w"], packed["patch_b"], packed["cls"], packed["pos"]]
    blk_arrays = [packed[k] for k in BLOCK_KEYS]
    sal, seq = pl.pallas_call(
        _pass1_kernel,
        out_shape=(jax.ShapeDtypeStruct((Bb, 1, S), jnp.float32),
                   jax.ShapeDtypeStruct((Bb, S, D), jnp.float32)),
        grid=(Bb,),
        in_specs=[pl.BlockSpec((1, N_PATCH, C * PATCH * PATCH), lambda b: (b, 0, 0))]
                 + [_full_spec(a) for a in embed]
                 + [_full_spec(a) for a in blk_arrays],
        out_specs=(pl.BlockSpec((1, 1, S), lambda b: (b, 0, 0)),
                   pl.BlockSpec((1, S, D), lambda b: (b, 0, 0))),
        compiler_params=pltpu.CompilerParams(dimension_semantics=("parallel",)),
    )(p_mat, *embed, *blk_arrays)
    return sal[:, 0, :], seq                                    # (B, S), (B, S, D)


def vit_pass2(seq, idx, packed):
    Bb = seq.shape[0]
    blk_arrays = [packed[k] for k in BLOCK_KEYS]
    extra = [packed["norm"], packed["head_w"], packed["head_b"]]
    grid_spec = pltpu.PrefetchScalarGridSpec(
        num_scalar_prefetch=1,                                  # idx -> SMEM, read inside the kernel
        grid=(Bb,),
        in_specs=[pl.BlockSpec((1, S, D), lambda b, idx_ref: (b, 0, 0))]
                 + [_full_spec(a) for a in blk_arrays]
                 + [_full_spec(a) for a in extra],
        out_specs=pl.BlockSpec((1, 1, NUM_CLASSES), lambda b, idx_ref: (b, 0, 0)),
    )
    logits = pl.pallas_call(
        _pass2_kernel,
        out_shape=jax.ShapeDtypeStruct((Bb, 1, NUM_CLASSES), jnp.float32),
        grid_spec=grid_spec,
        compiler_params=pltpu.CompilerParams(dimension_semantics=("parallel",)),
    )(idx, seq, *blk_arrays, *extra)
    return logits[:, 0, :]                                      # (B, NUM_CLASSES)


# ------------------------- params -------------------------
def init_params(key):
    keys = jax.random.split(key, 16)
    it = iter(keys)

    def w(shape, scale=0.02):
        return (scale * jax.random.normal(next(it), shape)).astype(jnp.float32)

    params = dict(
        patch_w=w((C * PATCH * PATCH, D)),
        patch_b=jnp.zeros((D,), jnp.float32),
        cls=w((1, 1, D)),
        pos=w((1, S, D)),
        norm_g=jnp.ones((D,), jnp.float32),
        norm_b=jnp.zeros((D,), jnp.float32),
        head_w=w((D, NUM_CLASSES)),
        head_b=jnp.zeros((NUM_CLASSES,), jnp.float32),
        blocks=[],
    )
    for _ in range(DEPTH):
        params["blocks"].append(dict(
            ln1_g=jnp.ones((D,), jnp.float32), ln1_b=jnp.zeros((D,), jnp.float32),
            qkv_w=w((D, 3 * D)), qkv_b=jnp.zeros((3 * D,), jnp.float32),
            proj_w=w((D, D)), proj_b=jnp.zeros((D,), jnp.float32),
            ln2_g=jnp.ones((D,), jnp.float32), ln2_b=jnp.zeros((D,), jnp.float32),
            fc1_w=w((D, MLP)), fc1_b=jnp.zeros((MLP,), jnp.float32),
            fc2_w=w((MLP, D)), fc2_b=jnp.zeros((D,), jnp.float32),
        ))
    return params


def pack_params(params):
    """Stack per-block weights along DEPTH, fold the attention scale into the q columns of qkv,
    and cast matmul weights to bf16 (biases / LN stay f32). qkv columns keep the timm layout
    [q | k | v], each D-wide slice split per-head as (HEADS, DH)."""
    blks = params["blocks"]

    def stack(fn):
        return jnp.stack([fn(b) for b in blks], axis=0)

    # fold ATTN_SCALE into q columns (weights + bias) at pack time
    col_scale = jnp.concatenate([jnp.full((D,), ATTN_SCALE, jnp.float32),
                                 jnp.ones((2 * D,), jnp.float32)], axis=0)

    return dict(
        patch_w=params["patch_w"].astype(MXU_DTYPE),                     # (CPP, D)
        patch_b=params["patch_b"].reshape(1, D),
        cls=params["cls"].reshape(1, D),
        pos=params["pos"].reshape(S, D),
        ln1=stack(lambda b: jnp.stack([b["ln1_g"], b["ln1_b"]], 0)),     # (DEPTH, 2, D)
        ln2=stack(lambda b: jnp.stack([b["ln2_g"], b["ln2_b"]], 0)),
        qkv_w=stack(lambda b: b["qkv_w"] * col_scale[None, :]).astype(MXU_DTYPE),   # (DEPTH, D, 3D)
        qkv_b=stack(lambda b: (b["qkv_b"] * col_scale).reshape(1, 3 * D)),          # (DEPTH, 1, 3D)
        proj_w=stack(lambda b: b["proj_w"]).astype(MXU_DTYPE),           # (DEPTH, D, D)
        proj_b=stack(lambda b: b["proj_b"].reshape(1, D)),
        fc1_w=stack(lambda b: b["fc1_w"]).astype(MXU_DTYPE),             # (DEPTH, D, MLP)
        fc1_b=stack(lambda b: b["fc1_b"].reshape(1, MLP)),
        fc2_w=stack(lambda b: b["fc2_w"]).astype(MXU_DTYPE),             # (DEPTH, MLP, D)
        fc2_b=stack(lambda b: b["fc2_b"].reshape(1, D)),
        norm=jnp.stack([params["norm_g"], params["norm_b"]], 0),         # (2, D)
        head_w=params["head_w"].astype(MXU_DTYPE),                       # (D, NUM_CLASSES)
        head_b=params["head_b"].reshape(1, NUM_CLASSES),
    )


# ------------------------- forward -------------------------
def optimal_sampler_forward(x, packed):
    Bb = x.shape[0]

    # layout-only glue: NCHW image -> per-patch flattened matrix (B, N_PATCH, C*P*P)
    p = x.reshape(Bb, C, GRID, PATCH, GRID, PATCH)
    p = p.transpose(0, 2, 4, 1, 3, 5).reshape(Bb, N_PATCH, C * PATCH * PATCH)

    # --- pass 1 (query_model): fused patch-embed + ViT + attention rollout -> saliency + seq ---
    cls_row, seq = vit_pass1(p, packed)                          # (B, S), (B, S, D)
    saliency = cls_row[:, 1:]                                    # (B, N_PATCH)
    # (dividing by the per-image max, as the reference rollout does, is a positive rescale and
    #  cannot change top-k ordering, so it is skipped)

    # --- SaliencyDropout.set_mask: top-k patch indices (descending, like torch.topk) ---
    # TODO(synk): top-k selection is data-dependent; done in plain JAX.
    _, idx = jax.lax.top_k(saliency, KEEP)                       # (B, KEEP) int32

    # --- pass 2 (model with patch_drop): token gather happens inside the kernel via scalar prefetch ---
    return vit_pass2(seq, idx, packed)                           # (B, NUM_CLASSES)


if __name__ == "__main__":
    key = jax.random.PRNGKey(0)
    pkey, xkey = jax.random.split(key)
    params = init_params(pkey)
    packed = pack_params(params)
    x = jax.random.normal(xkey, (B, C, IMG, IMG), dtype=jnp.float32)   # NCHW like PyTorch
    fwd = jax.jit(optimal_sampler_forward)
    out = fwd(x, packed)
    jax.block_until_ready(out)
    assert out.shape == (B, NUM_CLASSES), out.shape
    assert bool(jnp.all(jnp.isfinite(out)))
    print("KERNEL_OK")
</pallas_src>

<mosaic_0001>
module attributes {stable_mosaic.version = 11 : i64} {
  func.func @_pass1_kernel(%arg0: i32, %arg1: memref<1x16x48xf32, #tpu.memory_space<vmem>>, %arg2: memref<48x32xbf16, #tpu.memory_space<vmem>>, %arg3: memref<1x32xf32, #tpu.memory_space<vmem>>, %arg4: memref<1x32xf32, #tpu.memory_space<vmem>>, %arg5: memref<17x32xf32, #tpu.memory_space<vmem>>, %arg6: memref<2x2x32xf32, #tpu.memory_space<vmem>>, %arg7: memref<2x32x96xbf16, #tpu.memory_space<vmem>>, %arg8: memref<2x1x96xf32, #tpu.memory_space<vmem>>, %arg9: memref<2x32x32xbf16, #tpu.memory_space<vmem>>, %arg10: memref<2x1x32xf32, #tpu.memory_space<vmem>>, %arg11: memref<2x2x32xf32, #tpu.memory_space<vmem>>, %arg12: memref<2x32x128xbf16, #tpu.memory_space<vmem>>, %arg13: memref<2x1x128xf32, #tpu.memory_space<vmem>>, %arg14: memref<2x128x32xbf16, #tpu.memory_space<vmem>>, %arg15: memref<2x1x32xf32, #tpu.memory_space<vmem>>, %arg16: memref<1x1x17xf32, #tpu.memory_space<vmem>>, %arg17: memref<1x17x32xf32, #tpu.memory_space<vmem>>) attributes {dimension_semantics = [#tpu.dimension_semantics<parallel>], iteration_bounds = array<i64: 2>, scalar_prefetch = 0 : i64, scratch_operands = 0 : i64, tpu.core_type = #tpu.core_type<tc>, window_params = [{transform_indices = @transform_0, window_bounds = array<i64: 1, 16, 48>}, {pipeline_mode = #tpu.pipeline_mode<synchronous>, transform_indices = @transform_1, window_bounds = array<i64: 48, 32>}, {pipeline_mode = #tpu.pipeline_mode<synchronous>, transform_indices = @transform_2, window_bounds = array<i64: 1, 32>}, {pipeline_mode = #tpu.pipeline_mode<synchronous>, transform_indices = @transform_3, window_bounds = array<i64: 1, 32>}, {pipeline_mode = #tpu.pipeline_mode<synchronous>, transform_indices = @transform_4, window_bounds = array<i64: 17, 32>}, {pipeline_mode = #tpu.pipeline_mode<synchronous>, transform_indices = @transform_5, window_bounds = array<i64: 2, 2, 32>}, {pipeline_mode = #tpu.pipeline_mode<synchronous>, transform_indices = @transform_6, window_bounds = array<i64: 2, 32, 96>}, {pipeline_mode = #tpu.pipeline_mode<synchronous>, transform_indices = @transform_7, window_bounds = array<i64: 2, 1, 96>}, {pipeline_mode = #tpu.pipeline_mode<synchronous>, transform_indices = @transform_8, window_bounds = array<i64: 2, 32, 32>}, {pipeline_mode = #tpu.pipeline_mode<synchronous>, transform_indices = @transform_9, window_bounds = array<i64: 2, 1, 32>}, {pipeline_mode = #tpu.pipeline_mode<synchronous>, transform_indices = @transform_10, window_bounds = array<i64: 2, 2, 32>}, {pipeline_mode = #tpu.pipeline_mode<synchronous>, transform_indices = @transform_11, window_bounds = array<i64: 2, 32, 128>}, {pipeline_mode = #tpu.pipeline_mode<synchronous>, transform_indices = @transform_12, window_bounds = array<i64: 2, 1, 128>}, {pipeline_mode = #tpu.pipeline_mode<synchronous>, transform_indices = @transform_13, window_bounds = array<i64: 2, 128, 32>}, {pipeline_mode = #tpu.pipeline_mode<synchronous>, transform_indices = @transform_14, window_bounds = array<i64: 2, 1, 32>}, {transform_indices = @transform_15, window_bounds = array<i64: 1, 1, 17>}, {transform_indices = @transform_16, window_bounds = array<i64: 1, 17, 32>}]} {
    %c0 = arith.constant 0 : index
    %c0_0 = arith.constant 0 : index
    %c0_1 = arith.constant 0 : index
    %0 = vector.load %arg1[%c0, %c0_0, %c0_1] : memref<1x16x48xf32, #tpu.memory_space<vmem>>, vector<1x16x48xf32>
    %1 = vector.shape_cast %0 : vector<1x16x48xf32> to vector<16x48xf32>
    %c0_2 = arith.constant 0 : index
    %c0_3 = arith.constant 0 : index
    %2 = vector.load %arg2[%c0_2, %c0_3] : memref<48x32xbf16, #tpu.memory_space<vmem>>, vector<48x32xbf16>
    %3 = arith.truncf %1 : vector<16x48xf32> to vector<16x48xbf16>
    %cst = arith.constant dense<0.000000e+00> : vector<16x32xf32>
    %4 = tpu.matmul %3, %2, %cst {dimension_numbers = #tpu.dot_dimension_numbers<[1], [0], [0], [1], [0, 0, 1, 1], [], []>} : vector<16x48xbf16>, vector<48x32xbf16>, vector<16x32xf32> -> vector<16x32xf32>
    %c0_4 = arith.constant 0 : index
    %c0_5 = arith.constant 0 : index
    %5 = vector.load %arg3[%c0_4, %c0_5] : memref<1x32xf32, #tpu.memory_space<vmem>>, vector<1x32xf32>
    %6 = vector.broadcast %5 : vector<1x32xf32> to vector<16x32xf32>
    %7 = arith.addf %4, %6 : vector<16x32xf32>
    %c0_6 = arith.constant 0 : index
    %c0_7 = arith.constant 0 : index
    %8 = vector.load %arg4[%c0_6, %c0_7] : memref<1x32xf32, #tpu.memory_space<vmem>>, vector<1x32xf32>
    %c0_8 = arith.constant 0 : index
    %c0_9 = arith.constant 0 : index
    %9 = vector.load %arg5[%c0_8, %c0_9] : memref<17x32xf32, #tpu.memory_space<vmem>>, vector<1x32xf32>
    %10 = arith.addf %8, %9 : vector<1x32xf32>
    %c0_10 = arith.constant 0 : index
    %c0_11 = arith.constant 0 : index
    %c0_12 = arith.constant 0 : index
    %11 = vector.load %arg17[%c0_10, %c0_11, %c0_12] : memref<1x17x32xf32, #tpu.memory_space<vmem>>, vector<1x1x32xf32>
    %12 = vector.shape_cast %11 : vector<1x1x32xf32> to vector<1x32xf32>
    %13 = vector.shape_cast %10 : vector<1x32xf32> to vector<1x1x32xf32>
    tpu.vector_store %arg17[%c0_10, %c0_11, %c0_12], %13 {strides = array<i32>} : memref<1x17x32xf32, #tpu.memory_space<vmem>>, vector<1x1x32xf32>,
    %c1 = arith.constant 1 : index
    %c0_13 = arith.constant 0 : index
    %14 = vector.load %arg5[%c1, %c0_13] : memref<17x32xf32, #tpu.memory_space<vmem>>, vector<16x32xf32>
    %15 = arith.addf %7, %14 : vector<16x32xf32>
    %c0_14 = arith.constant 0 : index
    %c1_15 = arith.constant 1 : index
    %c0_16 = arith.constant 0 : index
    %16 = vector.load %arg17[%c0_14, %c1_15, %c0_16] : memref<1x17x32xf32, #tpu.memory_space<vmem>>, vector<1x16x32xf32>
    %17 = vector.shape_cast %16 : vector<1x16x32xf32> to vector<16x32xf32>
    %18 = vector.shape_cast %15 : vector<16x32xf32> to vector<1x16x32xf32>
    tpu.vector_store %arg17[%c0_14, %c1_15, %c0_16], %18 {strides = array<i32>} : memref<1x17x32xf32, #tpu.memory_space<vmem>>, vector<1x16x32xf32>,
    %c0_17 = arith.constant 0 : index
    %c0_18 = arith.constant 0 : index
    %c0_19 = arith.constant 0 : index
    %19 = vector.load %arg17[%c0_17, %c0_18, %c0_19] : memref<1x17x32xf32, #tpu.memory_space<vmem>>, vector<1x17x32xf32>
    %20 = vector.shape_cast %19 : vector<1x17x32xf32> to vector<17x32xf32>
    %21 = tpu.iota {dimensions = array<i32: 0>} : vector<17x17xi32>
    %22 = tpu.iota {dimensions = array<i32: 1>} : vector<17x17xi32>
    %23 = arith.cmpi eq, %21, %22 : vector<17x17xi32>
    %24 = arith.extui %23 : vector<17x17xi1> to vector<17x17xi32>
    %25 = arith.sitofp %24 : vector<17x17xi32> to vector<17x17xf32>
    %c0_20 = arith.constant 0 : index
    %c0_21 = arith.constant 0 : index
    %c0_22 = arith.constant 0 : index
    %26 = vector.load %arg6[%c0_20, %c0_21, %c0_22] : memref<2x2x32xf32, #tpu.memory_space<vmem>>, vector<1x2x32xf32>
    %27 = vector.shape_cast %26 : vector<1x2x32xf32> to vector<2x32xf32>
    %28 = vector.extract_strided_slice %27 {offsets = [0, 0], sizes = [1, 32], strides = [1, 1]} : vector<2x32xf32> to vector<1x32xf32>
    %29 = vector.extract_strided_slice %27 {offsets = [1, 0], sizes = [1, 32], strides = [1, 1]} : vector<2x32xf32> to vector<1x32xf32>
    %cst_23 = arith.constant dense<0.000000e+00> : vector<17xf32>
    %30 = vector.multi_reduction <add>, %20, %cst_23 [1] : vector<17x32xf32> to vector<17xf32>
    %31 = vector.shape_cast %30 : vector<17xf32> to vector<17x1xf32>
    %cst_24 = arith.constant 3.200000e+01 : f32
    %32 = vector.broadcast %cst_24 : f32 to vector<17x1xf32>
    %33 = arith.divf %31, %32 : vector<17x1xf32>
    %34 = vector.broadcast %33 : vector<17x1xf32> to vector<17x32xf32>
    %35 = arith.subf %20, %34 : vector<17x32xf32>
    %36 = arith.mulf %35, %35 : vector<17x32xf32>
    %cst_25 = arith.constant dense<0.000000e+00> : vector<17xf32>
    %37 = vector.multi_reduction <add>, %36, %cst_25 [1] : vector<17x32xf32> to vector<17xf32>
    %38 = vector.shape_cast %37 : vector<17xf32> to vector<17x1xf32>
    %cst_26 = arith.constant 3.200000e+01 : f32
    %39 = vector.broadcast %cst_26 : f32 to vector<17x1xf32>
    %40 = arith.divf %38, %39 : vector<17x1xf32>
    %cst_27 = arith.constant 9.99999997E-7 : f32
    %41 = vector.broadcast %cst_27 : f32 to vector<17x1xf32>
    %42 = arith.addf %40, %41 : vector<17x1xf32>
    %43 = math.rsqrt %42 : vector<17x1xf32>
    %44 = vector.broadcast %43 : vector<17x1xf32> to vector<17x32xf32>
    %45 = arith.mulf %35, %44 : vector<17x32xf32>
    %46 = vector.broadcast %28 : vector<1x32xf32> to vector<17x32xf32>
    %47 = arith.mulf %45, %46 : vector<17x32xf32>
    %48 = vector.broadcast %29 : vector<1x32xf32> to vector<17x32xf32>
    %49 = arith.addf %47, %48 : vector<17x32xf32>
    %50 = arith.truncf %49 : vector<17x32xf32> to vector<17x32xbf16>
    %c0_28 = arith.constant 0 : index
    %c0_29 = arith.constant 0 : index
    %c0_30 = arith.constant 0 : index
    %51 = vector.load %arg7[%c0_28, %c0_29, %c0_30] : memref<2x32x96xbf16, #tpu.memory_space<vmem>>, vector<1x32x96xbf16>
    %52 = vector.shape_cast %51 : vector<1x32x96xbf16> to vector<32x96xbf16>
    %cst_31 = arith.constant dense<0.000000e+00> : vector<17x96xf32>
    %53 = tpu.matmul %50, %52, %cst_31 {dimension_numbers = #tpu.dot_dimension_numbers<[1], [0], [0], [1], [0, 0, 1, 1], [], []>} : vector<17x32xbf16>, vector<32x96xbf16>, vector<17x96xf32> -> vector<17x96xf32>
    %c0_32 = arith.constant 0 : index
    %c0_33 = arith.constant 0 : index
    %c0_34 = arith.constant 0 : index
    %54 = vector.load %arg8[%c0_32, %c0_33, %c0_34] : memref<2x1x96xf32, #tpu.memory_space<vmem>>, vector<1x1x96xf32>
    %55 = vector.shape_cast %54 : vector<1x1x96xf32> to vector<1x96xf32>
    %56 = vector.broadcast %55 : vector<1x96xf32> to vector<17x96xf32>
    %57 = arith.addf %53, %56 : vector<17x96xf32>
    %58 = arith.truncf %57 : vector<17x96xf32> to vector<17x96xbf16>
    %59 = vector.extract_strided_slice %58 {offsets = [0, 0], sizes = [17, 8], strides = [1, 1]} : vector<17x96xbf16> to vector<17x8xbf16>
    %60 = vector.extract_strided_slice %58 {offsets = [0, 32], sizes = [17, 8], strides = [1, 1]} : vector<17x96xbf16> to vector<17x8xbf16>
    %61 = vector.extract_strided_slice %58 {offsets = [0, 64], sizes = [17, 8], strides = [1, 1]} : vector<17x96xbf16> to vector<17x8xbf16>
    %cst_35 = arith.constant dense<0.000000e+00> : vector<17x17xf32>
    %62 = tpu.matmul %59, %60, %cst_35 {dimension_numbers = #tpu.dot_dimension_numbers<[1], [1], [0], [0], [0, 0, 1, 0], [], []>} : vector<17x8xbf16>, vector<17x8xbf16>, vector<17x17xf32> -> vector<17x17xf32>
    %cst_36 = arith.constant dense<0xFF800000> : vector<17xf32>
    %63 = vector.multi_reduction <maximumf>, %62, %cst_36 [1] : vector<17x17xf32> to vector<17xf32>
    %64 = vector.shape_cast %63 : vector<17xf32> to vector<17x1xf32>
    %65 = vector.broadcast %64 : vector<17x1xf32> to vector<17x17xf32>
    %66 = arith.subf %62, %65 : vector<17x17xf32>
    %67 = math.exp %66 : vector<17x17xf32>
    %cst_37 = arith.constant dense<0.000000e+00> : vector<17xf32>
    %68 = vector.multi_reduction <add>, %67, %cst_37 [1] : vector<17x17xf32> to vector<17xf32>
    %69 = vector.shape_cast %68 : vector<17xf32> to vector<17x1xf32>
    %70 = tpu.reciprocal %69 {approx = true} : vector<17x1xf32> -> vector<17x1xf32>
    %71 = vector.broadcast %70 : vector<17x1xf32> to vector<17x17xf32>
    %72 = arith.mulf %67, %71 : vector<17x17xf32>
    %73 = arith.truncf %72 : vector<17x17xf32> to vector<17x17xbf16>
    %cst_38 = arith.constant dense<0.000000e+00> : vector<17x8xf32>
    %74 = tpu.matmul %73, %61, %cst_38 {dimension_numbers = #tpu.dot_dimension_numbers<[1], [0], [0], [1], [0, 0, 1, 1], [], []>} : vector<17x17xbf16>, vector<17x8xbf16>, vector<17x8xf32> -> vector<17x8xf32>
    %75 = vector.extract_strided_slice %58 {offsets = [0, 8], sizes = [17, 8], strides = [1, 1]} : vector<17x96xbf16> to vector<17x8xbf16>
    %76 = vector.extract_strided_slice %58 {offsets = [0, 40], sizes = [17, 8], strides = [1, 1]} : vector<17x96xbf16> to vector<17x8xbf16>
    %77 = vector.extract_strided_slice %58 {offsets = [0, 72], sizes = [17, 8], strides = [1, 1]} : vector<17x96xbf16> to vector<17x8xbf16>
    %cst_39 = arith.constant dense<0.000000e+00> : vector<17x17xf32>
    %78 = tpu.matmul %75, %76, %cst_39 {dimension_numbers = #tpu.dot_dimension_numbers<[1], [1], [0], [0], [0, 0, 1, 0], [], []>} : vector<17x8xbf16>, vector<17x8xbf16>, vector<17x17xf32> -> vector<17x17xf32>
    %cst_40 = arith.constant dense<0xFF800000> : vector<17xf32>
    %79 = vector.multi_reduction <maximumf>, %78, %cst_40 [1] : vector<17x17xf32> to vector<17xf32>
    %80 = vector.shape_cast %79 : vector<17xf32> to vector<17x1xf32>
    %81 = vector.broadcast %80 : vector<17x1xf32> to vector<17x17xf32>
    %82 = arith.subf %78, %81 : vector<17x17xf32>
    %83 = math.exp %82 : vector<17x17xf32>
    %cst_41 = arith.constant dense<0.000000e+00> : vector<17xf32>
    %84 = vector.multi_reduction <add>, %83, %cst_41 [1] : vector<17x17xf32> to vector<17xf32>
    %85 = vector.shape_cast %84 : vector<17xf32> to vector<17x1xf32>
    %86 = tpu.reciprocal %85 {approx = true} : vector<17x1xf32> -> vector<17x1xf32>
    %87 = vector.broadcast %86 : vector<17x1xf32> to vector<17x17xf32>
    %88 = arith.mulf %83, %87 : vector<17x17xf32>
    %89 = arith.addf %72, %88 : vector<17x17xf32>
    %90 = arith.truncf %88 : vector<17x17xf32> to vector<17x17xbf16>
    %cst_42 = arith.constant dense<0.000000e+00> : vector<17x8xf32>
    %91 = tpu.matmul %90, %77, %cst_42 {dimension_numbers = #tpu.dot_dimension_numbers<[1], [0], [0], [1], [0, 0, 1, 1], [], []>} : vector<17x17xbf16>, vector<17x8xbf16>, vector<17x8xf32> -> vector<17x8xf32>
    %92 = vector.extract_strided_slice %58 {offsets = [0, 16], sizes = [17, 8], strides = [1, 1]} : vector<17x96xbf16> to vector<17x8xbf16>
    %93 = vector.extract_strided_slice %58 {offsets = [0, 48], sizes = [17, 8], strides = [1, 1]} : vector<17x96xbf16> to vector<17x8xbf16>
    %94 = vector.extract_strided_slice %58 {offsets = [0, 80], sizes = [17, 8], strides = [1, 1]} : vector<17x96xbf16> to vector<17x8xbf16>
    %cst_43 = arith.constant dense<0.000000e+00> : vector<17x17xf32>
    %95 = tpu.matmul %92, %93, %cst_43 {dimension_numbers = #tpu.dot_dimension_numbers<[1], [1], [0], [0], [0, 0, 1, 0], [], []>} : vector<17x8xbf16>, vector<17x8xbf16>, vector<17x17xf32> -> vector<17x17xf32>
    %cst_44 = arith.constant dense<0xFF800000> : vector<17xf32>
    %96 = vector.multi_reduction <maximumf>, %95, %cst_44 [1] : vector<17x17xf32> to vector<17xf32>
    %97 = vector.shape_cast %96 : vector<17xf32> to vector<17x1xf32>
    %98 = vector.broadcast %97 : vector<17x1xf32> to vector<17x17xf32>
    %99 = arith.subf %95, %98 : vector<17x17xf32>
    %100 = math.exp %99 : vector<17x17xf32>
    %cst_45 = arith.constant dense<0.000000e+00> : vector<17xf32>
    %101 = vector.multi_reduction <add>, %100, %cst_45 [1] : vector<17x17xf32> to vector<17xf32>
    %102 = vector.shape_cast %101 : vector<17xf32> to vector<17x1xf32>
    %103 = tpu.reciprocal %102 {approx = true} : vector<17x1xf32> -> vector<17x1xf32>
    %104 = vector.broadcast %103 : vector<17x1xf32> to vector<17x17xf32>
    %105 = arith.mulf %100, %104 : vector<17x17xf32>
    %106 = arith.addf %89, %105 : vector<17x17xf32>
    %107 = arith.truncf %105 : vector<17x17xf32> to vector<17x17xbf16>
    %cst_46 = arith.constant dense<0.000000e+00> : vector<17x8xf32>
    %108 = tpu.matmul %107, %94, %cst_46 {dimension_numbers = #tpu.dot_dimension_numbers<[1], [0], [0], [1], [0, 0, 1, 1], [], []>} : vector<17x17xbf16>, vector<17x8xbf16>, vector<17x8xf32> -> vector<17x8xf32>
    %109 = vector.extract_strided_slice %58 {offsets = [0, 24], sizes = [17, 8], strides = [1, 1]} : vector<17x96xbf16> to vector<17x8xbf16>
    %110 = vector.extract_strided_slice %58 {offsets = [0, 56], sizes = [17, 8], strides = [1, 1]} : vector<17x96xbf16> to vector<17x8xbf16>
    %111 = vector.extract_strided_slice %58 {offsets = [0, 88], sizes = [17, 8], strides = [1, 1]} : vector<17x96xbf16> to vector<17x8xbf16>
    %cst_47 = arith.constant dense<0.000000e+00> : vector<17x17xf32>
    %112 = tpu.matmul %109, %110, %cst_47 {dimension_numbers = #tpu.dot_dimension_numbers<[1], [1], [0], [0], [0, 0, 1, 0], [], []>} : vector<17x8xbf16>, vector<17x8xbf16>, vector<17x17xf32> -> vector<17x17xf32>
    %cst_48 = arith.constant dense<0xFF800000> : vector<17xf32>
    %113 = vector.multi_reduction <maximumf>, %112, %cst_48 [1] : vector<17x17xf32> to vector<17xf32>
    %114 = vector.shape_cast %113 : vector<17xf32> to vector<17x1xf32>
    %115 = vector.broadcast %114 : vector<17x1xf32> to vector<17x17xf32>
    %116 = arith.subf %112, %115 : vector<17x17xf32>
    %117 = math.exp %116 : vector<17x17xf32>
    %cst_49 = arith.constant dense<0.000000e+00> : vector<17xf32>
    %118 = vector.multi_reduction <add>, %117, %cst_49 [1] : vector<17x17xf32> to vector<17xf32>
    %119 = vector.shape_cast %118 : vector<17xf32> to vector<17x1xf32>
    %120 = tpu.reciprocal %119 {approx = true} : vector<17x1xf32> -> vector<17x1xf32>
    %121 = vector.broadcast %120 : vector<17x1xf32> to vector<17x17xf32>
    %122 = arith.mulf %117, %121 : vector<17x17xf32>
    %123 = arith.addf %106, %122 : vector<17x17xf32>
    %124 = arith.truncf %122 : vector<17x17xf32> to vector<17x17xbf16>
    %cst_50 = arith.constant dense<0.000000e+00> : vector<17x8xf32>
    %125 = tpu.matmul %124, %111, %cst_50 {dimension_numbers = #tpu.dot_dimension_numbers<[1], [0], [0], [1], [0, 0, 1, 1], [], []>} : vector<17x17xbf16>, vector<17x8xbf16>, vector<17x8xf32> -> vector<17x8xf32>
    %126 = tpu.concatenate %74, %91, %108, %125 in 1 : vector<17x8xf32>, vector<17x8xf32>, vector<17x8xf32>, vector<17x8xf32> -> vector<17x32xf32>
    %127 = arith.truncf %126 : vector<17x32xf32> to vector<17x32xbf16>
    %c0_51 = arith.constant 0 : index
    %c0_52 = arith.constant 0 : index
    %c0_53 = arith.constant 0 : index
    %128 = vector.load %arg9[%c0_51, %c0_52, %c0_53] : memref<2x32x32xbf16, #tpu.memory_space<vmem>>, vector<1x32x32xbf16>
    %129 = vector.shape_cast %128 : vector<1x32x32xbf16> to vector<32x32xbf16>
    %cst_54 = arith.constant dense<0.000000e+00> : vector<17x32xf32>
    %130 = tpu.matmul %127, %129, %cst_54 {dimension_numbers = #tpu.dot_dimension_numbers<[1], [0], [0], [1], [0, 0, 1, 1], [], []>} : vector<17x32xbf16>, vector<32x32xbf16>, vector<17x32xf32> -> vector<17x32xf32>
    %131 = arith.addf %20, %130 : vector<17x32xf32>
    %c0_55 = arith.constant 0 : index
    %c0_56 = arith.constant 0 : index
    %c0_57 = arith.constant 0 : index
    %132 = vector.load %arg10[%c0_55, %c0_56, %c0_57] : memref<2x1x32xf32, #tpu.memory_space<vmem>>, vector<1x1x32xf32>
    %133 = vector.shape_cast %132 : vector<1x1x32xf32> to vector<1x32xf32>
    %134 = vector.broadcast %133 : vector<1x32xf32> to vector<17x32xf32>
    %135 = arith.addf %131, %134 : vector<17x32xf32>
    %cst_58 = arith.constant 2.500000e-01 : f32
    %136 = vector.broadcast %cst_58 : f32 to vector<17x17xf32>
    %137 = arith.mulf %123, %136 : vector<17x17xf32>
    %138 = arith.addf %137, %25 : vector<17x17xf32>
    %cst_59 = arith.constant 5.000000e-01 : f32
    %139 = vector.broadcast %cst_59 : f32 to vector<17x17xf32>
    %140 = arith.mulf %138, %139 : vector<17x17xf32>
    %cst_60 = arith.constant dense<0.000000e+00> : vector<17xf32>
    %141 = vector.multi_reduction <add>, %140, %cst_60 [1] : vector<17x17xf32> to vector<17xf32>
    %142 = vector.shape_cast %141 : vector<17xf32> to vector<17x1xf32>
    %143 = vector.broadcast %142 : vector<17x1xf32> to vector<17x17xf32>
    %144 = arith.divf %140, %143 : vector<17x17xf32>
    %145 = arith.truncf %144 : vector<17x17xf32> to vector<17x17xbf16>
    %146 = arith.truncf %25 : vector<17x17xf32> to vector<17x17xbf16>
    %cst_61 = arith.constant dense<0.000000e+00> : vector<17x17xf32>
    %147 = tpu.matmul %145, %146, %cst_61 {dimension_numbers = #tpu.dot_dimension_numbers<[1], [0], [0], [1], [0, 0, 1, 1], [], []>} : vector<17x17xbf16>, vector<17x17xbf16>, vector<17x17xf32> -> vector<17x17xf32>
    %c0_62 = arith.constant 0 : index
    %c0_63 = arith.constant 0 : index
    %c0_64 = arith.constant 0 : index
    %148 = vector.load %arg11[%c0_62, %c0_63, %c0_64] : memref<2x2x32xf32, #tpu.memory_space<vmem>>, vector<1x2x32xf32>
    %149 = vector.shape_cast %148 : vector<1x2x32xf32> to vector<2x32xf32>
    %150 = vector.extract_strided_slice %149 {offsets = [0, 0], sizes = [1, 32], strides = [1, 1]} : vector<2x32xf32> to vector<1x32xf32>
    %151 = vector.extract_strided_slice %149 {offsets = [1, 0], sizes = [1, 32], strides = [1, 1]} : vector<2x32xf32> to vector<1x32xf32>
    %cst_65 = arith.constant dense<0.000000e+00> : vector<17xf32>
    %152 = vector.multi_reduction <add>, %135, %cst_65 [1] : vector<17x32xf32> to vector<17xf32>
    %153 = vector.shape_cast %152 : vector<17xf32> to vector<17x1xf32>
    %cst_66 = arith.constant 3.200000e+01 : f32
    %154 = vector.broadcast %cst_66 : f32 to vector<17x1xf32>
    %155 = arith.divf %153, %154 : vector<17x1xf32>
    %156 = vector.broadcast %155 : vector<17x1xf32> to vector<17x32xf32>
    %157 = arith.subf %135, %156 : vector<17x32xf32>
    %158 = arith.mulf %157, %157 : vector<17x32xf32>
    %cst_67 = arith.constant dense<0.000000e+00> : vector<17xf32>
    %159 = vector.multi_reduction <add>, %158, %cst_67 [1] : vector<17x32xf32> to vector<17xf32>
    %160 = vector.shape_cast %159 : vector<17xf32> to vector<17x1xf32>
    %cst_68 = arith.constant 3.200000e+01 : f32
    %161 = vector.broadcast %cst_68 : f32 to vector<17x1xf32>
    %162 = arith.divf %160, %161 : vector<17x1xf32>
    %cst_69 = arith.constant 9.99999997E-7 : f32
    %163 = vector.broadcast %cst_69 : f32 to vector<17x1xf32>
    %164 = arith.addf %162, %163 : vector<17x1xf32>
    %165 = math.rsqrt %164 : vector<17x1xf32>
    %166 = vector.broadcast %165 : vector<17x1xf32> to vector<17x32xf32>
    %167 = arith.mulf %157, %166 : vector<17x32xf32>
    %168 = vector.broadcast %150 : vector<1x32xf32> to vector<17x32xf32>
    %169 = arith.mulf %167, %168 : vector<17x32xf32>
    %170 = vector.broadcast %151 : vector<1x32xf32> to vector<17x32xf32>
    %171 = arith.addf %169, %170 : vector<17x32xf32>
    %172 = arith.truncf %171 : vector<17x32xf32> to vector<17x32xbf16>
    %c0_70 = arith.constant 0 : index
    %c0_71 = arith.constant 0 : index
    %c0_72 = arith.constant 0 : index
    %173 = vector.load %arg12[%c0_70, %c0_71, %c0_72] : memref<2x32x128xbf16, #tpu.memory_space<vmem>>, vector<1x32x128xbf16>
    %174 = vector.shape_cast %173 : vector<1x32x128xbf16> to vector<32x128xbf16>
    %cst_73 = arith.constant dense<0.000000e+00> : vector<17x128xf32>
    %175 = tpu.matmul %172, %174, %cst_73 {dimension_numbers = #tpu.dot_dimension_numbers<[1], [0], [0], [1], [0, 0, 1, 1], [], []>} : vector<17x32xbf16>, vector<32x128xbf16>, vector<17x128xf32> -> vector<17x128xf32>
    %c0_74 = arith.constant 0 : index
    %c0_75 = arith.constant 0 : index
    %c0_76 = arith.constant 0 : index
    %176 = vector.load %arg13[%c0_74, %c0_75, %c0_76] : memref<2x1x128xf32, #tpu.memory_space<vmem>>, vector<1x1x128xf32>
    %177 = vector.shape_cast %176 : vector<1x1x128xf32> to vector<1x128xf32>
    %178 = vector.broadcast %177 : vector<1x128xf32> to vector<17x128xf32>
    %179 = arith.addf %175, %178 : vector<17x128xf32>
    %180 = arith.mulf %179, %179 : vector<17x128xf32>
    %181 = arith.mulf %179, %180 : vector<17x128xf32>
    %cst_77 = arith.constant 4.471500e-02 : f32
    %182 = vector.broadcast %cst_77 : f32 to vector<17x128xf32>
    %183 = arith.mulf %182, %181 : vector<17x128xf32>
    %184 = arith.addf %179, %183 : vector<17x128xf32>
    %cst_78 = arith.constant 0.797884583 : f32
    %185 = vector.broadcast %cst_78 : f32 to vector<17x128xf32>
    %186 = arith.mulf %185, %184 : vector<17x128xf32>
    %187 = math.tanh %186 : vector<17x128xf32>
    %cst_79 = arith.constant 1.000000e+00 : f32
    %188 = vector.broadcast %cst_79 : f32 to vector<17x128xf32>
    %189 = arith.addf %188, %187 : vector<17x128xf32>
    %cst_80 = arith.constant 5.000000e-01 : f32
    %190 = vector.broadcast %cst_80 : f32 to vector<17x128xf32>
    %191 = arith.mulf %190, %189 : vector<17x128xf32>
    %192 = arith.mulf %179, %191 : vector<17x128xf32>
    %193 = arith.truncf %192 : vector<17x128xf32> to vector<17x128xbf16>
    %c0_81 = arith.constant 0 : index
    %c0_82 = arith.constant 0 : index
    %c0_83 = arith.constant 0 : index
    %194 = vector.load %arg14[%c0_81, %c0_82, %c0_83] : memref<2x128x32xbf16, #tpu.memory_space<vmem>>, vector<1x128x32xbf16>
    %195 = vector.shape_cast %194 : vector<1x128x32xbf16> to vector<128x32xbf16>
    %cst_84 = arith.constant dense<0.000000e+00> : vector<17x32xf32>
    %196 = tpu.matmul %193, %195, %cst_84 {dimension_numbers = #tpu.dot_dimension_numbers<[1], [0], [0], [1], [0, 0, 1, 1], [], []>} : vector<17x128xbf16>, vector<128x32xbf16>, vector<17x32xf32> -> vector<17x32xf32>
    %c0_85 = arith.constant 0 : index
    %c0_86 = arith.constant 0 : index
    %c0_87 = arith.constant 0 : index
    %197 = vector.load %arg15[%c0_85, %c0_86, %c0_87] : memref<2x1x32xf32, #tpu.memory_space<vmem>>, vector<1x1x32xf32>
    %198 = vector.shape_cast %197 : vector<1x1x32xf32> to vector<1x32xf32>
    %199 = vector.broadcast %198 : vector<1x32xf32> to vector<17x32xf32>
    %200 = arith.addf %196, %199 : vector<17x32xf32>
    %201 = arith.addf %135, %200 : vector<17x32xf32>
    %c1_88 = arith.constant 1 : index
    %c0_89 = arith.constant 0 : index
    %c0_90 = arith.constant 0 : index
    %202 = vector.load %arg6[%c1_88, %c0_89, %c0_90] : memref<2x2x32xf32, #tpu.memory_space<vmem>>, vector<1x2x32xf32>
    %203 = vector.shape_cast %202 : vector<1x2x32xf32> to vector<2x32xf32>
    %204 = vector.extract_strided_slice %203 {offsets = [0, 0], sizes = [1, 32], strides = [1, 1]} : vector<2x32xf32> to vector<1x32xf32>
    %205 = vector.extract_strided_slice %203 {offsets = [1, 0], sizes = [1, 32], strides = [1, 1]} : vector<2x32xf32> to vector<1x32xf32>
    %cst_91 = arith.constant dense<0.000000e+00> : vector<17xf32>
    %206 = vector.multi_reduction <add>, %201, %cst_91 [1] : vector<17x32xf32> to vector<17xf32>
    %207 = vector.shape_cast %206 : vector<17xf32> to vector<17x1xf32>
    %cst_92 = arith.constant 3.200000e+01 : f32
    %208 = vector.broadcast %cst_92 : f32 to vector<17x1xf32>
    %209 = arith.divf %207, %208 : vector<17x1xf32>
    %210 = vector.broadcast %209 : vector<17x1xf32> to vector<17x32xf32>
    %211 = arith.subf %201, %210 : vector<17x32xf32>
    %212 = arith.mulf %211, %211 : vector<17x32xf32>
    %cst_93 = arith.constant dense<0.000000e+00> : vector<17xf32>
    %213 = vector.multi_reduction <add>, %212, %cst_93 [1] : vector<17x32xf32> to vector<17xf32>
    %214 = vector.shape_cast %213 : vector<17xf32> to vector<17x1xf32>
    %cst_94 = arith.constant 3.200000e+01 : f32
    %215 = vector.broadcast %cst_94 : f32 to vector<17x1xf32>
    %216 = arith.divf %214, %215 : vector<17x1xf32>
    %cst_95 = arith.constant 9.99999997E-7 : f32
    %217 = vector.broadcast %cst_95 : f32 to vector<17x1xf32>
    %218 = arith.addf %216, %217 : vector<17x1xf32>
    %219 = math.rsqrt %218 : vector<17x1xf32>
    %220 = vector.broadcast %219 : vector<17x1xf32> to vector<17x32xf32>
    %221 = arith.mulf %211, %220 : vector<17x32xf32>
    %222 = vector.broadcast %204 : vector<1x32xf32> to vector<17x32xf32>
    %223 = arith.mulf %221, %222 : vector<17x32xf32>
    %224 = vector.broadcast %205 : vector<1x32xf32> to vector<17x32xf32>
    %225 = arith.addf %223, %224 : vector<17x32xf32>
    %226 = arith.truncf %225 : vector<17x32xf32> to vector<17x32xbf16>
    %c1_96 = arith.constant 1 : index
    %c0_97 = arith.constant 0 : index
    %c0_98 = arith.constant 0 : index
    %227 = vector.load %arg7[%c1_96, %c0_97, %c0_98] : memref<2x32x96xbf16, #tpu.memory_space<vmem>>, vector<1x32x96xbf16>
    %228 = vector.shape_cast %227 : vector<1x32x96xbf16> to vector<32x96xbf16>
    %cst_99 = arith.constant dense<0.000000e+00> : vector<17x96xf32>
    %229 = tpu.matmul %226, %228, %cst_99 {dimension_numbers = #tpu.dot_dimension_numbers<[1], [0], [0], [1], [0, 0, 1, 1], [], []>} : vector<17x32xbf16>, vector<32x96xbf16>, vector<17x96xf32> -> vector<17x96xf32>
    %c1_100 = arith.constant 1 : index
    %c0_101 = arith.constant 0 : index
    %c0_102 = arith.constant 0 : index
    %230 = vector.load %arg8[%c1_100, %c0_101, %c0_102] : memref<2x1x96xf32, #tpu.memory_space<vmem>>, vector<1x1x96xf32>
    %231 = vector.shape_cast %230 : vector<1x1x96xf32> to vector<1x96xf32>
    %232 = vector.broadcast %231 : vector<1x96xf32> to vector<17x96xf32>
    %233 = arith.addf %229, %232 : vector<17x96xf32>
    %234 = arith.truncf %233 : vector<17x96xf32> to vector<17x96xbf16>
    %235 = vector.extract_strided_slice %234 {offsets = [0, 0], sizes = [17, 8], strides = [1, 1]} : vector<17x96xbf16> to vector<17x8xbf16>
    %236 = vector.extract_strided_slice %234 {offsets = [0, 32], sizes = [17, 8], strides = [1, 1]} : vector<17x96xbf16> to vector<17x8xbf16>
    %cst_103 = arith.constant dense<0.000000e+00> : vector<17x17xf32>
    %237 = tpu.matmul %235, %236, %cst_103 {dimension_numbers = #tpu.dot_dimension_numbers<[1], [1], [0], [0], [0, 0, 1, 0], [], []>} : vector<17x8xbf16>, vector<17x8xbf16>, vector<17x17xf32> -> vector<17x17xf32>
    %cst_104 = arith.constant dense<0xFF800000> : vector<17xf32>
    %238 = vector.multi_reduction <maximumf>, %237, %cst_104 [1] : vector<17x17xf32> to vector<17xf32>
    %239 = vector.shape_cast %238 : vector<17xf32> to vector<17x1xf32>
    %240 = vector.broadcast %239 : vector<17x1xf32> to vector<17x17xf32>
    %241 = arith.subf %237, %240 : vector<17x17xf32>
    %242 = math.exp %241 : vector<17x17xf32>
    %cst_105 = arith.constant dense<0.000000e+00> : vector<17xf32>
    %243 = vector.multi_reduction <add>, %242, %cst_105 [1] : vector<17x17xf32> to vector<17xf32>
    %244 = vector.shape_cast %243 : vector<17xf32> to vector<17x1xf32>
    %245 = tpu.reciprocal %244 {approx = true} : vector<17x1xf32> -> vector<17x1xf32>
    %246 = vector.broadcast %245 : vector<17x1xf32> to vector<17x17xf32>
    %247 = arith.mulf %242, %246 : vector<17x17xf32>
    %248 = vector.extract_strided_slice %234 {offsets = [0, 8], sizes = [17, 8], strides = [1, 1]} : vector<17x96xbf16> to vector<17x8xbf16>
    %249 = vector.extract_strided_slice %234 {offsets = [0, 40], sizes = [17, 8], strides = [1, 1]} : vector<17x96xbf16> to vector<17x8xbf16>
    %cst_106 = arith.constant dense<0.000000e+00> : vector<17x17xf32>
    %250 = tpu.matmul %248, %249, %cst_106 {dimension_numbers = #tpu.dot_dimension_numbers<[1], [1], [0], [0], [0, 0, 1, 0], [], []>} : vector<17x8xbf16>, vector<17x8xbf16>, vector<17x17xf32> -> vector<17x17xf32>
    %cst_107 = arith.constant dense<0xFF800000> : vector<17xf32>
    %251 = vector.multi_reduction <maximumf>, %250, %cst_107 [1] : vector<17x17xf32> to vector<17xf32>
    %252 = vector.shape_cast %251 : vector<17xf32> to vector<17x1xf32>
    %253 = vector.broadcast %252 : vector<17x1xf32> to vector<17x17xf32>
    %254 = arith.subf %250, %253 : vector<17x17xf32>
    %255 = math.exp %254 : vector<17x17xf32>
    %cst_108 = arith.constant dense<0.000000e+00> : vector<17xf32>
    %256 = vector.multi_reduction <add>, %255, %cst_108 [1] : vector<17x17xf32> to vector<17xf32>
    %257 = vector.shape_cast %256 : vector<17xf32> to vector<17x1xf32>
    %258 = tpu.reciprocal %257 {approx = true} : vector<17x1xf32> -> vector<17x1xf32>
    %259 = vector.broadcast %258 : vector<17x1xf32> to vector<17x17xf32>
    %260 = arith.mulf %255, %259 : vector<17x17xf32>
    %261 = arith.addf %247, %260 : vector<17x17xf32>
    %262 = vector.extract_strided_slice %234 {offsets = [0, 16], sizes = [17, 8], strides = [1, 1]} : vector<17x96xbf16> to vector<17x8xbf16>
    %263 = vector.extract_strided_slice %234 {offsets = [0, 48], sizes = [17, 8], strides = [1, 1]} : vector<17x96xbf16> to vector<17x8xbf16>
    %cst_109 = arith.constant dense<0.000000e+00> : vector<17x17xf32>
    %264 = tpu.matmul %262, %263, %cst_109 {dimension_numbers = #tpu.dot_dimension_numbers<[1], [1], [0], [0], [0, 0, 1, 0], [], []>} : vector<17x8xbf16>, vector<17x8xbf16>, vector<17x17xf32> -> vector<17x17xf32>
    %cst_110 = arith.constant dense<0xFF800000> : vector<17xf32>
    %265 = vector.multi_reduction <maximumf>, %264, %cst_110 [1] : vector<17x17xf32> to vector<17xf32>
    %266 = vector.shape_cast %265 : vector<17xf32> to vector<17x1xf32>
    %267 = vector.broadcast %266 : vector<17x1xf32> to vector<17x17xf32>
    %268 = arith.subf %264, %267 : vector<17x17xf32>
    %269 = math.exp %268 : vector<17x17xf32>
    %cst_111 = arith.constant dense<0.000000e+00> : vector<17xf32>
    %270 = vector.multi_reduction <add>, %269, %cst_111 [1] : vector<17x17xf32> to vector<17xf32>
    %271 = vector.shape_cast %270 : vector<17xf32> to vector<17x1xf32>
    %272 = tpu.reciprocal %271 {approx = true} : vector<17x1xf32> -> vector<17x1xf32>
    %273 = vector.broadcast %272 : vector<17x1xf32> to vector<17x17xf32>
    %274 = arith.mulf %269, %273 : vector<17x17xf32>
    %275 = arith.addf %261, %274 : vector<17x17xf32>
    %276 = vector.extract_strided_slice %234 {offsets = [0, 24], sizes = [17, 8], strides = [1, 1]} : vector<17x96xbf16> to vector<17x8xbf16>
    %277 = vector.extract_strided_slice %234 {offsets = [0, 56], sizes = [17, 8], strides = [1, 1]} : vector<17x96xbf16> to vector<17x8xbf16>
    %cst_112 = arith.constant dense<0.000000e+00> : vector<17x17xf32>
    %278 = tpu.matmul %276, %277, %cst_112 {dimension_numbers = #tpu.dot_dimension_numbers<[1], [1], [0], [0], [0, 0, 1, 0], [], []>} : vector<17x8xbf16>, vector<17x8xbf16>, vector<17x17xf32> -> vector<17x17xf32>
    %cst_113 = arith.constant dense<0xFF800000> : vector<17xf32>
    %279 = vector.multi_reduction <maximumf>, %278, %cst_113 [1] : vector<17x17xf32> to vector<17xf32>
    %280 = vector.shape_cast %279 : vector<17xf32> to vector<17x1xf32>
    %281 = vector.broadcast %280 : vector<17x1xf32> to vector<17x17xf32>
    %282 = arith.subf %278, %281 : vector<17x17xf32>
    %283 = math.exp %282 : vector<17x17xf32>
    %cst_114 = arith.constant dense<0.000000e+00> : vector<17xf32>
    %284 = vector.multi_reduction <add>, %283, %cst_114 [1] : vector<17x17xf32> to vector<17xf32>
    %285 = vector.shape_cast %284 : vector<17xf32> to vector<17x1xf32>
    %286 = tpu.reciprocal %285 {approx = true} : vector<17x1xf32> -> vector<17x1xf32>
    %287 = vector.broadcast %286 : vector<17x1xf32> to vector<17x17xf32>
    %288 = arith.mulf %283, %287 : vector<17x17xf32>
    %289 = arith.addf %275, %288 : vector<17x17xf32>
    %cst_115 = arith.constant 2.500000e-01 : f32
    %290 = vector.broadcast %cst_115 : f32 to vector<17x17xf32>
    %291 = arith.mulf %289, %290 : vector<17x17xf32>
    %292 = arith.addf %291, %25 : vector<17x17xf32>
    %cst_116 = arith.constant 5.000000e-01 : f32
    %293 = vector.broadcast %cst_116 : f32 to vector<17x17xf32>
    %294 = arith.mulf %292, %293 : vector<17x17xf32>
    %cst_117 = arith.constant dense<0.000000e+00> : vector<17xf32>
    %295 = vector.multi_reduction <add>, %294, %cst_117 [1] : vector<17x17xf32> to vector<17xf32>
    %296 = vector.shape_cast %295 : vector<17xf32> to vector<17x1xf32>
    %297 = vector.broadcast %296 : vector<17x1xf32> to vector<17x17xf32>
    %298 = arith.divf %294, %297 : vector<17x17xf32>
    %299 = arith.truncf %298 : vector<17x17xf32> to vector<17x17xbf16>
    %300 = arith.truncf %147 : vector<17x17xf32> to vector<17x17xbf16>
    %cst_118 = arith.constant dense<0.000000e+00> : vector<17x17xf32>
    %301 = tpu.matmul %299, %300, %cst_118 {dimension_numbers = #tpu.dot_dimension_numbers<[1], [0], [0], [1], [0, 0, 1, 1], [], []>} : vector<17x17xbf16>, vector<17x17xbf16>, vector<17x17xf32> -> vector<17x17xf32>
    %302 = vector.extract_strided_slice %301 {offsets = [0, 0], sizes = [1, 17], strides = [1, 1]} : vector<17x17xf32> to vector<1x17xf32>
    %c0_119 = arith.constant 0 : index
    %c0_120 = arith.constant 0 : index
    %c0_121 = arith.constant 0 : index
    %303 = vector.load %arg16[%c0_119, %c0_120, %c0_121] : memref<1x1x17xf32, #tpu.memory_space<vmem>>, vector<1x1x17xf32>
    %304 = vector.shape_cast %303 : vector<1x1x17xf32> to vector<1x17xf32>
    %305 = vector.shape_cast %302 : vector<1x17xf32> to vector<1x1x17xf32>
    tpu.vector_store %arg16[%c0_119, %c0_120, %c0_121], %305 {strides = array<i32>} : memref<1x1x17xf32, #tpu.memory_space<vmem>>, vector<1x1x17xf32>,
    return
  }
  func.func @transform_0(%arg0: i32) -> (i32, i32, i32) {
    %c0_i32 = arith.constant 0 : i32
    %c0_i32_0 = arith.constant 0 : i32
    %c0_i32_1 = arith.constant 0 : i32
    return %arg0, %c0_i32, %c0_i32_0 : i32, i32, i32
  }
  func.func @transform_1(%arg0: i32) -> (i32, i32) {
    %c0_i32 = arith.constant 0 : i32
    %c0_i32_0 = arith.constant 0 : i32
    %c0_i32_1 = arith.constant 0 : i32
    return %c0_i32, %c0_i32_0 : i32, i32
  }
  func.func @transform_2(%arg0: i32) -> (i32, i32) {
    %c0_i32 = arith.constant 0 : i32
    %c0_i32_0 = arith.constant 0 : i32
    %c0_i32_1 = arith.constant 0 : i32
    return %c0_i32, %c0_i32_0 : i32, i32
  }
  func.func @transform_3(%arg0: i32) -> (i32, i32) {
    %c0_i32 = arith.constant 0 : i32
    %c0_i32_0 = arith.constant 0 : i32
    %c0_i32_1 = arith.constant 0 : i32
    return %c0_i32, %c0_i32_0 : i32, i32
  }
  func.func @transform_4(%arg0: i32) -> (i32, i32) {
    %c0_i32 = arith.constant 0 : i32
    %c0_i32_0 = arith.constant 0 : i32
    %c0_i32_1 = arith.constant 0 : i32
    return %c0_i32, %c0_i32_0 : i32, i32
  }
  func.func @transform_5(%arg0: i32) -> (i32, i32, i32) {
    %c0_i32 = arith.constant 0 : i32
    %c0_i32_0 = arith.constant 0 : i32
    %c0_i32_1 = arith.constant 0 : i32
    %c0_i32_2 = arith.constant 0 : i32
    return %c0_i32, %c0_i32_0, %c0_i32_1 : i32, i32, i32
  }
  func.func @transform_6(%arg0: i32) -> (i32, i32, i32) {
    %c0_i32 = arith.constant 0 : i32
    %c0_i32_0 = arith.constant 0 : i32
    %c0_i32_1 = arith.constant 0 : i32
    %c0_i32_2 = arith.constant 0 : i32
    return %c0_i32, %c0_i32_0, %c0_i32_1 : i32, i32, i32
  }
  func.func @transform_7(%arg0: i32) -> (i32, i32, i32) {
    %c0_i32 = arith.constant 0 : i32
    %c0_i32_0 = arith.constant 0 : i32
    %c0_i32_1 = arith.constant 0 : i32
    %c0_i32_2 = arith.constant 0 : i32
    return %c0_i32, %c0_i32_0, %c0_i32_1 : i32, i32, i32
  }
  func.func @transform_8(%arg0: i32) -> (i32, i32, i32) {
    %c0_i32 = arith.constant 0 : i32
    %c0_i32_0 = arith.constant 0 : i32
    %c0_i32_1 = arith.constant 0 : i32
    %c0_i32_2 = arith.constant 0 : i32
    return %c0_i32, %c0_i32_0, %c0_i32_1 : i32, i32, i32
  }
  func.func @transform_9(%arg0: i32) -> (i32, i32, i32) {
    %c0_i32 = arith.constant 0 : i32
    %c0_i32_0 = arith.constant 0 : i32
    %c0_i32_1 = arith.constant 0 : i32
    %c0_i32_2 = arith.constant 0 : i32
    return %c0_i32, %c0_i32_0, %c0_i32_1 : i32, i32, i32
  }
  func.func @transform_10(%arg0: i32) -> (i32, i32, i32) {
    %c0_i32 = arith.constant 0 : i32
    %c0_i32_0 = arith.constant 0 : i32
    %c0_i32_1 = arith.constant 0 : i32
    %c0_i32_2 = arith.constant 0 : i32
    return %c0_i32, %c0_i32_0, %c0_i32_1 : i32, i32, i32
  }
  func.func @transform_11(%arg0: i32) -> (i32, i32, i32) {
    %c0_i32 = arith.constant 0 : i32
    %c0_i32_0 = arith.constant 0 : i32
    %c0_i32_1 = arith.constant 0 : i32
    %c0_i32_2 = arith.constant 0 : i32
    return %c0_i32, %c0_i32_0, %c0_i32_1 : i32, i32, i32
  }
  func.func @transform_12(%arg0: i32) -> (i32, i32, i32) {
    %c0_i32 = arith.constant 0 : i32
    %c0_i32_0 = arith.constant 0 : i32
    %c0_i32_1 = arith.constant 0 : i32
    %c0_i32_2 = arith.constant 0 : i32
    return %c0_i32, %c0_i32_0, %c0_i32_1 : i32, i32, i32
  }
  func.func @transform_13(%arg0: i32) -> (i32, i32, i32) {
    %c0_i32 = arith.constant 0 : i32
    %c0_i32_0 = arith.constant 0 : i32
    %c0_i32_1 = arith.constant 0 : i32
    %c0_i32_2 = arith.constant 0 : i32
    return %c0_i32, %c0_i32_0, %c0_i32_1 : i32, i32, i32
  }
  func.func @transform_14(%arg0: i32) -> (i32, i32, i32) {
    %c0_i32 = arith.constant 0 : i32
    %c0_i32_0 = arith.constant 0 : i32
    %c0_i32_1 = arith.constant 0 : i32
    %c0_i32_2 = arith.constant 0 : i32
    return %c0_i32, %c0_i32_0, %c0_i32_1 : i32, i32, i32
  }
  func.func @transform_15(%arg0: i32) -> (i32, i32, i32) {
    %c0_i32 = arith.constant 0 : i32
    %c0_i32_0 = arith.constant 0 : i32
    %c0_i32_1 = arith.constant 0 : i32
    return %arg0, %c0_i32, %c0_i32_0 : i32, i32, i32
  }
  func.func @transform_16(%arg0: i32) -> (i32, i32, i32) {
    %c0_i32 = arith.constant 0 : i32
    %c0_i32_0 = arith.constant 0 : i32
    %c0_i32_1 = arith.constant 0 : i32
    return %arg0, %c0_i32, %c0_i32_0 : i32, i32, i32
  }
}

module attributes {stable_mosaic.version = 11 : i64} {
  func.func @_pass2_kernel(%arg0: i32, %arg1: memref<2x8xi32, #tpu.memory_space<smem>>, %arg2: memref<1x17x32xf32, #tpu.memory_space<vmem>>, %arg3: memref<2x2x32xf32, #tpu.memory_space<vmem>>, %arg4: memref<2x32x96xbf16, #tpu.memory_space<vmem>>, %arg5: memref<2x1x96xf32, #tpu.memory_space<vmem>>, %arg6: memref<2x32x32xbf16, #tpu.memory_space<vmem>>, %arg7: memref<2x1x32xf32, #tpu.memory_space<vmem>>, %arg8: memref<2x2x32xf32, #tpu.memory_space<vmem>>, %arg9: memref<2x32x128xbf16, #tpu.memory_space<vmem>>, %arg10: memref<2x1x128xf32, #tpu.memory_space<vmem>>, %arg11: memref<2x128x32xbf16, #tpu.memory_space<vmem>>, %arg12: memref<2x1x32xf32, #tpu.memory_space<vmem>>, %arg13: memref<2x32xf32, #tpu.memory_space<vmem>>, %arg14: memref<32x8xbf16, #tpu.memory_space<vmem>>, %arg15: memref<1x8xf32, #tpu.memory_space<vmem>>, %arg16: memref<1x1x8xf32, #tpu.memory_space<vmem>>) attributes {dimension_semantics = [#tpu.dimension_semantics<parallel>], iteration_bounds = array<i64: 2>, scalar_prefetch = 1 : i64, scratch_operands = 0 : i64, tpu.core_type = #tpu.core_type<tc>, window_params = [{transform_indices = @transform_0, window_bounds = array<i64: 1, 17, 32>}, {pipeline_mode = #tpu.pipeline_mode<synchronous>, transform_indices = @transform_1, window_bounds = array<i64: 2, 2, 32>}, {pipeline_mode = #tpu.pipeline_mode<synchronous>, transform_indices = @transform_2, window_bounds = array<i64: 2, 32, 96>}, {pipeline_mode = #tpu.pipeline_mode<synchronous>, transform_indices = @transform_3, window_bounds = array<i64: 2, 1, 96>}, {pipeline_mode = #tpu.pipeline_mode<synchronous>, transform_indices = @transform_4, window_bounds = array<i64: 2, 32, 32>}, {pipeline_mode = #tpu.pipeline_mode<synchronous>, transform_indices = @transform_5, window_bounds = array<i64: 2, 1, 32>}, {pipeline_mode = #tpu.pipeline_mode<synchronous>, transform_indices = @transform_6, window_bounds = array<i64: 2, 2, 32>}, {pipeline_mode = #tpu.pipeline_mode<synchronous>, transform_indices = @transform_7, window_bounds = array<i64: 2, 32, 128>}, {pipeline_mode = #tpu.pipeline_mode<synchronous>, transform_indices = @transform_8, window_bounds = array<i64: 2, 1, 128>}, {pipeline_mode = #tpu.pipeline_mode<synchronous>, transform_indices = @transform_9, window_bounds = array<i64: 2, 128, 32>}, {pipeline_mode = #tpu.pipeline_mode<synchronous>, transform_indices = @transform_10, window_bounds = array<i64: 2, 1, 32>}, {pipeline_mode = #tpu.pipeline_mode<synchronous>, transform_indices = @transform_11, window_bounds = array<i64: 2, 32>}, {pipeline_mode = #tpu.pipeline_mode<synchronous>, transform_indices = @transform_12, window_bounds = array<i64: 32, 8>}, {pipeline_mode = #tpu.pipeline_mode<synchronous>, transform_indices = @transform_13, window_bounds = array<i64: 1, 8>}, {transform_indices = @transform_14, window_bounds = array<i64: 1, 1, 8>}]} {
    %c0 = arith.constant 0 : index
    %c0_0 = arith.constant 0 : index
    %c0_1 = arith.constant 0 : index
    %0 = vector.load %arg2[%c0, %c0_0, %c0_1] : memref<1x17x32xf32, #tpu.memory_space<vmem>>, vector<1x17x32xf32>
    %1 = vector.shape_cast %0 : vector<1x17x32xf32> to vector<17x32xf32>
    %2 = tpu.iota {dimensions = array<i32: 0>} : vector<9x17xi32>
    %3 = tpu.iota {dimensions = array<i32: 1>} : vector<9x17xi32>
    %c0_i32 = arith.constant 0 : i32
    %4 = vector.broadcast %c0_i32 : i32 to vector<9x17xi32>
    %5 = arith.cmpi eq, %2, %4 : vector<9x17xi32>
    %c0_i32_2 = arith.constant 0 : i32
    %6 = vector.broadcast %c0_i32_2 : i32 to vector<9x17xi32>
    %7 = arith.cmpi eq, %3, %6 : vector<9x17xi32>
    %8 = arith.andi %5, %7 : vector<9x17xi1>
    %c1_i32 = arith.constant 1 : i32
    %9 = vector.broadcast %c1_i32 : i32 to vector<9x17xi32>
    %10 = arith.cmpi eq, %2, %9 : vector<9x17xi32>
    %11 = arith.index_cast %arg0 : i32 to index
    %c0_3 = arith.constant 0 : index
    %12 = memref.load %arg1[%11, %c0_3] : memref<2x8xi32, #tpu.memory_space<smem>>
    %c1_i32_4 = arith.constant 1 : i32
    %13 = arith.addi %12, %c1_i32_4 : i32
    %14 = vector.broadcast %13 : i32 to vector<9x17xi32>
    %15 = arith.cmpi eq, %3, %14 : vector<9x17xi32>
    %16 = arith.andi %10, %15 : vector<9x17xi1>
    %17 = arith.ori %8, %16 : vector<9x17xi1>
    %c2_i32 = arith.constant 2 : i32
    %18 = vector.broadcast %c2_i32 : i32 to vector<9x17xi32>
    %19 = arith.cmpi eq, %2, %18 : vector<9x17xi32>
    %20 = arith.index_cast %arg0 : i32 to index
    %c1 = arith.constant 1 : index
    %21 = memref.load %arg1[%20, %c1] : memref<2x8xi32, #tpu.memory_space<smem>>
    %c1_i32_5 = arith.constant 1 : i32
    %22 = arith.addi %21, %c1_i32_5 : i32
    %23 = vector.broadcast %22 : i32 to vector<9x17xi32>
    %24 = arith.cmpi eq, %3, %23 : vector<9x17xi32>
    %25 = arith.andi %19, %24 : vector<9x17xi1>
    %26 = arith.ori %17, %25 : vector<9x17xi1>
    %c3_i32 = arith.constant 3 : i32
    %27 = vector.broadcast %c3_i32 : i32 to vector<9x17xi32>
    %28 = arith.cmpi eq, %2, %27 : vector<9x17xi32>
    %29 = arith.index_cast %arg0 : i32 to index
    %c2 = arith.constant 2 : index
    %30 = memref.load %arg1[%29, %c2] : memref<2x8xi32, #tpu.memory_space<smem>>
    %c1_i32_6 = arith.constant 1 : i32
    %31 = arith.addi %30, %c1_i32_6 : i32
    %32 = vector.broadcast %31 : i32 to vector<9x17xi32>
    %33 = arith.cmpi eq, %3, %32 : vector<9x17xi32>
    %34 = arith.andi %28, %33 : vector<9x17xi1>
    %35 = arith.ori %26, %34 : vector<9x17xi1>
    %c4_i32 = arith.constant 4 : i32
    %36 = vector.broadcast %c4_i32 : i32 to vector<9x17xi32>
    %37 = arith.cmpi eq, %2, %36 : vector<9x17xi32>
    %38 = arith.index_cast %arg0 : i32 to index
    %c3 = arith.constant 3 : index
    %39 = memref.load %arg1[%38, %c3] : memref<2x8xi32, #tpu.memory_space<smem>>
    %c1_i32_7 = arith.constant 1 : i32
    %40 = arith.addi %39, %c1_i32_7 : i32
    %41 = vector.broadcast %40 : i32 to vector<9x17xi32>
    %42 = arith.cmpi eq, %3, %41 : vector<9x17xi32>
    %43 = arith.andi %37, %42 : vector<9x17xi1>
    %44 = arith.ori %35, %43 : vector<9x17xi1>
    %c5_i32 = arith.constant 5 : i32
    %45 = vector.broadcast %c5_i32 : i32 to vector<9x17xi32>
    %46 = arith.cmpi eq, %2, %45 : vector<9x17xi32>
    %47 = arith.index_cast %arg0 : i32 to index
    %c4 = arith.constant 4 : index
    %48 = memref.load %arg1[%47, %c4] : memref<2x8xi32, #tpu.memory_space<smem>>
    %c1_i32_8 = arith.constant 1 : i32
    %49 = arith.addi %48, %c1_i32_8 : i32
    %50 = vector.broadcast %49 : i32 to vector<9x17xi32>
    %51 = arith.cmpi eq, %3, %50 : vector<9x17xi32>
    %52 = arith.andi %46, %51 : vector<9x17xi1>
    %53 = arith.ori %44, %52 : vector<9x17xi1>
    %c6_i32 = arith.constant 6 : i32
    %54 = vector.broadcast %c6_i32 : i32 to vector<9x17xi32>
    %55 = arith.cmpi eq, %2, %54 : vector<9x17xi32>
    %56 = arith.index_cast %arg0 : i32 to index
    %c5 = arith.constant 5 : index
    %57 = memref.load %arg1[%56, %c5] : memref<2x8xi32, #tpu.memory_space<smem>>
    %c1_i32_9 = arith.constant 1 : i32
    %58 = arith.addi %57, %c1_i32_9 : i32
    %59 = vector.broadcast %58 : i32 to vector<9x17xi32>
    %60 = arith.cmpi eq, %3, %59 : vector<9x17xi32>
    %61 = arith.andi %55, %60 : vector<9x17xi1>
    %62 = arith.ori %53, %61 : vector<9x17xi1>
    %c7_i32 = arith.constant 7 : i32
    %63 = vector.broadcast %c7_i32 : i32 to vector<9x17xi32>
    %64 = arith.cmpi eq, %2, %63 : vector<9x17xi32>
    %65 = arith.index_cast %arg0 : i32 to index
    %c6 = arith.constant 6 : index
    %66 = memref.load %arg1[%65, %c6] : memref<2x8xi32, #tpu.memory_space<smem>>
    %c1_i32_10 = arith.constant 1 : i32
    %67 = arith.addi %66, %c1_i32_10 : i32
    %68 = vector.broadcast %67 : i32 to vector<9x17xi32>
    %69 = arith.cmpi eq, %3, %68 : vector<9x17xi32>
    %70 = arith.andi %64, %69 : vector<9x17xi1>
    %71 = arith.ori %62, %70 : vector<9x17xi1>
    %c8_i32 = arith.constant 8 : i32
    %72 = vector.broadcast %c8_i32 : i32 to vector<9x17xi32>
    %73 = arith.cmpi eq, %2, %72 : vector<9x17xi32>
    %74 = arith.index_cast %arg0 : i32 to index
    %c7 = arith.constant 7 : index
    %75 = memref.load %arg1[%74, %c7] : memref<2x8xi32, #tpu.memory_space<smem>>
    %c1_i32_11 = arith.constant 1 : i32
    %76 = arith.addi %75, %c1_i32_11 : i32
    %77 = vector.broadcast %76 : i32 to vector<9x17xi32>
    %78 = arith.cmpi eq, %3, %77 : vector<9x17xi32>
    %79 = arith.andi %73, %78 : vector<9x17xi1>
    %80 = arith.ori %71, %79 : vector<9x17xi1>
    %81 = arith.extui %80 : vector<9x17xi1> to vector<9x17xi32>
    %82 = arith.sitofp %81 : vector<9x17xi32> to vector<9x17xf32>
    %cst = arith.constant dense<0.000000e+00> : vector<9x32xf32>
    %83 = tpu.matmul %82, %1, %cst {dimension_numbers = #tpu.dot_dimension_numbers<[1], [0], [0], [1], [0, 0, 1, 1], [], []>} : vector<9x17xf32>, vector<17x32xf32>, vector<9x32xf32> -> vector<9x32xf32>
    %c0_12 = arith.constant 0 : index
    %c0_13 = arith.constant 0 : index
    %c0_14 = arith.constant 0 : index
    %84 = vector.load %arg3[%c0_12, %c0_13, %c0_14] : memref<2x2x32xf32, #tpu.memory_space<vmem>>, vector<1x2x32xf32>
    %85 = vector.shape_cast %84 : vector<1x2x32xf32> to vector<2x32xf32>
    %86 = vector.extract_strided_slice %85 {offsets = [0, 0], sizes = [1, 32], strides = [1, 1]} : vector<2x32xf32> to vector<1x32xf32>
    %87 = vector.extract_strided_slice %85 {offsets = [1, 0], sizes = [1, 32], strides = [1, 1]} : vector<2x32xf32> to vector<1x32xf32>
    %cst_15 = arith.constant dense<0.000000e+00> : vector<9xf32>
    %88 = vector.multi_reduction <add>, %83, %cst_15 [1] : vector<9x32xf32> to vector<9xf32>
    %89 = vector.shape_cast %88 : vector<9xf32> to vector<9x1xf32>
    %cst_16 = arith.constant 3.200000e+01 : f32
    %90 = vector.broadcast %cst_16 : f32 to vector<9x1xf32>
    %91 = arith.divf %89, %90 : vector<9x1xf32>
    %92 = vector.broadcast %91 : vector<9x1xf32> to vector<9x32xf32>
    %93 = arith.subf %83, %92 : vector<9x32xf32>
    %94 = arith.mulf %93, %93 : vector<9x32xf32>
    %cst_17 = arith.constant dense<0.000000e+00> : vector<9xf32>
    %95 = vector.multi_reduction <add>, %94, %cst_17 [1] : vector<9x32xf32> to vector<9xf32>
    %96 = vector.shape_cast %95 : vector<9xf32> to vector<9x1xf32>
    %cst_18 = arith.constant 3.200000e+01 : f32
    %97 = vector.broadcast %cst_18 : f32 to vector<9x1xf32>
    %98 = arith.divf %96, %97 : vector<9x1xf32>
    %cst_19 = arith.constant 9.99999997E-7 : f32
    %99 = vector.broadcast %cst_19 : f32 to vector<9x1xf32>
    %100 = arith.addf %98, %99 : vector<9x1xf32>
    %101 = math.rsqrt %100 : vector<9x1xf32>
    %102 = vector.broadcast %101 : vector<9x1xf32> to vector<9x32xf32>
    %103 = arith.mulf %93, %102 : vector<9x32xf32>
    %104 = vector.broadcast %86 : vector<1x32xf32> to vector<9x32xf32>
    %105 = arith.mulf %103, %104 : vector<9x32xf32>
    %106 = vector.broadcast %87 : vector<1x32xf32> to vector<9x32xf32>
    %107 = arith.addf %105, %106 : vector<9x32xf32>
    %108 = arith.truncf %107 : vector<9x32xf32> to vector<9x32xbf16>
    %c0_20 = arith.constant 0 : index
    %c0_21 = arith.constant 0 : index
    %c0_22 = arith.constant 0 : index
    %109 = vector.load %arg4[%c0_20, %c0_21, %c0_22] : memref<2x32x96xbf16, #tpu.memory_space<vmem>>, vector<1x32x96xbf16>
    %110 = vector.shape_cast %109 : vector<1x32x96xbf16> to vector<32x96xbf16>
    %cst_23 = arith.constant dense<0.000000e+00> : vector<9x96xf32>
    %111 = tpu.matmul %108, %110, %cst_23 {dimension_numbers = #tpu.dot_dimension_numbers<[1], [0], [0], [1], [0, 0, 1, 1], [], []>} : vector<9x32xbf16>, vector<32x96xbf16>, vector<9x96xf32> -> vector<9x96xf32>
    %c0_24 = arith.constant 0 : index
    %c0_25 = arith.constant 0 : index
    %c0_26 = arith.constant 0 : index
    %112 = vector.load %arg5[%c0_24, %c0_25, %c0_26] : memref<2x1x96xf32, #tpu.memory_space<vmem>>, vector<1x1x96xf32>
    %113 = vector.shape_cast %112 : vector<1x1x96xf32> to vector<1x96xf32>
    %114 = vector.broadcast %113 : vector<1x96xf32> to vector<9x96xf32>
    %115 = arith.addf %111, %114 : vector<9x96xf32>
    %116 = arith.truncf %115 : vector<9x96xf32> to vector<9x96xbf16>
    %117 = vector.extract_strided_slice %116 {offsets = [0, 0], sizes = [9, 8], strides = [1, 1]} : vector<9x96xbf16> to vector<9x8xbf16>
    %118 = vector.extract_strided_slice %116 {offsets = [0, 32], sizes = [9, 8], strides = [1, 1]} : vector<9x96xbf16> to vector<9x8xbf16>
    %119 = vector.extract_strided_slice %116 {offsets = [0, 64], sizes = [9, 8], strides = [1, 1]} : vector<9x96xbf16> to vector<9x8xbf16>
    %cst_27 = arith.constant dense<0.000000e+00> : vector<9x9xf32>
    %120 = tpu.matmul %117, %118, %cst_27 {dimension_numbers = #tpu.dot_dimension_numbers<[1], [1], [0], [0], [0, 0, 1, 0], [], []>} : vector<9x8xbf16>, vector<9x8xbf16>, vector<9x9xf32> -> vector<9x9xf32>
    %cst_28 = arith.constant dense<0xFF800000> : vector<9xf32>
    %121 = vector.multi_reduction <maximumf>, %120, %cst_28 [1] : vector<9x9xf32> to vector<9xf32>
    %122 = vector.shape_cast %121 : vector<9xf32> to vector<9x1xf32>
    %123 = vector.broadcast %122 : vector<9x1xf32> to vector<9x9xf32>
    %124 = arith.subf %120, %123 : vector<9x9xf32>
    %125 = math.exp %124 : vector<9x9xf32>
    %cst_29 = arith.constant dense<0.000000e+00> : vector<9xf32>
    %126 = vector.multi_reduction <add>, %125, %cst_29 [1] : vector<9x9xf32> to vector<9xf32>
    %127 = vector.shape_cast %126 : vector<9xf32> to vector<9x1xf32>
    %128 = tpu.reciprocal %127 {approx = true} : vector<9x1xf32> -> vector<9x1xf32>
    %129 = vector.broadcast %128 : vector<9x1xf32> to vector<9x9xf32>
    %130 = arith.mulf %125, %129 : vector<9x9xf32>
    %131 = arith.truncf %130 : vector<9x9xf32> to vector<9x9xbf16>
    %cst_30 = arith.constant dense<0.000000e+00> : vector<9x8xf32>
    %132 = tpu.matmul %131, %119, %cst_30 {dimension_numbers = #tpu.dot_dimension_numbers<[1], [0], [0], [1], [0, 0, 1, 1], [], []>} : vector<9x9xbf16>, vector<9x8xbf16>, vector<9x8xf32> -> vector<9x8xf32>
    %133 = vector.extract_strided_slice %116 {offsets = [0, 8], sizes = [9, 8], strides = [1, 1]} : vector<9x96xbf16> to vector<9x8xbf16>
    %134 = vector.extract_strided_slice %116 {offsets = [0, 40], sizes = [9, 8], strides = [1, 1]} : vector<9x96xbf16> to vector<9x8xbf16>
    %135 = vector.extract_strided_slice %116 {offsets = [0, 72], sizes = [9, 8], strides = [1, 1]} : vector<9x96xbf16> to vector<9x8xbf16>
    %cst_31 = arith.constant dense<0.000000e+00> : vector<9x9xf32>
    %136 = tpu.matmul %133, %134, %cst_31 {dimension_numbers = #tpu.dot_dimension_numbers<[1], [1], [0], [0], [0, 0, 1, 0], [], []>} : vector<9x8xbf16>, vector<9x8xbf16>, vector<9x9xf32> -> vector<9x9xf32>
    %cst_32 = arith.constant dense<0xFF800000> : vector<9xf32>
    %137 = vector.multi_reduction <maximumf>, %136, %cst_32 [1] : vector<9x9xf32> to vector<9xf32>
    %138 = vector.shape_cast %137 : vector<9xf32> to vector<9x1xf32>
    %139 = vector.broadcast %138 : vector<9x1xf32> to vector<9x9xf32>
    %140 = arith.subf %136, %139 : vector<9x9xf32>
    %141 = math.exp %140 : vector<9x9xf32>
    %cst_33 = arith.constant dense<0.000000e+00> : vector<9xf32>
    %142 = vector.multi_reduction <add>, %141, %cst_33 [1] : vector<9x9xf32> to vector<9xf32>
    %143 = vector.shape_cast %142 : vector<9xf32> to vector<9x1xf32>
    %144 = tpu.reciprocal %143 {approx = true} : vector<9x1xf32> -> vector<9x1xf32>
    %145 = vector.broadcast %144 : vector<9x1xf32> to vector<9x9xf32>
    %146 = arith.mulf %141, %145 : vector<9x9xf32>
    %147 = arith.truncf %146 : vector<9x9xf32> to vector<9x9xbf16>
    %cst_34 = arith.constant dense<0.000000e+00> : vector<9x8xf32>
    %148 = tpu.matmul %147, %135, %cst_34 {dimension_numbers = #tpu.dot_dimension_numbers<[1], [0], [0], [1], [0, 0, 1, 1], [], []>} : vector<9x9xbf16>, vector<9x8xbf16>, vector<9x8xf32> -> vector<9x8xf32>
    %149 = vector.extract_strided_slice %116 {offsets = [0, 16], sizes = [9, 8], strides = [1, 1]} : vector<9x96xbf16> to vector<9x8xbf16>
    %150 = vector.extract_strided_slice %116 {offsets = [0, 48], sizes = [9, 8], strides = [1, 1]} : vector<9x96xbf16> to vector<9x8xbf16>
    %151 = vector.extract_strided_slice %116 {offsets = [0, 80], sizes = [9, 8], strides = [1, 1]} : vector<9x96xbf16> to vector<9x8xbf16>
    %cst_35 = arith.constant dense<0.000000e+00> : vector<9x9xf32>
    %152 = tpu.matmul %149, %150, %cst_35 {dimension_numbers = #tpu.dot_dimension_numbers<[1], [1], [0], [0], [0, 0, 1, 0], [], []>} : vector<9x8xbf16>, vector<9x8xbf16>, vector<9x9xf32> -> vector<9x9xf32>
    %cst_36 = arith.constant dense<0xFF800000> : vector<9xf32>
    %153 = vector.multi_reduction <maximumf>, %152, %cst_36 [1] : vector<9x9xf32> to vector<9xf32>
    %154 = vector.shape_cast %153 : vector<9xf32> to vector<9x1xf32>
    %155 = vector.broadcast %154 : vector<9x1xf32> to vector<9x9xf32>
    %156 = arith.subf %152, %155 : vector<9x9xf32>
    %157 = math.exp %156 : vector<9x9xf32>
    %cst_37 = arith.constant dense<0.000000e+00> : vector<9xf32>
    %158 = vector.multi_reduction <add>, %157, %cst_37 [1] : vector<9x9xf32> to vector<9xf32>
    %159 = vector.shape_cast %158 : vector<9xf32> to vector<9x1xf32>
    %160 = tpu.reciprocal %159 {approx = true} : vector<9x1xf32> -> vector<9x1xf32>
    %161 = vector.broadcast %160 : vector<9x1xf32> to vector<9x9xf32>
    %162 = arith.mulf %157, %161 : vector<9x9xf32>
    %163 = arith.truncf %162 : vector<9x9xf32> to vector<9x9xbf16>
    %cst_38 = arith.constant dense<0.000000e+00> : vector<9x8xf32>
    %164 = tpu.matmul %163, %151, %cst_38 {dimension_numbers = #tpu.dot_dimension_numbers<[1], [0], [0], [1], [0, 0, 1, 1], [], []>} : vector<9x9xbf16>, vector<9x8xbf16>, vector<9x8xf32> -> vector<9x8xf32>
    %165 = vector.extract_strided_slice %116 {offsets = [0, 24], sizes = [9, 8], strides = [1, 1]} : vector<9x96xbf16> to vector<9x8xbf16>
    %166 = vector.extract_strided_slice %116 {offsets = [0, 56], sizes = [9, 8], strides = [1, 1]} : vector<9x96xbf16> to vector<9x8xbf16>
    %167 = vector.extract_strided_slice %116 {offsets = [0, 88], sizes = [9, 8], strides = [1, 1]} : vector<9x96xbf16> to vector<9x8xbf16>
    %cst_39 = arith.constant dense<0.000000e+00> : vector<9x9xf32>
    %168 = tpu.matmul %165, %166, %cst_39 {dimension_numbers = #tpu.dot_dimension_numbers<[1], [1], [0], [0], [0, 0, 1, 0], [], []>} : vector<9x8xbf16>, vector<9x8xbf16>, vector<9x9xf32> -> vector<9x9xf32>
    %cst_40 = arith.constant dense<0xFF800000> : vector<9xf32>
    %169 = vector.multi_reduction <maximumf>, %168, %cst_40 [1] : vector<9x9xf32> to vector<9xf32>
    %170 = vector.shape_cast %169 : vector<9xf32> to vector<9x1xf32>
    %171 = vector.broadcast %170 : vector<9x1xf32> to vector<9x9xf32>
    %172 = arith.subf %168, %171 : vector<9x9xf32>
    %173 = math.exp %172 : vector<9x9xf32>
    %cst_41 = arith.constant dense<0.000000e+00> : vector<9xf32>
    %174 = vector.multi_reduction <add>, %173, %cst_41 [1] : vector<9x9xf32> to vector<9xf32>
    %175 = vector.shape_cast %174 : vector<9xf32> to vector<9x1xf32>
    %176 = tpu.reciprocal %175 {approx = true} : vector<9x1xf32> -> vector<9x1xf32>
    %177 = vector.broadcast %176 : vector<9x1xf32> to vector<9x9xf32>
    %178 = arith.mulf %173, %177 : vector<9x9xf32>
    %179 = arith.truncf %178 : vector<9x9xf32> to vector<9x9xbf16>
    %cst_42 = arith.constant dense<0.000000e+00> : vector<9x8xf32>
    %180 = tpu.matmul %179, %167, %cst_42 {dimension_numbers = #tpu.dot_dimension_numbers<[1], [0], [0], [1], [0, 0, 1, 1], [], []>} : vector<9x9xbf16>, vector<9x8xbf16>, vector<9x8xf32> -> vector<9x8xf32>
    %181 = tpu.concatenate %132, %148, %164, %180 in 1 : vector<9x8xf32>, vector<9x8xf32>, vector<9x8xf32>, vector<9x8xf32> -> vector<9x32xf32>
    %182 = arith.truncf %181 : vector<9x32xf32> to vector<9x32xbf16>
    %c0_43 = arith.constant 0 : index
    %c0_44 = arith.constant 0 : index
    %c0_45 = arith.constant 0 : index
    %183 = vector.load %arg6[%c0_43, %c0_44, %c0_45] : memref<2x32x32xbf16, #tpu.memory_space<vmem>>, vector<1x32x32xbf16>
    %184 = vector.shape_cast %183 : vector<1x32x32xbf16> to vector<32x32xbf16>
    %cst_46 = arith.constant dense<0.000000e+00> : vector<9x32xf32>
    %185 = tpu.matmul %182, %184, %cst_46 {dimension_numbers = #tpu.dot_dimension_numbers<[1], [0], [0], [1], [0, 0, 1, 1], [], []>} : vector<9x32xbf16>, vector<32x32xbf16>, vector<9x32xf32> -> vector<9x32xf32>
    %186 = arith.addf %83, %185 : vector<9x32xf32>
    %c0_47 = arith.constant 0 : index
    %c0_48 = arith.constant 0 : index
    %c0_49 = arith.constant 0 : index
    %187 = vector.load %arg7[%c0_47, %c0_48, %c0_49] : memref<2x1x32xf32, #tpu.memory_space<vmem>>, vector<1x1x32xf32>
    %188 = vector.shape_cast %187 : vector<1x1x32xf32> to vector<1x32xf32>
    %189 = vector.broadcast %188 : vector<1x32xf32> to vector<9x32xf32>
    %190 = arith.addf %186, %189 : vector<9x32xf32>
    %c0_50 = arith.constant 0 : index
    %c0_51 = arith.constant 0 : index
    %c0_52 = arith.constant 0 : index
    %191 = vector.load %arg8[%c0_50, %c0_51, %c0_52] : memref<2x2x32xf32, #tpu.memory_space<vmem>>, vector<1x2x32xf32>
    %192 = vector.shape_cast %191 : vector<1x2x32xf32> to vector<2x32xf32>
    %193 = vector.extract_strided_slice %192 {offsets = [0, 0], sizes = [1, 32], strides = [1, 1]} : vector<2x32xf32> to vector<1x32xf32>
    %194 = vector.extract_strided_slice %192 {offsets = [1, 0], sizes = [1, 32], strides = [1, 1]} : vector<2x32xf32> to vector<1x32xf32>
    %cst_53 = arith.constant dense<0.000000e+00> : vector<9xf32>
    %195 = vector.multi_reduction <add>, %190, %cst_53 [1] : vector<9x32xf32> to vector<9xf32>
    %196 = vector.shape_cast %195 : vector<9xf32> to vector<9x1xf32>
    %cst_54 = arith.constant 3.200000e+01 : f32
    %197 = vector.broadcast %cst_54 : f32 to vector<9x1xf32>
    %198 = arith.divf %196, %197 : vector<9x1xf32>
    %199 = vector.broadcast %198 : vector<9x1xf32> to vector<9x32xf32>
    %200 = arith.subf %190, %199 : vector<9x32xf32>
    %201 = arith.mulf %200, %200 : vector<9x32xf32>
    %cst_55 = arith.constant dense<0.000000e+00> : vector<9xf32>
    %202 = vector.multi_reduction <add>, %201, %cst_55 [1] : vector<9x32xf32> to vector<9xf32>
    %203 = vector.shape_cast %202 : vector<9xf32> to vector<9x1xf32>
    %cst_56 = arith.constant 3.200000e+01 : f32
    %204 = vector.broadcast %cst_56 : f32 to vector<9x1xf32>
    %205 = arith.divf %203, %204 : vector<9x1xf32>
    %cst_57 = arith.constant 9.99999997E-7 : f32
    %206 = vector.broadcast %cst_57 : f32 to vector<9x1xf32>
    %207 = arith.addf %205, %206 : vector<9x1xf32>
    %208 = math.rsqrt %207 : vector<9x1xf32>
    %209 = vector.broadcast %208 : vector<9x1xf32> to vector<9x32xf32>
    %210 = arith.mulf %200, %209 : vector<9x32xf32>
    %211 = vector.broadcast %193 : vector<1x32xf32> to vector<9x32xf32>
    %212 = arith.mulf %210, %211 : vector<9x32xf32>
    %213 = vector.broadcast %194 : vector<1x32xf32> to vector<9x32xf32>
    %214 = arith.addf %212, %213 : vector<9x32xf32>
    %215 = arith.truncf %214 : vector<9x32xf32> to vector<9x32xbf16>
    %c0_58 = arith.constant 0 : index
    %c0_59 = arith.constant 0 : index
    %c0_60 = arith.constant 0 : index
    %216 = vector.load %arg9[%c0_58, %c0_59, %c0_60] : memref<2x32x128xbf16, #tpu.memory_space<vmem>>, vector<1x32x128xbf16>
    %217 = vector.shape_cast %216 : vector<1x32x128xbf16> to vector<32x128xbf16>
    %cst_61 = arith.constant dense<0.000000e+00> : vector<9x128xf32>
    %218 = tpu.matmul %215, %217, %cst_61 {dimension_numbers = #tpu.dot_dimension_numbers<[1], [0], [0], [1], [0, 0, 1, 1], [], []>} : vector<9x32xbf16>, vector<32x128xbf16>, vector<9x128xf32> -> vector<9x128xf32>
    %c0_62 = arith.constant 0 : index
    %c0_63 = arith.constant 0 : index
    %c0_64 = arith.constant 0 : index
    %219 = vector.load %arg10[%c0_62, %c0_63, %c0_64] : memref<2x1x128xf32, #tpu.memory_space<vmem>>, vector<1x1x128xf32>
    %220 = vector.shape_cast %219 : vector<1x1x128xf32> to vector<1x128xf32>
    %221 = vector.broadcast %220 : vector<1x128xf32> to vector<9x128xf32>
    %222 = arith.addf %218, %221 : vector<9x128xf32>
    %223 = arith.mulf %222, %222 : vector<9x128xf32>
    %224 = arith.mulf %222, %223 : vector<9x128xf32>
    %cst_65 = arith.constant 4.471500e-02 : f32
    %225 = vector.broadcast %cst_65 : f32 to vector<9x128xf32>
    %226 = arith.mulf %225, %224 : vector<9x128xf32>
    %227 = arith.addf %222, %226 : vector<9x128xf32>
    %cst_66 = arith.constant 0.797884583 : f32
    %228 = vector.broadcast %cst_66 : f32 to vector<9x128xf32>
    %229 = arith.mulf %228, %227 : vector<9x128xf32>
    %230 = math.tanh %229 : vector<9x128xf32>
    %cst_67 = arith.constant 1.000000e+00 : f32
    %231 = vector.broadcast %cst_67 : f32 to vector<9x128xf32>
    %232 = arith.addf %231, %230 : vector<9x128xf32>
    %cst_68 = arith.constant 5.000000e-01 : f32
    %233 = vector.broadcast %cst_68 : f32 to vector<9x128xf32>
    %234 = arith.mulf %233, %232 : vector<9x128xf32>
    %235 = arith.mulf %222, %234 : vector<9x128xf32>
    %236 = arith.truncf %235 : vector<9x128xf32> to vector<9x128xbf16>
    %c0_69 = arith.constant 0 : index
    %c0_70 = arith.constant 0 : index
    %c0_71 = arith.constant 0 : index
    %237 = vector.load %arg11[%c0_69, %c0_70, %c0_71] : memref<2x128x32xbf16, #tpu.memory_space<vmem>>, vector<1x128x32xbf16>
    %238 = vector.shape_cast %237 : vector<1x128x32xbf16> to vector<128x32xbf16>
    %cst_72 = arith.constant dense<0.000000e+00> : vector<9x32xf32>
    %239 = tpu.matmul %236, %238, %cst_72 {dimension_numbers = #tpu.dot_dimension_numbers<[1], [0], [0], [1], [0, 0, 1, 1], [], []>} : vector<9x128xbf16>, vector<128x32xbf16>, vector<9x32xf32> -> vector<9x32xf32>
    %c0_73 = arith.constant 0 : index
    %c0_74 = arith.constant 0 : index
    %c0_75 = arith.constant 0 : index
    %240 = vector.load %arg12[%c0_73, %c0_74, %c0_75] : memref<2x1x32xf32, #tpu.memory_space<vmem>>, vector<1x1x32xf32>
    %241 = vector.shape_cast %240 : vector<1x1x32xf32> to vector<1x32xf32>
    %242 = vector.broadcast %241 : vector<1x32xf32> to vector<9x32xf32>
    %243 = arith.addf %239, %242 : vector<9x32xf32>
    %244 = arith.addf %190, %243 : vector<9x32xf32>
    %c1_76 = arith.constant 1 : index
    %c0_77 = arith.constant 0 : index
    %c0_78 = arith.constant 0 : index
    %245 = vector.load %arg3[%c1_76, %c0_77, %c0_78] : memref<2x2x32xf32, #tpu.memory_space<vmem>>, vector<1x2x32xf32>
    %246 = vector.shape_cast %245 : vector<1x2x32xf32> to vector<2x32xf32>
    %247 = vector.extract_strided_slice %246 {offsets = [0, 0], sizes = [1, 32], strides = [1, 1]} : vector<2x32xf32> to vector<1x32xf32>
    %248 = vector.extract_strided_slice %246 {offsets = [1, 0], sizes = [1, 32], strides = [1, 1]} : vector<2x32xf32> to vector<1x32xf32>
    %cst_79 = arith.constant dense<0.000000e+00> : vector<9xf32>
    %249 = vector.multi_reduction <add>, %244, %cst_79 [1] : vector<9x32xf32> to vector<9xf32>
    %250 = vector.shape_cast %249 : vector<9xf32> to vector<9x1xf32>
    %cst_80 = arith.constant 3.200000e+01 : f32
    %251 = vector.broadcast %cst_80 : f32 to vector<9x1xf32>
    %252 = arith.divf %250, %251 : vector<9x1xf32>
    %253 = vector.broadcast %252 : vector<9x1xf32> to vector<9x32xf32>
    %254 = arith.subf %244, %253 : vector<9x32xf32>
    %255 = arith.mulf %254, %254 : vector<9x32xf32>
    %cst_81 = arith.constant dense<0.000000e+00> : vector<9xf32>
    %256 = vector.multi_reduction <add>, %255, %cst_81 [1] : vector<9x32xf32> to vector<9xf32>
    %257 = vector.shape_cast %256 : vector<9xf32> to vector<9x1xf32>
    %cst_82 = arith.constant 3.200000e+01 : f32
    %258 = vector.broadcast %cst_82 : f32 to vector<9x1xf32>
    %259 = arith.divf %257, %258 : vector<9x1xf32>
    %cst_83 = arith.constant 9.99999997E-7 : f32
    %260 = vector.broadcast %cst_83 : f32 to vector<9x1xf32>
    %261 = arith.addf %259, %260 : vector<9x1xf32>
    %262 = math.rsqrt %261 : vector<9x1xf32>
    %263 = vector.broadcast %262 : vector<9x1xf32> to vector<9x32xf32>
    %264 = arith.mulf %254, %263 : vector<9x32xf32>
    %265 = vector.broadcast %247 : vector<1x32xf32> to vector<9x32xf32>
    %266 = arith.mulf %264, %265 : vector<9x32xf32>
    %267 = vector.broadcast %248 : vector<1x32xf32> to vector<9x32xf32>
    %268 = arith.addf %266, %267 : vector<9x32xf32>
    %269 = arith.truncf %268 : vector<9x32xf32> to vector<9x32xbf16>
    %c1_84 = arith.constant 1 : index
    %c0_85 = arith.constant 0 : index
    %c0_86 = arith.constant 0 : index
    %270 = vector.load %arg4[%c1_84, %c0_85, %c0_86] : memref<2x32x96xbf16, #tpu.memory_space<vmem>>, vector<1x32x96xbf16>
    %271 = vector.shape_cast %270 : vector<1x32x96xbf16> to vector<32x96xbf16>
    %cst_87 = arith.constant dense<0.000000e+00> : vector<9x96xf32>
    %272 = tpu.matmul %269, %271, %cst_87 {dimension_numbers = #tpu.dot_dimension_numbers<[1], [0], [0], [1], [0, 0, 1, 1], [], []>} : vector<9x32xbf16>, vector<32x96xbf16>, vector<9x96xf32> -> vector<9x96xf32>
    %c1_88 = arith.constant 1 : index
    %c0_89 = arith.constant 0 : index
    %c0_90 = arith.constant 0 : index
    %273 = vector.load %arg5[%c1_88, %c0_89, %c0_90] : memref<2x1x96xf32, #tpu.memory_space<vmem>>, vector<1x1x96xf32>
    %274 = vector.shape_cast %273 : vector<1x1x96xf32> to vector<1x96xf32>
    %275 = vector.broadcast %274 : vector<1x96xf32> to vector<9x96xf32>
    %276 = arith.addf %272, %275 : vector<9x96xf32>
    %277 = arith.truncf %276 : vector<9x96xf32> to vector<9x96xbf16>
    %278 = vector.extract_strided_slice %277 {offsets = [0, 0], sizes = [9, 8], strides = [1, 1]} : vector<9x96xbf16> to vector<9x8xbf16>
    %279 = vector.extract_strided_slice %277 {offsets = [0, 32], sizes = [9, 8], strides = [1, 1]} : vector<9x96xbf16> to vector<9x8xbf16>
    %280 = vector.extract_strided_slice %277 {offsets = [0, 64], sizes = [9, 8], strides = [1, 1]} : vector<9x96xbf16> to vector<9x8xbf16>
    %cst_91 = arith.constant dense<0.000000e+00> : vector<9x9xf32>
    %281 = tpu.matmul %278, %279, %cst_91 {dimension_numbers = #tpu.dot_dimension_numbers<[1], [1], [0], [0], [0, 0, 1, 0], [], []>} : vector<9x8xbf16>, vector<9x8xbf16>, vector<9x9xf32> -> vector<9x9xf32>
    %cst_92 = arith.constant dense<0xFF800000> : vector<9xf32>
    %282 = vector.multi_reduction <maximumf>, %281, %cst_92 [1] : vector<9x9xf32> to vector<9xf32>
    %283 = vector.shape_cast %282 : vector<9xf32> to vector<9x1xf32>
    %284 = vector.broadcast %283 : vector<9x1xf32> to vector<9x9xf32>
    %285 = arith.subf %281, %284 : vector<9x9xf32>
    %286 = math.exp %285 : vector<9x9xf32>
    %cst_93 = arith.constant dense<0.000000e+00> : vector<9xf32>
    %287 = vector.multi_reduction <add>, %286, %cst_93 [1] : vector<9x9xf32> to vector<9xf32>
    %288 = vector.shape_cast %287 : vector<9xf32> to vector<9x1xf32>
    %289 = tpu.reciprocal %288 {approx = true} : vector<9x1xf32> -> vector<9x1xf32>
    %290 = vector.broadcast %289 : vector<9x1xf32> to vector<9x9xf32>
    %291 = arith.mulf %286, %290 : vector<9x9xf32>
    %292 = arith.truncf %291 : vector<9x9xf32> to vector<9x9xbf16>
    %cst_94 = arith.constant dense<0.000000e+00> : vector<9x8xf32>
    %293 = tpu.matmul %292, %280, %cst_94 {dimension_numbers = #tpu.dot_dimension_numbers<[1], [0], [0], [1], [0, 0, 1, 1], [], []>} : vector<9x9xbf16>, vector<9x8xbf16>, vector<9x8xf32> -> vector<9x8xf32>
    %294 = vector.extract_strided_slice %277 {offsets = [0, 8], sizes = [9, 8], strides = [1, 1]} : vector<9x96xbf16> to vector<9x8xbf16>
    %295 = vector.extract_strided_slice %277 {offsets = [0, 40], sizes = [9, 8], strides = [1, 1]} : vector<9x96xbf16> to vector<9x8xbf16>
    %296 = vector.extract_strided_slice %277 {offsets = [0, 72], sizes = [9, 8], strides = [1, 1]} : vector<9x96xbf16> to vector<9x8xbf16>
    %cst_95 = arith.constant dense<0.000000e+00> : vector<9x9xf32>
    %297 = tpu.matmul %294, %295, %cst_95 {dimension_numbers = #tpu.dot_dimension_numbers<[1], [1], [0], [0], [0, 0, 1, 0], [], []>} : vector<9x8xbf16>, vector<9x8xbf16>, vector<9x9xf32> -> vector<9x9xf32>
    %cst_96 = arith.constant dense<0xFF800000> : vector<9xf32>
    %298 = vector.multi_reduction <maximumf>, %297, %cst_96 [1] : vector<9x9xf32> to vector<9xf32>
    %299 = vector.shape_cast %298 : vector<9xf32> to vector<9x1xf32>
    %300 = vector.broadcast %299 : vector<9x1xf32> to vector<9x9xf32>
    %301 = arith.subf %297, %300 : vector<9x9xf32>
    %302 = math.exp %301 : vector<9x9xf32>
    %cst_97 = arith.constant dense<0.000000e+00> : vector<9xf32>
    %303 = vector.multi_reduction <add>, %302, %cst_97 [1] : vector<9x9xf32> to vector<9xf32>
    %304 = vector.shape_cast %303 : vector<9xf32> to vector<9x1xf32>
    %305 = tpu.reciprocal %304 {approx = true} : vector<9x1xf32> -> vector<9x1xf32>
    %306 = vector.broadcast %305 : vector<9x1xf32> to vector<9x9xf32>
    %307 = arith.mulf %302, %306 : vector<9x9xf32>
    %308 = arith.truncf %307 : vector<9x9xf32> to vector<9x9xbf16>
    %cst_98 = arith.constant dense<0.000000e+00> : vector<9x8xf32>
    %309 = tpu.matmul %308, %296, %cst_98 {dimension_numbers = #tpu.dot_dimension_numbers<[1], [0], [0], [1], [0, 0, 1, 1], [], []>} : vector<9x9xbf16>, vector<9x8xbf16>, vector<9x8xf32> -> vector<9x8xf32>
    %310 = vector.extract_strided_slice %277 {offsets = [0, 16], sizes = [9, 8], strides = [1, 1]} : vector<9x96xbf16> to vector<9x8xbf16>
    %311 = vector.extract_strided_slice %277 {offsets = [0, 48], sizes = [9, 8], strides = [1, 1]} : vector<9x96xbf16> to vector<9x8xbf16>
    %312 = vector.extract_strided_slice %277 {offsets = [0, 80], sizes = [9, 8], strides = [1, 1]} : vector<9x96xbf16> to vector<9x8xbf16>
    %cst_99 = arith.constant dense<0.000000e+00> : vector<9x9xf32>
    %313 = tpu.matmul %310, %311, %cst_99 {dimension_numbers = #tpu.dot_dimension_numbers<[1], [1], [0], [0], [0, 0, 1, 0], [], []>} : vector<9x8xbf16>, vector<9x8xbf16>, vector<9x9xf32> -> vector<9x9xf32>
    %cst_100 = arith.constant dense<0xFF800000> : vector<9xf32>
    %314 = vector.multi_reduction <maximumf>, %313, %cst_100 [1] : vector<9x9xf32> to vector<9xf32>
    %315 = vector.shape_cast %314 : vector<9xf32> to vector<9x1xf32>
    %316 = vector.broadcast %315 : vector<9x1xf32> to vector<9x9xf32>
    %317 = arith.subf %313, %316 : vector<9x9xf32>
    %318 = math.exp %317 : vector<9x9xf32>
    %cst_101 = arith.constant dense<0.000000e+00> : vector<9xf32>
    %319 = vector.multi_reduction <add>, %318, %cst_101 [1] : vector<9x9xf32> to vector<9xf32>
    %320 = vector.shape_cast %319 : vector<9xf32> to vector<9x1xf32>
    %321 = tpu.reciprocal %320 {approx = true} : vector<9x1xf32> -> vector<9x1xf32>
    %322 = vector.broadcast %321 : vector<9x1xf32> to vector<9x9xf32>
    %323 = arith.mulf %318, %322 : vector<9x9xf32>
    %324 = arith.truncf %323 : vector<9x9xf32> to vector<9x9xbf16>
    %cst_102 = arith.constant dense<0.000000e+00> : vector<9x8xf32>
    %325 = tpu.matmul %324, %312, %cst_102 {dimension_numbers = #tpu.dot_dimension_numbers<[1], [0], [0], [1], [0, 0, 1, 1], [], []>} : vector<9x9xbf16>, vector<9x8xbf16>, vector<9x8xf32> -> vector<9x8xf32>
    %326 = vector.extract_strided_slice %277 {offsets = [0, 24], sizes = [9, 8], strides = [1, 1]} : vector<9x96xbf16> to vector<9x8xbf16>
    %327 = vector.extract_strided_slice %277 {offsets = [0, 56], sizes = [9, 8], strides = [1, 1]} : vector<9x96xbf16> to vector<9x8xbf16>
    %328 = vector.extract_strided_slice %277 {offsets = [0, 88], sizes = [9, 8], strides = [1, 1]} : vector<9x96xbf16> to vector<9x8xbf16>
    %cst_103 = arith.constant dense<0.000000e+00> : vector<9x9xf32>
    %329 = tpu.matmul %326, %327, %cst_103 {dimension_numbers = #tpu.dot_dimension_numbers<[1], [1], [0], [0], [0, 0, 1, 0], [], []>} : vector<9x8xbf16>, vector<9x8xbf16>, vector<9x9xf32> -> vector<9x9xf32>
    %cst_104 = arith.constant dense<0xFF800000> : vector<9xf32>
    %330 = vector.multi_reduction <maximumf>, %329, %cst_104 [1] : vector<9x9xf32> to vector<9xf32>
    %331 = vector.shape_cast %330 : vector<9xf32> to vector<9x1xf32>
    %332 = vector.broadcast %331 : vector<9x1xf32> to vector<9x9xf32>
    %333 = arith.subf %329, %332 : vector<9x9xf32>
    %334 = math.exp %333 : vector<9x9xf32>
    %cst_105 = arith.constant dense<0.000000e+00> : vector<9xf32>
    %335 = vector.multi_reduction <add>, %334, %cst_105 [1] : vector<9x9xf32> to vector<9xf32>
    %336 = vector.shape_cast %335 : vector<9xf32> to vector<9x1xf32>
    %337 = tpu.reciprocal %336 {approx = true} : vector<9x1xf32> -> vector<9x1xf32>
    %338 = vector.broadcast %337 : vector<9x1xf32> to vector<9x9xf32>
    %339 = arith.mulf %334, %338 : vector<9x9xf32>
    %340 = arith.truncf %339 : vector<9x9xf32> to vector<9x9xbf16>
    %cst_106 = arith.constant dense<0.000000e+00> : vector<9x8xf32>
    %341 = tpu.matmul %340, %328, %cst_106 {dimension_numbers = #tpu.dot_dimension_numbers<[1], [0], [0], [1], [0, 0, 1, 1], [], []>} : vector<9x9xbf16>, vector<9x8xbf16>, vector<9x8xf32> -> vector<9x8xf32>
    %342 = tpu.concatenate %293, %309, %325, %341 in 1 : vector<9x8xf32>, vector<9x8xf32>, vector<9x8xf32>, vector<9x8xf32> -> vector<9x32xf32>
    %343 = arith.truncf %342 : vector<9x32xf32> to vector<9x32xbf16>
    %c1_107 = arith.constant 1 : index
    %c0_108 = arith.constant 0 : index
    %c0_109 = arith.constant 0 : index
    %344 = vector.load %arg6[%c1_107, %c0_108, %c0_109] : memref<2x32x32xbf16, #tpu.memory_space<vmem>>, vector<1x32x32xbf16>
    %345 = vector.shape_cast %344 : vector<1x32x32xbf16> to vector<32x32xbf16>
    %cst_110 = arith.constant dense<0.000000e+00> : vector<9x32xf32>
    %346 = tpu.matmul %343, %345, %cst_110 {dimension_numbers = #tpu.dot_dimension_numbers<[1], [0], [0], [1], [0, 0, 1, 1], [], []>} : vector<9x32xbf16>, vector<32x32xbf16>, vector<9x32xf32> -> vector<9x32xf32>
    %347 = arith.addf %244, %346 : vector<9x32xf32>
    %c1_111 = arith.constant 1 : index
    %c0_112 = arith.constant 0 : index
    %c0_113 = arith.constant 0 : index
    %348 = vector.load %arg7[%c1_111, %c0_112, %c0_113] : memref<2x1x32xf32, #tpu.memory_space<vmem>>, vector<1x1x32xf32>
    %349 = vector.shape_cast %348 : vector<1x1x32xf32> to vector<1x32xf32>
    %350 = vector.broadcast %349 : vector<1x32xf32> to vector<9x32xf32>
    %351 = arith.addf %347, %350 : vector<9x32xf32>
    %c1_114 = arith.constant 1 : index
    %c0_115 = arith.constant 0 : index
    %c0_116 = arith.constant 0 : index
    %352 = vector.load %arg8[%c1_114, %c0_115, %c0_116] : memref<2x2x32xf32, #tpu.memory_space<vmem>>, vector<1x2x32xf32>
    %353 = vector.shape_cast %352 : vector<1x2x32xf32> to vector<2x32xf32>
    %354 = vector.extract_strided_slice %353 {offsets = [0, 0], sizes = [1, 32], strides = [1, 1]} : vector<2x32xf32> to vector<1x32xf32>
    %355 = vector.extract_strided_slice %353 {offsets = [1, 0], sizes = [1, 32], strides = [1, 1]} : vector<2x32xf32> to vector<1x32xf32>
    %cst_117 = arith.constant dense<0.000000e+00> : vector<9xf32>
    %356 = vector.multi_reduction <add>, %351, %cst_117 [1] : vector<9x32xf32> to vector<9xf32>
    %357 = vector.shape_cast %356 : vector<9xf32> to vector<9x1xf32>
    %cst_118 = arith.constant 3.200000e+01 : f32
    %358 = vector.broadcast %cst_118 : f32 to vector<9x1xf32>
    %359 = arith.divf %357, %358 : vector<9x1xf32>
    %360 = vector.broadcast %359 : vector<9x1xf32> to vector<9x32xf32>
    %361 = arith.subf %351, %360 : vector<9x32xf32>
    %362 = arith.mulf %361, %361 : vector<9x32xf32>
    %cst_119 = arith.constant dense<0.000000e+00> : vector<9xf32>
    %363 = vector.multi_reduction <add>, %362, %cst_119 [1] : vector<9x32xf32> to vector<9xf32>
    %364 = vector.shape_cast %363 : vector<9xf32> to vector<9x1xf32>
    %cst_120 = arith.constant 3.200000e+01 : f32
    %365 = vector.broadcast %cst_120 : f32 to vector<9x1xf32>
    %366 = arith.divf %364, %365 : vector<9x1xf32>
    %cst_121 = arith.constant 9.99999997E-7 : f32
    %367 = vector.broadcast %cst_121 : f32 to vector<9x1xf32>
    %368 = arith.addf %366, %367 : vector<9x1xf32>
    %369 = math.rsqrt %368 : vector<9x1xf32>
    %370 = vector.broadcast %369 : vector<9x1xf32> to vector<9x32xf32>
    %371 = arith.mulf %361, %370 : vector<9x32xf32>
    %372 = vector.broadcast %354 : vector<1x32xf32> to vector<9x32xf32>
    %373 = arith.mulf %371, %372 : vector<9x32xf32>
    %374 = vector.broadcast %355 : vector<1x32xf32> to vector<9x32xf32>
    %375 = arith.addf %373, %374 : vector<9x32xf32>
    %376 = arith.truncf %375 : vector<9x32xf32> to vector<9x32xbf16>
    %c1_122 = arith.constant 1 : index
    %c0_123 = arith.constant 0 : index
    %c0_124 = arith.constant 0 : index
    %377 = vector.load %arg9[%c1_122, %c0_123, %c0_124] : memref<2x32x128xbf16, #tpu.memory_space<vmem>>, vector<1x32x128xbf16>
    %378 = vector.shape_cast %377 : vector<1x32x128xbf16> to vector<32x128xbf16>
    %cst_125 = arith.constant dense<0.000000e+00> : vector<9x128xf32>
    %379 = tpu.matmul %376, %378, %cst_125 {dimension_numbers = #tpu.dot_dimension_numbers<[1], [0], [0], [1], [0, 0, 1, 1], [], []>} : vector<9x32xbf16>, vector<32x128xbf16>, vector<9x128xf32> -> vector<9x128xf32>
    %c1_126 = arith.constant 1 : index
    %c0_127 = arith.constant 0 : index
    %c0_128 = arith.constant 0 : index
    %380 = vector.load %arg10[%c1_126, %c0_127, %c0_128] : memref<2x1x128xf32, #tpu.memory_space<vmem>>, vector<1x1x128xf32>
    %381 = vector.shape_cast %380 : vector<1x1x128xf32> to vector<1x128xf32>
    %382 = vector.broadcast %381 : vector<1x128xf32> to vector<9x128xf32>
    %383 = arith.addf %379, %382 : vector<9x128xf32>
    %384 = arith.mulf %383, %383 : vector<9x128xf32>
    %385 = arith.mulf %383, %384 : vector<9x128xf32>
    %cst_129 = arith.constant 4.471500e-02 : f32
    %386 = vector.broadcast %cst_129 : f32 to vector<9x128xf32>
    %387 = arith.mulf %386, %385 : vector<9x128xf32>
    %388 = arith.addf %383, %387 : vector<9x128xf32>
    %cst_130 = arith.constant 0.797884583 : f32
    %389 = vector.broadcast %cst_130 : f32 to vector<9x128xf32>
    %390 = arith.mulf %389, %388 : vector<9x128xf32>
    %391 = math.tanh %390 : vector<9x128xf32>
    %cst_131 = arith.constant 1.000000e+00 : f32
    %392 = vector.broadcast %cst_131 : f32 to vector<9x128xf32>
    %393 = arith.addf %392, %391 : vector<9x128xf32>
    %cst_132 = arith.constant 5.000000e-01 : f32
    %394 = vector.broadcast %cst_132 : f32 to vector<9x128xf32>
    %395 = arith.mulf %394, %393 : vector<9x128xf32>
    %396 = arith.mulf %383, %395 : vector<9x128xf32>
    %397 = arith.truncf %396 : vector<9x128xf32> to vector<9x128xbf16>
    %c1_133 = arith.constant 1 : index
    %c0_134 = arith.constant 0 : index
    %c0_135 = arith.constant 0 : index
    %398 = vector.load %arg11[%c1_133, %c0_134, %c0_135] : memref<2x128x32xbf16, #tpu.memory_space<vmem>>, vector<1x128x32xbf16>
    %399 = vector.shape_cast %398 : vector<1x128x32xbf16> to vector<128x32xbf16>
    %cst_136 = arith.constant dense<0.000000e+00> : vector<9x32xf32>
    %400 = tpu.matmul %397, %399, %cst_136 {dimension_numbers = #tpu.dot_dimension_numbers<[1], [0], [0], [1], [0, 0, 1, 1], [], []>} : vector<9x128xbf16>, vector<128x32xbf16>, vector<9x32xf32> -> vector<9x32xf32>
    %c1_137 = arith.constant 1 : index
    %c0_138 = arith.constant 0 : index
    %c0_139 = arith.constant 0 : index
    %401 = vector.load %arg12[%c1_137, %c0_138, %c0_139] : memref<2x1x32xf32, #tpu.memory_space<vmem>>, vector<1x1x32xf32>
    %402 = vector.shape_cast %401 : vector<1x1x32xf32> to vector<1x32xf32>
    %403 = vector.broadcast %402 : vector<1x32xf32> to vector<9x32xf32>
    %404 = arith.addf %400, %403 : vector<9x32xf32>
    %405 = arith.addf %351, %404 : vector<9x32xf32>
    %406 = vector.extract_strided_slice %405 {offsets = [0, 0], sizes = [1, 32], strides = [1, 1]} : vector<9x32xf32> to vector<1x32xf32>
    %c0_140 = arith.constant 0 : index
    %c0_141 = arith.constant 0 : index
    %407 = vector.load %arg13[%c0_140, %c0_141] : memref<2x32xf32, #tpu.memory_space<vmem>>, vector<2x32xf32>
    %408 = vector.extract_strided_slice %407 {offsets = [0, 0], sizes = [1, 32], strides = [1, 1]} : vector<2x32xf32> to vector<1x32xf32>
    %409 = vector.extract_strided_slice %407 {offsets = [1, 0], sizes = [1, 32], strides = [1, 1]} : vector<2x32xf32> to vector<1x32xf32>
    %cst_142 = arith.constant dense<0.000000e+00> : vector<1xf32>
    %410 = vector.multi_reduction <add>, %406, %cst_142 [1] : vector<1x32xf32> to vector<1xf32>
    %411 = vector.shape_cast %410 : vector<1xf32> to vector<1x1xf32>
    %cst_143 = arith.constant 3.200000e+01 : f32
    %412 = vector.broadcast %cst_143 : f32 to vector<1x1xf32>
    %413 = arith.divf %411, %412 : vector<1x1xf32>
    %414 = vector.broadcast %413 : vector<1x1xf32> to vector<1x32xf32>
    %415 = arith.subf %406, %414 : vector<1x32xf32>
    %416 = arith.mulf %415, %415 : vector<1x32xf32>
    %cst_144 = arith.constant dense<0.000000e+00> : vector<1xf32>
    %417 = vector.multi_reduction <add>, %416, %cst_144 [1] : vector<1x32xf32> to vector<1xf32>
    %418 = vector.shape_cast %417 : vector<1xf32> to vector<1x1xf32>
    %cst_145 = arith.constant 3.200000e+01 : f32
    %419 = vector.broadcast %cst_145 : f32 to vector<1x1xf32>
    %420 = arith.divf %418, %419 : vector<1x1xf32>
    %cst_146 = arith.constant 9.99999997E-7 : f32
    %421 = vector.broadcast %cst_146 : f32 to vector<1x1xf32>
    %422 = arith.addf %420, %421 : vector<1x1xf32>
    %423 = math.rsqrt %422 : vector<1x1xf32>
    %424 = vector.broadcast %423 : vector<1x1xf32> to vector<1x32xf32>
    %425 = arith.mulf %415, %424 : vector<1x32xf32>
    %426 = arith.mulf %425, %408 : vector<1x32xf32>
    %427 = arith.addf %426, %409 : vector<1x32xf32>
    %c0_147 = arith.constant 0 : index
    %c0_148 = arith.constant 0 : index
    %428 = vector.load %arg14[%c0_147, %c0_148] : memref<32x8xbf16, #tpu.memory_space<vmem>>, vector<32x8xbf16>
    %429 = arith.truncf %427 : vector<1x32xf32> to vector<1x32xbf16>
    %cst_149 = arith.constant dense<0.000000e+00> : vector<1x8xf32>
    %430 = tpu.matmul %429, %428, %cst_149 {dimension_numbers = #tpu.dot_dimension_numbers<[1], [0], [0], [1], [0, 0, 1, 1], [], []>} : vector<1x32xbf16>, vector<32x8xbf16>, vector<1x8xf32> -> vector<1x8xf32>
    %c0_150 = arith.constant 0 : index
    %c0_151 = arith.constant 0 : index
    %431 = vector.load %arg15[%c0_150, %c0_151] : memref<1x8xf32, #tpu.memory_space<vmem>>, vector<1x8xf32>
    %432 = arith.addf %430, %431 : vector<1x8xf32>
    %c0_152 = arith.constant 0 : index
    %c0_153 = arith.constant 0 : index
    %c0_154 = arith.constant 0 : index
    %433 = vector.load %arg16[%c0_152, %c0_153, %c0_154] : memref<1x1x8xf32, #tpu.memory_space<vmem>>, vector<1x1x8xf32>
    %434 = vector.shape_cast %433 : vector<1x1x8xf32> to vector<1x8xf32>
    %435 = vector.shape_cast %432 : vector<1x8xf32> to vector<1x1x8xf32>
    tpu.vector_store %arg16[%c0_152, %c0_153, %c0_154], %435 {strides = array<i32>} : memref<1x1x8xf32, #tpu.memory_space<vmem>>, vector<1x1x8xf32>,
    return
  }
  func.func @transform_0(%arg0: i32, %arg1: memref<2x8xi32, #tpu.memory_space<smem>>) -> (i32, i32, i32) {
    %c0_i32 = arith.constant 0 : i32
    %c0_i32_0 = arith.constant 0 : i32
    %c0_i32_1 = arith.constant 0 : i32
    return %arg0, %c0_i32, %c0_i32_0 : i32, i32, i32
  }
  func.func @transform_1(%arg0: i32, %arg1: memref<2x8xi32, #tpu.memory_space<smem>>) -> (i32, i32, i32) {
    %c0_i32 = arith.constant 0 : i32
    %c0_i32_0 = arith.constant 0 : i32
    %c0_i32_1 = arith.constant 0 : i32
    %c0_i32_2 = arith.constant 0 : i32
    return %c0_i32, %c0_i32_0, %c0_i32_1 : i32, i32, i32
  }
  func.func @transform_2(%arg0: i32, %arg1: memref<2x8xi32, #tpu.memory_space<smem>>) -> (i32, i32, i32) {
    %c0_i32 = arith.constant 0 : i32
    %c0_i32_0 = arith.constant 0 : i32
    %c0_i32_1 = arith.constant 0 : i32
    %c0_i32_2 = arith.constant 0 : i32
    return %c0_i32, %c0_i32_0, %c0_i32_1 : i32, i32, i32
  }
  func.func @transform_3(%arg0: i32, %arg1: memref<2x8xi32, #tpu.memory_space<smem>>) -> (i32, i32, i32) {
    %c0_i32 = arith.constant 0 : i32
    %c0_i32_0 = arith.constant 0 : i32
    %c0_i32_1 = arith.constant 0 : i32
    %c0_i32_2 = arith.constant 0 : i32
    return %c0_i32, %c0_i32_0, %c0_i32_1 : i32, i32, i32
  }
  func.func @transform_4(%arg0: i32, %arg1: memref<2x8xi32, #tpu.memory_space<smem>>) -> (i32, i32, i32) {
    %c0_i32 = arith.constant 0 : i32
    %c0_i32_0 = arith.constant 0 : i32
    %c0_i32_1 = arith.constant 0 : i32
    %c0_i32_2 = arith.constant 0 : i32
    return %c0_i32, %c0_i32_0, %c0_i32_1 : i32, i32, i32
  }
  func.func @transform_5(%arg0: i32, %arg1: memref<2x8xi32, #tpu.memory_space<smem>>) -> (i32, i32, i32) {
    %c0_i32 = arith.constant 0 : i32
    %c0_i32_0 = arith.constant 0 : i32
    %c0_i32_1 = arith.constant 0 : i32
    %c0_i32_2 = arith.constant 0 : i32
    return %c0_i32, %c0_i32_0, %c0_i32_1 : i32, i32, i32
  }
  func.func @transform_6(%arg0: i32, %arg1: memref<2x8xi32, #tpu.memory_space<smem>>) -> (i32, i32, i32) {
    %c0_i32 = arith.constant 0 : i32
    %c0_i32_0 = arith.constant 0 : i32
    %c0_i32_1 = arith.constant 0 : i32
    %c0_i32_2 = arith.constant 0 : i32
    return %c0_i32, %c0_i32_0, %c0_i32_1 : i32, i32, i32
  }
  func.func @transform_7(%arg0: i32, %arg1: memref<2x8xi32, #tpu.memory_space<smem>>) -> (i32, i32, i32) {
    %c0_i32 = arith.constant 0 : i32
    %c0_i32_0 = arith.constant 0 : i32
    %c0_i32_1 = arith.constant 0 : i32
    %c0_i32_2 = arith.constant 0 : i32
    return %c0_i32, %c0_i32_0, %c0_i32_1 : i32, i32, i32
  }
  func.func @transform_8(%arg0: i32, %arg1: memref<2x8xi32, #tpu.memory_space<smem>>) -> (i32, i32, i32) {
    %c0_i32 = arith.constant 0 : i32
    %c0_i32_0 = arith.constant 0 : i32
    %c0_i32_1 = arith.constant 0 : i32
    %c0_i32_2 = arith.constant 0 : i32
    return %c0_i32, %c0_i32_0, %c0_i32_1 : i32, i32, i32
  }
  func.func @transform_9(%arg0: i32, %arg1: memref<2x8xi32, #tpu.memory_space<smem>>) -> (i32, i32, i32) {
    %c0_i32 = arith.constant 0 : i32
    %c0_i32_0 = arith.constant 0 : i32
    %c0_i32_1 = arith.constant 0 : i32
    %c0_i32_2 = arith.constant 0 : i32
    return %c0_i32, %c0_i32_0, %c0_i32_1 : i32, i32, i32
  }
  func.func @transform_10(%arg0: i32, %arg1: memref<2x8xi32, #tpu.memory_space<smem>>) -> (i32, i32, i32) {
    %c0_i32 = arith.constant 0 : i32
    %c0_i32_0 = arith.constant 0 : i32
    %c0_i32_1 = arith.constant 0 : i32
    %c0_i32_2 = arith.constant 0 : i32
    return %c0_i32, %c0_i32_0, %c0_i32_1 : i32, i32, i32
  }
  func.func @transform_11(%arg0: i32, %arg1: memref<2x8xi32, #tpu.memory_space<smem>>) -> (i32, i32) {
    %c0_i32 = arith.constant 0 : i32
    %c0_i32_0 = arith.constant 0 : i32
    %c0_i32_1 = arith.constant 0 : i32
    return %c0_i32, %c0_i32_0 : i32, i32
  }
  func.func @transform_12(%arg0: i32, %arg1: memref<2x8xi32, #tpu.memory_space<smem>>) -> (i32, i32) {
    %c0_i32 = arith.constant 0 : i32
    %c0_i32_0 = arith.constant 0 : i32
    %c0_i32_1 = arith.constant 0 : i32
    return %c0_i32, %c0_i32_0 : i32, i32
  }
  func.func @transform_13(%arg0: i32, %arg1: memref<2x8xi32, #tpu.memory_space<smem>>) -> (i32, i32) {
    %c0_i32 = arith.constant 0 : i32
    %c0_i32_0 = arith.constant 0 : i32
    %c0_i32_1 = arith.constant 0 : i32
    return %c0_i32, %c0_i32_0 : i32, i32
  }
  func.func @transform_14(%arg0: i32, %arg1: memref<2x8xi32, #tpu.memory_space<smem>>) -> (i32, i32, i32) {
    %c0_i32 = arith.constant 0 : i32
    %c0_i32_0 = arith.constant 0 : i32
    %c0_i32_1 = arith.constant 0 : i32
    return %arg0, %c0_i32, %c0_i32_0 : i32, i32, i32
  }
}

</mosaic_0001>

<llo_original>
// kernel: optimal_sampler_forward.2
$region0: #{optimal_sampler_forward.2}
  #allocation0 [shape = 'u32[]', space=smem, size = 0x4, offset = 0x4, fixed_abs, tag = 'smem constant byte address 0x4 - core index']
  #allocation1 [shape = 'u32[144,128]{1,0:T(1,128)}', space=vmem, size = 0x12000, scoped, tag = 'internal scratch']
  %s0 = inlined_call_operand.vmem [shape: f32[2,16,48], index: 0, kind: input, shape index: {}]
  %s1 = inlined_call_operand.vmem [shape: bf16[48,32], index: 1, kind: input, shape index: {}]
  %s2 = inlined_call_operand.vmem [shape: f32[1,32], index: 2, kind: input, shape index: {}]
  %s3 = inlined_call_operand.vmem [shape: f32[1,32], index: 3, kind: input, shape index: {}]
  %s4 = inlined_call_operand.vmem [shape: f32[17,32], index: 4, kind: input, shape index: {}]
  %s5 = inlined_call_operand.vmem [shape: f32[2,2,32], index: 5, kind: input, shape index: {}]
  %s6 = inlined_call_operand.vmem [shape: bf16[2,32,96], index: 6, kind: input, shape index: {}]
  %s7 = inlined_call_operand.vmem [shape: f32[2,1,96], index: 7, kind: input, shape index: {}]
  %s8 = inlined_call_operand.vmem [shape: bf16[2,32,32], index: 8, kind: input, shape index: {}]
  %s9 = inlined_call_operand.vmem [shape: f32[2,1,32], index: 9, kind: input, shape index: {}]
  %s10 = inlined_call_operand.vmem [shape: f32[2,2,32], index: 10, kind: input, shape index: {}]
  %s11 = inlined_call_operand.vmem [shape: bf16[2,32,128], index: 11, kind: input, shape index: {}]
  %s12 = inlined_call_operand.vmem [shape: f32[2,1,128], index: 12, kind: input, shape index: {}]
  %s13 = inlined_call_operand.vmem [shape: bf16[2,128,32], index: 13, kind: input, shape index: {}]
  %s14 = inlined_call_operand.vmem [shape: f32[2,1,32], index: 14, kind: input, shape index: {}]
  %s15 = inlined_call_operand.vmem [shape: f32[2,1,17], index: 15, kind: output, shape index: {0}]
  %s16 = inlined_call_operand.vmem [shape: f32[2,17,32], index: 16, kind: output, shape index: {1}]
  %17 = xla_tuple %s15, %s16
  %s18 = sld [smem:[#allocation0]]
  $region101: #{optimal_sampler_forward.2} parent=0
    _
  %s20 = ssub.s32 1, %s18
  %s21 = scalar_select 0, %s20, %s18
  loop: start=0, step=1, limit=4
  $region2: #{optimal_sampler_forward.2} parent=0 // loop_pre_header
    _
  $region3: #{optimal_sampler_forward.2} parent=0 // loop_header
    %s23 = sphi 0, %s27
    %p24 = scmp.ge.s32.totalorder %s23, 4
    %s33 = sphi 0, %s35
    %s36 = sphi 0, %s33
    %s37 = sphi 0, %s36
    %s53 = sphi 0, %s37
    %s57 = sphi 0, %s57
    %s59 = sphi 0, %s57
    %s60 = sphi 0, %s59
    %s74 = sphi 0, %s60
    %s78 = sphi 0, %s78
    %s80 = sphi 0, %s78
    %s81 = sphi 0, %s80
    %s95 = sphi 0, %s81
    %s99 = sphi 0, %s99
    %s101 = sphi 0, %s99
    %s102 = sphi 0, %s101
    %s116 = sphi 0, %s102
    %s120 = sphi 0, %s120
    %s122 = sphi 0, %s120
    %s123 = sphi 0, %s122
    %s137 = sphi 0, %s123
    %s141 = sphi 0, %s141
    %s143 = sphi 0, %s141
    %s144 = sphi 0, %s143
    %s158 = sphi 0, %s144
    %s162 = sphi 0, %s162
    %s164 = sphi 0, %s162
    %s165 = sphi 0, %s164
    %s179 = sphi 0, %s165
    %s183 = sphi 0, %s183
    %s185 = sphi 0, %s183
    %s186 = sphi 0, %s185
    %s200 = sphi 0, %s186
    %s204 = sphi 0, %s204
    %s206 = sphi 0, %s204
    %s207 = sphi 0, %s206
    %s221 = sphi 0, %s207
    %s225 = sphi 0, %s225
    %s227 = sphi 0, %s225
    %s228 = sphi 0, %s227
    %s242 = sphi 0, %s228
    %s246 = sphi 0, %s246
    %s248 = sphi 0, %s246
    %s249 = sphi 0, %s248
    %s263 = sphi 0, %s249
    %s267 = sphi 0, %s267
    %s269 = sphi 0, %s267
    %s270 = sphi 0, %s269
    %s284 = sphi 0, %s270
    %s288 = sphi 0, %s288
    %s290 = sphi 0, %s288
    %s291 = sphi 0, %s290
    %s305 = sphi 0, %s291
    %s309 = sphi 0, %s309
    %s311 = sphi 0, %s309
    %s312 = sphi 0, %s311
    %s326 = sphi 0, %s312
    %s330 = sphi 0, %s330
    %s332 = sphi 0, %s330
    %s333 = sphi 0, %s332
    %s347 = sphi 0, %s333
    %s353 = sphi 0, %s355
    %s356 = sphi 0, %s353
    %s357 = sphi 0, %s356
    %s373 = sphi 0, %s357
    %s379 = sphi 0, %s381
    %s382 = sphi 0, %s379
    %s383 = sphi 0, %s382
    %s399 = sphi 0, %s383
  $region4: #{optimal_sampler_forward.2} parent=0 // loop_header_branch
    %26 = sbr.rel (%p24) target = $region8
  $region5: #{optimal_sampler_forward.2} parent=0 // loop_body
    %s28 = ssub.s32 %s23, 1
    %s29 = ssub.s32 %s23, 2
    %s30 = sadd.s32 %s23, 1
    %s31 = ssub.s32 %s23, %s30
    %p32 = scmp.eq.s32.totalorder %s31, 0
    %s34 = sadd.s32 %s33, 1
    %s35 = scalar_select %p32, %s33, %s34
    %p38 = pneg %p32
    %p39 = scmp.eq.s32.totalorder %s23, 1
    %p40 = por %p38, %p39
    %p41 = scmp.ne.s32.totalorder %s33, %s36
    %p42 = scmp.eq.s32.totalorder %s23, 0
    %p43 = por %p41, %p42
    %p44 = scmp.ne.s32.totalorder %s33, %s36
    %p45 = scmp.eq.s32.totalorder %s28, 1
    %p46 = por %p44, %p45
    %p47 = scmp.ne.s32.totalorder %s36, %s37
    %p48 = scmp.eq.s32.totalorder %s28, 0
    %p49 = por %p47, %p48
    %p50 = scmp.ne.s32.totalorder %s36, %s37
    %p51 = scmp.eq.s32.totalorder %s29, 1
    %p52 = por %p50, %p51
    %p54 = scmp.ne.s32.totalorder %s37, %s53
    %p55 = scmp.eq.s32.totalorder %s29, 0
    %p56 = por %p54, %p55
    %s58 = sadd.s32 %s57, 1
    %p61 = scmp.eq.s32.totalorder %s23, 1
    %p62 = scmp.ne.s32.totalorder %s57, %s59
    %p63 = scmp.eq.s32.totalorder %s23, 0
    %p64 = por %p62, %p63
    %p65 = scmp.ne.s32.totalorder %s57, %s59
    %p66 = scmp.eq.s32.totalorder %s28, 1
    %p67 = por %p65, %p66
    %p68 = scmp.ne.s32.totalorder %s59, %s60
    %p69 = scmp.eq.s32.totalorder %s28, 0
    %p70 = por %p68, %p69
    %p71 = scmp.ne.s32.totalorder %s59, %s60
    %p72 = scmp.eq.s32.totalorder %s29, 1
    %p73 = por %p71, %p72
    %p75 = scmp.ne.s32.totalorder %s60, %s74
    %p76 = scmp.eq.s32.totalorder %s29, 0
    %p77 = por %p75, %p76
    %s79 = sadd.s32 %s78, 1
    %p82 = scmp.eq.s32.totalorder %s23, 1
    %p83 = scmp.ne.s32.totalorder %s78, %s80
    %p84 = scmp.eq.s32.totalorder %s23, 0
    %p85 = por %p83, %p84
    %p86 = scmp.ne.s32.totalorder %s78, %s80
    %p87 = scmp.eq.s32.totalorder %s28, 1
    %p88 = por %p86, %p87
    %p89 = scmp.ne.s32.totalorder %s80, %s81
    %p90 = scmp.eq.s32.totalorder %s28, 0
    %p91 = por %p89, %p90
    %p92 = scmp.ne.s32.totalorder %s80, %s81
    %p93 = scmp.eq.s32.totalorder %s29, 1
    %p94 = por %p92, %p93
    %p96 = scmp.ne.s32.totalorder %s81, %s95
    %p97 = scmp.eq.s32.totalorder %s29, 0
    %p98 = por %p96, %p97
    %s100 = sadd.s32 %s99, 1
    %p103 = scmp.eq.s32.totalorder %s23, 1
    %p104 = scmp.ne.s32.totalorder %s99, %s101
    %p105 = scmp.eq.s32.totalorder %s23, 0
    %p106 = por %p104, %p105
    %p107 = scmp.ne.s32.totalorder %s99, %s101
    %p108 = scmp.eq.s32.totalorder %s28, 1
    %p109 = por %p107, %p108
    %p110 = scmp.ne.s32.totalorder %s101, %s102
    %p111 = scmp.eq.s32.totalorder %s28, 0
    %p112 = por %p110, %p111
    %p113 = scmp.ne.s32.totalorder %s101, %s102
    %p114 = scmp.eq.s32.totalorder %s29, 1
    %p115 = por %p113, %p114
    %p117 = scmp.ne.s32.totalorder %s102, %s116
    %p118 = scmp.eq.s32.totalorder %s29, 0
    %p119 = por %p117, %p118
    %s121 = sadd.s32 %s120, 1
    %p124 = scmp.eq.s32.totalorder %s23, 1
    %p125 = scmp.ne.s32.totalorder %s120, %s122
    %p126 = scmp.eq.s32.totalorder %s23, 0
    %p127 = por %p125, %p126
    %p128 = scmp.ne.s32.totalorder %s120, %s122
    %p129 = scmp.eq.s32.totalorder %s28, 1
    %p130 = por %p128, %p129
    %p131 = scmp.ne.s32.totalorder %s122, %s123
    %p132 = scmp.eq.s32.totalorder %s28, 0
    %p133 = por %p131, %p132
    %p134 = scmp.ne.s32.totalorder %s122, %s123
    %p135 = scmp.eq.s32.totalorder %s29, 1
    %p136 = por %p134, %p135
    %p138 = scmp.ne.s32.totalorder %s123, %s137
    %p139 = scmp.eq.s32.totalorder %s29, 0
    %p140 = por %p138, %p139
    %s142 = sadd.s32 %s141, 1
    %p145 = scmp.eq.s32.totalorder %s23, 1
    %p146 = scmp.ne.s32.totalorder %s141, %s143
    %p147 = scmp.eq.s32.totalorder %s23, 0
    %p148 = por %p146, %p147
    %p149 = scmp.ne.s32.totalorder %s141, %s143
    %p150 = scmp.eq.s32.totalorder %s28, 1
    %p151 = por %p149, %p150
    %p152 = scmp.ne.s32.totalorder %s143, %s144
    %p153 = scmp.eq.s32.totalorder %s28, 0
    %p154 = por %p152, %p153
    %p155 = scmp.ne.s32.totalorder %s143, %s144
    %p156 = scmp.eq.s32.totalorder %s29, 1
    %p157 = por %p155, %p156
    %p159 = scmp.ne.s32.totalorder %s144, %s158
    %p160 = scmp.eq.s32.totalorder %s29, 0
    %p161 = por %p159, %p160
    %s163 = sadd.s32 %s162, 1
    %p166 = scmp.eq.s32.totalorder %s23, 1
    %p167 = scmp.ne.s32.totalorder %s162, %s164
    %p168 = scmp.eq.s32.totalorder %s23, 0
    %p169 = por %p167, %p168
    %p170 = scmp.ne.s32.totalorder %s162, %s164
    %p171 = scmp.eq.s32.totalorder %s28, 1
    %p172 = por %p170, %p171
    %p173 = scmp.ne.s32.totalorder %s164, %s165
    %p174 = scmp.eq.s32.totalorder %s28, 0
    %p175 = por %p173, %p174
    %p176 = scmp.ne.s32.totalorder %s164, %s165
    %p177 = scmp.eq.s32.totalorder %s29, 1
    %p178 = por %p176, %p177
    %p180 = scmp.ne.s32.totalorder %s165, %s179
    %p181 = scmp.eq.s32.totalorder %s29, 0
    %p182 = por %p180, %p181
    %s184 = sadd.s32 %s183, 1
    %p187 = scmp.eq.s32.totalorder %s23, 1
    %p188 = scmp.ne.s32.totalorder %s183, %s185
    %p189 = scmp.eq.s32.totalorder %s23, 0
    %p190 = por %p188, %p189
    %p191 = scmp.ne.s32.totalorder %s183, %s185
    %p192 = scmp.eq.s32.totalorder %s28, 1
    %p193 = por %p191, %p192
    %p194 = scmp.ne.s32.totalorder %s185, %s186
    %p195 = scmp.eq.s32.totalorder %s28, 0
    %p196 = por %p194, %p195
    %p197 = scmp.ne.s32.totalorder %s185, %s186
    %p198 = scmp.eq.s32.totalorder %s29, 1
    %p199 = por %p197, %p198
    %p201 = scmp.ne.s32.totalorder %s186, %s200
    %p202 = scmp.eq.s32.totalorder %s29, 0
    %p203 = por %p201, %p202
    %s205 = sadd.s32 %s204, 1
    %p208 = scmp.eq.s32.totalorder %s23, 1
    %p209 = scmp.ne.s32.totalorder %s204, %s206
    %p210 = scmp.eq.s32.totalorder %s23, 0
    %p211 = por %p209, %p210
    %p212 = scmp.ne.s32.totalorder %s204, %s206
    %p213 = scmp.eq.s32.totalorder %s28, 1
    %p214 = por %p212, %p213
    %p215 = scmp.ne.s32.totalorder %s206, %s207
    %p216 = scmp.eq.s32.totalorder %s28, 0
    %p217 = por %p215, %p216
    %p218 = scmp.ne.s32.totalorder %s206, %s207
    %p219 = scmp.eq.s32.totalorder %s29, 1
    %p220 = por %p218, %p219
    %p222 = scmp.ne.s32.totalorder %s207, %s221
    %p223 = scmp.eq.s32.totalorder %s29, 0
    %p224 = por %p222, %p223
    %s226 = sadd.s32 %s225, 1
    %p229 = scmp.eq.s32.totalorder %s23, 1
    %p230 = scmp.ne.s32.totalorder %s225, %s227
    %p231 = scmp.eq.s32.totalorder %s23, 0
    %p232 = por %p230, %p231
    %p233 = scmp.ne.s32.totalorder %s225, %s227
    %p234 = scmp.eq.s32.totalorder %s28, 1
    %p235 = por %p233, %p234
    %p236 = scmp.ne.s32.totalorder %s227, %s228
    %p237 = scmp.eq.s32.totalorder %s28, 0
    %p238 = por %p236, %p237
    %p239 = scmp.ne.s32.totalorder %s227, %s228
    %p240 = scmp.eq.s32.totalorder %s29, 1
    %p241 = por %p239, %p240
    %p243 = scmp.ne.s32.totalorder %s228, %s242
    %p244 = scmp.eq.s32.totalorder %s29, 0
    %p245 = por %p243, %p244
    %s247 = sadd.s32 %s246, 1
    %p250 = scmp.eq.s32.totalorder %s23, 1
    %p251 = scmp.ne.s32.totalorder %s246, %s248
    %p252 = scmp.eq.s32.totalorder %s23, 0
    %p253 = por %p251, %p252
    %p254 = scmp.ne.s32.totalorder %s246, %s248
    %p255 = scmp.eq.s32.totalorder %s28, 1
    %p256 = por %p254, %p255
    %p257 = scmp.ne.s32.totalorder %s248, %s249
    %p258 = scmp.eq.s32.totalorder %s28, 0
    %p259 = por %p257, %p258
    %p260 = scmp.ne.s32.totalorder %s248, %s249
    %p261 = scmp.eq.s32.totalorder %s29, 1
    %p262 = por %p260, %p261
    %p264 = scmp.ne.s32.totalorder %s249, %s263
    %p265 = scmp.eq.s32.totalorder %s29, 0
    %p266 = por %p264, %p265
    %s268 = sadd.s32 %s267, 1
    %p271 = scmp.eq.s32.totalorder %s23, 1
    %p272 = scmp.ne.s32.totalorder %s267, %s269
    %p273 = scmp.eq.s32.totalorder %s23, 0
    %p274 = por %p272, %p273
    %p275 = scmp.ne.s32.totalorder %s267, %s269
    %p276 = scmp.eq.s32.totalorder %s28, 1
    %p277 = por %p275, %p276
    %p278 = scmp.ne.s32.totalorder %s269, %s270
    %p279 = scmp.eq.s32.totalorder %s28, 0
    %p280 = por %p278, %p279
    %p281 = scmp.ne.s32.totalorder %s269, %s270
    %p282 = scmp.eq.s32.totalorder %s29, 1
    %p283 = por %p281, %p282
    %p285 = scmp.ne.s32.totalorder %s270, %s284
    %p286 = scmp.eq.s32.totalorder %s29, 0
    %p287 = por %p285, %p286
    %s289 = sadd.s32 %s288, 1
    %p292 = scmp.eq.s32.totalorder %s23, 1
    %p293 = scmp.ne.s32.totalorder %s288, %s290
    %p294 = scmp.eq.s32.totalorder %s23, 0
    %p295 = por %p293, %p294
    %p296 = scmp.ne.s32.totalorder %s288, %s290
    %p297 = scmp.eq.s32.totalorder %s28, 1
    %p298 = por %p296, %p297
    %p299 = scmp.ne.s32.totalorder %s290, %s291
    %p300 = scmp.eq.s32.totalorder %s28, 0
    %p301 = por %p299, %p300
    %p302 = scmp.ne.s32.totalorder %s290, %s291
    %p303 = scmp.eq.s32.totalorder %s29, 1
    %p304 = por %p302, %p303
    %p306 = scmp.ne.s32.totalorder %s291, %s305
    %p307 = scmp.eq.s32.totalorder %s29, 0
    %p308 = por %p306, %p307
    %s310 = sadd.s32 %s309, 1
    %p313 = scmp.eq.s32.totalorder %s23, 1
    %p314 = scmp.ne.s32.totalorder %s309, %s311
    %p315 = scmp.eq.s32.totalorder %s23, 0
    %p316 = por %p314, %p315
    %p317 = scmp.ne.s32.totalorder %s309, %s311
    %p318 = scmp.eq.s32.totalorder %s28, 1
    %p319 = por %p317, %p318
    %p320 = scmp.ne.s32.totalorder %s311, %s312
    %p321 = scmp.eq.s32.totalorder %s28, 0
    %p322 = por %p320, %p321
    %p323 = scmp.ne.s32.totalorder %s311, %s312
    %p324 = scmp.eq.s32.totalorder %s29, 1
    %p325 = por %p323, %p324
    %p327 = scmp.ne.s32.totalorder %s312, %s326
    %p328 = scmp.eq.s32.totalorder %s29, 0
    %p329 = por %p327, %p328
    %s331 = sadd.s32 %s330, 1
    %p334 = scmp.eq.s32.totalorder %s23, 1
    %p335 = scmp.ne.s32.totalorder %s330, %s332
    %p336 = scmp.eq.s32.totalorder %s23, 0
    %p337 = por %p335, %p336
    %p338 = scmp.ne.s32.totalorder %s330, %s332
    %p339 = scmp.eq.s32.totalorder %s28, 1
    %p340 = por %p338, %p339
    %p341 = scmp.ne.s32.totalorder %s332, %s333
    %p342 = scmp.eq.s32.totalorder %s28, 0
    %p343 = por %p341, %p342
    %p344 = scmp.ne.s32.totalorder %s332, %s333
    %p345 = scmp.eq.s32.totalorder %s29, 1
    %p346 = por %p344, %p345
    %p348 = scmp.ne.s32.totalorder %s333, %s347
    %p349 = scmp.eq.s32.totalorder %s29, 0
    %p350 = por %p348, %p349
    %s351 = ssub.s32 %s23, %s30
    %p352 = scmp.eq.s32.totalorder %s351, 0
    %s354 = sadd.s32 %s353, 1
    %s355 = scalar_select %p352, %s353, %s354
    %p358 = pneg %p352
    %p359 = scmp.eq.s32.totalorder %s23, 1
    %p360 = por %p358, %p359
    %p361 = scmp.ne.s32.totalorder %s353, %s356
    %p362 = scmp.eq.s32.totalorder %s23, 0
    %p363 = por %p361, %p362
    %p364 = scmp.ne.s32.totalorder %s353, %s356
    %p365 = scmp.eq.s32.totalorder %s28, 1
    %p366 = por %p364, %p365
    %p367 = scmp.ne.s32.totalorder %s356, %s357
    %p368 = scmp.eq.s32.totalorder %s28, 0
    %p369 = por %p367, %p368
    %p370 = scmp.ne.s32.totalorder %s356, %s357
    %p371 = scmp.eq.s32.totalorder %s29, 1
    %p372 = por %p370, %p371
    %p374 = scmp.ne.s32.totalorder %s357, %s373
    %p375 = scmp.eq.s32.totalorder %s29, 0
    %p376 = por %p374, %p375
    %s377 = ssub.s32 %s23, %s30
    %p378 = scmp.eq.s32.totalorder %s377, 0
    %s380 = sadd.s32 %s379, 1
    %s381 = scalar_select %p378, %s379, %s380
    %p384 = pneg %p378
    %p385 = scmp.eq.s32.totalorder %s23, 1
    %p386 = por %p384, %p385
    %p387 = scmp.ne.s32.totalorder %s379, %s382
    %p388 = scmp.eq.s32.totalorder %s23, 0
    %p389 = por %p387, %p388
    %p390 = scmp.ne.s32.totalorder %s379, %s382
    %p391 = scmp.eq.s32.totalorder %s28, 1
    %p392 = por %p390, %p391
    %p393 = scmp.ne.s32.totalorder %s382, %s383
    %p394 = scmp.eq.s32.totalorder %s28, 0
    %p395 = por %p393, %p394
    %p396 = scmp.ne.s32.totalorder %s382, %s383
    %p397 = scmp.eq.s32.totalorder %s29, 1
    %p398 = por %p396, %p397
    %p400 = scmp.ne.s32.totalorder %s383, %s399
    %p401 = scmp.eq.s32.totalorder %s29, 0
    %p402 = por %p400, %p401
    %p403 = scmp.le.s32.totalorder 1, %s23
    %p404 = scmp.lt.s32.totalorder %s23, 3
    %p405 = pnand %p403, %p404
    %p406 = pneg %p405
    // Predicated region
    $region9: #{optimal_sampler_forward.2} parent=5 // pred_check
      _
    $region10: #{optimal_sampler_forward.2} parent=5 // pred_check_branch
      %408 = sbr.rel (%p405) target = $region12
    $region11: #{optimal_sampler_forward.2} parent=5 // pred_region
      %s409 = ssub.s32 %s23, 1
      // Predicated region
      $region13: #{optimal_sampler_forward.2} parent=11 // pred_check
        %p410 = pneg %p70
      $region14: #{optimal_sampler_forward.2} parent=11 // pred_check_branch
        %412 = sbr.rel (%p410) target = $region16
      $region15: #{optimal_sampler_forward.2} parent=11 // pred_region
        _
      $region16: #{optimal_sampler_forward.2} parent=11 // pred_fallthru
        _
      // Predicated region
      $region17: #{optimal_sampler_forward.2} parent=11 // pred_check
        %p413 = pneg %p91
      $region18: #{optimal_sampler_forward.2} parent=11 // pred_check_branch
        %415 = sbr.rel (%p413) target = $region20
      $region19: #{optimal_sampler_forward.2} parent=11 // pred_region
        _
      $region20: #{optimal_sampler_forward.2} parent=11 // pred_fallthru
        _
      // Predicated region
      $region21: #{optimal_sampler_forward.2} parent=11 // pred_check
        %p416 = pneg %p112
      $region22: #{optimal_sampler_forward.2} parent=11 // pred_check_branch
        %418 = sbr.rel (%p416) target = $region24
      $region23: #{optimal_sampler_forward.2} parent=11 // pred_region
        _
      $region24: #{optimal_sampler_forward.2} parent=11 // pred_fallthru
        _
      // Predicated region
      $region25: #{optimal_sampler_forward.2} parent=11 // pred_check
        %p419 = pneg %p133
      $region26: #{optimal_sampler_forward.2} parent=11 // pred_check_branch
        %421 = sbr.rel (%p419) target = $region28
      $region27: #{optimal_sampler_forward.2} parent=11 // pred_region
        _
      $region28: #{optimal_sampler_forward.2} parent=11 // pred_fallthru
        _
      // Predicated region
      $region29: #{optimal_sampler_forward.2} parent=11 // pred_check
        %p422 = pneg %p154
      $region30: #{optimal_sampler_forward.2} parent=11 // pred_check_branch
        %424 = sbr.rel (%p422) target = $region32
      $region31: #{optimal_sampler_forward.2} parent=11 // pred_region
        _
      $region32: #{optimal_sampler_forward.2} parent=11 // pred_fallthru
        _
      // Predicated region
      $region33: #{optimal_sampler_forward.2} parent=11 // pred_check
        %p425 = pneg %p175
      $region34: #{optimal_sampler_forward.2} parent=11 // pred_check_branch
        %427 = sbr.rel (%p425) target = $region36
      $region35: #{optimal_sampler_forward.2} parent=11 // pred_region
        _
      $region36: #{optimal_sampler_forward.2} parent=11 // pred_fallthru
        _
      // Predicated region
      $region37: #{optimal_sampler_forward.2} parent=11 // pred_check
        %p428 = pneg %p196
      $region38: #{optimal_sampler_forward.2} parent=11 // pred_check_branch
        %430 = sbr.rel (%p428) target = $region40
      $region39: #{optimal_sampler_forward.2} parent=11 // pred_region
        _
      $region40: #{optimal_sampler_forward.2} parent=11 // pred_fallthru
        _
      // Predicated region
      $region41: #{optimal_sampler_forward.2} parent=11 // pred_check
        %p431 = pneg %p217
      $region42: #{optimal_sampler_forward.2} parent=11 // pred_check_branch
        %433 = sbr.rel (%p431) target = $region44
      $region43: #{optimal_sampler_forward.2} parent=11 // pred_region
        _
      $region44: #{optimal_sampler_forward.2} parent=11 // pred_fallthru
        _
      // Predicated region
      $region45: #{optimal_sampler_forward.2} parent=11 // pred_check
        %p434 = pneg %p238
      $region46: #{optimal_sampler_forward.2} parent=11 // pred_check_branch
        %436 = sbr.rel (%p434) target = $region48
      $region47: #{optimal_sampler_forward.2} parent=11 // pred_region
        _
      $region48: #{optimal_sampler_forward.2} parent=11 // pred_fallthru
        _
      // Predicated region
      $region49: #{optimal_sampler_forward.2} parent=11 // pred_check
        %p437 = pneg %p259
      $region50: #{optimal_sampler_forward.2} parent=11 // pred_check_branch
        %439 = sbr.rel (%p437) target = $region52
      $region51: #{optimal_sampler_forward.2} parent=11 // pred_region
        _
      $region52: #{optimal_sampler_forward.2} parent=11 // pred_fallthru
        _
      // Predicated region
      $region53: #{optimal_sampler_forward.2} parent=11 // pred_check
        %p440 = pneg %p280
      $region54: #{optimal_sampler_forward.2} parent=11 // pred_check_branch
        %442 = sbr.rel (%p440) target = $region56
      $region55: #{optimal_sampler_forward.2} parent=11 // pred_region
        _
      $region56: #{optimal_sampler_forward.2} parent=11 // pred_fallthru
        _
      // Predicated region
      $region57: #{optimal_sampler_forward.2} parent=11 // pred_check
        %p443 = pneg %p301
      $region58: #{optimal_sampler_forward.2} parent=11 // pred_check_branch
        %445 = sbr.rel (%p443) target = $region60
      $region59: #{optimal_sampler_forward.2} parent=11 // pred_region
        _
      $region60: #{optimal_sampler_forward.2} parent=11 // pred_fallthru
        _
      // Predicated region
      $region61: #{optimal_sampler_forward.2} parent=11 // pred_check
        %p446 = pneg %p322
      $region62: #{optimal_sampler_forward.2} parent=11 // pred_check_branch
        %448 = sbr.rel (%p446) target = $region64
      $region63: #{optimal_sampler_forward.2} parent=11 // pred_region
        _
      $region64: #{optimal_sampler_forward.2} parent=11 // pred_fallthru
        _
      // Predicated region
      $region65: #{optimal_sampler_forward.2} parent=11 // pred_check
        %p449 = pneg %p343
      $region66: #{optimal_sampler_forward.2} parent=11 // pred_check_branch
        %451 = sbr.rel (%p449) target = $region68
      $region67: #{optimal_sampler_forward.2} parent=11 // pred_region
        _
      $region68: #{optimal_sampler_forward.2} parent=11 // pred_fallthru
        _
    $region12: #{optimal_sampler_forward.2} parent=5 // pred_fallthru
      _
    %p452 = scmp.lt.s32.totalorder %s23, 2
    // Predicated region
    $region69: #{optimal_sampler_forward.2} parent=5 // pred_check
      %p453 = pneg %p452
    $region70: #{optimal_sampler_forward.2} parent=5 // pred_check_branch
      %455 = sbr.rel (%p453) target = $region72
    $region71: #{optimal_sampler_forward.2} parent=5 // pred_region
      // Predicated region
      $region73: #{optimal_sampler_forward.2} parent=71 // pred_check
        %p456 = pneg %p43
      $region74: #{optimal_sampler_forward.2} parent=71 // pred_check_branch
        %458 = sbr.rel (%p456) target = $region76
      $region75: #{optimal_sampler_forward.2} parent=71 // pred_region
        %p459 = scmp.lt.s32.totalorder %s23, 1
        %s460 = scalar_select %p459, %s23, 1
        %s461 = smul.addr %s460, 2
        %s462 = smul.addr %s461, 8
        %s463 = scalar_lea.vmem %s0, %s462
      $region76: #{optimal_sampler_forward.2} parent=71 // pred_fallthru
        _
    $region72: #{optimal_sampler_forward.2} parent=5 // pred_fallthru
      _
    %p464 = scmp.le.s32.totalorder 1, %s23
    %p465 = scmp.lt.s32.totalorder %s23, 3
    %p466 = pnand %p464, %p465
    %p467 = pneg %p466
    // Predicated region
    $region77: #{optimal_sampler_forward.2} parent=5 // pred_check
      _
    $region78: #{optimal_sampler_forward.2} parent=5 // pred_check_branch
      %469 = sbr.rel (%p466) target = $region80
    $region79: #{optimal_sampler_forward.2} parent=5 // pred_region
      %s470 = ssub.s32 %s23, 1
      %p471 = scmp.lt.s32.totalorder %s28, 1
      %s472 = scalar_select %p471, %s28, 1
      %s473 = smul.addr %s472, 2
      %s474 = smul.addr %s473, 8
      %s475 = scalar_lea.vmem %s0, %s474
      %p476 = pneg %p49
      %p477 = pneg %p46
      %p478 = pneg %p70
      %p479 = pneg %p67
      %p480 = pneg %p91
      %p481 = pneg %p88
      %p482 = pneg %p112
      %p483 = pneg %p109
      %p484 = pneg %p133
      %p485 = pneg %p130
      %p486 = pneg %p154
      %p487 = pneg %p151
      %p488 = pneg %p175
      %p489 = pneg %p172
      %p490 = pneg %p196
      %p491 = pneg %p193
      %p492 = pneg %p217
      %p493 = pneg %p214
      %p494 = pneg %p238
      %p495 = pneg %p235
      %p496 = pneg %p259
      %p497 = pneg %p256
      %p498 = pneg %p280
      %p499 = pneg %p277
      %p500 = pneg %p301
      %p501 = pneg %p298
      %p502 = pneg %p322
      %p503 = pneg %p319
      %p504 = pneg %p343
      %p505 = pneg %p340
      %p506 = pneg %p369
      %p507 = pneg %p366
      %p508 = scmp.lt.s32.totalorder %s28, 1
      %s509 = scalar_select %p508, %s28, 1
      %s510 = scalar_lea.vmem %s15, %s509
      %p511 = pneg %p395
      %p512 = pneg %p392
      %p513 = scmp.lt.s32.totalorder %s28, 1
      %s514 = scalar_select %p513, %s28, 1
      %s515 = smul.addr %s514, 3
      %s516 = smul.addr %s515, 8
      %s517 = scalar_lea.vmem %s16, %s516
      %p518 = scmp.lt.s32.totalorder %s28, 1
      %s519 = scalar_select %p518, %s28, 1
      %s520 = smul.addr %s519, 2
      %s521 = smul.addr %s520, 8
      %s522 = scalar_lea.vmem %s0, %s521
      %p523 = scmp.lt.s32.totalorder %s28, 1
      %s524 = scalar_select %p523, %s28, 1
      %s525 = scalar_lea.vmem %s15, %s524
      %p526 = scmp.lt.s32.totalorder %s28, 1
      %s527 = scalar_select %p526, %s28, 1
      %s528 = smul.addr %s527, 3
      %s529 = smul.addr %s528, 8
      %s530 = scalar_lea.vmem %s16, %s529
      %v532 = vld [vmem:[%s522] sm:$0xff]
      %v533 = vld [vmem:[%s522 + $0x8] sm:$0xff]
      %v534 = vld [vmem:[%s1] sm:$0xf]
      %v535 = vld [vmem:[%s1 + $0x4] sm:$0xf]
      %v536 = vld [vmem:[%s1 + $0x8] sm:$0xf]
      %v537 = vld [vmem:[%s1 + $0xc] sm:$0xf]
      %v538 = vld [vmem:[%s1 + $0x10] sm:$0xf]
      %v539 = vld [vmem:[%s1 + $0x14] sm:$0xf]
      %v540 = vpack.c.bf16 %v533, %v532
      %v541 = vld [vmem:[%s2] sm:$0x1]
      %v543 = vlaneseq
      %v544 = vshrl.u32 %v543, 7
      %v545 = vsub.s32 0, %v544
      %v546 = vrot.slane %v541, %v545
      %v554 = vunpack.c.l.b16 %v534
      %v555 = vunpack.c.l.b16 %v535
      %v556 = vunpack.c.l.b16 %v536
      %v557 = vunpack.c.l.b16 %v537
      %v558 = vunpack.c.l.b16 %v538
      %v559 = vunpack.c.l.b16 %v539
      %v560 = vpack.c.b16 %v555, %v554
      %v561 = vpack.c.b16 %v557, %v556
      %v562 = vpack.c.b16 %v559, %v558
      %vm566 = vcmask 392192
      %v568 = vsel %vm566, %v540, 0
      %570 = vmatprep.subr.bf16.mxu0 0
      %571 = vmatpush1.bf16.msra.mxu0 %v560
      %572 = vmatprep.subr.bf16.mxu0 0
      %573 = vmatpush1.bf16.msra.mxu0 %v561
      %574 = vmatprep.subr.bf16.mxu0 0
      %575 = vmatpush1.bf16.msra.mxu0 %v562
      %576 = vmatprep.subr.bf16.mxu0 0
      %577 = vmatpush1.bf16.msra.mxu0 0
      %578 = vmatprep.subr.bf16.mxu0 0
      %579 = vmatpush1.bf16.msra.mxu0 0
      %580 = vmatprep.subr.bf16.mxu0 0
      %581 = vmatpush1.bf16.msra.mxu0 0
      %582 = vmatprep.subr.bf16.mxu0 0
      %583 = vmatpush1.bf16.msra.mxu0 0
      %584 = vmatprep.subr.bf16.mxu0 0
      %585 = vmatpush1.bf16.msra.mxu0 0
      %586 = vmatprep.subr.bf16.mxu0 0
      %587 = vmatpush1.bf16.msra.mxu0 0
      %588 = vmatprep.subr.bf16.mxu0 0
      %589 = vmatpush1.bf16.msra.mxu0 0
      %590 = vmatprep.subr.bf16.mxu0 0
      %591 = vmatpush1.bf16.msra.mxu0 0
      %592 = vmatprep.subr.bf16.mxu0 0
      %593 = vmatpush1.bf16.msra.mxu0 0
      %594 = vmatprep.subr.bf16.mxu0 0
      %595 = vmatpush1.bf16.msra.mxu0 0
      %596 = vmatprep.subr.bf16.mxu0 0
      %597 = vmatpush1.bf16.msra.mxu0 0
      %598 = vmatprep.subr.bf16.mxu0 0
      %599 = vmatpush1.bf16.msra.mxu0 0
      %600 = vmatprep.subr.bf16.mxu0 0
      %601 = vmatpush1.bf16.msra.mxu0 0
      %602 = vmatprep.mubr.bf16.mxu0 0
      %603 = vmatmul.mubr.bf16.gmra.mrb[0].mxu0 %v568
      %v604 = vpop.f32.mrb[0].mxu0
      %v605 = vadd.f32 %v546, %v604
      %v606 = vpop.f32.mrb[0].mxu0
      %v607 = vpop.f32.mrb[0].mxu0
      %v608 = vadd.f32 %v546, %v607
      %v609 = vpop.f32.mrb[0].mxu0
      %610 = vdwg.mxu0
      %v611 = vld [vmem:[%s3] sm:$0x1]
      %v612 = vld [vmem:[%s4] sm:$0x1]
      %v613 = vadd.f32 %v611, %v612
      %vm614 = vcmask 253952
      %615 = vst.msk [vmem:[%s530] sm:$0x1] %vm614, %v613
      %v616 = vld [vmem:[%s4 + $0x1] sm:$0xff]
      %v617 = vld [vmem:[%s4 + $0x9] sm:$0xff]
      %v618 = vadd.f32 %v605, %v616
      %v619 = vadd.f32 %v608, %v617
      %vm620 = vcmask 261120
      %621 = vst.msk [vmem:[%s530 + $0x1] sm:$0xff] %vm620, %v618
      %622 = vst.msk [vmem:[%s530 + $0x9] sm:$0xff] %vm620, %v619
      %v623 = vld [vmem:[%s530] sm:$0xff]
      %v624 = vld [vmem:[%s530 + $0x8] sm:$0xff]
      %v625 = vld [vmem:[%s530 + $0x10] sm:$0x1]
      %v626 = vlaneseq
      %v627 = vshrl.u32 %v626, 7
      %v628 = vadd.s32 %v627, 8
      %v629 = vadd.s32 %v627, 16
      %v630 = vlaneseq
      %v631 = vand.u32 %v630, 127
      %vm632 = vcmp.eq.s32.totalorder %v627, %v631
      %vm633 = vcmp.eq.s32.totalorder %v628, %v631
      %vm634 = vcmp.eq.s32.totalorder %v629, %v631
      %v635 = vsel %vm632, 1, 0
      %v636 = vsel %vm633, 1, 0
      %v637 = vsel %vm634, 1, 0
      %v638 = vcvt.s32.f32 %v635
      %v639 = vcvt.s32.f32 %v636
      %v640 = vcvt.s32.f32 %v637
      %v641 = vld [vmem:[%s5] sm:$0x3]
      %v642 = vsel %vm620, %v623, 0.0
      %643 = vadd.xlane.f32.xlu0 %v642
      %v644 = vpop.xlane.xlu0 %643
      %v645 = vsel %vm620, %v624, 0.0
      %646 = vadd.xlane.f32.xlu0 %v645
      %v647 = vpop.xlane.xlu0 %646
      %v648 = vsel %vm614, %v625, 0.0
      %649 = vadd.xlane.f32.xlu0 %v648
      %v650 = vpop.xlane.xlu0 %649
      %v651 = vrcp.pop 32.0
      %v652 = vmul.f32 %v644, %v651
      %v653 = vmul.f32 %v647, %v651
      %v654 = vmul.f32 %v650, %v651
      %v655 = vsub.f32 %v623, %v652
      %v656 = vsub.f32 %v624, %v653
      %v657 = vsub.f32 %v625, %v654
      %v658 = vmul.f32 %v655, %v655
      %v659 = vmul.f32 %v656, %v656
      %v660 = vmul.f32 %v657, %v657
      %v661 = vsel %vm620, %v658, 0.0
      %662 = vadd.xlane.f32.xlu0 %v661
      %v663 = vpop.xlane.xlu0 %662
      %v664 = vsel %vm620, %v659, 0.0
      %665 = vadd.xlane.f32.xlu0 %v664
      %v666 = vpop.xlane.xlu0 %665
      %v667 = vsel %vm614, %v660, 0.0
      %668 = vadd.xlane.f32.xlu0 %v667
      %v669 = vpop.xlane.xlu0 %668
      %v670 = vmul.f32 %v663, %v651
      %v671 = vmul.f32 %v666, %v651
      %v672 = vmul.f32 %v669, %v651
      %v673 = vadd.f32 %v670, 1e-06
      %v674 = vadd.f32 %v671, 1e-06
      %v675 = vadd.f32 %v672, 1e-06
      %v676 = vrsqrt.pop %v673
      %v677 = vrsqrt.pop %v674
      %v678 = vrsqrt.pop %v675
      %v679 = vmul.f32 %v655, %v676
      %v680 = vmul.f32 %v656, %v677
      %v681 = vmul.f32 %v657, %v678
      %v682 = vlaneseq
      %v683 = vshrl.u32 %v682, 7
      %v684 = vsub.s32 0, %v683
      %v685 = vrot.slane %v641, %v684
      %v686 = vmul.f32 %v679, %v685
      %v687 = vmul.f32 %v680, %v685
      %v688 = vmul.f32 %v681, %v685
      %v689 = vlaneseq
      %v690 = vshrl.u32 %v689, 7
      %v691 = vsub.s32 1, %v690
      %v692 = vrot.slane %v641, %v691
      %v693 = vadd.f32 %v686, %v692
      %v694 = vadd.f32 %v687, %v692
      %v695 = vadd.f32 %v688, %v692
      %v696 = vpack.c.bf16 %v694, %v693
      %v697 = vpack.c.bf16 %v695, %v695
      %v698 = vld [vmem:[%s6] sm:$0xf]
      %v699 = vld [vmem:[%s6 + $0x4] sm:$0xf]
      %v700 = vld [vmem:[%s6 + $0x8] sm:$0xf]
      %v701 = vld [vmem:[%s6 + $0xc] sm:$0xf]
      %v702 = vld [vmem:[%s7] sm:$0x1]
      %v704 = vlaneseq
      %v705 = vshrl.u32 %v704, 7
      %v706 = vsub.s32 0, %v705
      %v707 = vrot.slane %v702, %v706
      %v713 = vunpack.c.l.b16 %v698
      %v714 = vunpack.c.l.b16 %v699
      %v715 = vunpack.c.l.b16 %v700
      %v716 = vunpack.c.l.b16 %v701
      %v717 = vpack.c.b16 %v714, %v713
      %v718 = vpack.c.b16 %v716, %v715
      %v722 = vsel %vm620, %v696, 0
      %v725 = vsel %vm620, %v697, 0
      %727 = vmatprep.subr.bf16.mxu0 0
      %728 = vmatpush1.bf16.msra.mxu0 %v717
      %729 = vmatprep.subr.bf16.mxu0 0
      %730 = vmatpush1.bf16.msra.mxu0 %v718
      %731 = vmatprep.subr.bf16.mxu0 0
      %732 = vmatpush1.bf16.msra.mxu0 0
      %733 = vmatprep.subr.bf16.mxu0 0
      %734 = vmatpush1.bf16.msra.mxu0 0
      %735 = vmatprep.subr.bf16.mxu0 0
      %736 = vmatpush1.bf16.msra.mxu0 0
      %737 = vmatprep.subr.bf16.mxu0 0
      %738 = vmatpush1.bf16.msra.mxu0 0
      %739 = vmatprep.subr.bf16.mxu0 0
      %740 = vmatpush1.bf16.msra.mxu0 0
      %741 = vmatprep.subr.bf16.mxu0 0
      %742 = vmatpush1.bf16.msra.mxu0 0
      %743 = vmatprep.subr.bf16.mxu0 0
      %744 = vmatpush1.bf16.msra.mxu0 0
      %745 = vmatprep.subr.bf16.mxu0 0
      %746 = vmatpush1.bf16.msra.mxu0 0
      %747 = vmatprep.subr.bf16.mxu0 0
      %748 = vmatpush1.bf16.msra.mxu0 0
      %749 = vmatprep.subr.bf16.mxu0 0
      %750 = vmatpush1.bf16.msra.mxu0 0
      %751 = vmatprep.subr.bf16.mxu0 0
      %752 = vmatpush1.bf16.msra.mxu0 0
      %753 = vmatprep.subr.bf16.mxu0 0
      %754 = vmatpush1.bf16.msra.mxu0 0
      %755 = vmatprep.subr.bf16.mxu0 0
      %756 = vmatpush1.bf16.msra.mxu0 0
      %757 = vmatprep.subr.bf16.mxu0 0
      %758 = vmatpush1.bf16.msra.mxu0 0
      %759 = vmatprep.mubr.bf16.mxu0 0
      %760 = vmatmul.mubr.bf16.gmra.mrb[0].mxu0 %v722
      %v761 = vpop.f32.mrb[0].mxu0
      %v762 = vadd.f32 %v707, %v761
      %v763 = vpop.f32.mrb[0].mxu0
      %v764 = vpop.f32.mrb[0].mxu0
      %v765 = vadd.f32 %v707, %v764
      %v766 = vpop.f32.mrb[0].mxu0
      %767 = vmatprep.mubr.bf16.mxu0 0
      %768 = vmatmul.mubr.bf16.gmra.mrb[0].mxu0 %v725
      %v769 = vpop.f32.mrb[0].mxu0
      %v770 = vadd.f32 %v707, %v769
      %v771 = vpop.f32.mrb[0].mxu0
      %v772 = vpop.f32.mrb[0].mxu0
      %v773 = vpop.f32.mrb[0].mxu0
      %774 = vdwg.mxu0
      %v775 = vpack.c.bf16 %v765, %v762
      %v776 = vpack.c.bf16 %v770, %v770
      %779 = vrot.lane.b32.xlu0 %v775, 96
      %v780 = vpop.permute.xlu0 %779
      %781 = vrot.lane.b32.xlu0 %v776, 96
      %v782 = vpop.permute.xlu0 %781
      %vm783 = vcmask 64512
      %v785 = vsel %vm783, %v775, 0
      %v788 = vsel %vm783, %v776, 0
      %v791 = vsel %vm783, %v780, 0
      %v794 = vsel %vm783, %v782, 0
      %796 = vmatprep.subr.bf16.mxu0 0
      %797 = vmatpush1.bf16.xpose.msra.mxu0 %v791
      %798 = vmatprep.subr.bf16.mxu0 0
      %799 = vmatpush1.bf16.xpose.msra.mxu0 %v794
      %800 = vmatprep.subr.bf16.mxu0 0
      %801 = vmatpush1.bf16.xpose.msra.mxu0 0
      %802 = vmatprep.subr.bf16.mxu0 0
      %803 = vmatpush1.bf16.xpose.msra.mxu0 0
      %804 = vmatprep.subr.bf16.mxu0 0
      %805 = vmatpush1.bf16.xpose.msra.mxu0 0
      %806 = vmatprep.subr.bf16.mxu0 0
      %807 = vmatpush1.bf16.xpose.msra.mxu0 0
      %808 = vmatprep.subr.bf16.mxu0 0
      %809 = vmatpush1.bf16.xpose.msra.mxu0 0
      %810 = vmatprep.subr.bf16.mxu0 0
      %811 = vmatpush1.bf16.xpose.msra.mxu0 0
      %812 = vmatprep.subr.bf16.mxu0 0
      %813 = vmatpush1.bf16.xpose.msra.mxu0 0
      %814 = vmatprep.subr.bf16.mxu0 0
      %815 = vmatpush1.bf16.xpose.msra.mxu0 0
      %816 = vmatprep.subr.bf16.mxu0 0
      %817 = vmatpush1.bf16.xpose.msra.mxu0 0
      %818 = vmatprep.subr.bf16.mxu0 0
      %819 = vmatpush1.bf16.xpose.msra.mxu0 0
      %820 = vmatprep.subr.bf16.mxu0 0
      %821 = vmatpush1.bf16.xpose.msra.mxu0 0
      %822 = vmatprep.subr.bf16.mxu0 0
      %823 = vmatpush1.bf16.xpose.msra.mxu0 0
      %824 = vmatprep.subr.bf16.mxu0 0
      %825 = vmatpush1.bf16.xpose.msra.mxu0 0
      %826 = vmatprep.subr.bf16.mxu0 0
      %827 = vmatpush1.bf16.xpose.msra.mxu0 0
      %828 = vmatprep.mubr.bf16.mxu0 0
      %829 = vmatmul.mubr.bf16.gmra.mrb[0].mxu0 %v785
      %v830 = vpop.f32.mrb[0].mxu0
      %v831 = vadd.f32 0.0, %v830
      %v832 = vpop.f32.mrb[0].mxu0
      %v833 = vpop.f32.mrb[0].mxu0
      %v834 = vadd.f32 0.0, %v833
      %v835 = vpop.f32.mrb[0].mxu0
      %836 = vmatprep.mubr.bf16.mxu0 0
      %837 = vmatmul.mubr.bf16.gmra.mrb[0].mxu0 %v788
      %v838 = vpop.f32.mrb[0].mxu0
      %v839 = vadd.f32 0.0, %v838
      %v840 = vpop.f32.mrb[0].mxu0
      %v841 = vpop.f32.mrb[0].mxu0
      %v842 = vpop.f32.mrb[0].mxu0
      %843 = vdwg.mxu0
      %vm844 = vcmask 138240
      %v845 = vsel %vm844, %v831, -inf
      %846 = vmax.xlane.f32.xlu0 %v845
      %v847 = vpop.xlane.xlu0 %846
      %v848 = vsel %vm844, %v834, -inf
      %849 = vmax.xlane.f32.xlu0 %v848
      %v850 = vpop.xlane.xlu0 %849
      %vm851 = vcmask 131072
      %v852 = vsel %vm851, %v839, -inf
      %853 = vmax.xlane.f32.xlu0 %v852
      %v854 = vpop.xlane.xlu0 %853
      %v855 = vsub.f32 %v831, %v847
      %v856 = vsub.f32 %v834, %v850
      %v857 = vsub.f32 %v839, %v854
      %v858 = vmul.f32 %v855, 1.442695
      %v859 = vpow.pop %v858
      %v860 = vmul.f32 %v856, 1.442695
      %v861 = vpow.pop %v860
      %v862 = vmul.f32 %v857, 1.442695
      %v863 = vpow.pop %v862
      %v864 = vsel %vm844, %v859, 0.0
      %865 = vadd.xlane.f32.xlu0 %v864
      %v866 = vpop.xlane.xlu0 %865
      %v867 = vsel %vm844, %v861, 0.0
      %868 = vadd.xlane.f32.xlu0 %v867
      %v869 = vpop.xlane.xlu0 %868
      %v870 = vsel %vm851, %v863, 0.0
      %871 = vadd.xlane.f32.xlu0 %v870
      %v872 = vpop.xlane.xlu0 %871
      %v873 = vrcp.pop %v866
      %v874 = vrcp.pop %v869
      %v875 = vrcp.pop %v872
      %v876 = vmul.f32 %v859, %v873
      %v877 = vmul.f32 %v861, %v874
      %v878 = vmul.f32 %v863, %v875
      %v879 = vpack.c.bf16 %v877, %v876
      %v880 = vpack.c.bf16 %v878, %v878
      %881 = vrot.lane.b32.xlu0 %v775, 64
      %v882 = vpop.permute.xlu0 %881
      %883 = vrot.lane.b32.xlu0 %v776, 64
      %v884 = vpop.permute.xlu0 %883
      %v887 = vsel %vm844, %v879, 0
      %v890 = vsel %vm844, %v880, 0
      %vm892 = vcmask 1040384
      %v893 = vsel 0, 4294967295, 65535
      %v894 = vsel %vm892, %v893, 0
      %v896 = vand.u32 %v884, %v894
      %898 = vmatprep.subr.bf16.mxu0 0
      %899 = vmatpush1.bf16.msra.mxu0 %v882
      %900 = vmatprep.subr.bf16.mxu0 0
      %901 = vmatpush1.bf16.msra.mxu0 %v896
      %902 = vmatprep.subr.bf16.mxu0 0
      %903 = vmatpush1.bf16.msra.mxu0 0
      %904 = vmatprep.subr.bf16.mxu0 0
      %905 = vmatpush1.bf16.msra.mxu0 0
      %906 = vmatprep.subr.bf16.mxu0 0
      %907 = vmatpush1.bf16.msra.mxu0 0
      %908 = vmatprep.subr.bf16.mxu0 0
      %909 = vmatpush1.bf16.msra.mxu0 0
      %910 = vmatprep.subr.bf16.mxu0 0
      %911 = vmatpush1.bf16.msra.mxu0 0
      %912 = vmatprep.subr.bf16.mxu0 0
      %913 = vmatpush1.bf16.msra.mxu0 0
      %914 = vmatprep.subr.bf16.mxu0 0
      %915 = vmatpush1.bf16.msra.mxu0 0
      %916 = vmatprep.subr.bf16.mxu0 0
      %917 = vmatpush1.bf16.msra.mxu0 0
      %918 = vmatprep.subr.bf16.mxu0 0
      %919 = vmatpush1.bf16.msra.mxu0 0
      %920 = vmatprep.subr.bf16.mxu0 0
      %921 = vmatpush1.bf16.msra.mxu0 0
      %922 = vmatprep.subr.bf16.mxu0 0
      %923 = vmatpush1.bf16.msra.mxu0 0
      %924 = vmatprep.subr.bf16.mxu0 0
      %925 = vmatpush1.bf16.msra.mxu0 0
      %926 = vmatprep.subr.bf16.mxu0 0
      %927 = vmatpush1.bf16.msra.mxu0 0
      %928 = vmatprep.subr.bf16.mxu0 0
      %929 = vmatpush1.bf16.msra.mxu0 0
      %930 = vmatprep.mubr.bf16.mxu0 0
      %931 = vmatmul.mubr.bf16.gmra.mrb[0].mxu0 %v887
      %v932 = vpop.f32.mrb[0].mxu0
      %v933 = vadd.f32 0.0, %v932
      %v934 = vpop.f32.mrb[0].mxu0
      %v935 = vpop.f32.mrb[0].mxu0
      %v936 = vadd.f32 0.0, %v935
      %v937 = vpop.f32.mrb[0].mxu0
      %938 = vmatprep.mubr.bf16.mxu0 0
      %939 = vmatmul.mubr.bf16.gmra.mrb[0].mxu0 %v890
      %v940 = vpop.f32.mrb[0].mxu0
      %v941 = vadd.f32 0.0, %v940
      %v942 = vpop.f32.mrb[0].mxu0
      %v943 = vpop.f32.mrb[0].mxu0
      %v944 = vpop.f32.mrb[0].mxu0
      %945 = vdwg.mxu0
      %946 = vrot.lane.b32.xlu0 %v775, 120
      %v947 = vpop.permute.xlu0 %946
      %948 = vrot.lane.b32.xlu0 %v776, 120
      %v949 = vpop.permute.xlu0 %948
      %950 = vrot.lane.b32.xlu0 %v775, 88
      %v951 = vpop.permute.xlu0 %950
      %952 = vrot.lane.b32.xlu0 %v776, 88
      %v953 = vpop.permute.xlu0 %952
      %v955 = vsel %vm783, %v947, 0
      %v958 = vsel %vm783, %v949, 0
      %v961 = vsel %vm783, %v951, 0
      %v964 = vsel %vm783, %v953, 0
      %966 = vmatprep.subr.bf16.mxu0 0
      %967 = vmatpush1.bf16.xpose.msra.mxu0 %v961
      %968 = vmatprep.subr.bf16.mxu0 0
      %969 = vmatpush1.bf16.xpose.msra.mxu0 %v964
      %970 = vmatprep.subr.bf16.mxu0 0
      %971 = vmatpush1.bf16.xpose.msra.mxu0 0
      %972 = vmatprep.subr.bf16.mxu0 0
      %973 = vmatpush1.bf16.xpose.msra.mxu0 0
      %974 = vmatprep.subr.bf16.mxu0 0
      %975 = vmatpush1.bf16.xpose.msra.mxu0 0
      %976 = vmatprep.subr.bf16.mxu0 0
      %977 = vmatpush1.bf16.xpose.msra.mxu0 0
      %978 = vmatprep.subr.bf16.mxu0 0
      %979 = vmatpush1.bf16.xpose.msra.mxu0 0
      %980 = vmatprep.subr.bf16.mxu0 0
      %981 = vmatpush1.bf16.xpose.msra.mxu0 0
      %982 = vmatprep.subr.bf16.mxu0 0
      %983 = vmatpush1.bf16.xpose.msra.mxu0 0
      %984 = vmatprep.subr.bf16.mxu0 0
      %985 = vmatpush1.bf16.xpose.msra.mxu0 0
      %986 = vmatprep.subr.bf16.mxu0 0
      %987 = vmatpush1.bf16.xpose.msra.mxu0 0
      %988 = vmatprep.subr.bf16.mxu0 0
      %989 = vmatpush1.bf16.xpose.msra.mxu0 0
      %990 = vmatprep.subr.bf16.mxu0 0
      %991 = vmatpush1.bf16.xpose.msra.mxu0 0
      %992 = vmatprep.subr.bf16.mxu0 0
      %993 = vmatpush1.bf16.xpose.msra.mxu0 0
      %994 = vmatprep.subr.bf16.mxu0 0
      %995 = vmatpush1.bf16.xpose.msra.mxu0 0
      %996 = vmatprep.subr.bf16.mxu0 0
      %997 = vmatpush1.bf16.xpose.msra.mxu0 0
      %998 = vmatprep.mubr.bf16.mxu0 0
      %999 = vmatmul.mubr.bf16.gmra.mrb[0].mxu0 %v955
      %v1000 = vpop.f32.mrb[0].mxu0
      %v1001 = vadd.f32 0.0, %v1000
      %v1002 = vpop.f32.mrb[0].mxu0
      %v1003 = vpop.f32.mrb[0].mxu0
      %v1004 = vadd.f32 0.0, %v1003
      %v1005 = vpop.f32.mrb[0].mxu0
      %1006 = vmatprep.mubr.bf16.mxu0 0
      %1007 = vmatmul.mubr.bf16.gmra.mrb[0].mxu0 %v958
      %v1008 = vpop.f32.mrb[0].mxu0
      %v1009 = vadd.f32 0.0, %v1008
      %v1010 = vpop.f32.mrb[0].mxu0
      %v1011 = vpop.f32.mrb[0].mxu0
      %v1012 = vpop.f32.mrb[0].mxu0
      %1013 = vdwg.mxu0
      %v1014 = vsel %vm844, %v1001, -inf
      %1015 = vmax.xlane.f32.xlu0 %v1014
      %v1016 = vpop.xlane.xlu0 %1015
      %v1017 = vsel %vm844, %v1004, -inf
      %1018 = vmax.xlane.f32.xlu0 %v1017
      %v1019 = vpop.xlane.xlu0 %1018
      %v1020 = vsel %vm851, %v1009, -inf
      %1021 = vmax.xlane.f32.xlu0 %v1020
      %v1022 = vpop.xlane.xlu0 %1021
      %v1023 = vsub.f32 %v1001, %v1016
      %v1024 = vsub.f32 %v1004, %v1019
      %v1025 = vsub.f32 %v1009, %v1022
      %v1026 = vmul.f32 %v1023, 1.442695
      %v1027 = vpow.pop %v1026
      %v1028 = vmul.f32 %v1024, 1.442695
      %v1029 = vpow.pop %v1028
      %v1030 = vmul.f32 %v1025, 1.442695
      %v1031 = vpow.pop %v1030
      %v1032 = vsel %vm844, %v1027, 0.0
      %1033 = vadd.xlane.f32.xlu0 %v1032
      %v1034 = vpop.xlane.xlu0 %1033
      %v1035 = vsel %vm844, %v1029, 0.0
      %1036 = vadd.xlane.f32.xlu0 %v1035
      %v1037 = vpop.xlane.xlu0 %1036
      %v1038 = vsel %vm851, %v1031, 0.0
      %1039 = vadd.xlane.f32.xlu0 %v1038
      %v1040 = vpop.xlane.xlu0 %1039
      %v1041 = vrcp.pop %v1034
      %v1042 = vrcp.pop %v1037
      %v1043 = vrcp.pop %v1040
      %v1044 = vmul.f32 %v1027, %v1041
      %v1045 = vmul.f32 %v1029, %v1042
      %v1046 = vmul.f32 %v1031, %v1043
      %v1047 = vadd.f32 %v876, %v1044
      %v1048 = vadd.f32 %v877, %v1045
      %v1049 = vadd.f32 %v878, %v1046
      %v1050 = vpack.c.bf16 %v1045, %v1044
      %v1051 = vpack.c.bf16 %v1046, %v1046
      %1052 = vrot.lane.b32.xlu0 %v775, 56
      %v1053 = vpop.permute.xlu0 %1052
      %1054 = vrot.lane.b32.xlu0 %v776, 56
      %v1055 = vpop.permute.xlu0 %1054
      %v1058 = vsel %vm844, %v1050, 0
      %v1061 = vsel %vm844, %v1051, 0
      %v1064 = vand.u32 %v1055, %v894
      %1066 = vmatprep.subr.bf16.mxu0 0
      %1067 = vmatpush1.bf16.msra.mxu0 %v1053
      %1068 = vmatprep.subr.bf16.mxu0 0
      %1069 = vmatpush1.bf16.msra.mxu0 %v1064
      %1070 = vmatprep.subr.bf16.mxu0 0
      %1071 = vmatpush1.bf16.msra.mxu0 0
      %1072 = vmatprep.subr.bf16.mxu0 0
      %1073 = vmatpush1.bf16.msra.mxu0 0
      %1074 = vmatprep.subr.bf16.mxu0 0
      %1075 = vmatpush1.bf16.msra.mxu0 0
      %1076 = vmatprep.subr.bf16.mxu0 0
      %1077 = vmatpush1.bf16.msra.mxu0 0
      %1078 = vmatprep.subr.bf16.mxu0 0
      %1079 = vmatpush1.bf16.msra.mxu0 0
      %1080 = vmatprep.subr.bf16.mxu0 0
      %1081 = vmatpush1.bf16.msra.mxu0 0
      %1082 = vmatprep.subr.bf16.mxu0 0
      %1083 = vmatpush1.bf16.msra.mxu0 0
      %1084 = vmatprep.subr.bf16.mxu0 0
      %1085 = vmatpush1.bf16.msra.mxu0 0
      %1086 = vmatprep.subr.bf16.mxu0 0
      %1087 = vmatpush1.bf16.msra.mxu0 0
      %1088 = vmatprep.subr.bf16.mxu0 0
      %1089 = vmatpush1.bf16.msra.mxu0 0
      %1090 = vmatprep.subr.bf16.mxu0 0
      %1091 = vmatpush1.bf16.msra.mxu0 0
      %1092 = vmatprep.subr.bf16.mxu0 0
      %1093 = vmatpush1.bf16.msra.mxu0 0
      %1094 = vmatprep.subr.bf16.mxu0 0
      %1095 = vmatpush1.bf16.msra.mxu0 0
      %1096 = vmatprep.subr.bf16.mxu0 0
      %1097 = vmatpush1.bf16.msra.mxu0 0
      %1098 = vmatprep.mubr.bf16.mxu0 0
      %1099 = vmatmul.mubr.bf16.gmra.mrb[0].mxu0 %v1058
      %v1100 = vpop.f32.mrb[0].mxu0
      %v1101 = vadd.f32 0.0, %v1100
      %v1102 = vpop.f32.mrb[0].mxu0
      %v1103 = vpop.f32.mrb[0].mxu0
      %v1104 = vadd.f32 0.0, %v1103
      %v1105 = vpop.f32.mrb[0].mxu0
      %1106 = vmatprep.mubr.bf16.mxu0 0
      %1107 = vmatmul.mubr.bf16.gmra.mrb[0].mxu0 %v1061
      %v1108 = vpop.f32.mrb[0].mxu0
      %v1109 = vadd.f32 0.0, %v1108
      %v1110 = vpop.f32.mrb[0].mxu0
      %v1111 = vpop.f32.mrb[0].mxu0
      %v1112 = vpop.f32.mrb[0].mxu0
      %1113 = vdwg.mxu0
      %1114 = vrot.lane.b32.xlu0 %v775, 112
      %v1115 = vpop.permute.xlu0 %1114
      %1116 = vrot.lane.b32.xlu0 %v776, 112
      %v1117 = vpop.permute.xlu0 %1116
      %1118 = vrot.lane.b32.xlu0 %v775, 80
      %v1119 = vpop.permute.xlu0 %1118
      %1120 = vrot.lane.b32.xlu0 %v776, 80
      %v1121 = vpop.permute.xlu0 %1120
      %v1123 = vsel %vm783, %v1115, 0
      %v1126 = vsel %vm783, %v1117, 0
      %v1129 = vsel %vm783, %v1119, 0
      %v1132 = vsel %vm783, %v1121, 0
      %1134 = vmatprep.subr.bf16.mxu0 0
      %1135 = vmatpush1.bf16.xpose.msra.mxu0 %v1129
      %1136 = vmatprep.subr.bf16.mxu0 0
      %1137 = vmatpush1.bf16.xpose.msra.mxu0 %v1132
      %1138 = vmatprep.subr.bf16.mxu0 0
      %1139 = vmatpush1.bf16.xpose.msra.mxu0 0
      %1140 = vmatprep.subr.bf16.mxu0 0
      %1141 = vmatpush1.bf16.xpose.msra.mxu0 0
      %1142 = vmatprep.subr.bf16.mxu0 0
      %1143 = vmatpush1.bf16.xpose.msra.mxu0 0
      %1144 = vmatprep.subr.bf16.mxu0 0
      %1145 = vmatpush1.bf16.xpose.msra.mxu0 0
      %1146 = vmatprep.subr.bf16.mxu0 0
      %1147 = vmatpush1.bf16.xpose.msra.mxu0 0
      %1148 = vmatprep.subr.bf16.mxu0 0
      %1149 = vmatpush1.bf16.xpose.msra.mxu0 0
      %1150 = vmatprep.subr.bf16.mxu0 0
      %1151 = vmatpush1.bf16.xpose.msra.mxu0 0
      %1152 = vmatprep.subr.bf16.mxu0 0
      %1153 = vmatpush1.bf16.xpose.msra.mxu0 0
      %1154 = vmatprep.subr.bf16.mxu0 0
      %1155 = vmatpush1.bf16.xpose.msra.mxu0 0
      %1156 = vmatprep.subr.bf16.mxu0 0
      %1157 = vmatpush1.bf16.xpose.msra.mxu0 0
      %1158 = vmatprep.subr.bf16.mxu0 0
      %1159 = vmatpush1.bf16.xpose.msra.mxu0 0
      %1160 = vmatprep.subr.bf16.mxu0 0
      %1161 = vmatpush1.bf16.xpose.msra.mxu0 0
      %1162 = vmatprep.subr.bf16.mxu0 0
      %1163 = vmatpush1.bf16.xpose.msra.mxu0 0
      %1164 = vmatprep.subr.bf16.mxu0 0
      %1165 = vmatpush1.bf16.xpose.msra.mxu0 0
      %1166 = vmatprep.mubr.bf16.mxu0 0
      %1167 = vmatmul.mubr.bf16.gmra.mrb[0].mxu0 %v1123
      %v1168 = vpop.f32.mrb[0].mxu0
      %v1169 = vadd.f32 0.0, %v1168
      %v1170 = vpop.f32.mrb[0].mxu0
      %v1171 = vpop.f32.mrb[0].mxu0
      %v1172 = vadd.f32 0.0, %v1171
      %v1173 = vpop.f32.mrb[0].mxu0
      %1174 = vmatprep.mubr.bf16.mxu0 0
      %1175 = vmatmul.mubr.bf16.gmra.mrb[0].mxu0 %v1126
      %v1176 = vpop.f32.mrb[0].mxu0
      %v1177 = vadd.f32 0.0, %v1176
      %v1178 = vpop.f32.mrb[0].mxu0
      %v1179 = vpop.f32.mrb[0].mxu0
      %v1180 = vpop.f32.mrb[0].mxu0
      %1181 = vdwg.mxu0
      %v1182 = vsel %vm844, %v1169, -inf
      %1183 = vmax.xlane.f32.xlu0 %v1182
      %v1184 = vpop.xlane.xlu0 %1183
      %v1185 = vsel %vm844, %v1172, -inf
      %1186 = vmax.xlane.f32.xlu0 %v1185
      %v1187 = vpop.xlane.xlu0 %1186
      %v1188 = vsel %vm851, %v1177, -inf
      %1189 = vmax.xlane.f32.xlu0 %v1188
      %v1190 = vpop.xlane.xlu0 %1189
      %v1191 = vsub.f32 %v1169, %v1184
      %v1192 = vsub.f32 %v1172, %v1187
      %v1193 = vsub.f32 %v1177, %v1190
      %v1194 = vmul.f32 %v1191, 1.442695
      %v1195 = vpow.pop %v1194
      %v1196 = vmul.f32 %v1192, 1.442695
      %v1197 = vpow.pop %v1196
      %v1198 = vmul.f32 %v1193, 1.442695
      %v1199 = vpow.pop %v1198
      %v1200 = vsel %vm844, %v1195, 0.0
      %1201 = vadd.xlane.f32.xlu0 %v1200
      %v1202 = vpop.xlane.xlu0 %1201
      %v1203 = vsel %vm844, %v1197, 0.0
      %1204 = vadd.xlane.f32.xlu0 %v1203
      %v1205 = vpop.xlane.xlu0 %1204
      %v1206 = vsel %vm851, %v1199, 0.0
      %1207 = vadd.xlane.f32.xlu0 %v1206
      %v1208 = vpop.xlane.xlu0 %1207
      %v1209 = vrcp.pop %v1202
      %v1210 = vrcp.pop %v1205
      %v1211 = vrcp.pop %v1208
      %v1212 = vmul.f32 %v1195, %v1209
      %v1213 = vmul.f32 %v1197, %v1210
      %v1214 = vmul.f32 %v1199, %v1211
      %v1215 = vadd.f32 %v1047, %v1212
      %v1216 = vadd.f32 %v1048, %v1213
      %v1217 = vadd.f32 %v1049, %v1214
      %v1218 = vpack.c.bf16 %v1213, %v1212
      %v1219 = vpack.c.bf16 %v1214, %v1214
      %1220 = vrot.lane.b32.xlu0 %v775, 48
      %v1221 = vpop.permute.xlu0 %1220
      %1222 = vrot.lane.b32.xlu0 %v776, 48
      %v1223 = vpop.permute.xlu0 %1222
      %v1226 = vsel %vm844, %v1218, 0
      %v1229 = vsel %vm844, %v1219, 0
      %v1232 = vand.u32 %v1223, %v894
      %1234 = vmatprep.subr.bf16.mxu0 0
      %1235 = vmatpush1.bf16.msra.mxu0 %v1221
      %1236 = vmatprep.subr.bf16.mxu0 0
      %1237 = vmatpush1.bf16.msra.mxu0 %v1232
      %1238 = vmatprep.subr.bf16.mxu0 0
      %1239 = vmatpush1.bf16.msra.mxu0 0
      %1240 = vmatprep.subr.bf16.mxu0 0
      %1241 = vmatpush1.bf16.msra.mxu0 0
      %1242 = vmatprep.subr.bf16.mxu0 0
      %1243 = vmatpush1.bf16.msra.mxu0 0
      %1244 = vmatprep.subr.bf16.mxu0 0
      %1245 = vmatpush1.bf16.msra.mxu0 0
      %1246 = vmatprep.subr.bf16.mxu0 0
      %1247 = vmatpush1.bf16.msra.mxu0 0
      %1248 = vmatprep.subr.bf16.mxu0 0
      %1249 = vmatpush1.bf16.msra.mxu0 0
      %1250 = vmatprep.subr.bf16.mxu0 0
      %1251 = vmatpush1.bf16.msra.mxu0 0
      %1252 = vmatprep.subr.bf16.mxu0 0
      %1253 = vmatpush1.bf16.msra.mxu0 0
      %1254 = vmatprep.subr.bf16.mxu0 0
      %1255 = vmatpush1.bf16.msra.mxu0 0
      %1256 = vmatprep.subr.bf16.mxu0 0
      %1257 = vmatpush1.bf16.msra.mxu0 0
      %1258 = vmatprep.subr.bf16.mxu0 0
      %1259 = vmatpush1.bf16.msra.mxu0 0
      %1260 = vmatprep.subr.bf16.mxu0 0
      %1261 = vmatpush1.bf16.msra.mxu0 0
      %1262 = vmatprep.subr.bf16.mxu0 0
      %1263 = vmatpush1.bf16.msra.mxu0 0
      %1264 = vmatprep.subr.bf16.mxu0 0
      %1265 = vmatpush1.bf16.msra.mxu0 0
      %1266 = vmatprep.mubr.bf16.mxu0 0
      %1267 = vmatmul.mubr.bf16.gmra.mrb[0].mxu0 %v1226
      %v1268 = vpop.f32.mrb[0].mxu0
      %v1269 = vadd.f32 0.0, %v1268
      %v1270 = vpop.f32.mrb[0].mxu0
      %v1271 = vpop.f32.mrb[0].mxu0
      %v1272 = vadd.f32 0.0, %v1271
      %v1273 = vpop.f32.mrb[0].mxu0
      %1274 = vmatprep.mubr.bf16.mxu0 0
      %1275 = vmatmul.mubr.bf16.gmra.mrb[0].mxu0 %v1229
      %v1276 = vpop.f32.mrb[0].mxu0
      %v1277 = vadd.f32 0.0, %v1276
      %v1278 = vpop.f32.mrb[0].mxu0
      %v1279 = vpop.f32.mrb[0].mxu0
      %v1280 = vpop.f32.mrb[0].mxu0
      %1281 = vdwg.mxu0
      %1282 = vrot.lane.b32.xlu0 %v775, 104
      %v1283 = vpop.permute.xlu0 %1282
      %1284 = vrot.lane.b32.xlu0 %v776, 104
      %v1285 = vpop.permute.xlu0 %1284
      %1286 = vrot.lane.b32.xlu0 %v775, 72
      %v1287 = vpop.permute.xlu0 %1286
      %1288 = vrot.lane.b32.xlu0 %v776, 72
      %v1289 = vpop.permute.xlu0 %1288
      %v1291 = vsel %vm783, %v1283, 0
      %v1294 = vsel %vm783, %v1285, 0
      %v1297 = vsel %vm783, %v1287, 0
      %v1300 = vsel %vm783, %v1289, 0
      %1302 = vmatprep.subr.bf16.mxu0 0
      %1303 = vmatpush1.bf16.xpose.msra.mxu0 %v1297
      %1304 = vmatprep.subr.bf16.mxu0 0
      %1305 = vmatpush1.bf16.xpose.msra.mxu0 %v1300
      %1306 = vmatprep.subr.bf16.mxu0 0
      %1307 = vmatpush1.bf16.xpose.msra.mxu0 0
      %1308 = vmatprep.subr.bf16.mxu0 0
      %1309 = vmatpush1.bf16.xpose.msra.mxu0 0
      %1310 = vmatprep.subr.bf16.mxu0 0
      %1311 = vmatpush1.bf16.xpose.msra.mxu0 0
      %1312 = vmatprep.subr.bf16.mxu0 0
      %1313 = vmatpush1.bf16.xpose.msra.mxu0 0
      %1314 = vmatprep.subr.bf16.mxu0 0
      %1315 = vmatpush1.bf16.xpose.msra.mxu0 0
      %1316 = vmatprep.subr.bf16.mxu0 0
      %1317 = vmatpush1.bf16.xpose.msra.mxu0 0
      %1318 = vmatprep.subr.bf16.mxu0 0
      %1319 = vmatpush1.bf16.xpose.msra.mxu0 0
      %1320 = vmatprep.subr.bf16.mxu0 0
      %1321 = vmatpush1.bf16.xpose.msra.mxu0 0
      %1322 = vmatprep.subr.bf16.mxu0 0
      %1323 = vmatpush1.bf16.xpose.msra.mxu0 0
      %1324 = vmatprep.subr.bf16.mxu0 0
      %1325 = vmatpush1.bf16.xpose.msra.mxu0 0
      %1326 = vmatprep.subr.bf16.mxu0 0
      %1327 = vmatpush1.bf16.xpose.msra.mxu0 0
      %1328 = vmatprep.subr.bf16.mxu0 0
      %1329 = vmatpush1.bf16.xpose.msra.mxu0 0
      %1330 = vmatprep.subr.bf16.mxu0 0
      %1331 = vmatpush1.bf16.xpose.msra.mxu0 0
      %1332 = vmatprep.subr.bf16.mxu0 0
      %1333 = vmatpush1.bf16.xpose.msra.mxu0 0
      %1334 = vmatprep.mubr.bf16.mxu0 0
      %1335 = vmatmul.mubr.bf16.gmra.mrb[0].mxu0 %v1291
      %v1336 = vpop.f32.mrb[0].mxu0
      %v1337 = vadd.f32 0.0, %v1336
      %v1338 = vpop.f32.mrb[0].mxu0
      %v1339 = vpop.f32.mrb[0].mxu0
      %v1340 = vadd.f32 0.0, %v1339
      %v1341 = vpop.f32.mrb[0].mxu0
      %1342 = vmatprep.mubr.bf16.mxu0 0
      %1343 = vmatmul.mubr.bf16.gmra.mrb[0].mxu0 %v1294
      %v1344 = vpop.f32.mrb[0].mxu0
      %v1345 = vadd.f32 0.0, %v1344
      %v1346 = vpop.f32.mrb[0].mxu0
      %v1347 = vpop.f32.mrb[0].mxu0
      %v1348 = vpop.f32.mrb[0].mxu0
      %1349 = vdwg.mxu0
      %v1350 = vsel %vm844, %v1337, -inf
      %1351 = vmax.xlane.f32.xlu0 %v1350
      %v1352 = vpop.xlane.xlu0 %1351
      %v1353 = vsel %vm844, %v1340, -inf
      %1354 = vmax.xlane.f32.xlu0 %v1353
      %v1355 = vpop.xlane.xlu0 %1354
      %v1356 = vsel %vm851, %v1345, -inf
      %1357 = vmax.xlane.f32.xlu0 %v1356
      %v1358 = vpop.xlane.xlu0 %1357
      %v1359 = vsub.f32 %v1337, %v1352
      %v1360 = vsub.f32 %v1340, %v1355
      %v1361 = vsub.f32 %v1345, %v1358
      %v1362 = vmul.f32 %v1359, 1.442695
      %v1363 = vpow.pop %v1362
      %v1364 = vmul.f32 %v1360, 1.442695
      %v1365 = vpow.pop %v1364
      %v1366 = vmul.f32 %v1361, 1.442695
      %v1367 = vpow.pop %v1366
      %v1368 = vsel %vm844, %v1363, 0.0
      %1369 = vadd.xlane.f32.xlu0 %v1368
      %v1370 = vpop.xlane.xlu0 %1369
      %v1371 = vsel %vm844, %v1365, 0.0
      %1372 = vadd.xlane.f32.xlu0 %v1371
      %v1373 = vpop.xlane.xlu0 %1372
      %v1374 = vsel %vm851, %v1367, 0.0
      %1375 = vadd.xlane.f32.xlu0 %v1374
      %v1376 = vpop.xlane.xlu0 %1375
      %v1377 = vrcp.pop %v1370
      %v1378 = vrcp.pop %v1373
      %v1379 = vrcp.pop %v1376
      %v1380 = vmul.f32 %v1363, %v1377
      %v1381 = vmul.f32 %v1365, %v1378
      %v1382 = vmul.f32 %v1367, %v1379
      %v1383 = vadd.f32 %v1215, %v1380
      %v1384 = vadd.f32 %v1216, %v1381
      %v1385 = vadd.f32 %v1217, %v1382
      %v1386 = vpack.c.bf16 %v1381, %v1380
      %v1387 = vpack.c.bf16 %v1382, %v1382
      %1388 = vrot.lane.b32.xlu0 %v775, 40
      %v1389 = vpop.permute.xlu0 %1388
      %1390 = vrot.lane.b32.xlu0 %v776, 40
      %v1391 = vpop.permute.xlu0 %1390
      %v1394 = vsel %vm844, %v1386, 0
      %v1397 = vsel %vm844, %v1387, 0
      %v1400 = vand.u32 %v1391, %v894
      %1402 = vmatprep.subr.bf16.mxu0 0
      %1403 = vmatpush1.bf16.msra.mxu0 %v1389
      %1404 = vmatprep.subr.bf16.mxu0 0
      %1405 = vmatpush1.bf16.msra.mxu0 %v1400
      %1406 = vmatprep.subr.bf16.mxu0 0
      %1407 = vmatpush1.bf16.msra.mxu0 0
      %1408 = vmatprep.subr.bf16.mxu0 0
      %1409 = vmatpush1.bf16.msra.mxu0 0
      %1410 = vmatprep.subr.bf16.mxu0 0
      %1411 = vmatpush1.bf16.msra.mxu0 0
      %1412 = vmatprep.subr.bf16.mxu0 0
      %1413 = vmatpush1.bf16.msra.mxu0 0
      %1414 = vmatprep.subr.bf16.mxu0 0
      %1415 = vmatpush1.bf16.msra.mxu0 0
      %1416 = vmatprep.subr.bf16.mxu0 0
      %1417 = vmatpush1.bf16.msra.mxu0 0
      %1418 = vmatprep.subr.bf16.mxu0 0
      %1419 = vmatpush1.bf16.msra.mxu0 0
      %1420 = vmatprep.subr.bf16.mxu0 0
      %1421 = vmatpush1.bf16.msra.mxu0 0
      %1422 = vmatprep.subr.bf16.mxu0 0
      %1423 = vmatpush1.bf16.msra.mxu0 0
      %1424 = vmatprep.subr.bf16.mxu0 0
      %1425 = vmatpush1.bf16.msra.mxu0 0
      %1426 = vmatprep.subr.bf16.mxu0 0
      %1427 = vmatpush1.bf16.msra.mxu0 0
      %1428 = vmatprep.subr.bf16.mxu0 0
      %1429 = vmatpush1.bf16.msra.mxu0 0
      %1430 = vmatprep.subr.bf16.mxu0 0
      %1431 = vmatpush1.bf16.msra.mxu0 0
      %1432 = vmatprep.subr.bf16.mxu0 0
      %1433 = vmatpush1.bf16.msra.mxu0 0
      %1434 = vmatprep.mubr.bf16.mxu0 0
      %1435 = vmatmul.mubr.bf16.gmra.mrb[0].mxu0 %v1394
      %v1436 = vpop.f32.mrb[0].mxu0
      %v1437 = vadd.f32 0.0, %v1436
      %v1438 = vpop.f32.mrb[0].mxu0
      %v1439 = vpop.f32.mrb[0].mxu0
      %v1440 = vadd.f32 0.0, %v1439
      %v1441 = vpop.f32.mrb[0].mxu0
      %1442 = vmatprep.mubr.bf16.mxu0 0
      %1443 = vmatmul.mubr.bf16.gmra.mrb[0].mxu0 %v1397
      %v1444 = vpop.f32.mrb[0].mxu0
      %v1445 = vadd.f32 0.0, %v1444
      %v1446 = vpop.f32.mrb[0].mxu0
      %v1447 = vpop.f32.mrb[0].mxu0
      %v1448 = vpop.f32.mrb[0].mxu0
      %1449 = vdwg.mxu0
      %1453 = vrot.lane.b32.xlu0 %v1101, 8
      %v1454 = vpop.permute.xlu0 %1453
      %1455 = vrot.lane.b32.xlu0 %v1104, 8
      %v1456 = vpop.permute.xlu0 %1455
      %1457 = vrot.lane.b32.xlu0 %v1109, 8
      %v1458 = vpop.permute.xlu0 %1457
      %1465 = vrot.lane.b32.xlu0 %v1269, 16
      %v1466 = vpop.permute.xlu0 %1465
      %1467 = vrot.lane.b32.xlu0 %v1272, 16
      %v1468 = vpop.permute.xlu0 %1467
      %1469 = vrot.lane.b32.xlu0 %v1277, 16
      %v1470 = vpop.permute.xlu0 %1469
      %1477 = vrot.lane.b32.xlu0 %v1437, 24
      %v1478 = vpop.permute.xlu0 %1477
      %1479 = vrot.lane.b32.xlu0 %v1440, 24
      %v1480 = vpop.permute.xlu0 %1479
      %1481 = vrot.lane.b32.xlu0 %v1445, 24
      %v1482 = vpop.permute.xlu0 %1481
      %v1486 = vsel %vm783, %v933, %v1454
      %v1487 = vsel %vm783, %v936, %v1456
      %v1488 = vsel %vm783, %v941, %v1458
      %vm1489 = vcmask 130048
      %v1490 = vsel %vm1489, %v1486, %v1466
      %v1491 = vsel %vm1489, %v1487, %v1468
      %v1492 = vsel %vm1489, %v1488, %v1470
      %vm1493 = vcmask 195584
      %v1494 = vsel %vm1493, %v1490, %v1478
      %v1495 = vsel %vm1493, %v1491, %v1480
      %v1496 = vsel %vm1493, %v1492, %v1482
      %v1497 = vpack.c.bf16 %v1495, %v1494
      %v1498 = vpack.c.bf16 %v1496, %v1496
      %v1499 = vld [vmem:[%s8] sm:$0xf]
      %v1500 = vld [vmem:[%s8 + $0x4] sm:$0xf]
      %v1501 = vld [vmem:[%s8 + $0x8] sm:$0xf]
      %v1502 = vld [vmem:[%s8 + $0xc] sm:$0xf]
      %v1507 = vunpack.c.l.b16 %v1499
      %v1508 = vunpack.c.l.b16 %v1500
      %v1509 = vunpack.c.l.b16 %v1501
      %v1510 = vunpack.c.l.b16 %v1502
      %v1511 = vpack.c.b16 %v1508, %v1507
      %v1512 = vpack.c.b16 %v1510, %v1509
      %v1516 = vsel %vm620, %v1497, 0
      %v1519 = vsel %vm620, %v1498, 0
      %1521 = vmatprep.subr.bf16.mxu0 0
      %1522 = vmatpush1.bf16.msra.mxu0 %v1511
      %1523 = vmatprep.subr.bf16.mxu0 0
      %1524 = vmatpush1.bf16.msra.mxu0 %v1512
      %1525 = vmatprep.subr.bf16.mxu0 0
      %1526 = vmatpush1.bf16.msra.mxu0 0
      %1527 = vmatprep.subr.bf16.mxu0 0
      %1528 = vmatpush1.bf16.msra.mxu0 0
      %1529 = vmatprep.subr.bf16.mxu0 0
      %1530 = vmatpush1.bf16.msra.mxu0 0
      %1531 = vmatprep.subr.bf16.mxu0 0
      %1532 = vmatpush1.bf16.msra.mxu0 0
      %1533 = vmatprep.subr.bf16.mxu0 0
      %1534 = vmatpush1.bf16.msra.mxu0 0
      %1535 = vmatprep.subr.bf16.mxu0 0
      %1536 = vmatpush1.bf16.msra.mxu0 0
      %1537 = vmatprep.subr.bf16.mxu0 0
      %1538 = vmatpush1.bf16.msra.mxu0 0
      %1539 = vmatprep.subr.bf16.mxu0 0
      %1540 = vmatpush1.bf16.msra.mxu0 0
      %1541 = vmatprep.subr.bf16.mxu0 0
      %1542 = vmatpush1.bf16.msra.mxu0 0
      %1543 = vmatprep.subr.bf16.mxu0 0
      %1544 = vmatpush1.bf16.msra.mxu0 0
      %1545 = vmatprep.subr.bf16.mxu0 0
      %1546 = vmatpush1.bf16.msra.mxu0 0
      %1547 = vmatprep.subr.bf16.mxu0 0
      %1548 = vmatpush1.bf16.msra.mxu0 0
      %1549 = vmatprep.subr.bf16.mxu0 0
      %1550 = vmatpush1.bf16.msra.mxu0 0
      %1551 = vmatprep.subr.bf16.mxu0 0
      %1552 = vmatpush1.bf16.msra.mxu0 0
      %1553 = vmatprep.mubr.bf16.mxu0 0
      %1554 = vmatmul.mubr.bf16.gmra.mrb[0].mxu0 %v1516
      %v1555 = vpop.f32.mrb[0].mxu0
      %v1556 = vadd.f32 0.0, %v1555
      %v1557 = vpop.f32.mrb[0].mxu0
      %v1558 = vpop.f32.mrb[0].mxu0
      %v1559 = vadd.f32 0.0, %v1558
      %v1560 = vpop.f32.mrb[0].mxu0
      %1561 = vmatprep.mubr.bf16.mxu0 0
      %1562 = vmatmul.mubr.bf16.gmra.mrb[0].mxu0 %v1519
      %v1563 = vpop.f32.mrb[0].mxu0
      %v1564 = vadd.f32 0.0, %v1563
      %v1565 = vpop.f32.mrb[0].mxu0
      %v1566 = vpop.f32.mrb[0].mxu0
      %v1567 = vpop.f32.mrb[0].mxu0
      %1568 = vdwg.mxu0
      %v1569 = vadd.f32 %v623, %v1556
      %v1570 = vadd.f32 %v624, %v1559
      %v1571 = vadd.f32 %v625, %v1564
      %v1572 = vld [vmem:[%s9] sm:$0x1]
      %v1574 = vlaneseq
      %v1575 = vshrl.u32 %v1574, 7
      %v1576 = vsub.s32 0, %v1575
      %v1577 = vrot.slane %v1572, %v1576
      %v1579 = vadd.f32 %v1569, %v1577
      %v1580 = vadd.f32 %v1570, %v1577
      %v1581 = vadd.f32 %v1571, %v1577
      %v1582 = vmul.f32 %v1383, 0.25
      %v1583 = vmul.f32 %v1384, 0.25
      %v1584 = vmul.f32 %v1385, 0.25
      %v1585 = vadd.f32 %v1582, %v638
      %v1586 = vadd.f32 %v1583, %v639
      %v1587 = vadd.f32 %v1584, %v640
      %v1588 = vmul.f32 %v1585, 0.5
      %v1589 = vmul.f32 %v1586, 0.5
      %v1590 = vmul.f32 %v1587, 0.5
      %v1591 = vsel %vm844, %v1588, 0.0
      %1592 = vadd.xlane.f32.xlu0 %v1591
      %v1593 = vpop.xlane.xlu0 %1592
      %v1594 = vsel %vm844, %v1589, 0.0
      %1595 = vadd.xlane.f32.xlu0 %v1594
      %v1596 = vpop.xlane.xlu0 %1595
      %v1597 = vsel %vm851, %v1590, 0.0
      %1598 = vadd.xlane.f32.xlu0 %v1597
      %v1599 = vpop.xlane.xlu0 %1598
      %v1600 = vrcp.pop %v1593
      %v1601 = vmul.f32 %v1588, %v1600
      %v1602 = vrcp.pop %v1596
      %v1603 = vmul.f32 %v1589, %v1602
      %v1604 = vrcp.pop %v1599
      %v1605 = vmul.f32 %v1590, %v1604
      %v1606 = vpack.c.bf16 %v1603, %v1601
      %v1607 = vpack.c.bf16 %v1605, %v1605
      %v1608 = vpack.c.bf16 %v639, %v638
      %v1609 = vpack.c.bf16 %v640, %v640
      %v1611 = vsel %vm844, %v1606, 0
      %v1614 = vsel %vm844, %v1607, 0
      %v1617 = vand.u32 %v1609, %v894
      %1619 = vmatprep.subr.bf16.mxu0 0
      %1620 = vmatpush1.bf16.msra.mxu0 %v1608
      %1621 = vmatprep.subr.bf16.mxu0 0
      %1622 = vmatpush1.bf16.msra.mxu0 %v1617
      %1623 = vmatprep.subr.bf16.mxu0 0
      %1624 = vmatpush1.bf16.msra.mxu0 0
      %1625 = vmatprep.subr.bf16.mxu0 0
      %1626 = vmatpush1.bf16.msra.mxu0 0
      %1627 = vmatprep.subr.bf16.mxu0 0
      %1628 = vmatpush1.bf16.msra.mxu0 0
      %1629 = vmatprep.subr.bf16.mxu0 0
      %1630 = vmatpush1.bf16.msra.mxu0 0
      %1631 = vmatprep.subr.bf16.mxu0 0
      %1632 = vmatpush1.bf16.msra.mxu0 0
      %1633 = vmatprep.subr.bf16.mxu0 0
      %1634 = vmatpush1.bf16.msra.mxu0 0
      %1635 = vmatprep.subr.bf16.mxu0 0
      %1636 = vmatpush1.bf16.msra.mxu0 0
      %1637 = vmatprep.subr.bf16.mxu0 0
      %1638 = vmatpush1.bf16.msra.mxu0 0
      %1639 = vmatprep.subr.bf16.mxu0 0
      %1640 = vmatpush1.bf16.msra.mxu0 0
      %1641 = vmatprep.subr.bf16.mxu0 0
      %1642 = vmatpush1.bf16.msra.mxu0 0
      %1643 = vmatprep.subr.bf16.mxu0 0
      %1644 = vmatpush1.bf16.msra.mxu0 0
      %1645 = vmatprep.subr.bf16.mxu0 0
      %1646 = vmatpush1.bf16.msra.mxu0 0
      %1647 = vmatprep.subr.bf16.mxu0 0
      %1648 = vmatpush1.bf16.msra.mxu0 0
      %1649 = vmatprep.subr.bf16.mxu0 0
      %1650 = vmatpush1.bf16.msra.mxu0 0
      %1651 = vmatprep.mubr.bf16.mxu0 0
      %1652 = vmatmul.mubr.bf16.gmra.mrb[0].mxu0 %v1611
      %v1653 = vpop.f32.mrb[0].mxu0
      %v1654 = vadd.f32 0.0, %v1653
      %v1655 = vpop.f32.mrb[0].mxu0
      %v1656 = vpop.f32.mrb[0].mxu0
      %v1657 = vadd.f32 0.0, %v1656
      %v1658 = vpop.f32.mrb[0].mxu0
      %1659 = vmatprep.mubr.bf16.mxu0 0
      %1660 = vmatmul.mubr.bf16.gmra.mrb[0].mxu0 %v1614
      %v1661 = vpop.f32.mrb[0].mxu0
      %v1662 = vadd.f32 0.0, %v1661
      %v1663 = vpop.f32.mrb[0].mxu0
      %v1664 = vpop.f32.mrb[0].mxu0
      %v1665 = vpop.f32.mrb[0].mxu0
      %1666 = vdwg.mxu0
      %v1667 = vld [vmem:[%s10] sm:$0x3]
      %v1668 = vsel %vm620, %v1579, 0.0
      %1669 = vadd.xlane.f32.xlu0 %v1668
      %v1670 = vpop.xlane.xlu0 %1669
      %v1671 = vsel %vm620, %v1580, 0.0
      %1672 = vadd.xlane.f32.xlu0 %v1671
      %v1673 = vpop.xlane.xlu0 %1672
      %v1674 = vsel %vm614, %v1581, 0.0
      %1675 = vadd.xlane.f32.xlu0 %v1674
      %v1676 = vpop.xlane.xlu0 %1675
      %v1677 = vmul.f32 %v1670, %v651
      %v1678 = vmul.f32 %v1673, %v651
      %v1679 = vmul.f32 %v1676, %v651
      %v1680 = vsub.f32 %v1579, %v1677
      %v1681 = vsub.f32 %v1580, %v1678
      %v1682 = vsub.f32 %v1581, %v1679
      %v1683 = vmul.f32 %v1680, %v1680
      %v1684 = vmul.f32 %v1681, %v1681
      %v1685 = vmul.f32 %v1682, %v1682
      %v1686 = vsel %vm620, %v1683, 0.0
      %1687 = vadd.xlane.f32.xlu0 %v1686
      %v1688 = vpop.xlane.xlu0 %1687
      %v1689 = vsel %vm620, %v1684, 0.0
      %1690 = vadd.xlane.f32.xlu0 %v1689
      %v1691 = vpop.xlane.xlu0 %1690
      %v1692 = vsel %vm614, %v1685, 0.0
      %1693 = vadd.xlane.f32.xlu0 %v1692
      %v1694 = vpop.xlane.xlu0 %1693
      %v1695 = vmul.f32 %v1688, %v651
      %v1696 = vmul.f32 %v1691, %v651
      %v1697 = vmul.f32 %v1694, %v651
      %v1698 = vadd.f32 %v1695, 1e-06
      %v1699 = vadd.f32 %v1696, 1e-06
      %v1700 = vadd.f32 %v1697, 1e-06
      %v1701 = vrsqrt.pop %v1698
      %v1702 = vrsqrt.pop %v1699
      %v1703 = vrsqrt.pop %v1700
      %v1704 = vmul.f32 %v1680, %v1701
      %v1705 = vmul.f32 %v1681, %v1702
      %v1706 = vmul.f32 %v1682, %v1703
      %v1707 = vlaneseq
      %v1708 = vshrl.u32 %v1707, 7
      %v1709 = vsub.s32 0, %v1708
      %v1710 = vrot.slane %v1667, %v1709
      %v1711 = vmul.f32 %v1704, %v1710
      %v1712 = vmul.f32 %v1705, %v1710
      %v1713 = vmul.f32 %v1706, %v1710
      %v1714 = vlaneseq
      %v1715 = vshrl.u32 %v1714, 7
      %v1716 = vsub.s32 1, %v1715
      %v1717 = vrot.slane %v1667, %v1716
      %v1718 = vadd.f32 %v1711, %v1717
      %v1719 = vadd.f32 %v1712, %v1717
      %v1720 = vadd.f32 %v1713, %v1717
      %v1721 = vpack.c.bf16 %v1719, %v1718
      %v1722 = vpack.c.bf16 %v1720, %v1720
      %v1723 = vld [vmem:[%s11] sm:$0xf]
      %v1724 = vld [vmem:[%s11 + $0x4] sm:$0xf]
      %v1725 = vld [vmem:[%s11 + $0x8] sm:$0xf]
      %v1726 = vld [vmem:[%s11 + $0xc] sm:$0xf]
      %v1727 = vld [vmem:[%s12] sm:$0x1]
      %v1729 = vlaneseq
      %v1730 = vshrl.u32 %v1729, 7
      %v1731 = vsub.s32 0, %v1730
      %v1732 = vrot.slane %v1727, %v1731
      %v1738 = vunpack.c.l.b16 %v1723
      %v1739 = vunpack.c.l.b16 %v1724
      %v1740 = vunpack.c.l.b16 %v1725
      %v1741 = vunpack.c.l.b16 %v1726
      %v1742 = vpack.c.b16 %v1739, %v1738
      %v1743 = vpack.c.b16 %v1741, %v1740
      %v1747 = vsel %vm620, %v1721, 0
      %v1750 = vsel %vm620, %v1722, 0
      %1752 = vmatprep.subr.bf16.mxu0 0
      %1753 = vmatpush1.bf16.msra.mxu0 %v1742
      %1754 = vmatprep.subr.bf16.mxu0 0
      %1755 = vmatpush1.bf16.msra.mxu0 %v1743
      %1756 = vmatprep.subr.bf16.mxu0 0
      %1757 = vmatpush1.bf16.msra.mxu0 0
      %1758 = vmatprep.subr.bf16.mxu0 0
      %1759 = vmatpush1.bf16.msra.mxu0 0
      %1760 = vmatprep.subr.bf16.mxu0 0
      %1761 = vmatpush1.bf16.msra.mxu0 0
      %1762 = vmatprep.subr.bf16.mxu0 0
      %1763 = vmatpush1.bf16.msra.mxu0 0
      %1764 = vmatprep.subr.bf16.mxu0 0
      %1765 = vmatpush1.bf16.msra.mxu0 0
      %1766 = vmatprep.subr.bf16.mxu0 0
      %1767 = vmatpush1.bf16.msra.mxu0 0
      %1768 = vmatprep.subr.bf16.mxu0 0
      %1769 = vmatpush1.bf16.msra.mxu0 0
      %1770 = vmatprep.subr.bf16.mxu0 0
      %1771 = vmatpush1.bf16.msra.mxu0 0
      %1772 = vmatprep.subr.bf16.mxu0 0
      %1773 = vmatpush1.bf16.msra.mxu0 0
      %1774 = vmatprep.subr.bf16.mxu0 0
      %1775 = vmatpush1.bf16.msra.mxu0 0
      %1776 = vmatprep.subr.bf16.mxu0 0
      %1777 = vmatpush1.bf16.msra.mxu0 0
      %1778 = vmatprep.subr.bf16.mxu0 0
      %1779 = vmatpush1.bf16.msra.mxu0 0
      %1780 = vmatprep.subr.bf16.mxu0 0
      %1781 = vmatpush1.bf16.msra.mxu0 0
      %1782 = vmatprep.subr.bf16.mxu0 0
      %1783 = vmatpush1.bf16.msra.mxu0 0
      %1784 = vmatprep.mubr.bf16.mxu0 0
      %1785 = vmatmul.mubr.bf16.gmra.mrb[0].mxu0 %v1747
      %v1786 = vpop.f32.mrb[0].mxu0
      %v1787 = vadd.f32 %v1732, %v1786
      %v1788 = vpop.f32.mrb[0].mxu0
      %v1789 = vpop.f32.mrb[0].mxu0
      %v1790 = vadd.f32 %v1732, %v1789
      %v1791 = vpop.f32.mrb[0].mxu0
      %1792 = vmatprep.mubr.bf16.mxu0 0
      %1793 = vmatmul.mubr.bf16.gmra.mrb[0].mxu0 %v1750
      %v1794 = vpop.f32.mrb[0].mxu0
      %v1795 = vadd.f32 %v1732, %v1794
      %v1796 = vpop.f32.mrb[0].mxu0
      %v1797 = vpop.f32.mrb[0].mxu0
      %v1798 = vpop.f32.mrb[0].mxu0
      %1799 = vdwg.mxu0
      %v1800 = vmul.f32 %v1787, %v1787
      %v1801 = vmul.f32 %v1790, %v1790
      %v1802 = vmul.f32 %v1795, %v1795
      %v1803 = vmul.f32 %v1787, %v1800
      %v1804 = vmul.f32 %v1790, %v1801
      %v1805 = vmul.f32 %v1795, %v1802
      %v1806 = vmul.f32 %v1803, 0.044715
      %v1807 = vmul.f32 %v1804, 0.044715
      %v1808 = vmul.f32 %v1805, 0.044715
      %v1809 = vadd.f32 %v1787, %v1806
      %v1810 = vadd.f32 %v1790, %v1807
      %v1811 = vadd.f32 %v1795, %v1808
      %v1812 = vmul.f32 %v1809, 0.7978846
      %v1813 = vmul.f32 %v1810, 0.7978846
      %v1814 = vmul.f32 %v1811, 0.7978846
      %v1815 = vtanh.pop %v1812
      %v1816 = vtanh.pop %v1813
      %v1817 = vtanh.pop %v1814
      %v1818 = vadd.f32 %v1815, 1.0
      %v1819 = vadd.f32 %v1816, 1.0
      %v1820 = vadd.f32 %v1817, 1.0
      %v1821 = vmul.f32 %v1818, 0.5
      %v1822 = vmul.f32 %v1819, 0.5
      %v1823 = vmul.f32 %v1820, 0.5
      %v1824 = vmul.f32 %v1787, %v1821
      %v1825 = vmul.f32 %v1790, %v1822
      %v1826 = vmul.f32 %v1795, %v1823
      %v1827 = vpack.c.bf16 %v1825, %v1824
      %v1828 = vpack.c.bf16 %v1826, %v1826
      %v1829 = vld [vmem:[%s13] sm:$0xf]
      %v1830 = vld [vmem:[%s13 + $0x4] sm:$0xf]
      %v1831 = vld [vmem:[%s13 + $0x8] sm:$0xf]
      %v1832 = vld [vmem:[%s13 + $0xc] sm:$0xf]
      %v1833 = vld [vmem:[%s13 + $0x10] sm:$0xf]
      %v1834 = vld [vmem:[%s13 + $0x14] sm:$0xf]
      %v1835 = vld [vmem:[%s13 + $0x18] sm:$0xf]
      %v1836 = vld [vmem:[%s13 + $0x1c] sm:$0xf]
      %v1837 = vld [vmem:[%s13 + $0x20] sm:$0xf]
      %v1838 = vld [vmem:[%s13 + $0x24] sm:$0xf]
      %v1839 = vld [vmem:[%s13 + $0x28] sm:$0xf]
      %v1840 = vld [vmem:[%s13 + $0x2c] sm:$0xf]
      %v1841 = vld [vmem:[%s13 + $0x30] sm:$0xf]
      %v1842 = vld [vmem:[%s13 + $0x34] sm:$0xf]
      %v1843 = vld [vmem:[%s13 + $0x38] sm:$0xf]
      %v1844 = vld [vmem:[%s13 + $0x3c] sm:$0xf]
      %v1845 = vld [vmem:[%s14] sm:$0x1]
      %v1847 = vlaneseq
      %v1848 = vshrl.u32 %v1847, 7
      %v1849 = vsub.s32 0, %v1848
      %v1850 = vrot.slane %v1845, %v1849
      %v1868 = vunpack.c.l.b16 %v1829
      %v1869 = vunpack.c.l.b16 %v1830
      %v1870 = vunpack.c.l.b16 %v1831
      %v1871 = vunpack.c.l.b16 %v1832
      %v1872 = vunpack.c.l.b16 %v1833
      %v1873 = vunpack.c.l.b16 %v1834
      %v1874 = vunpack.c.l.b16 %v1835
      %v1875 = vunpack.c.l.b16 %v1836
      %v1876 = vunpack.c.l.b16 %v1837
      %v1877 = vunpack.c.l.b16 %v1838
      %v1878 = vunpack.c.l.b16 %v1839
      %v1879 = vunpack.c.l.b16 %v1840
      %v1880 = vunpack.c.l.b16 %v1841
      %v1881 = vunpack.c.l.b16 %v1842
      %v1882 = vunpack.c.l.b16 %v1843
      %v1883 = vunpack.c.l.b16 %v1844
      %v1884 = vpack.c.b16 %v1869, %v1868
      %v1885 = vpack.c.b16 %v1871, %v1870
      %v1886 = vpack.c.b16 %v1873, %v1872
      %v1887 = vpack.c.b16 %v1875, %v1874
      %v1888 = vpack.c.b16 %v1877, %v1876
      %v1889 = vpack.c.b16 %v1879, %v1878
      %v1890 = vpack.c.b16 %v1881, %v1880
      %v1891 = vpack.c.b16 %v1883, %v1882
      %1900 = vmatprep.subr.bf16.mxu0 0
      %1901 = vmatpush1.bf16.msra.mxu0 %v1884
      %1902 = vmatprep.subr.bf16.mxu0 0
      %1903 = vmatpush1.bf16.msra.mxu0 %v1885
      %1904 = vmatprep.subr.bf16.mxu0 0
      %1905 = vmatpush1.bf16.msra.mxu0 %v1886
      %1906 = vmatprep.subr.bf16.mxu0 0
      %1907 = vmatpush1.bf16.msra.mxu0 %v1887
      %1908 = vmatprep.subr.bf16.mxu0 0
      %1909 = vmatpush1.bf16.msra.mxu0 %v1888
      %1910 = vmatprep.subr.bf16.mxu0 0
      %1911 = vmatpush1.bf16.msra.mxu0 %v1889
      %1912 = vmatprep.subr.bf16.mxu0 0
      %1913 = vmatpush1.bf16.msra.mxu0 %v1890
      %1914 = vmatprep.subr.bf16.mxu0 0
      %1915 = vmatpush1.bf16.msra.mxu0 %v1891
      %1916 = vmatprep.subr.bf16.mxu0 0
      %1917 = vmatpush1.bf16.msra.mxu0 0
      %1918 = vmatprep.subr.bf16.mxu0 0
      %1919 = vmatpush1.bf16.msra.mxu0 0
      %1920 = vmatprep.subr.bf16.mxu0 0
      %1921 = vmatpush1.bf16.msra.mxu0 0
      %1922 = vmatprep.subr.bf16.mxu0 0
      %1923 = vmatpush1.bf16.msra.mxu0 0
      %1924 = vmatprep.subr.bf16.mxu0 0
      %1925 = vmatpush1.bf16.msra.mxu0 0
      %1926 = vmatprep.subr.bf16.mxu0 0
      %1927 = vmatpush1.bf16.msra.mxu0 0
      %1928 = vmatprep.subr.bf16.mxu0 0
      %1929 = vmatpush1.bf16.msra.mxu0 0
      %1930 = vmatprep.subr.bf16.mxu0 0
      %1931 = vmatpush1.bf16.msra.mxu0 0
      %1932 = vmatprep.mubr.bf16.mxu0 0
      %1933 = vmatmul.mubr.bf16.gmra.mrb[0].mxu0 %v1827
      %v1934 = vpop.f32.mrb[0].mxu0
      %v1935 = vadd.f32 %v1850, %v1934
      %v1936 = vpop.f32.mrb[0].mxu0
      %v1937 = vpop.f32.mrb[0].mxu0
      %v1938 = vadd.f32 %v1850, %v1937
      %v1939 = vpop.f32.mrb[0].mxu0
      %1940 = vmatprep.mubr.bf16.mxu0 0
      %1941 = vmatmul.mubr.bf16.gmra.mrb[0].mxu0 %v1828
      %v1942 = vpop.f32.mrb[0].mxu0
      %v1943 = vadd.f32 %v1850, %v1942
      %v1944 = vpop.f32.mrb[0].mxu0
      %v1945 = vpop.f32.mrb[0].mxu0
      %v1946 = vpop.f32.mrb[0].mxu0
      %1947 = vdwg.mxu0
      %v1948 = vadd.f32 %v1579, %v1935
      %v1949 = vadd.f32 %v1580, %v1938
      %v1950 = vadd.f32 %v1581, %v1943
      %s1951 = scalar_lea.vmem %s5, 2
      %v1952 = vld [vmem:[%s1951] sm:$0x3]
      %v1953 = vsel %vm620, %v1948, 0.0
      %1954 = vadd.xlane.f32.xlu0 %v1953
      %v1955 = vpop.xlane.xlu0 %1954
      %v1956 = vsel %vm620, %v1949, 0.0
      %1957 = vadd.xlane.f32.xlu0 %v1956
      %v1958 = vpop.xlane.xlu0 %1957
      %v1959 = vsel %vm614, %v1950, 0.0
      %1960 = vadd.xlane.f32.xlu0 %v1959
      %v1961 = vpop.xlane.xlu0 %1960
      %v1962 = vmul.f32 %v1955, %v651
      %v1963 = vmul.f32 %v1958, %v651
      %v1964 = vmul.f32 %v1961, %v651
      %v1965 = vsub.f32 %v1948, %v1962
      %v1966 = vsub.f32 %v1949, %v1963
      %v1967 = vsub.f32 %v1950, %v1964
      %v1968 = vmul.f32 %v1965, %v1965
      %v1969 = vmul.f32 %v1966, %v1966
      %v1970 = vmul.f32 %v1967, %v1967
      %v1971 = vsel %vm620, %v1968, 0.0
      %1972 = vadd.xlane.f32.xlu0 %v1971
      %v1973 = vpop.xlane.xlu0 %1972
      %v1974 = vsel %vm620, %v1969, 0.0
      %1975 = vadd.xlane.f32.xlu0 %v1974
      %v1976 = vpop.xlane.xlu0 %1975
      %v1977 = vsel %vm614, %v1970, 0.0
      %1978 = vadd.xlane.f32.xlu0 %v1977
      %v1979 = vpop.xlane.xlu0 %1978
      %v1980 = vmul.f32 %v1973, %v651
      %v1981 = vmul.f32 %v1976, %v651
      %v1982 = vmul.f32 %v1979, %v651
      %v1983 = vadd.f32 %v1980, 1e-06
      %v1984 = vadd.f32 %v1981, 1e-06
      %v1985 = vadd.f32 %v1982, 1e-06
      %v1986 = vrsqrt.pop %v1983
      %v1987 = vrsqrt.pop %v1984
      %v1988 = vrsqrt.pop %v1985
      %v1989 = vmul.f32 %v1965, %v1986
      %v1990 = vmul.f32 %v1966, %v1987
      %v1991 = vmul.f32 %v1967, %v1988
      %v1992 = vlaneseq
      %v1993 = vshrl.u32 %v1992, 7
      %v1994 = vsub.s32 0, %v1993
      %v1995 = vrot.slane %v1952, %v1994
      %v1996 = vmul.f32 %v1989, %v1995
      %v1997 = vmul.f32 %v1990, %v1995
      %v1998 = vmul.f32 %v1991, %v1995
      %v1999 = vlaneseq
      %v2000 = vshrl.u32 %v1999, 7
      %v2001 = vsub.s32 1, %v2000
      %v2002 = vrot.slane %v1952, %v2001
      %v2003 = vadd.f32 %v1996, %v2002
      %v2004 = vadd.f32 %v1997, %v2002
      %v2005 = vadd.f32 %v1998, %v2002
      %v2006 = vpack.c.bf16 %v2004, %v2003
      %v2007 = vpack.c.bf16 %v2005, %v2005
      %s2008 = scalar_lea.vmem %s6, 16
      %v2009 = vld [vmem:[%s2008] sm:$0xf]
      %v2010 = vld [vmem:[%s2008 + $0x4] sm:$0xf]
      %v2011 = vld [vmem:[%s2008 + $0x8] sm:$0xf]
      %v2012 = vld [vmem:[%s2008 + $0xc] sm:$0xf]
      %s2013 = scalar_lea.vmem %s7, 1
      %v2014 = vld [vmem:[%s2013] sm:$0x1]
      %v2016 = vlaneseq
      %v2017 = vshrl.u32 %v2016, 7
      %v2018 = vsub.s32 0, %v2017
      %v2019 = vrot.slane %v2014, %v2018
      %v2025 = vunpack.c.l.b16 %v2009
      %v2026 = vunpack.c.l.b16 %v2010
      %v2027 = vunpack.c.l.b16 %v2011
      %v2028 = vunpack.c.l.b16 %v2012
      %v2029 = vpack.c.b16 %v2026, %v2025
      %v2030 = vpack.c.b16 %v2028, %v2027
      %v2034 = vsel %vm620, %v2006, 0
      %v2037 = vsel %vm620, %v2007, 0
      %2039 = vmatprep.subr.bf16.mxu0 0
      %2040 = vmatpush1.bf16.msra.mxu0 %v2029
      %2041 = vmatprep.subr.bf16.mxu0 0
      %2042 = vmatpush1.bf16.msra.mxu0 %v2030
      %2043 = vmatprep.subr.bf16.mxu0 0
      %2044 = vmatpush1.bf16.msra.mxu0 0
      %2045 = vmatprep.subr.bf16.mxu0 0
      %2046 = vmatpush1.bf16.msra.mxu0 0
      %2047 = vmatprep.subr.bf16.mxu0 0
      %2048 = vmatpush1.bf16.msra.mxu0 0
      %2049 = vmatprep.subr.bf16.mxu0 0
      %2050 = vmatpush1.bf16.msra.mxu0 0
      %2051 = vmatprep.subr.bf16.mxu0 0
      %2052 = vmatpush1.bf16.msra.mxu0 0
      %2053 = vmatprep.subr.bf16.mxu0 0
      %2054 = vmatpush1.bf16.msra.mxu0 0
      %2055 = vmatprep.subr.bf16.mxu0 0
      %2056 = vmatpush1.bf16.msra.mxu0 0
      %2057 = vmatprep.subr.bf16.mxu0 0
      %2058 = vmatpush1.bf16.msra.mxu0 0
      %2059 = vmatprep.subr.bf16.mxu0 0
      %2060 = vmatpush1.bf16.msra.mxu0 0
      %2061 = vmatprep.subr.bf16.mxu0 0
      %2062 = vmatpush1.bf16.msra.mxu0 0
      %2063 = vmatprep.subr.bf16.mxu0 0
      %2064 = vmatpush1.bf16.msra.mxu0 0
      %2065 = vmatprep.subr.bf16.mxu0 0
      %2066 = vmatpush1.bf16.msra.mxu0 0
      %2067 = vmatprep.subr.bf16.mxu0 0
      %2068 = vmatpush1.bf16.msra.mxu0 0
      %2069 = vmatprep.subr.bf16.mxu0 0
      %2070 = vmatpush1.bf16.msra.mxu0 0
      %2071 = vmatprep.mubr.bf16.mxu0 0
      %2072 = vmatmul.mubr.bf16.gmra.mrb[0].mxu0 %v2034
      %v2073 = vpop.f32.mrb[0].mxu0
      %v2074 = vadd.f32 %v2019, %v2073
      %v2075 = vpop.f32.mrb[0].mxu0
      %v2076 = vpop.f32.mrb[0].mxu0
      %v2077 = vadd.f32 %v2019, %v2076
      %v2078 = vpop.f32.mrb[0].mxu0
      %2079 = vmatprep.mubr.bf16.mxu0 0
      %2080 = vmatmul.mubr.bf16.gmra.mrb[0].mxu0 %v2037
      %v2081 = vpop.f32.mrb[0].mxu0
      %v2082 = vadd.f32 %v2019, %v2081
      %v2083 = vpop.f32.mrb[0].mxu0
      %v2084 = vpop.f32.mrb[0].mxu0
      %v2085 = vpop.f32.mrb[0].mxu0
      %2086 = vdwg.mxu0
      %v2087 = vpack.c.bf16 %v2077, %v2074
      %v2088 = vpack.c.bf16 %v2082, %v2082
      %2091 = vrot.lane.b32.xlu0 %v2087, 96
      %v2092 = vpop.permute.xlu0 %2091
      %2093 = vrot.lane.b32.xlu0 %v2088, 96
      %v2094 = vpop.permute.xlu0 %2093
      %v2096 = vsel %vm783, %v2087, 0
      %v2099 = vsel %vm783, %v2088, 0
      %v2102 = vsel %vm783, %v2092, 0
      %v2105 = vsel %vm783, %v2094, 0
      %2107 = vmatprep.subr.bf16.mxu0 0
      %2108 = vmatpush1.bf16.xpose.msra.mxu0 %v2102
      %2109 = vmatprep.subr.bf16.mxu0 0
      %2110 = vmatpush1.bf16.xpose.msra.mxu0 %v2105
      %2111 = vmatprep.subr.bf16.mxu0 0
      %2112 = vmatpush1.bf16.xpose.msra.mxu0 0
      %2113 = vmatprep.subr.bf16.mxu0 0
      %2114 = vmatpush1.bf16.xpose.msra.mxu0 0
      %2115 = vmatprep.subr.bf16.mxu0 0
      %2116 = vmatpush1.bf16.xpose.msra.mxu0 0
      %2117 = vmatprep.subr.bf16.mxu0 0
      %2118 = vmatpush1.bf16.xpose.msra.mxu0 0
      %2119 = vmatprep.subr.bf16.mxu0 0
      %2120 = vmatpush1.bf16.xpose.msra.mxu0 0
      %2121 = vmatprep.subr.bf16.mxu0 0
      %2122 = vmatpush1.bf16.xpose.msra.mxu0 0
      %2123 = vmatprep.subr.bf16.mxu0 0
      %2124 = vmatpush1.bf16.xpose.msra.mxu0 0
      %2125 = vmatprep.subr.bf16.mxu0 0
      %2126 = vmatpush1.bf16.xpose.msra.mxu0 0
      %2127 = vmatprep.subr.bf16.mxu0 0
      %2128 = vmatpush1.bf16.xpose.msra.mxu0 0
      %2129 = vmatprep.subr.bf16.mxu0 0
      %2130 = vmatpush1.bf16.xpose.msra.mxu0 0
      %2131 = vmatprep.subr.bf16.mxu0 0
      %2132 = vmatpush1.bf16.xpose.msra.mxu0 0
      %2133 = vmatprep.subr.bf16.mxu0 0
      %2134 = vmatpush1.bf16.xpose.msra.mxu0 0
      %2135 = vmatprep.subr.bf16.mxu0 0
      %2136 = vmatpush1.bf16.xpose.msra.mxu0 0
      %2137 = vmatprep.subr.bf16.mxu0 0
      %2138 = vmatpush1.bf16.xpose.msra.mxu0 0
      %2139 = vmatprep.mubr.bf16.mxu0 0
      %2140 = vmatmul.mubr.bf16.gmra.mrb[0].mxu0 %v2096
      %v2141 = vpop.f32.mrb[0].mxu0
      %v2142 = vadd.f32 0.0, %v2141
      %v2143 = vpop.f32.mrb[0].mxu0
      %v2144 = vpop.f32.mrb[0].mxu0
      %v2145 = vadd.f32 0.0, %v2144
      %v2146 = vpop.f32.mrb[0].mxu0
      %2147 = vmatprep.mubr.bf16.mxu0 0
      %2148 = vmatmul.mubr.bf16.gmra.mrb[0].mxu0 %v2099
      %v2149 = vpop.f32.mrb[0].mxu0
      %v2150 = vadd.f32 0.0, %v2149
      %v2151 = vpop.f32.mrb[0].mxu0
      %v2152 = vpop.f32.mrb[0].mxu0
      %v2153 = vpop.f32.mrb[0].mxu0
      %2154 = vdwg.mxu0
      %v2155 = vsel %vm844, %v2142, -inf
      %2156 = vmax.xlane.f32.xlu0 %v2155
      %v2157 = vpop.xlane.xlu0 %2156
      %v2158 = vsel %vm844, %v2145, -inf
      %2159 = vmax.xlane.f32.xlu0 %v2158
      %v2160 = vpop.xlane.xlu0 %2159
      %v2161 = vsel %vm851, %v2150, -inf
      %2162 = vmax.xlane.f32.xlu0 %v2161
      %v2163 = vpop.xlane.xlu0 %2162
      %v2164 = vsub.f32 %v2142, %v2157
      %v2165 = vsub.f32 %v2145, %v2160
      %v2166 = vsub.f32 %v2150, %v2163
      %v2167 = vmul.f32 %v2164, 1.442695
      %v2168 = vpow.pop %v2167
      %v2169 = vmul.f32 %v2165, 1.442695
      %v2170 = vpow.pop %v2169
      %v2171 = vmul.f32 %v2166, 1.442695
      %v2172 = vpow.pop %v2171
      %v2173 = vsel %vm844, %v2168, 0.0
      %2174 = vadd.xlane.f32.xlu0 %v2173
      %v2175 = vpop.xlane.xlu0 %2174
      %v2176 = vsel %vm844, %v2170, 0.0
      %2177 = vadd.xlane.f32.xlu0 %v2176
      %v2178 = vpop.xlane.xlu0 %2177
      %v2179 = vsel %vm851, %v2172, 0.0
      %2180 = vadd.xlane.f32.xlu0 %v2179
      %v2181 = vpop.xlane.xlu0 %2180
      %v2182 = vrcp.pop %v2175
      %v2183 = vrcp.pop %v2178
      %v2184 = vrcp.pop %v2181
      %v2185 = vmul.f32 %v2168, %v2182
      %v2186 = vmul.f32 %v2170, %v2183
      %v2187 = vmul.f32 %v2172, %v2184
      %2188 = vrot.lane.b32.xlu0 %v2087, 120
      %v2189 = vpop.permute.xlu0 %2188
      %2190 = vrot.lane.b32.xlu0 %v2088, 120
      %v2191 = vpop.permute.xlu0 %2190
      %2192 = vrot.lane.b32.xlu0 %v2087, 88
      %v2193 = vpop.permute.xlu0 %2192
      %2194 = vrot.lane.b32.xlu0 %v2088, 88
      %v2195 = vpop.permute.xlu0 %2194
      %v2197 = vsel %vm783, %v2189, 0
      %v2200 = vsel %vm783, %v2191, 0
      %v2203 = vsel %vm783, %v2193, 0
      %v2206 = vsel %vm783, %v2195, 0
      %2208 = vmatprep.subr.bf16.mxu0 0
      %2209 = vmatpush1.bf16.xpose.msra.mxu0 %v2203
      %2210 = vmatprep.subr.bf16.mxu0 0
      %2211 = vmatpush1.bf16.xpose.msra.mxu0 %v2206
      %2212 = vmatprep.subr.bf16.mxu0 0
      %2213 = vmatpush1.bf16.xpose.msra.mxu0 0
      %2214 = vmatprep.subr.bf16.mxu0 0
      %2215 = vmatpush1.bf16.xpose.msra.mxu0 0
      %2216 = vmatprep.subr.bf16.mxu0 0
      %2217 = vmatpush1.bf16.xpose.msra.mxu0 0
      %2218 = vmatprep.subr.bf16.mxu0 0
      %2219 = vmatpush1.bf16.xpose.msra.mxu0 0
      %2220 = vmatprep.subr.bf16.mxu0 0
      %2221 = vmatpush1.bf16.xpose.msra.mxu0 0
      %2222 = vmatprep.subr.bf16.mxu0 0
      %2223 = vmatpush1.bf16.xpose.msra.mxu0 0
      %2224 = vmatprep.subr.bf16.mxu0 0
      %2225 = vmatpush1.bf16.xpose.msra.mxu0 0
      %2226 = vmatprep.subr.bf16.mxu0 0
      %2227 = vmatpush1.bf16.xpose.msra.mxu0 0
      %2228 = vmatprep.subr.bf16.mxu0 0
      %2229 = vmatpush1.bf16.xpose.msra.mxu0 0
      %2230 = vmatprep.subr.bf16.mxu0 0
      %2231 = vmatpush1.bf16.xpose.msra.mxu0 0
      %2232 = vmatprep.subr.bf16.mxu0 0
      %2233 = vmatpush1.bf16.xpose.msra.mxu0 0
      %2234 = vmatprep.subr.bf16.mxu0 0
      %2235 = vmatpush1.bf16.xpose.msra.mxu0 0
      %2236 = vmatprep.subr.bf16.mxu0 0
      %2237 = vmatpush1.bf16.xpose.msra.mxu0 0
      %2238 = vmatprep.subr.bf16.mxu0 0
      %2239 = vmatpush1.bf16.xpose.msra.mxu0 0
      %2240 = vmatprep.mubr.bf16.mxu0 0
      %2241 = vmatmul.mubr.bf16.gmra.mrb[0].mxu0 %v2197
      %v2242 = vpop.f32.mrb[0].mxu0
      %v2243 = vadd.f32 0.0, %v2242
      %v2244 = vpop.f32.mrb[0].mxu0
      %v2245 = vpop.f32.mrb[0].mxu0
      %v2246 = vadd.f32 0.0, %v2245
      %v2247 = vpop.f32.mrb[0].mxu0
      %2248 = vmatprep.mubr.bf16.mxu0 0
      %2249 = vmatmul.mubr.bf16.gmra.mrb[0].mxu0 %v2200
      %v2250 = vpop.f32.mrb[0].mxu0
      %v2251 = vadd.f32 0.0, %v2250
      %v2252 = vpop.f32.mrb[0].mxu0
      %v2253 = vpop.f32.mrb[0].mxu0
      %v2254 = vpop.f32.mrb[0].mxu0
      %2255 = vdwg.mxu0
      %v2256 = vsel %vm844, %v2243, -inf
      %2257 = vmax.xlane.f32.xlu0 %v2256
      %v2258 = vpop.xlane.xlu0 %2257
      %v2259 = vsel %vm844, %v2246, -inf
      %2260 = vmax.xlane.f32.xlu0 %v2259
      %v2261 = vpop.xlane.xlu0 %2260
      %v2262 = vsel %vm851, %v2251, -inf
      %2263 = vmax.xlane.f32.xlu0 %v2262
      %v2264 = vpop.xlane.xlu0 %2263
      %v2265 = vsub.f32 %v2243, %v2258
      %v2266 = vsub.f32 %v2246, %v2261
      %v2267 = vsub.f32 %v2251, %v2264
      %v2268 = vmul.f32 %v2265, 1.442695
      %v2269 = vpow.pop %v2268
      %v2270 = vmul.f32 %v2266, 1.442695
      %v2271 = vpow.pop %v2270
      %v2272 = vmul.f32 %v2267, 1.442695
      %v2273 = vpow.pop %v2272
      %v2274 = vsel %vm844, %v2269, 0.0
      %2275 = vadd.xlane.f32.xlu0 %v2274
      %v2276 = vpop.xlane.xlu0 %2275
      %v2277 = vsel %vm844, %v2271, 0.0
      %2278 = vadd.xlane.f32.xlu0 %v2277
      %v2279 = vpop.xlane.xlu0 %2278
      %v2280 = vsel %vm851, %v2273, 0.0
      %2281 = vadd.xlane.f32.xlu0 %v2280
      %v2282 = vpop.xlane.xlu0 %2281
      %v2283 = vrcp.pop %v2276
      %v2284 = vrcp.pop %v2279
      %v2285 = vrcp.pop %v2282
      %v2286 = vmul.f32 %v2269, %v2283
      %v2287 = vmul.f32 %v2271, %v2284
      %v2288 = vmul.f32 %v2273, %v2285
      %v2289 = vadd.f32 %v2185, %v2286
      %v2290 = vadd.f32 %v2186, %v2287
      %v2291 = vadd.f32 %v2187, %v2288
      %2292 = vrot.lane.b32.xlu0 %v2087, 112
      %v2293 = vpop.permute.xlu0 %2292
      %2294 = vrot.lane.b32.xlu0 %v2088, 112
      %v2295 = vpop.permute.xlu0 %2294
      %2296 = vrot.lane.b32.xlu0 %v2087, 80
      %v2297 = vpop.permute.xlu0 %2296
      %2298 = vrot.lane.b32.xlu0 %v2088, 80
      %v2299 = vpop.permute.xlu0 %2298
      %v2301 = vsel %vm783, %v2293, 0
      %v2304 = vsel %vm783, %v2295, 0
      %v2307 = vsel %vm783, %v2297, 0
      %v2310 = vsel %vm783, %v2299, 0
      %2312 = vmatprep.subr.bf16.mxu0 0
      %2313 = vmatpush1.bf16.xpose.msra.mxu0 %v2307
      %2314 = vmatprep.subr.bf16.mxu0 0
      %2315 = vmatpush1.bf16.xpose.msra.mxu0 %v2310
      %2316 = vmatprep.subr.bf16.mxu0 0
      %2317 = vmatpush1.bf16.xpose.msra.mxu0 0
      %2318 = vmatprep.subr.bf16.mxu0 0
      %2319 = vmatpush1.bf16.xpose.msra.mxu0 0
      %2320 = vmatprep.subr.bf16.mxu0 0
      %2321 = vmatpush1.bf16.xpose.msra.mxu0 0
      %2322 = vmatprep.subr.bf16.mxu0 0
      %2323 = vmatpush1.bf16.xpose.msra.mxu0 0
      %2324 = vmatprep.subr.bf16.mxu0 0
      %2325 = vmatpush1.bf16.xpose.msra.mxu0 0
      %2326 = vmatprep.subr.bf16.mxu0 0
      %2327 = vmatpush1.bf16.xpose.msra.mxu0 0
      %2328 = vmatprep.subr.bf16.mxu0 0
      %2329 = vmatpush1.bf16.xpose.msra.mxu0 0
      %2330 = vmatprep.subr.bf16.mxu0 0
      %2331 = vmatpush1.bf16.xpose.msra.mxu0 0
      %2332 = vmatprep.subr.bf16.mxu0 0
      %2333 = vmatpush1.bf16.xpose.msra.mxu0 0
      %2334 = vmatprep.subr.bf16.mxu0 0
      %2335 = vmatpush1.bf16.xpose.msra.mxu0 0
      %2336 = vmatprep.subr.bf16.mxu0 0
      %2337 = vmatpush1.bf16.xpose.msra.mxu0 0
      %2338 = vmatprep.subr.bf16.mxu0 0
      %2339 = vmatpush1.bf16.xpose.msra.mxu0 0
      %2340 = vmatprep.subr.bf16.mxu0 0
      %2341 = vmatpush1.bf16.xpose.msra.mxu0 0
      %2342 = vmatprep.subr.bf16.mxu0 0
      %2343 = vmatpush1.bf16.xpose.msra.mxu0 0
      %2344 = vmatprep.mubr.bf16.mxu0 0
      %2345 = vmatmul.mubr.bf16.gmra.mrb[0].mxu0 %v2301
      %v2346 = vpop.f32.mrb[0].mxu0
      %v2347 = vadd.f32 0.0, %v2346
      %v2348 = vpop.f32.mrb[0].mxu0
      %v2349 = vpop.f32.mrb[0].mxu0
      %v2350 = vadd.f32 0.0, %v2349
      %v2351 = vpop.f32.mrb[0].mxu0
      %2352 = vmatprep.mubr.bf16.mxu0 0
      %2353 = vmatmul.mubr.bf16.gmra.mrb[0].mxu0 %v2304
      %v2354 = vpop.f32.mrb[0].mxu0
      %v2355 = vadd.f32 0.0, %v2354
      %v2356 = vpop.f32.mrb[0].mxu0
      %v2357 = vpop.f32.mrb[0].mxu0
      %v2358 = vpop.f32.mrb[0].mxu0
      %2359 = vdwg.mxu0
      %v2360 = vsel %vm844, %v2347, -inf
      %2361 = vmax.xlane.f32.xlu0 %v2360
      %v2362 = vpop.xlane.xlu0 %2361
      %v2363 = vsel %vm844, %v2350, -inf
      %2364 = vmax.xlane.f32.xlu0 %v2363
      %v2365 = vpop.xlane.xlu0 %2364
      %v2366 = vsel %vm851, %v2355, -inf
      %2367 = vmax.xlane.f32.xlu0 %v2366
      %v2368 = vpop.xlane.xlu0 %2367
      %v2369 = vsub.f32 %v2347, %v2362
      %v2370 = vsub.f32 %v2350, %v2365
      %v2371 = vsub.f32 %v2355, %v2368
      %v2372 = vmul.f32 %v2369, 1.442695
      %v2373 = vpow.pop %v2372
      %v2374 = vmul.f32 %v2370, 1.442695
      %v2375 = vpow.pop %v2374
      %v2376 = vmul.f32 %v2371, 1.442695
      %v2377 = vpow.pop %v2376
      %v2378 = vsel %vm844, %v2373, 0.0
      %2379 = vadd.xlane.f32.xlu0 %v2378
      %v2380 = vpop.xlane.xlu0 %2379
      %v2381 = vsel %vm844, %v2375, 0.0
      %2382 = vadd.xlane.f32.xlu0 %v2381
      %v2383 = vpop.xlane.xlu0 %2382
      %v2384 = vsel %vm851, %v2377, 0.0
      %2385 = vadd.xlane.f32.xlu0 %v2384
      %v2386 = vpop.xlane.xlu0 %2385
      %v2387 = vrcp.pop %v2380
      %v2388 = vrcp.pop %v2383
      %v2389 = vrcp.pop %v2386
      %v2390 = vmul.f32 %v2373, %v2387
      %v2391 = vmul.f32 %v2375, %v2388
      %v2392 = vmul.f32 %v2377, %v2389
      %v2393 = vadd.f32 %v2289, %v2390
      %v2394 = vadd.f32 %v2290, %v2391
      %v2395 = vadd.f32 %v2291, %v2392
      %2396 = vrot.lane.b32.xlu0 %v2087, 104
      %v2397 = vpop.permute.xlu0 %2396
      %2398 = vrot.lane.b32.xlu0 %v2088, 104
      %v2399 = vpop.permute.xlu0 %2398
      %2400 = vrot.lane.b32.xlu0 %v2087, 72
      %v2401 = vpop.permute.xlu0 %2400
      %2402 = vrot.lane.b32.xlu0 %v2088, 72
      %v2403 = vpop.permute.xlu0 %2402
      %v2405 = vsel %vm783, %v2397, 0
      %v2408 = vsel %vm783, %v2399, 0
      %v2411 = vsel %vm783, %v2401, 0
      %v2414 = vsel %vm783, %v2403, 0
      %2416 = vmatprep.subr.bf16.mxu0 0
      %2417 = vmatpush1.bf16.xpose.msra.mxu0 %v2411
      %2418 = vmatprep.subr.bf16.mxu0 0
      %2419 = vmatpush1.bf16.xpose.msra.mxu0 %v2414
      %2420 = vmatprep.subr.bf16.mxu0 0
      %2421 = vmatpush1.bf16.xpose.msra.mxu0 0
      %2422 = vmatprep.subr.bf16.mxu0 0
      %2423 = vmatpush1.bf16.xpose.msra.mxu0 0
      %2424 = vmatprep.subr.bf16.mxu0 0
      %2425 = vmatpush1.bf16.xpose.msra.mxu0 0
      %2426 = vmatprep.subr.bf16.mxu0 0
      %2427 = vmatpush1.bf16.xpose.msra.mxu0 0
      %2428 = vmatprep.subr.bf16.mxu0 0
      %2429 = vmatpush1.bf16.xpose.msra.mxu0 0
      %2430 = vmatprep.subr.bf16.mxu0 0
      %2431 = vmatpush1.bf16.xpose.msra.mxu0 0
      %2432 = vmatprep.subr.bf16.mxu0 0
      %2433 = vmatpush1.bf16.xpose.msra.mxu0 0
      %2434 = vmatprep.subr.bf16.mxu0 0
      %2435 = vmatpush1.bf16.xpose.msra.mxu0 0
      %2436 = vmatprep.subr.bf16.mxu0 0
      %2437 = vmatpush1.bf16.xpose.msra.mxu0 0
      %2438 = vmatprep.subr.bf16.mxu0 0
      %2439 = vmatpush1.bf16.xpose.msra.mxu0 0
      %2440 = vmatprep.subr.bf16.mxu0 0
      %2441 = vmatpush1.bf16.xpose.msra.mxu0 0
      %2442 = vmatprep.subr.bf16.mxu0 0
      %2443 = vmatpush1.bf16.xpose.msra.mxu0 0
      %2444 = vmatprep.subr.bf16.mxu0 0
      %2445 = vmatpush1.bf16.xpose.msra.mxu0 0
      %2446 = vmatprep.subr.bf16.mxu0 0
      %2447 = vmatpush1.bf16.xpose.msra.mxu0 0
      %2448 = vmatprep.mubr.bf16.mxu0 0
      %2449 = vmatmul.mubr.bf16.gmra.mrb[0].mxu0 %v2405
      %v2450 = vpop.f32.mrb[0].mxu0
      %v2451 = vadd.f32 0.0, %v2450
      %v2452 = vpop.f32.mrb[0].mxu0
      %v2453 = vpop.f32.mrb[0].mxu0
      %v2454 = vadd.f32 0.0, %v2453
      %v2455 = vpop.f32.mrb[0].mxu0
      %2456 = vmatprep.mubr.bf16.mxu0 0
      %2457 = vmatmul.mubr.bf16.gmra.mrb[0].mxu0 %v2408
      %v2458 = vpop.f32.mrb[0].mxu0
      %v2459 = vadd.f32 0.0, %v2458
      %v2460 = vpop.f32.mrb[0].mxu0
      %v2461 = vpop.f32.mrb[0].mxu0
      %v2462 = vpop.f32.mrb[0].mxu0
      %2463 = vdwg.mxu0
      %v2464 = vsel %vm844, %v2451, -inf
      %2465 = vmax.xlane.f32.xlu0 %v2464
      %v2466 = vpop.xlane.xlu0 %2465
      %v2467 = vsel %vm844, %v2454, -inf
      %2468 = vmax.xlane.f32.xlu0 %v2467
      %v2469 = vpop.xlane.xlu0 %2468
      %v2470 = vsel %vm851, %v2459, -inf
      %2471 = vmax.xlane.f32.xlu0 %v2470
      %v2472 = vpop.xlane.xlu0 %2471
      %v2473 = vsub.f32 %v2451, %v2466
      %v2474 = vsub.f32 %v2454, %v2469
      %v2475 = vsub.f32 %v2459, %v2472
      %v2476 = vmul.f32 %v2473, 1.442695
      %v2477 = vpow.pop %v2476
      %v2478 = vmul.f32 %v2474, 1.442695
      %v2479 = vpow.pop %v2478
      %v2480 = vmul.f32 %v2475, 1.442695
      %v2481 = vpow.pop %v2480
      %v2482 = vsel %vm844, %v2477, 0.0
      %2483 = vadd.xlane.f32.xlu0 %v2482
      %v2484 = vpop.xlane.xlu0 %2483
      %v2485 = vsel %vm844, %v2479, 0.0
      %2486 = vadd.xlane.f32.xlu0 %v2485
      %v2487 = vpop.xlane.xlu0 %2486
      %v2488 = vsel %vm851, %v2481, 0.0
      %2489 = vadd.xlane.f32.xlu0 %v2488
      %v2490 = vpop.xlane.xlu0 %2489
      %v2491 = vrcp.pop %v2484
      %v2492 = vrcp.pop %v2487
      %v2493 = vrcp.pop %v2490
      %v2494 = vmul.f32 %v2477, %v2491
      %v2495 = vmul.f32 %v2479, %v2492
      %v2496 = vmul.f32 %v2481, %v2493
      %v2497 = vadd.f32 %v2393, %v2494
      %v2498 = vadd.f32 %v2394, %v2495
      %v2499 = vadd.f32 %v2395, %v2496
      %v2500 = vmul.f32 %v2497, 0.25
      %v2501 = vmul.f32 %v2498, 0.25
      %v2502 = vmul.f32 %v2499, 0.25
      %v2503 = vadd.f32 %v2500, %v638
      %v2504 = vadd.f32 %v2501, %v639
      %v2505 = vadd.f32 %v2502, %v640
      %v2506 = vmul.f32 %v2503, 0.5
      %v2507 = vmul.f32 %v2504, 0.5
      %v2508 = vmul.f32 %v2505, 0.5
      %v2509 = vsel %vm844, %v2506, 0.0
      %2510 = vadd.xlane.f32.xlu0 %v2509
      %v2511 = vpop.xlane.xlu0 %2510
      %v2512 = vsel %vm844, %v2507, 0.0
      %2513 = vadd.xlane.f32.xlu0 %v2512
      %v2514 = vpop.xlane.xlu0 %2513
      %v2515 = vsel %vm851, %v2508, 0.0
      %2516 = vadd.xlane.f32.xlu0 %v2515
      %v2517 = vpop.xlane.xlu0 %2516
      %v2518 = vrcp.pop %v2511
      %v2519 = vmul.f32 %v2506, %v2518
      %v2520 = vrcp.pop %v2514
      %v2521 = vmul.f32 %v2507, %v2520
      %v2522 = vrcp.pop %v2517
      %v2523 = vmul.f32 %v2508, %v2522
      %v2524 = vpack.c.bf16 %v2521, %v2519
      %v2525 = vpack.c.bf16 %v2523, %v2523
      %v2526 = vpack.c.bf16 %v1657, %v1654
      %v2527 = vpack.c.bf16 %v1662, %v1662
      %v2529 = vsel %vm844, %v2524, 0
      %v2532 = vsel %vm844, %v2525, 0
      %v2535 = vand.u32 %v2527, %v894
      %2537 = vmatprep.subr.bf16.mxu0 0
      %2538 = vmatpush1.bf16.msra.mxu0 %v2526
      %2539 = vmatprep.subr.bf16.mxu0 0
      %2540 = vmatpush1.bf16.msra.mxu0 %v2535
      %2541 = vmatprep.subr.bf16.mxu0 0
      %2542 = vmatpush1.bf16.msra.mxu0 0
      %2543 = vmatprep.subr.bf16.mxu0 0
      %2544 = vmatpush1.bf16.msra.mxu0 0
      %2545 = vmatprep.subr.bf16.mxu0 0
      %2546 = vmatpush1.bf16.msra.mxu0 0
      %2547 = vmatprep.subr.bf16.mxu0 0
      %2548 = vmatpush1.bf16.msra.mxu0 0
      %2549 = vmatprep.subr.bf16.mxu0 0
      %2550 = vmatpush1.bf16.msra.mxu0 0
      %2551 = vmatprep.subr.bf16.mxu0 0
      %2552 = vmatpush1.bf16.msra.mxu0 0
      %2553 = vmatprep.subr.bf16.mxu0 0
      %2554 = vmatpush1.bf16.msra.mxu0 0
      %2555 = vmatprep.subr.bf16.mxu0 0
      %2556 = vmatpush1.bf16.msra.mxu0 0
      %2557 = vmatprep.subr.bf16.mxu0 0
      %2558 = vmatpush1.bf16.msra.mxu0 0
      %2559 = vmatprep.subr.bf16.mxu0 0
      %2560 = vmatpush1.bf16.msra.mxu0 0
      %2561 = vmatprep.subr.bf16.mxu0 0
      %2562 = vmatpush1.bf16.msra.mxu0 0
      %2563 = vmatprep.subr.bf16.mxu0 0
      %2564 = vmatpush1.bf16.msra.mxu0 0
      %2565 = vmatprep.subr.bf16.mxu0 0
      %2566 = vmatpush1.bf16.msra.mxu0 0
      %2567 = vmatprep.subr.bf16.mxu0 0
      %2568 = vmatpush1.bf16.msra.mxu0 0
      %2569 = vmatprep.mubr.bf16.mxu0 0
      %2570 = vmatmul.mubr.bf16.gmra.mrb[0].mxu0 %v2529
      %v2571 = vpop.f32.mrb[0].mxu0
      %v2572 = vadd.f32 0.0, %v2571
      %v2573 = vpop.f32.mrb[0].mxu0
      %v2574 = vpop.f32.mrb[0].mxu0
      %v2575 = vpop.f32.mrb[0].mxu0
      %2576 = vmatprep.mubr.bf16.mxu0 0
      %2577 = vmatmul.mubr.bf16.gmra.mrb[0].mxu0 %v2532
      %v2578 = vpop.f32.mrb[0].mxu0
      %v2579 = vpop.f32.mrb[0].mxu0
      %v2580 = vpop.f32.mrb[0].mxu0
      %v2581 = vpop.f32.mrb[0].mxu0
      %2582 = vdwg.mxu0
      %2583 = vst.msk [vmem:[%s525] sm:$0x1] %vm851, %v2572
      %p2584 = scmp.lt.s32.totalorder %s28, 1
      %s2585 = scalar_select %p2584, %s28, 1
      %s2586 = scalar_lea.vmem %s15, %s2585
      %p2587 = scmp.lt.s32.totalorder %s28, 1
      %s2588 = scalar_select %p2587, %s28, 1
      %s2589 = smul.addr %s2588, 3
      %s2590 = smul.addr %s2589, 8
      %s2591 = scalar_lea.vmem %s16, %s2590
      // Predicated region
      $region81: #{optimal_sampler_forward.2} parent=79 // pred_check
        %p2592 = pneg %p366
      $region82: #{optimal_sampler_forward.2} parent=79 // pred_check_branch
        %2594 = sbr.rel (%p2592) target = $region84
      $region83: #{optimal_sampler_forward.2} parent=79 // pred_region
        _
      $region84: #{optimal_sampler_forward.2} parent=79 // pred_fallthru
        _
      // Predicated region
      $region85: #{optimal_sampler_forward.2} parent=79 // pred_check
        %p2595 = pneg %p392
      $region86: #{optimal_sampler_forward.2} parent=79 // pred_check_branch
        %2597 = sbr.rel (%p2595) target = $region88
      $region87: #{optimal_sampler_forward.2} parent=79 // pred_region
        _
      $region88: #{optimal_sampler_forward.2} parent=79 // pred_fallthru
        _
    $region80: #{optimal_sampler_forward.2} parent=5 // pred_fallthru
      _
    %p2598 = scmp.le.s32.totalorder 2, %s23
    // Predicated region
    $region89: #{optimal_sampler_forward.2} parent=5 // pred_check
      %p2599 = pneg %p2598
    $region90: #{optimal_sampler_forward.2} parent=5 // pred_check_branch
      %2601 = sbr.rel (%p2599) target = $region92
    $region91: #{optimal_sampler_forward.2} parent=5 // pred_region
      %s2602 = ssub.s32 %s23, 2
      // Predicated region
      $region93: #{optimal_sampler_forward.2} parent=91 // pred_check
        %p2603 = pneg %p372
      $region94: #{optimal_sampler_forward.2} parent=91 // pred_check_branch
        %2605 = sbr.rel (%p2603) target = $region96
      $region95: #{optimal_sampler_forward.2} parent=91 // pred_region
        %p2606 = scmp.lt.s32.totalorder %s29, 1
        %s2607 = scalar_select %p2606, %s29, 1
        %s2608 = scalar_lea.vmem %s15, %s2607
      $region96: #{optimal_sampler_forward.2} parent=91 // pred_fallthru
        _
      // Predicated region
      $region97: #{optimal_sampler_forward.2} parent=91 // pred_check
        %p2609 = pneg %p398
      $region98: #{optimal_sampler_forward.2} parent=91 // pred_check_branch
        %2611 = sbr.rel (%p2609) target = $region100
      $region99: #{optimal_sampler_forward.2} parent=91 // pred_region
        %p2612 = scmp.lt.s32.totalorder %s29, 1
        %s2613 = scalar_select %p2612, %s29, 1
        %s2614 = smul.addr %s2613, 3
        %s2615 = smul.addr %s2614, 8
        %s2616 = scalar_lea.vmem %s16, %s2615
      $region100: #{optimal_sampler_forward.2} parent=91 // pred_fallthru
        _
    $region92: #{optimal_sampler_forward.2} parent=5 // pred_fallthru
      _
  $region6: #{optimal_sampler_forward.2} parent=0 // loop_footer
    %s27 = sadd.s32 1, %s23
  $region7: #{optimal_sampler_forward.2} parent=0 // loop_footer_branch
    %22 = sbr.rel target = $region3
  $region8: #{optimal_sampler_forward.2} parent=0 // loop_exit
    _

// kernel: optimal_sampler_forward.3
$region0: #{optimal_sampler_forward.3}
  #allocation0 [shape = 'u32[]', space=smem, size = 0x4, offset = 0x4, fixed_abs, tag = 'smem constant byte address 0x4 - core index']
  #allocation1 [shape = 'u32[144,128]{1,0:T(1,128)}', space=vmem, size = 0x12000, scoped, tag = 'internal scratch']
  #allocation2 [shape = 's32[1]{0}', space=sflag, size = 0x4, scoped, tag = 'scoped memory for optimal_sampler_forward.3']
  #allocation3 [shape = 'u8[1024]{0}', space=smem, size = 0x400, scoped, tag = 'prefetched SMEM operand 0']
  %s0 = inlined_call_operand.vmem [shape: s32[2,8], index: 0, kind: input, shape index: {}]
  %s1 = inlined_call_operand.vmem [shape: f32[2,17,32], index: 1, kind: input, shape index: {}]
  %s2 = inlined_call_operand.vmem [shape: f32[2,2,32], index: 2, kind: input, shape index: {}]
  %s3 = inlined_call_operand.vmem [shape: bf16[2,32,96], index: 3, kind: input, shape index: {}]
  %s4 = inlined_call_operand.vmem [shape: f32[2,1,96], index: 4, kind: input, shape index: {}]
  %s5 = inlined_call_operand.vmem [shape: bf16[2,32,32], index: 5, kind: input, shape index: {}]
  %s6 = inlined_call_operand.vmem [shape: f32[2,1,32], index: 6, kind: input, shape index: {}]
  %s7 = inlined_call_operand.vmem [shape: f32[2,2,32], index: 7, kind: input, shape index: {}]
  %s8 = inlined_call_operand.vmem [shape: bf16[2,32,128], index: 8, kind: input, shape index: {}]
  %s9 = inlined_call_operand.vmem [shape: f32[2,1,128], index: 9, kind: input, shape index: {}]
  %s10 = inlined_call_operand.vmem [shape: bf16[2,128,32], index: 10, kind: input, shape index: {}]
  %s11 = inlined_call_operand.vmem [shape: f32[2,1,32], index: 11, kind: input, shape index: {}]
  %s12 = inlined_call_operand.vmem [shape: f32[2,32], index: 12, kind: input, shape index: {}]
  %s13 = inlined_call_operand.vmem [shape: bf16[32,8], index: 13, kind: input, shape index: {}]
  %s14 = inlined_call_operand.vmem [shape: f32[1,8], index: 14, kind: input, shape index: {}]
  %s15 = inlined_call_operand.hbm [shape: f32[2,1,8], index: 15, kind: output, shape index: {}]
  %s16 = sld [smem:[#allocation0]]
  $region89: #{optimal_sampler_forward.3} parent=0
    _
  %s18 = ssub.s32 1, %s16
  %s19 = scalar_select 0, %s18, %s16
  %s20 = sshll.u32 %s0, 4
  %s21 = int_to_ptr.vmem [resolvable:$true] %s20
  %23 = dma.vmem_to_smem %s21, 32, [#allocation3], [#allocation2]
  %24 = dma.done [#allocation2], 32
  %25 = sfence
  $region1: #{optimal_sampler_forward.3} parent=0
    #allocation4 [shape = 'u8[1024]{0}', space=vmem, size = 0x400, scoped, tag = 'output window, operand 0']
    #allocation5 [shape = 's32[2]{0}', space=sflag, size = 0x8, scoped, tag = 'scoped memory for optimal_sampler_forward.3']
    %26 = vsyncpa [#allocation5], 0
    %s27 = scalar_lea.sflag [#allocation5], 1
    %28 = vsyncpa %s27, 0
    loop: start=0, step=1, limit=4
    $region2: #{optimal_sampler_forward.3} parent=1 // loop_pre_header
      _
    $region3: #{optimal_sampler_forward.3} parent=1 // loop_header
      %s30 = sphi 0, %s34
      %p31 = scmp.ge.s32.totalorder %s30, 4
      %s40 = sphi 0, %s42
      %s43 = sphi 0, %s40
      %s44 = sphi 0, %s43
      %s60 = sphi 0, %s44
      %s64 = sphi 0, %s64
      %s66 = sphi 0, %s64
      %s67 = sphi 0, %s66
      %s81 = sphi 0, %s67
      %s85 = sphi 0, %s85
      %s87 = sphi 0, %s85
      %s88 = sphi 0, %s87
      %s102 = sphi 0, %s88
      %s106 = sphi 0, %s106
      %s108 = sphi 0, %s106
      %s109 = sphi 0, %s108
      %s123 = sphi 0, %s109
      %s127 = sphi 0, %s127
      %s129 = sphi 0, %s127
      %s130 = sphi 0, %s129
      %s144 = sphi 0, %s130
      %s148 = sphi 0, %s148
      %s150 = sphi 0, %s148
      %s151 = sphi 0, %s150
      %s165 = sphi 0, %s151
      %s169 = sphi 0, %s169
      %s171 = sphi 0, %s169
      %s172 = sphi 0, %s171
      %s186 = sphi 0, %s172
      %s190 = sphi 0, %s190
      %s192 = sphi 0, %s190
      %s193 = sphi 0, %s192
      %s207 = sphi 0, %s193
      %s211 = sphi 0, %s211
      %s213 = sphi 0, %s211
      %s214 = sphi 0, %s213
      %s228 = sphi 0, %s214
      %s232 = sphi 0, %s232
      %s234 = sphi 0, %s232
      %s235 = sphi 0, %s234
      %s249 = sphi 0, %s235
      %s253 = sphi 0, %s253
      %s255 = sphi 0, %s253
      %s256 = sphi 0, %s255
      %s270 = sphi 0, %s256
      %s274 = sphi 0, %s274
      %s276 = sphi 0, %s274
      %s277 = sphi 0, %s276
      %s291 = sphi 0, %s277
      %s295 = sphi 0, %s295
      %s297 = sphi 0, %s295
      %s298 = sphi 0, %s297
      %s312 = sphi 0, %s298
      %s316 = sphi 0, %s316
      %s318 = sphi 0, %s316
      %s319 = sphi 0, %s318
      %s333 = sphi 0, %s319
      %s339 = sphi 0, %s341
      %s342 = sphi 0, %s339
      %s343 = sphi 0, %s342
      %s359 = sphi 0, %s343
    $region4: #{optimal_sampler_forward.3} parent=1 // loop_header_branch
      %33 = sbr.rel (%p31) target = $region8
    $region5: #{optimal_sampler_forward.3} parent=1 // loop_body
      %s35 = ssub.s32 %s30, 1
      %s36 = ssub.s32 %s30, 2
      %s37 = sadd.s32 %s30, 1
      %s38 = ssub.s32 %s30, %s37
      %p39 = scmp.eq.s32.totalorder %s38, 0
      %s41 = sadd.s32 %s40, 1
      %s42 = scalar_select %p39, %s40, %s41
      %p45 = pneg %p39
      %p46 = scmp.eq.s32.totalorder %s30, 1
      %p47 = por %p45, %p46
      %p48 = scmp.ne.s32.totalorder %s40, %s43
      %p49 = scmp.eq.s32.totalorder %s30, 0
      %p50 = por %p48, %p49
      %p51 = scmp.ne.s32.totalorder %s40, %s43
      %p52 = scmp.eq.s32.totalorder %s35, 1
      %p53 = por %p51, %p52
      %p54 = scmp.ne.s32.totalorder %s43, %s44
      %p55 = scmp.eq.s32.totalorder %s35, 0
      %p56 = por %p54, %p55
      %p57 = scmp.ne.s32.totalorder %s43, %s44
      %p58 = scmp.eq.s32.totalorder %s36, 1
      %p59 = por %p57, %p58
      %p61 = scmp.ne.s32.totalorder %s44, %s60
      %p62 = scmp.eq.s32.totalorder %s36, 0
      %p63 = por %p61, %p62
      %s65 = sadd.s32 %s64, 1
      %p68 = scmp.eq.s32.totalorder %s30, 1
      %p69 = scmp.ne.s32.totalorder %s64, %s66
      %p70 = scmp.eq.s32.totalorder %s30, 0
      %p71 = por %p69, %p70
      %p72 = scmp.ne.s32.totalorder %s64, %s66
      %p73 = scmp.eq.s32.totalorder %s35, 1
      %p74 = por %p72, %p73
      %p75 = scmp.ne.s32.totalorder %s66, %s67
      %p76 = scmp.eq.s32.totalorder %s35, 0
      %p77 = por %p75, %p76
      %p78 = scmp.ne.s32.totalorder %s66, %s67
      %p79 = scmp.eq.s32.totalorder %s36, 1
      %p80 = por %p78, %p79
      %p82 = scmp.ne.s32.totalorder %s67, %s81
      %p83 = scmp.eq.s32.totalorder %s36, 0
      %p84 = por %p82, %p83
      %s86 = sadd.s32 %s85, 1
      %p89 = scmp.eq.s32.totalorder %s30, 1
      %p90 = scmp.ne.s32.totalorder %s85, %s87
      %p91 = scmp.eq.s32.totalorder %s30, 0
      %p92 = por %p90, %p91
      %p93 = scmp.ne.s32.totalorder %s85, %s87
      %p94 = scmp.eq.s32.totalorder %s35, 1
      %p95 = por %p93, %p94
      %p96 = scmp.ne.s32.totalorder %s87, %s88
      %p97 = scmp.eq.s32.totalorder %s35, 0
      %p98 = por %p96, %p97
      %p99 = scmp.ne.s32.totalorder %s87, %s88
      %p100 = scmp.eq.s32.totalorder %s36, 1
      %p101 = por %p99, %p100
      %p103 = scmp.ne.s32.totalorder %s88, %s102
      %p104 = scmp.eq.s32.totalorder %s36, 0
      %p105 = por %p103, %p104
      %s107 = sadd.s32 %s106, 1
      %p110 = scmp.eq.s32.totalorder %s30, 1
      %p111 = scmp.ne.s32.totalorder %s106, %s108
      %p112 = scmp.eq.s32.totalorder %s30, 0
      %p113 = por %p111, %p112
      %p114 = scmp.ne.s32.totalorder %s106, %s108
      %p115 = scmp.eq.s32.totalorder %s35, 1
      %p116 = por %p114, %p115
      %p117 = scmp.ne.s32.totalorder %s108, %s109
      %p118 = scmp.eq.s32.totalorder %s35, 0
      %p119 = por %p117, %p118
      %p120 = scmp.ne.s32.totalorder %s108, %s109
      %p121 = scmp.eq.s32.totalorder %s36, 1
      %p122 = por %p120, %p121
      %p124 = scmp.ne.s32.totalorder %s109, %s123
      %p125 = scmp.eq.s32.totalorder %s36, 0
      %p126 = por %p124, %p125
      %s128 = sadd.s32 %s127, 1
      %p131 = scmp.eq.s32.totalorder %s30, 1
      %p132 = scmp.ne.s32.totalorder %s127, %s129
      %p133 = scmp.eq.s32.totalorder %s30, 0
      %p134 = por %p132, %p133
      %p135 = scmp.ne.s32.totalorder %s127, %s129
      %p136 = scmp.eq.s32.totalorder %s35, 1
      %p137 = por %p135, %p136
      %p138 = scmp.ne.s32.totalorder %s129, %s130
      %p139 = scmp.eq.s32.totalorder %s35, 0
      %p140 = por %p138, %p139
      %p141 = scmp.ne.s32.totalorder %s129, %s130
      %p142 = scmp.eq.s32.totalorder %s36, 1
      %p143 = por %p141, %p142
      %p145 = scmp.ne.s32.totalorder %s130, %s144
      %p146 = scmp.eq.s32.totalorder %s36, 0
      %p147 = por %p145, %p146
      %s149 = sadd.s32 %s148, 1
      %p152 = scmp.eq.s32.totalorder %s30, 1
      %p153 = scmp.ne.s32.totalorder %s148, %s150
      %p154 = scmp.eq.s32.totalorder %s30, 0
      %p155 = por %p153, %p154
      %p156 = scmp.ne.s32.totalorder %s148, %s150
      %p157 = scmp.eq.s32.totalorder %s35, 1
      %p158 = por %p156, %p157
      %p159 = scmp.ne.s32.totalorder %s150, %s151
      %p160 = scmp.eq.s32.totalorder %s35, 0
      %p161 = por %p159, %p160
      %p162 = scmp.ne.s32.totalorder %s150, %s151
      %p163 = scmp.eq.s32.totalorder %s36, 1
      %p164 = por %p162, %p163
      %p166 = scmp.ne.s32.totalorder %s151, %s165
      %p167 = scmp.eq.s32.totalorder %s36, 0
      %p168 = por %p166, %p167
      %s170 = sadd.s32 %s169, 1
      %p173 = scmp.eq.s32.totalorder %s30, 1
      %p174 = scmp.ne.s32.totalorder %s169, %s171
      %p175 = scmp.eq.s32.totalorder %s30, 0
      %p176 = por %p174, %p175
      %p177 = scmp.ne.s32.totalorder %s169, %s171
      %p178 = scmp.eq.s32.totalorder %s35, 1
      %p179 = por %p177, %p178
      %p180 = scmp.ne.s32.totalorder %s171, %s172
      %p181 = scmp.eq.s32.totalorder %s35, 0
      %p182 = por %p180, %p181
      %p183 = scmp.ne.s32.totalorder %s171, %s172
      %p184 = scmp.eq.s32.totalorder %s36, 1
      %p185 = por %p183, %p184
      %p187 = scmp.ne.s32.totalorder %s172, %s186
      %p188 = scmp.eq.s32.totalorder %s36, 0
      %p189 = por %p187, %p188
      %s191 = sadd.s32 %s190, 1
      %p194 = scmp.eq.s32.totalorder %s30, 1
      %p195 = scmp.ne.s32.totalorder %s190, %s192
      %p196 = scmp.eq.s32.totalorder %s30, 0
      %p197 = por %p195, %p196
      %p198 = scmp.ne.s32.totalorder %s190, %s192
      %p199 = scmp.eq.s32.totalorder %s35, 1
      %p200 = por %p198, %p199
      %p201 = scmp.ne.s32.totalorder %s192, %s193
      %p202 = scmp.eq.s32.totalorder %s35, 0
      %p203 = por %p201, %p202
      %p204 = scmp.ne.s32.totalorder %s192, %s193
      %p205 = scmp.eq.s32.totalorder %s36, 1
      %p206 = por %p204, %p205
      %p208 = scmp.ne.s32.totalorder %s193, %s207
      %p209 = scmp.eq.s32.totalorder %s36, 0
      %p210 = por %p208, %p209
      %s212 = sadd.s32 %s211, 1
      %p215 = scmp.eq.s32.totalorder %s30, 1
      %p216 = scmp.ne.s32.totalorder %s211, %s213
      %p217 = scmp.eq.s32.totalorder %s30, 0
      %p218 = por %p216, %p217
      %p219 = scmp.ne.s32.totalorder %s211, %s213
      %p220 = scmp.eq.s32.totalorder %s35, 1
      %p221 = por %p219, %p220
      %p222 = scmp.ne.s32.totalorder %s213, %s214
      %p223 = scmp.eq.s32.totalorder %s35, 0
      %p224 = por %p222, %p223
      %p225 = scmp.ne.s32.totalorder %s213, %s214
      %p226 = scmp.eq.s32.totalorder %s36, 1
      %p227 = por %p225, %p226
      %p229 = scmp.ne.s32.totalorder %s214, %s228
      %p230 = scmp.eq.s32.totalorder %s36, 0
      %p231 = por %p229, %p230
      %s233 = sadd.s32 %s232, 1
      %p236 = scmp.eq.s32.totalorder %s30, 1
      %p237 = scmp.ne.s32.totalorder %s232, %s234
      %p238 = scmp.eq.s32.totalorder %s30, 0
      %p239 = por %p237, %p238
      %p240 = scmp.ne.s32.totalorder %s232, %s234
      %p241 = scmp.eq.s32.totalorder %s35, 1
      %p242 = por %p240, %p241
      %p243 = scmp.ne.s32.totalorder %s234, %s235
      %p244 = scmp.eq.s32.totalorder %s35, 0
      %p245 = por %p243, %p244
      %p246 = scmp.ne.s32.totalorder %s234, %s235
      %p247 = scmp.eq.s32.totalorder %s36, 1
      %p248 = por %p246, %p247
      %p250 = scmp.ne.s32.totalorder %s235, %s249
      %p251 = scmp.eq.s32.totalorder %s36, 0
      %p252 = por %p250, %p251
      %s254 = sadd.s32 %s253, 1
      %p257 = scmp.eq.s32.totalorder %s30, 1
      %p258 = scmp.ne.s32.totalorder %s253, %s255
      %p259 = scmp.eq.s32.totalorder %s30, 0
      %p260 = por %p258, %p259
      %p261 = scmp.ne.s32.totalorder %s253, %s255
      %p262 = scmp.eq.s32.totalorder %s35, 1
      %p263 = por %p261, %p262
      %p264 = scmp.ne.s32.totalorder %s255, %s256
      %p265 = scmp.eq.s32.totalorder %s35, 0
      %p266 = por %p264, %p265
      %p267 = scmp.ne.s32.totalorder %s255, %s256
      %p268 = scmp.eq.s32.totalorder %s36, 1
      %p269 = por %p267, %p268
      %p271 = scmp.ne.s32.totalorder %s256, %s270
      %p272 = scmp.eq.s32.totalorder %s36, 0
      %p273 = por %p271, %p272
      %s275 = sadd.s32 %s274, 1
      %p278 = scmp.eq.s32.totalorder %s30, 1
      %p279 = scmp.ne.s32.totalorder %s274, %s276
      %p280 = scmp.eq.s32.totalorder %s30, 0
      %p281 = por %p279, %p280
      %p282 = scmp.ne.s32.totalorder %s274, %s276
      %p283 = scmp.eq.s32.totalorder %s35, 1
      %p284 = por %p282, %p283
      %p285 = scmp.ne.s32.totalorder %s276, %s277
      %p286 = scmp.eq.s32.totalorder %s35, 0
      %p287 = por %p285, %p286
      %p288 = scmp.ne.s32.totalorder %s276, %s277
      %p289 = scmp.eq.s32.totalorder %s36, 1
      %p290 = por %p288, %p289
      %p292 = scmp.ne.s32.totalorder %s277, %s291
      %p293 = scmp.eq.s32.totalorder %s36, 0
      %p294 = por %p292, %p293
      %s296 = sadd.s32 %s295, 1
      %p299 = scmp.eq.s32.totalorder %s30, 1
      %p300 = scmp.ne.s32.totalorder %s295, %s297
      %p301 = scmp.eq.s32.totalorder %s30, 0
      %p302 = por %p300, %p301
      %p303 = scmp.ne.s32.totalorder %s295, %s297
      %p304 = scmp.eq.s32.totalorder %s35, 1
      %p305 = por %p303, %p304
      %p306 = scmp.ne.s32.totalorder %s297, %s298
      %p307 = scmp.eq.s32.totalorder %s35, 0
      %p308 = por %p306, %p307
      %p309 = scmp.ne.s32.totalorder %s297, %s298
      %p310 = scmp.eq.s32.totalorder %s36, 1
      %p311 = por %p309, %p310
      %p313 = scmp.ne.s32.totalorder %s298, %s312
      %p314 = scmp.eq.s32.totalorder %s36, 0
      %p315 = por %p313, %p314
      %s317 = sadd.s32 %s316, 1
      %p320 = scmp.eq.s32.totalorder %s30, 1
      %p321 = scmp.ne.s32.totalorder %s316, %s318
      %p322 = scmp.eq.s32.totalorder %s30, 0
      %p323 = por %p321, %p322
      %p324 = scmp.ne.s32.totalorder %s316, %s318
      %p325 = scmp.eq.s32.totalorder %s35, 1
      %p326 = por %p324, %p325
      %p327 = scmp.ne.s32.totalorder %s318, %s319
      %p328 = scmp.eq.s32.totalorder %s35, 0
      %p329 = por %p327, %p328
      %p330 = scmp.ne.s32.totalorder %s318, %s319
      %p331 = scmp.eq.s32.totalorder %s36, 1
      %p332 = por %p330, %p331
      %p334 = scmp.ne.s32.totalorder %s319, %s333
      %p335 = scmp.eq.s32.totalorder %s36, 0
      %p336 = por %p334, %p335
      %s337 = ssub.s32 %s30, %s37
      %p338 = scmp.eq.s32.totalorder %s337, 0
      %s340 = sadd.s32 %s339, 1
      %s341 = scalar_select %p338, %s339, %s340
      %p344 = pneg %p338
      %p345 = scmp.eq.s32.totalorder %s30, 1
      %p346 = por %p344, %p345
      %p347 = scmp.ne.s32.totalorder %s339, %s342
      %p348 = scmp.eq.s32.totalorder %s30, 0
      %p349 = por %p347, %p348
      %p350 = scmp.ne.s32.totalorder %s339, %s342
      %p351 = scmp.eq.s32.totalorder %s35, 1
      %p352 = por %p350, %p351
      %p353 = scmp.ne.s32.totalorder %s342, %s343
      %p354 = scmp.eq.s32.totalorder %s35, 0
      %p355 = por %p353, %p354
      %p356 = scmp.ne.s32.totalorder %s342, %s343
      %p357 = scmp.eq.s32.totalorder %s36, 1
      %p358 = por %p356, %p357
      %p360 = scmp.ne.s32.totalorder %s343, %s359
      %p361 = scmp.eq.s32.totalorder %s36, 0
      %p362 = por %p360, %p361
      %p363 = scmp.le.s32.totalorder 1, %s30
      %p364 = scmp.lt.s32.totalorder %s30, 3
      %p365 = pnand %p363, %p364
      %p366 = pneg %p365
      // Predicated region
      $region9: #{optimal_sampler_forward.3} parent=5 // pred_check
        _
      $region10: #{optimal_sampler_forward.3} parent=5 // pred_check_branch
        %368 = sbr.rel (%p365) target = $region12
      $region11: #{optimal_sampler_forward.3} parent=5 // pred_region
        %s369 = ssub.s32 %s30, 1
        // Predicated region
        $region13: #{optimal_sampler_forward.3} parent=11 // pred_check
          %p370 = pneg %p77
        $region14: #{optimal_sampler_forward.3} parent=11 // pred_check_branch
          %372 = sbr.rel (%p370) target = $region16
        $region15: #{optimal_sampler_forward.3} parent=11 // pred_region
          _
        $region16: #{optimal_sampler_forward.3} parent=11 // pred_fallthru
          _
        // Predicated region
        $region17: #{optimal_sampler_forward.3} parent=11 // pred_check
          %p373 = pneg %p98
        $region18: #{optimal_sampler_forward.3} parent=11 // pred_check_branch
          %375 = sbr.rel (%p373) target = $region20
        $region19: #{optimal_sampler_forward.3} parent=11 // pred_region
          _
        $region20: #{optimal_sampler_forward.3} parent=11 // pred_fallthru
          _
        // Predicated region
        $region21: #{optimal_sampler_forward.3} parent=11 // pred_check
          %p376 = pneg %p119
        $region22: #{optimal_sampler_forward.3} parent=11 // pred_check_branch
          %378 = sbr.rel (%p376) target = $region24
        $region23: #{optimal_sampler_forward.3} parent=11 // pred_region
          _
        $region24: #{optimal_sampler_forward.3} parent=11 // pred_fallthru
          _
        // Predicated region
        $region25: #{optimal_sampler_forward.3} parent=11 // pred_check
          %p379 = pneg %p140
        $region26: #{optimal_sampler_forward.3} parent=11 // pred_check_branch
          %381 = sbr.rel (%p379) target = $region28
        $region27: #{optimal_sampler_forward.3} parent=11 // pred_region
          _
        $region28: #{optimal_sampler_forward.3} parent=11 // pred_fallthru
          _
        // Predicated region
        $region29: #{optimal_sampler_forward.3} parent=11 // pred_check
          %p382 = pneg %p161
        $region30: #{optimal_sampler_forward.3} parent=11 // pred_check_branch
          %384 = sbr.rel (%p382) target = $region32
        $region31: #{optimal_sampler_forward.3} parent=11 // pred_region
          _
        $region32: #{optimal_sampler_forward.3} parent=11 // pred_fallthru
          _
        // Predicated region
        $region33: #{optimal_sampler_forward.3} parent=11 // pred_check
          %p385 = pneg %p182
        $region34: #{optimal_sampler_forward.3} parent=11 // pred_check_branch
          %387 = sbr.rel (%p385) target = $region36
        $region35: #{optimal_sampler_forward.3} parent=11 // pred_region
          _
        $region36: #{optimal_sampler_forward.3} parent=11 // pred_fallthru
          _
        // Predicated region
        $region37: #{optimal_sampler_forward.3} parent=11 // pred_check
          %p388 = pneg %p203
        $region38: #{optimal_sampler_forward.3} parent=11 // pred_check_branch
          %390 = sbr.rel (%p388) target = $region40
        $region39: #{optimal_sampler_forward.3} parent=11 // pred_region
          _
        $region40: #{optimal_sampler_forward.3} parent=11 // pred_fallthru
          _
        // Predicated region
        $region41: #{optimal_sampler_forward.3} parent=11 // pred_check
          %p391 = pneg %p224
        $region42: #{optimal_sampler_forward.3} parent=11 // pred_check_branch
          %393 = sbr.rel (%p391) target = $region44
        $region43: #{optimal_sampler_forward.3} parent=11 // pred_region
          _
        $region44: #{optimal_sampler_forward.3} parent=11 // pred_fallthru
          _
        // Predicated region
        $region45: #{optimal_sampler_forward.3} parent=11 // pred_check
          %p394 = pneg %p245
        $region46: #{optimal_sampler_forward.3} parent=11 // pred_check_branch
          %396 = sbr.rel (%p394) target = $region48
        $region47: #{optimal_sampler_forward.3} parent=11 // pred_region
          _
        $region48: #{optimal_sampler_forward.3} parent=11 // pred_fallthru
          _
        // Predicated region
        $region49: #{optimal_sampler_forward.3} parent=11 // pred_check
          %p397 = pneg %p266
        $region50: #{optimal_sampler_forward.3} parent=11 // pred_check_branch
          %399 = sbr.rel (%p397) target = $region52
        $region51: #{optimal_sampler_forward.3} parent=11 // pred_region
          _
        $region52: #{optimal_sampler_forward.3} parent=11 // pred_fallthru
          _
        // Predicated region
        $region53: #{optimal_sampler_forward.3} parent=11 // pred_check
          %p400 = pneg %p287
        $region54: #{optimal_sampler_forward.3} parent=11 // pred_check_branch
          %402 = sbr.rel (%p400) target = $region56
        $region55: #{optimal_sampler_forward.3} parent=11 // pred_region
          _
        $region56: #{optimal_sampler_forward.3} parent=11 // pred_fallthru
          _
        // Predicated region
        $region57: #{optimal_sampler_forward.3} parent=11 // pred_check
          %p403 = pneg %p308
        $region58: #{optimal_sampler_forward.3} parent=11 // pred_check_branch
          %405 = sbr.rel (%p403) target = $region60
        $region59: #{optimal_sampler_forward.3} parent=11 // pred_region
          _
        $region60: #{optimal_sampler_forward.3} parent=11 // pred_fallthru
          _
        // Predicated region
        $region61: #{optimal_sampler_forward.3} parent=11 // pred_check
          %p406 = pneg %p329
        $region62: #{optimal_sampler_forward.3} parent=11 // pred_check_branch
          %408 = sbr.rel (%p406) target = $region64
        $region63: #{optimal_sampler_forward.3} parent=11 // pred_region
          _
        $region64: #{optimal_sampler_forward.3} parent=11 // pred_fallthru
          _
      $region12: #{optimal_sampler_forward.3} parent=5 // pred_fallthru
        _
      %p409 = scmp.lt.s32.totalorder %s30, 2
      // Predicated region
      $region65: #{optimal_sampler_forward.3} parent=5 // pred_check
        %p410 = pneg %p409
      $region66: #{optimal_sampler_forward.3} parent=5 // pred_check_branch
        %412 = sbr.rel (%p410) target = $region68
      $region67: #{optimal_sampler_forward.3} parent=5 // pred_region
        // Predicated region
        $region69: #{optimal_sampler_forward.3} parent=67 // pred_check
          %p413 = pneg %p50
        $region70: #{optimal_sampler_forward.3} parent=67 // pred_check_branch
          %415 = sbr.rel (%p413) target = $region72
        $region71: #{optimal_sampler_forward.3} parent=67 // pred_region
          %p416 = scmp.lt.s32.totalorder %s30, 1
          %s417 = scalar_select %p416, %s30, 1
          %s418 = smul.addr %s417, 3
          %s419 = smul.addr %s418, 8
          %s420 = scalar_lea.vmem %s1, %s419
        $region72: #{optimal_sampler_forward.3} parent=67 // pred_fallthru
          _
      $region68: #{optimal_sampler_forward.3} parent=5 // pred_fallthru
        _
      %p421 = scmp.le.s32.totalorder 1, %s30
      %p422 = scmp.lt.s32.totalorder %s30, 3
      %p423 = pnand %p421, %p422
      %p424 = pneg %p423
      // Predicated region
      $region73: #{optimal_sampler_forward.3} parent=5 // pred_check
        _
      $region74: #{optimal_sampler_forward.3} parent=5 // pred_check_branch
        %426 = sbr.rel (%p423) target = $region76
      $region75: #{optimal_sampler_forward.3} parent=5 // pred_region
        %s427 = ssub.s32 %s30, 1
        %p428 = scmp.lt.s32.totalorder %s35, 1
        %s429 = scalar_select %p428, %s35, 1
        %s430 = smul.addr %s429, 3
        %s431 = smul.addr %s430, 8
        %s432 = scalar_lea.vmem %s1, %s431
        %p433 = pneg %p56
        %p434 = pneg %p53
        %p435 = pneg %p77
        %p436 = pneg %p74
        %p437 = pneg %p98
        %p438 = pneg %p95
        %p439 = pneg %p119
        %p440 = pneg %p116
        %p441 = pneg %p140
        %p442 = pneg %p137
        %p443 = pneg %p161
        %p444 = pneg %p158
        %p445 = pneg %p182
        %p446 = pneg %p179
        %p447 = pneg %p203
        %p448 = pneg %p200
        %p449 = pneg %p224
        %p450 = pneg %p221
        %p451 = pneg %p245
        %p452 = pneg %p242
        %p453 = pneg %p266
        %p454 = pneg %p263
        %p455 = pneg %p287
        %p456 = pneg %p284
        %p457 = pneg %p308
        %p458 = pneg %p305
        %p459 = pneg %p329
        %p460 = pneg %p326
        %p461 = pneg %p355
        %p462 = pneg %p352
        %s463 = sand.u32 %s342, 1
        %s464 = scalar_lea.sflag [#allocation5], %s463
        %s465 = sand.u32 %s342, 1
        %s466 = scalar_lea.vmem [#allocation4], %s465
        %p467 = scmp.lt.s32.totalorder %s35, 1
        %s468 = scalar_select %p467, %s35, 1
        %s469 = smul.addr %s468, 3
        %s470 = smul.addr %s469, 8
        %s471 = scalar_lea.vmem %s1, %s470
        %v473 = vld [vmem:[%s471] sm:$0xff]
        %v474 = vld [vmem:[%s471 + $0x8] sm:$0xff]
        %v475 = vld [vmem:[%s471 + $0x10] sm:$0x1]
        %v476 = vlaneseq
        %v477 = vshrl.u32 %v476, 7
        %v478 = vadd.s32 %v477, 8
        %v479 = vlaneseq
        %v480 = vand.u32 %v479, 127
        %vm481 = vcmp.eq.s32.totalorder %v477, 0
        %vm482 = vcmp.eq.s32.totalorder %v478, 0
        %vm483 = vcmp.eq.s32.totalorder %v480, 0
        %vm484 = vmand %vm481, %vm483
        %vm485 = vmand %vm482, %vm483
        %vm486 = vcmp.eq.s32.totalorder %v477, 1
        %vm487 = vcmp.eq.s32.totalorder %v478, 1
        %s488 = smul.u32 %s35, 128
        %s489 = sld [smem:[#allocation3 + %s488]]
        %s490 = sadd.s32 %s489, 1
        %v491 = vstv %s490
        %vm492 = vcmp.eq.s32.totalorder %v480, %v491
        %vm493 = vmand %vm486, %vm492
        %vm494 = vmand %vm487, %vm492
        %vm495 = vmor %vm484, %vm493
        %vm496 = vmor %vm485, %vm494
        %vm497 = vcmp.eq.s32.totalorder %v477, 2
        %vm498 = vcmp.eq.s32.totalorder %v478, 2
        %s499 = sadd.s32 %s488, 1
        %s500 = sld [smem:[#allocation3 + %s499]]
        %s501 = sadd.s32 %s500, 1
        %v502 = vstv %s501
        %vm503 = vcmp.eq.s32.totalorder %v480, %v502
        %vm504 = vmand %vm497, %vm503
        %vm505 = vmand %vm498, %vm503
        %vm506 = vmor %vm495, %vm504
        %vm507 = vmor %vm496, %vm505
        %vm508 = vcmp.eq.s32.totalorder %v477, 3
        %vm509 = vcmp.eq.s32.totalorder %v478, 3
        %s510 = sadd.s32 %s488, 2
        %s511 = sld [smem:[#allocation3 + %s510]]
        %s512 = sadd.s32 %s511, 1
        %v513 = vstv %s512
        %vm514 = vcmp.eq.s32.totalorder %v480, %v513
        %vm515 = vmand %vm508, %vm514
        %vm516 = vmand %vm509, %vm514
        %vm517 = vmor %vm506, %vm515
        %vm518 = vmor %vm507, %vm516
        %vm519 = vcmp.eq.s32.totalorder %v477, 4
        %vm520 = vcmp.eq.s32.totalorder %v478, 4
        %s521 = sadd.s32 %s488, 3
        %s522 = sld [smem:[#allocation3 + %s521]]
        %s523 = sadd.s32 %s522, 1
        %v524 = vstv %s523
        %vm525 = vcmp.eq.s32.totalorder %v480, %v524
        %vm526 = vmand %vm519, %vm525
        %vm527 = vmand %vm520, %vm525
        %vm528 = vmor %vm517, %vm526
        %vm529 = vmor %vm518, %vm527
        %vm530 = vcmp.eq.s32.totalorder %v477, 5
        %vm531 = vcmp.eq.s32.totalorder %v478, 5
        %s532 = sadd.s32 %s488, 4
        %s533 = sld [smem:[#allocation3 + %s532]]
        %s534 = sadd.s32 %s533, 1
        %v535 = vstv %s534
        %vm536 = vcmp.eq.s32.totalorder %v480, %v535
        %vm537 = vmand %vm530, %vm536
        %vm538 = vmand %vm531, %vm536
        %vm539 = vmor %vm528, %vm537
        %vm540 = vmor %vm529, %vm538
        %vm541 = vcmp.eq.s32.totalorder %v477, 6
        %vm542 = vcmp.eq.s32.totalorder %v478, 6
        %s543 = sadd.s32 %s488, 5
        %s544 = sld [smem:[#allocation3 + %s543]]
        %s545 = sadd.s32 %s544, 1
        %v546 = vstv %s545
        %vm547 = vcmp.eq.s32.totalorder %v480, %v546
        %vm548 = vmand %vm541, %vm547
        %vm549 = vmand %vm542, %vm547
        %vm550 = vmor %vm539, %vm548
        %vm551 = vmor %vm540, %vm549
        %vm552 = vcmp.eq.s32.totalorder %v477, 7
        %vm553 = vcmp.eq.s32.totalorder %v478, 7
        %s554 = sadd.s32 %s488, 6
        %s555 = sld [smem:[#allocation3 + %s554]]
        %s556 = sadd.s32 %s555, 1
        %v557 = vstv %s556
        %vm558 = vcmp.eq.s32.totalorder %v480, %v557
        %vm559 = vmand %vm552, %vm558
        %vm560 = vmand %vm553, %vm558
        %vm561 = vmor %vm550, %vm559
        %vm562 = vmor %vm551, %vm560
        %vm563 = vcmp.eq.s32.totalorder %v477, 8
        %vm564 = vcmp.eq.s32.totalorder %v478, 8
        %s565 = sadd.s32 %s488, 7
        %s566 = sld [smem:[#allocation3 + %s565]]
        %s567 = sadd.s32 %s566, 1
        %v568 = vstv %s567
        %vm569 = vcmp.eq.s32.totalorder %v480, %v568
        %vm570 = vmand %vm563, %vm569
        %vm571 = vmand %vm564, %vm569
        %vm572 = vmor %vm561, %vm570
        %vm573 = vmor %vm562, %vm571
        %v574 = vsel %vm572, 1, 0
        %v575 = vsel %vm573, 1, 0
        %v576 = vcvt.s32.f32 %v574
        %v577 = vcvt.s32.f32 %v575
        %vm578 = vcmask 138240
        %v580 = vsel %vm578, %v576, 0
        %v583 = vsel %vm578, %v577, 0
        %vm585 = vcmask 1040384
        %v587 = vsel %vm585, %v475, 0
        %589 = vmatprep.subr.mxu0 0.0
        %590 = vmatpush1.msra.mxu0 %v473
        %591 = vmatprep.subr.mxu0 0.0
        %592 = vmatpush1.msra.mxu0 %v474
        %593 = vmatprep.subr.mxu0 0.0
        %594 = vmatpush1.msra.mxu0 %v587
        %595 = vmatprep.subr.mxu0 0.0
        %596 = vmatpush1.msra.mxu0 0.0
        %597 = vmatprep.subr.mxu0 0.0
        %598 = vmatpush1.msra.mxu0 0.0
        %599 = vmatprep.subr.mxu0 0.0
        %600 = vmatpush1.msra.mxu0 0.0
        %601 = vmatprep.subr.mxu0 0.0
        %602 = vmatpush1.msra.mxu0 0.0
        %603 = vmatprep.subr.mxu0 0.0
        %604 = vmatpush1.msra.mxu0 0.0
        %605 = vmatprep.subr.mxu0 0.0
        %606 = vmatpush1.msra.mxu0 0.0
        %607 = vmatprep.subr.mxu0 0.0
        %608 = vmatpush1.msra.mxu0 0.0
        %609 = vmatprep.subr.mxu0 0.0
        %610 = vmatpush1.msra.mxu0 0.0
        %611 = vmatprep.subr.mxu0 0.0
        %612 = vmatpush1.msra.mxu0 0.0
        %613 = vmatprep.subr.mxu0 0.0
        %614 = vmatpush1.msra.mxu0 0.0
        %615 = vmatprep.subr.mxu0 0.0
        %616 = vmatpush1.msra.mxu0 0.0
        %617 = vmatprep.subr.mxu0 0.0
        %618 = vmatpush1.msra.mxu0 0.0
        %619 = vmatprep.subr.mxu0 0.0
        %620 = vmatpush1.msra.mxu0 0.0
        %621 = vmatprep.subr.mxu0 0.0
        %622 = vmatpush1.msra.mxu0 0.0
        %623 = vmatprep.subr.mxu0 0.0
        %624 = vmatpush1.msra.mxu0 0.0
        %625 = vmatprep.subr.mxu0 0.0
        %626 = vmatpush1.msra.mxu0 0.0
        %627 = vmatprep.subr.mxu0 0.0
        %628 = vmatpush1.msra.mxu0 0.0
        %629 = vmatprep.subr.mxu0 0.0
        %630 = vmatpush1.msra.mxu0 0.0
        %631 = vmatprep.subr.mxu0 0.0
        %632 = vmatpush1.msra.mxu0 0.0
        %633 = vmatprep.subr.mxu0 0.0
        %634 = vmatpush1.msra.mxu0 0.0
        %635 = vmatprep.subr.mxu0 0.0
        %636 = vmatpush1.msra.mxu0 0.0
        %637 = vmatprep.subr.mxu0 0.0
        %638 = vmatpush1.msra.mxu0 0.0
        %639 = vmatprep.subr.mxu0 0.0
        %640 = vmatpush1.msra.mxu0 0.0
        %641 = vmatprep.subr.mxu0 0.0
        %642 = vmatpush1.msra.mxu0 0.0
        %643 = vmatprep.subr.mxu0 0.0
        %644 = vmatpush1.msra.mxu0 0.0
        %645 = vmatprep.subr.mxu0 0.0
        %646 = vmatpush1.msra.mxu0 0.0
        %647 = vmatprep.subr.mxu0 0.0
        %648 = vmatpush1.msra.mxu0 0.0
        %649 = vmatprep.subr.mxu0 0.0
        %650 = vmatpush1.msra.mxu0 0.0
        %651 = vmatprep.subr.mxu0 0.0
        %652 = vmatpush1.msra.mxu0 0.0
        %653 = vmatprep.mubr.f32.mxu0 0.0
        %654 = vmatmul.mubr.f32.gmra.mrb[0].mxu0 %v580
        %v655 = vpop.f32.mrb[0].mxu0
        %v656 = vadd.f32 0.0, %v655
        %v657 = vpop.f32.mrb[0].mxu0
        %658 = vmatprep.mubr.f32.mxu0 0.0
        %659 = vmatmul.mubr.f32.gmra.mrb[0].mxu0 %v583
        %v660 = vpop.f32.mrb[0].mxu0
        %v661 = vadd.f32 0.0, %v660
        %v662 = vpop.f32.mrb[0].mxu0
        %663 = vdwg.mxu0
        %v664 = vld [vmem:[%s2] sm:$0x3]
        %vm665 = vcmask 261120
        %v666 = vsel %vm665, %v656, 0.0
        %667 = vadd.xlane.f32.xlu0 %v666
        %v668 = vpop.xlane.xlu0 %667
        %vm669 = vcmask 253952
        %v670 = vsel %vm669, %v661, 0.0
        %671 = vadd.xlane.f32.xlu0 %v670
        %v672 = vpop.xlane.xlu0 %671
        %v673 = vrcp.pop 32.0
        %v674 = vmul.f32 %v668, %v673
        %v675 = vmul.f32 %v672, %v673
        %v676 = vsub.f32 %v656, %v674
        %v677 = vsub.f32 %v661, %v675
        %v678 = vmul.f32 %v676, %v676
        %v679 = vmul.f32 %v677, %v677
        %v680 = vsel %vm665, %v678, 0.0
        %681 = vadd.xlane.f32.xlu0 %v680
        %v682 = vpop.xlane.xlu0 %681
        %v683 = vsel %vm669, %v679, 0.0
        %684 = vadd.xlane.f32.xlu0 %v683
        %v685 = vpop.xlane.xlu0 %684
        %v686 = vmul.f32 %v682, %v673
        %v687 = vmul.f32 %v685, %v673
        %v688 = vadd.f32 %v686, 1e-06
        %v689 = vadd.f32 %v687, 1e-06
        %v690 = vrsqrt.pop %v688
        %v691 = vrsqrt.pop %v689
        %v692 = vmul.f32 %v676, %v690
        %v693 = vmul.f32 %v677, %v691
        %v694 = vlaneseq
        %v695 = vshrl.u32 %v694, 7
        %v696 = vsub.s32 0, %v695
        %v697 = vrot.slane %v664, %v696
        %v698 = vmul.f32 %v692, %v697
        %v699 = vmul.f32 %v693, %v697
        %v700 = vlaneseq
        %v701 = vshrl.u32 %v700, 7
        %v702 = vsub.s32 1, %v701
        %v703 = vrot.slane %v664, %v702
        %v704 = vadd.f32 %v698, %v703
        %v705 = vadd.f32 %v699, %v703
        %v706 = vpack.c.bf16 %v705, %v704
        %v707 = vld [vmem:[%s3] sm:$0xf]
        %v708 = vld [vmem:[%s3 + $0x4] sm:$0xf]
        %v709 = vld [vmem:[%s3 + $0x8] sm:$0xf]
        %v710 = vld [vmem:[%s3 + $0xc] sm:$0xf]
        %v711 = vld [vmem:[%s4] sm:$0x1]
        %v713 = vlaneseq
        %v714 = vshrl.u32 %v713, 7
        %v715 = vsub.s32 0, %v714
        %v716 = vrot.slane %v711, %v715
        %v722 = vunpack.c.l.b16 %v707
        %v723 = vunpack.c.l.b16 %v708
        %v724 = vunpack.c.l.b16 %v709
        %v725 = vunpack.c.l.b16 %v710
        %v726 = vpack.c.b16 %v723, %v722
        %v727 = vpack.c.b16 %v725, %v724
        %v731 = vsel %vm665, %v706, 0
        %733 = vmatprep.subr.bf16.mxu0 0
        %734 = vmatpush1.bf16.msra.mxu0 %v726
        %735 = vmatprep.subr.bf16.mxu0 0
        %736 = vmatpush1.bf16.msra.mxu0 %v727
        %737 = vmatprep.subr.bf16.mxu0 0
        %738 = vmatpush1.bf16.msra.mxu0 0
        %739 = vmatprep.subr.bf16.mxu0 0
        %740 = vmatpush1.bf16.msra.mxu0 0
        %741 = vmatprep.subr.bf16.mxu0 0
        %742 = vmatpush1.bf16.msra.mxu0 0
        %743 = vmatprep.subr.bf16.mxu0 0
        %744 = vmatpush1.bf16.msra.mxu0 0
        %745 = vmatprep.subr.bf16.mxu0 0
        %746 = vmatpush1.bf16.msra.mxu0 0
        %747 = vmatprep.subr.bf16.mxu0 0
        %748 = vmatpush1.bf16.msra.mxu0 0
        %749 = vmatprep.subr.bf16.mxu0 0
        %750 = vmatpush1.bf16.msra.mxu0 0
        %751 = vmatprep.subr.bf16.mxu0 0
        %752 = vmatpush1.bf16.msra.mxu0 0
        %753 = vmatprep.subr.bf16.mxu0 0
        %754 = vmatpush1.bf16.msra.mxu0 0
        %755 = vmatprep.subr.bf16.mxu0 0
        %756 = vmatpush1.bf16.msra.mxu0 0
        %757 = vmatprep.subr.bf16.mxu0 0
        %758 = vmatpush1.bf16.msra.mxu0 0
        %759 = vmatprep.subr.bf16.mxu0 0
        %760 = vmatpush1.bf16.msra.mxu0 0
        %761 = vmatprep.subr.bf16.mxu0 0
        %762 = vmatpush1.bf16.msra.mxu0 0
        %763 = vmatprep.subr.bf16.mxu0 0
        %764 = vmatpush1.bf16.msra.mxu0 0
        %765 = vmatprep.mubr.bf16.mxu0 0
        %766 = vmatmul.mubr.bf16.gmra.mrb[0].mxu0 %v731
        %v767 = vpop.f32.mrb[0].mxu0
        %v768 = vadd.f32 %v716, %v767
        %v769 = vpop.f32.mrb[0].mxu0
        %v770 = vpop.f32.mrb[0].mxu0
        %v771 = vadd.f32 %v716, %v770
        %v772 = vpop.f32.mrb[0].mxu0
        %773 = vdwg.mxu0
        %v774 = vpack.c.bf16 %v771, %v768
        %776 = vrot.lane.b32.xlu0 %v774, 96
        %v777 = vpop.permute.xlu0 %776
        %vm778 = vcmask 64512
        %v780 = vsel %vm778, %v774, 0
        %v783 = vsel %vm778, %v777, 0
        %785 = vmatprep.subr.bf16.mxu0 0
        %786 = vmatpush1.bf16.xpose.msra.mxu0 %v783
        %787 = vmatprep.subr.bf16.mxu0 0
        %788 = vmatpush1.bf16.xpose.msra.mxu0 0
        %789 = vmatprep.subr.bf16.mxu0 0
        %790 = vmatpush1.bf16.xpose.msra.mxu0 0
        %791 = vmatprep.subr.bf16.mxu0 0
        %792 = vmatpush1.bf16.xpose.msra.mxu0 0
        %793 = vmatprep.subr.bf16.mxu0 0
        %794 = vmatpush1.bf16.xpose.msra.mxu0 0
        %795 = vmatprep.subr.bf16.mxu0 0
        %796 = vmatpush1.bf16.xpose.msra.mxu0 0
        %797 = vmatprep.subr.bf16.mxu0 0
        %798 = vmatpush1.bf16.xpose.msra.mxu0 0
        %799 = vmatprep.subr.bf16.mxu0 0
        %800 = vmatpush1.bf16.xpose.msra.mxu0 0
        %801 = vmatprep.subr.bf16.mxu0 0
        %802 = vmatpush1.bf16.xpose.msra.mxu0 0
        %803 = vmatprep.subr.bf16.mxu0 0
        %804 = vmatpush1.bf16.xpose.msra.mxu0 0
        %805 = vmatprep.subr.bf16.mxu0 0
        %806 = vmatpush1.bf16.xpose.msra.mxu0 0
        %807 = vmatprep.subr.bf16.mxu0 0
        %808 = vmatpush1.bf16.xpose.msra.mxu0 0
        %809 = vmatprep.subr.bf16.mxu0 0
        %810 = vmatpush1.bf16.xpose.msra.mxu0 0
        %811 = vmatprep.subr.bf16.mxu0 0
        %812 = vmatpush1.bf16.xpose.msra.mxu0 0
        %813 = vmatprep.subr.bf16.mxu0 0
        %814 = vmatpush1.bf16.xpose.msra.mxu0 0
        %815 = vmatprep.subr.bf16.mxu0 0
        %816 = vmatpush1.bf16.xpose.msra.mxu0 0
        %817 = vmatprep.mubr.bf16.mxu0 0
        %818 = vmatmul.mubr.bf16.gmra.mrb[0].mxu0 %v780
        %v819 = vpop.f32.mrb[0].mxu0
        %v820 = vadd.f32 0.0, %v819
        %v821 = vpop.f32.mrb[0].mxu0
        %v822 = vpop.f32.mrb[0].mxu0
        %v823 = vadd.f32 0.0, %v822
        %v824 = vpop.f32.mrb[0].mxu0
        %825 = vdwg.mxu0
        %vm826 = vcmask 72704
        %v827 = vsel %vm826, %v820, -inf
        %828 = vmax.xlane.f32.xlu0 %v827
        %v829 = vpop.xlane.xlu0 %828
        %vm830 = vcmask 65536
        %v831 = vsel %vm830, %v823, -inf
        %832 = vmax.xlane.f32.xlu0 %v831
        %v833 = vpop.xlane.xlu0 %832
        %v834 = vsub.f32 %v820, %v829
        %v835 = vsub.f32 %v823, %v833
        %v836 = vmul.f32 %v834, 1.442695
        %v837 = vpow.pop %v836
        %v838 = vmul.f32 %v835, 1.442695
        %v839 = vpow.pop %v838
        %v840 = vsel %vm826, %v837, 0.0
        %841 = vadd.xlane.f32.xlu0 %v840
        %v842 = vpop.xlane.xlu0 %841
        %v843 = vsel %vm830, %v839, 0.0
        %844 = vadd.xlane.f32.xlu0 %v843
        %v845 = vpop.xlane.xlu0 %844
        %v846 = vrcp.pop %v842
        %v847 = vrcp.pop %v845
        %v848 = vmul.f32 %v837, %v846
        %v849 = vmul.f32 %v839, %v847
        %v850 = vpack.c.bf16 %v849, %v848
        %851 = vrot.lane.b32.xlu0 %v774, 64
        %v852 = vpop.permute.xlu0 %851
        %v854 = vsel %vm826, %v850, 0
        %vm856 = vcmask 1043456
        %vm857 = vcmask 1044480
        %v858 = vsel %vm856, 4294967295, 65535
        %v859 = vsel %vm857, %v858, 0
        %v861 = vand.u32 %v852, %v859
        %863 = vmatprep.subr.bf16.mxu0 0
        %864 = vmatpush1.bf16.msra.mxu0 %v861
        %865 = vmatprep.subr.bf16.mxu0 0
        %866 = vmatpush1.bf16.msra.mxu0 0
        %867 = vmatprep.subr.bf16.mxu0 0
        %868 = vmatpush1.bf16.msra.mxu0 0
        %869 = vmatprep.subr.bf16.mxu0 0
        %870 = vmatpush1.bf16.msra.mxu0 0
        %871 = vmatprep.subr.bf16.mxu0 0
        %872 = vmatpush1.bf16.msra.mxu0 0
        %873 = vmatprep.subr.bf16.mxu0 0
        %874 = vmatpush1.bf16.msra.mxu0 0
        %875 = vmatprep.subr.bf16.mxu0 0
        %876 = vmatpush1.bf16.msra.mxu0 0
        %877 = vmatprep.subr.bf16.mxu0 0
        %878 = vmatpush1.bf16.msra.mxu0 0
        %879 = vmatprep.subr.bf16.mxu0 0
        %880 = vmatpush1.bf16.msra.mxu0 0
        %881 = vmatprep.subr.bf16.mxu0 0
        %882 = vmatpush1.bf16.msra.mxu0 0
        %883 = vmatprep.subr.bf16.mxu0 0
        %884 = vmatpush1.bf16.msra.mxu0 0
        %885 = vmatprep.subr.bf16.mxu0 0
        %886 = vmatpush1.bf16.msra.mxu0 0
        %887 = vmatprep.subr.bf16.mxu0 0
        %888 = vmatpush1.bf16.msra.mxu0 0
        %889 = vmatprep.subr.bf16.mxu0 0
        %890 = vmatpush1.bf16.msra.mxu0 0
        %891 = vmatprep.subr.bf16.mxu0 0
        %892 = vmatpush1.bf16.msra.mxu0 0
        %893 = vmatprep.subr.bf16.mxu0 0
        %894 = vmatpush1.bf16.msra.mxu0 0
        %895 = vmatprep.mubr.bf16.mxu0 0
        %896 = vmatmul.mubr.bf16.gmra.mrb[0].mxu0 %v854
        %v897 = vpop.f32.mrb[0].mxu0
        %v898 = vadd.f32 0.0, %v897
        %v899 = vpop.f32.mrb[0].mxu0
        %v900 = vpop.f32.mrb[0].mxu0
        %v901 = vadd.f32 0.0, %v900
        %v902 = vpop.f32.mrb[0].mxu0
        %903 = vdwg.mxu0
        %904 = vrot.lane.b32.xlu0 %v774, 120
        %v905 = vpop.permute.xlu0 %904
        %906 = vrot.lane.b32.xlu0 %v774, 88
        %v907 = vpop.permute.xlu0 %906
        %v909 = vsel %vm778, %v905, 0
        %v912 = vsel %vm778, %v907, 0
        %914 = vmatprep.subr.bf16.mxu0 0
        %915 = vmatpush1.bf16.xpose.msra.mxu0 %v912
        %916 = vmatprep.subr.bf16.mxu0 0
        %917 = vmatpush1.bf16.xpose.msra.mxu0 0
        %918 = vmatprep.subr.bf16.mxu0 0
        %919 = vmatpush1.bf16.xpose.msra.mxu0 0
        %920 = vmatprep.subr.bf16.mxu0 0
        %921 = vmatpush1.bf16.xpose.msra.mxu0 0
        %922 = vmatprep.subr.bf16.mxu0 0
        %923 = vmatpush1.bf16.xpose.msra.mxu0 0
        %924 = vmatprep.subr.bf16.mxu0 0
        %925 = vmatpush1.bf16.xpose.msra.mxu0 0
        %926 = vmatprep.subr.bf16.mxu0 0
        %927 = vmatpush1.bf16.xpose.msra.mxu0 0
        %928 = vmatprep.subr.bf16.mxu0 0
        %929 = vmatpush1.bf16.xpose.msra.mxu0 0
        %930 = vmatprep.subr.bf16.mxu0 0
        %931 = vmatpush1.bf16.xpose.msra.mxu0 0
        %932 = vmatprep.subr.bf16.mxu0 0
        %933 = vmatpush1.bf16.xpose.msra.mxu0 0
        %934 = vmatprep.subr.bf16.mxu0 0
        %935 = vmatpush1.bf16.xpose.msra.mxu0 0
        %936 = vmatprep.subr.bf16.mxu0 0
        %937 = vmatpush1.bf16.xpose.msra.mxu0 0
        %938 = vmatprep.subr.bf16.mxu0 0
        %939 = vmatpush1.bf16.xpose.msra.mxu0 0
        %940 = vmatprep.subr.bf16.mxu0 0
        %941 = vmatpush1.bf16.xpose.msra.mxu0 0
        %942 = vmatprep.subr.bf16.mxu0 0
        %943 = vmatpush1.bf16.xpose.msra.mxu0 0
        %944 = vmatprep.subr.bf16.mxu0 0
        %945 = vmatpush1.bf16.xpose.msra.mxu0 0
        %946 = vmatprep.mubr.bf16.mxu0 0
        %947 = vmatmul.mubr.bf16.gmra.mrb[0].mxu0 %v909
        %v948 = vpop.f32.mrb[0].mxu0
        %v949 = vadd.f32 0.0, %v948
        %v950 = vpop.f32.mrb[0].mxu0
        %v951 = vpop.f32.mrb[0].mxu0
        %v952 = vadd.f32 0.0, %v951
        %v953 = vpop.f32.mrb[0].mxu0
        %954 = vdwg.mxu0
        %v955 = vsel %vm826, %v949, -inf
        %956 = vmax.xlane.f32.xlu0 %v955
        %v957 = vpop.xlane.xlu0 %956
        %v958 = vsel %vm830, %v952, -inf
        %959 = vmax.xlane.f32.xlu0 %v958
        %v960 = vpop.xlane.xlu0 %959
        %v961 = vsub.f32 %v949, %v957
        %v962 = vsub.f32 %v952, %v960
        %v963 = vmul.f32 %v961, 1.442695
        %v964 = vpow.pop %v963
        %v965 = vmul.f32 %v962, 1.442695
        %v966 = vpow.pop %v965
        %v967 = vsel %vm826, %v964, 0.0
        %968 = vadd.xlane.f32.xlu0 %v967
        %v969 = vpop.xlane.xlu0 %968
        %v970 = vsel %vm830, %v966, 0.0
        %971 = vadd.xlane.f32.xlu0 %v970
        %v972 = vpop.xlane.xlu0 %971
        %v973 = vrcp.pop %v969
        %v974 = vrcp.pop %v972
        %v975 = vmul.f32 %v964, %v973
        %v976 = vmul.f32 %v966, %v974
        %v977 = vpack.c.bf16 %v976, %v975
        %978 = vrot.lane.b32.xlu0 %v774, 56
        %v979 = vpop.permute.xlu0 %978
        %v981 = vsel %vm826, %v977, 0
        %v984 = vand.u32 %v979, %v859
        %986 = vmatprep.subr.bf16.mxu0 0
        %987 = vmatpush1.bf16.msra.mxu0 %v984
        %988 = vmatprep.subr.bf16.mxu0 0
        %989 = vmatpush1.bf16.msra.mxu0 0
        %990 = vmatprep.subr.bf16.mxu0 0
        %991 = vmatpush1.bf16.msra.mxu0 0
        %992 = vmatprep.subr.bf16.mxu0 0
        %993 = vmatpush1.bf16.msra.mxu0 0
        %994 = vmatprep.subr.bf16.mxu0 0
        %995 = vmatpush1.bf16.msra.mxu0 0
        %996 = vmatprep.subr.bf16.mxu0 0
        %997 = vmatpush1.bf16.msra.mxu0 0
        %998 = vmatprep.subr.bf16.mxu0 0
        %999 = vmatpush1.bf16.msra.mxu0 0
        %1000 = vmatprep.subr.bf16.mxu0 0
        %1001 = vmatpush1.bf16.msra.mxu0 0
        %1002 = vmatprep.subr.bf16.mxu0 0
        %1003 = vmatpush1.bf16.msra.mxu0 0
        %1004 = vmatprep.subr.bf16.mxu0 0
        %1005 = vmatpush1.bf16.msra.mxu0 0
        %1006 = vmatprep.subr.bf16.mxu0 0
        %1007 = vmatpush1.bf16.msra.mxu0 0
        %1008 = vmatprep.subr.bf16.mxu0 0
        %1009 = vmatpush1.bf16.msra.mxu0 0
        %1010 = vmatprep.subr.bf16.mxu0 0
        %1011 = vmatpush1.bf16.msra.mxu0 0
        %1012 = vmatprep.subr.bf16.mxu0 0
        %1013 = vmatpush1.bf16.msra.mxu0 0
        %1014 = vmatprep.subr.bf16.mxu0 0
        %1015 = vmatpush1.bf16.msra.mxu0 0
        %1016 = vmatprep.subr.bf16.mxu0 0
        %1017 = vmatpush1.bf16.msra.mxu0 0
        %1018 = vmatprep.mubr.bf16.mxu0 0
        %1019 = vmatmul.mubr.bf16.gmra.mrb[0].mxu0 %v981
        %v1020 = vpop.f32.mrb[0].mxu0
        %v1021 = vadd.f32 0.0, %v1020
        %v1022 = vpop.f32.mrb[0].mxu0
        %v1023 = vpop.f32.mrb[0].mxu0
        %v1024 = vadd.f32 0.0, %v1023
        %v1025 = vpop.f32.mrb[0].mxu0
        %1026 = vdwg.mxu0
        %1027 = vrot.lane.b32.xlu0 %v774, 112
        %v1028 = vpop.permute.xlu0 %1027
        %1029 = vrot.lane.b32.xlu0 %v774, 80
        %v1030 = vpop.permute.xlu0 %1029
        %v1032 = vsel %vm778, %v1028, 0
        %v1035 = vsel %vm778, %v1030, 0
        %1037 = vmatprep.subr.bf16.mxu0 0
        %1038 = vmatpush1.bf16.xpose.msra.mxu0 %v1035
        %1039 = vmatprep.subr.bf16.mxu0 0
        %1040 = vmatpush1.bf16.xpose.msra.mxu0 0
        %1041 = vmatprep.subr.bf16.mxu0 0
        %1042 = vmatpush1.bf16.xpose.msra.mxu0 0
        %1043 = vmatprep.subr.bf16.mxu0 0
        %1044 = vmatpush1.bf16.xpose.msra.mxu0 0
        %1045 = vmatprep.subr.bf16.mxu0 0
        %1046 = vmatpush1.bf16.xpose.msra.mxu0 0
        %1047 = vmatprep.subr.bf16.mxu0 0
        %1048 = vmatpush1.bf16.xpose.msra.mxu0 0
        %1049 = vmatprep.subr.bf16.mxu0 0
        %1050 = vmatpush1.bf16.xpose.msra.mxu0 0
        %1051 = vmatprep.subr.bf16.mxu0 0
        %1052 = vmatpush1.bf16.xpose.msra.mxu0 0
        %1053 = vmatprep.subr.bf16.mxu0 0
        %1054 = vmatpush1.bf16.xpose.msra.mxu0 0
        %1055 = vmatprep.subr.bf16.mxu0 0
        %1056 = vmatpush1.bf16.xpose.msra.mxu0 0
        %1057 = vmatprep.subr.bf16.mxu0 0
        %1058 = vmatpush1.bf16.xpose.msra.mxu0 0
        %1059 = vmatprep.subr.bf16.mxu0 0
        %1060 = vmatpush1.bf16.xpose.msra.mxu0 0
        %1061 = vmatprep.subr.bf16.mxu0 0
        %1062 = vmatpush1.bf16.xpose.msra.mxu0 0
        %1063 = vmatprep.subr.bf16.mxu0 0
        %1064 = vmatpush1.bf16.xpose.msra.mxu0 0
        %1065 = vmatprep.subr.bf16.mxu0 0
        %1066 = vmatpush1.bf16.xpose.msra.mxu0 0
        %1067 = vmatprep.subr.bf16.mxu0 0
        %1068 = vmatpush1.bf16.xpose.msra.mxu0 0
        %1069 = vmatprep.mubr.bf16.mxu0 0
        %1070 = vmatmul.mubr.bf16.gmra.mrb[0].mxu0 %v1032
        %v1071 = vpop.f32.mrb[0].mxu0
        %v1072 = vadd.f32 0.0, %v1071
        %v1073 = vpop.f32.mrb[0].mxu0
        %v1074 = vpop.f32.mrb[0].mxu0
        %v1075 = vadd.f32 0.0, %v1074
        %v1076 = vpop.f32.mrb[0].mxu0
        %1077 = vdwg.mxu0
        %v1078 = vsel %vm826, %v1072, -inf
        %1079 = vmax.xlane.f32.xlu0 %v1078
        %v1080 = vpop.xlane.xlu0 %1079
        %v1081 = vsel %vm830, %v1075, -inf
        %1082 = vmax.xlane.f32.xlu0 %v1081
        %v1083 = vpop.xlane.xlu0 %1082
        %v1084 = vsub.f32 %v1072, %v1080
        %v1085 = vsub.f32 %v1075, %v1083
        %v1086 = vmul.f32 %v1084, 1.442695
        %v1087 = vpow.pop %v1086
        %v1088 = vmul.f32 %v1085, 1.442695
        %v1089 = vpow.pop %v1088
        %v1090 = vsel %vm826, %v1087, 0.0
        %1091 = vadd.xlane.f32.xlu0 %v1090
        %v1092 = vpop.xlane.xlu0 %1091
        %v1093 = vsel %vm830, %v1089, 0.0
        %1094 = vadd.xlane.f32.xlu0 %v1093
        %v1095 = vpop.xlane.xlu0 %1094
        %v1096 = vrcp.pop %v1092
        %v1097 = vrcp.pop %v1095
        %v1098 = vmul.f32 %v1087, %v1096
        %v1099 = vmul.f32 %v1089, %v1097
        %v1100 = vpack.c.bf16 %v1099, %v1098
        %1101 = vrot.lane.b32.xlu0 %v774, 48
        %v1102 = vpop.permute.xlu0 %1101
        %v1104 = vsel %vm826, %v1100, 0
        %v1107 = vand.u32 %v1102, %v859
        %1109 = vmatprep.subr.bf16.mxu0 0
        %1110 = vmatpush1.bf16.msra.mxu0 %v1107
        %1111 = vmatprep.subr.bf16.mxu0 0
        %1112 = vmatpush1.bf16.msra.mxu0 0
        %1113 = vmatprep.subr.bf16.mxu0 0
        %1114 = vmatpush1.bf16.msra.mxu0 0
        %1115 = vmatprep.subr.bf16.mxu0 0
        %1116 = vmatpush1.bf16.msra.mxu0 0
        %1117 = vmatprep.subr.bf16.mxu0 0
        %1118 = vmatpush1.bf16.msra.mxu0 0
        %1119 = vmatprep.subr.bf16.mxu0 0
        %1120 = vmatpush1.bf16.msra.mxu0 0
        %1121 = vmatprep.subr.bf16.mxu0 0
        %1122 = vmatpush1.bf16.msra.mxu0 0
        %1123 = vmatprep.subr.bf16.mxu0 0
        %1124 = vmatpush1.bf16.msra.mxu0 0
        %1125 = vmatprep.subr.bf16.mxu0 0
        %1126 = vmatpush1.bf16.msra.mxu0 0
        %1127 = vmatprep.subr.bf16.mxu0 0
        %1128 = vmatpush1.bf16.msra.mxu0 0
        %1129 = vmatprep.subr.bf16.mxu0 0
        %1130 = vmatpush1.bf16.msra.mxu0 0
        %1131 = vmatprep.subr.bf16.mxu0 0
        %1132 = vmatpush1.bf16.msra.mxu0 0
        %1133 = vmatprep.subr.bf16.mxu0 0
        %1134 = vmatpush1.bf16.msra.mxu0 0
        %1135 = vmatprep.subr.bf16.mxu0 0
        %1136 = vmatpush1.bf16.msra.mxu0 0
        %1137 = vmatprep.subr.bf16.mxu0 0
        %1138 = vmatpush1.bf16.msra.mxu0 0
        %1139 = vmatprep.subr.bf16.mxu0 0
        %1140 = vmatpush1.bf16.msra.mxu0 0
        %1141 = vmatprep.mubr.bf16.mxu0 0
        %1142 = vmatmul.mubr.bf16.gmra.mrb[0].mxu0 %v1104
        %v1143 = vpop.f32.mrb[0].mxu0
        %v1144 = vadd.f32 0.0, %v1143
        %v1145 = vpop.f32.mrb[0].mxu0
        %v1146 = vpop.f32.mrb[0].mxu0
        %v1147 = vadd.f32 0.0, %v1146
        %v1148 = vpop.f32.mrb[0].mxu0
        %1149 = vdwg.mxu0
        %1150 = vrot.lane.b32.xlu0 %v774, 104
        %v1151 = vpop.permute.xlu0 %1150
        %1152 = vrot.lane.b32.xlu0 %v774, 72
        %v1153 = vpop.permute.xlu0 %1152
        %v1155 = vsel %vm778, %v1151, 0
        %v1158 = vsel %vm778, %v1153, 0
        %1160 = vmatprep.subr.bf16.mxu0 0
        %1161 = vmatpush1.bf16.xpose.msra.mxu0 %v1158
        %1162 = vmatprep.subr.bf16.mxu0 0
        %1163 = vmatpush1.bf16.xpose.msra.mxu0 0
        %1164 = vmatprep.subr.bf16.mxu0 0
        %1165 = vmatpush1.bf16.xpose.msra.mxu0 0
        %1166 = vmatprep.subr.bf16.mxu0 0
        %1167 = vmatpush1.bf16.xpose.msra.mxu0 0
        %1168 = vmatprep.subr.bf16.mxu0 0
        %1169 = vmatpush1.bf16.xpose.msra.mxu0 0
        %1170 = vmatprep.subr.bf16.mxu0 0
        %1171 = vmatpush1.bf16.xpose.msra.mxu0 0
        %1172 = vmatprep.subr.bf16.mxu0 0
        %1173 = vmatpush1.bf16.xpose.msra.mxu0 0
        %1174 = vmatprep.subr.bf16.mxu0 0
        %1175 = vmatpush1.bf16.xpose.msra.mxu0 0
        %1176 = vmatprep.subr.bf16.mxu0 0
        %1177 = vmatpush1.bf16.xpose.msra.mxu0 0
        %1178 = vmatprep.subr.bf16.mxu0 0
        %1179 = vmatpush1.bf16.xpose.msra.mxu0 0
        %1180 = vmatprep.subr.bf16.mxu0 0
        %1181 = vmatpush1.bf16.xpose.msra.mxu0 0
        %1182 = vmatprep.subr.bf16.mxu0 0
        %1183 = vmatpush1.bf16.xpose.msra.mxu0 0
        %1184 = vmatprep.subr.bf16.mxu0 0
        %1185 = vmatpush1.bf16.xpose.msra.mxu0 0
        %1186 = vmatprep.subr.bf16.mxu0 0
        %1187 = vmatpush1.bf16.xpose.msra.mxu0 0
        %1188 = vmatprep.subr.bf16.mxu0 0
        %1189 = vmatpush1.bf16.xpose.msra.mxu0 0
        %1190 = vmatprep.subr.bf16.mxu0 0
        %1191 = vmatpush1.bf16.xpose.msra.mxu0 0
        %1192 = vmatprep.mubr.bf16.mxu0 0
        %1193 = vmatmul.mubr.bf16.gmra.mrb[0].mxu0 %v1155
        %v1194 = vpop.f32.mrb[0].mxu0
        %v1195 = vadd.f32 0.0, %v1194
        %v1196 = vpop.f32.mrb[0].mxu0
        %v1197 = vpop.f32.mrb[0].mxu0
        %v1198 = vadd.f32 0.0, %v1197
        %v1199 = vpop.f32.mrb[0].mxu0
        %1200 = vdwg.mxu0
        %v1201 = vsel %vm826, %v1195, -inf
        %1202 = vmax.xlane.f32.xlu0 %v1201
        %v1203 = vpop.xlane.xlu0 %1202
        %v1204 = vsel %vm830, %v1198, -inf
        %1205 = vmax.xlane.f32.xlu0 %v1204
        %v1206 = vpop.xlane.xlu0 %1205
        %v1207 = vsub.f32 %v1195, %v1203
        %v1208 = vsub.f32 %v1198, %v1206
        %v1209 = vmul.f32 %v1207, 1.442695
        %v1210 = vpow.pop %v1209
        %v1211 = vmul.f32 %v1208, 1.442695
        %v1212 = vpow.pop %v1211
        %v1213 = vsel %vm826, %v1210, 0.0
        %1214 = vadd.xlane.f32.xlu0 %v1213
        %v1215 = vpop.xlane.xlu0 %1214
        %v1216 = vsel %vm830, %v1212, 0.0
        %1217 = vadd.xlane.f32.xlu0 %v1216
        %v1218 = vpop.xlane.xlu0 %1217
        %v1219 = vrcp.pop %v1215
        %v1220 = vrcp.pop %v1218
        %v1221 = vmul.f32 %v1210, %v1219
        %v1222 = vmul.f32 %v1212, %v1220
        %v1223 = vpack.c.bf16 %v1222, %v1221
        %1224 = vrot.lane.b32.xlu0 %v774, 40
        %v1225 = vpop.permute.xlu0 %1224
        %v1227 = vsel %vm826, %v1223, 0
        %v1230 = vand.u32 %v1225, %v859
        %1232 = vmatprep.subr.bf16.mxu0 0
        %1233 = vmatpush1.bf16.msra.mxu0 %v1230
        %1234 = vmatprep.subr.bf16.mxu0 0
        %1235 = vmatpush1.bf16.msra.mxu0 0
        %1236 = vmatprep.subr.bf16.mxu0 0
        %1237 = vmatpush1.bf16.msra.mxu0 0
        %1238 = vmatprep.subr.bf16.mxu0 0
        %1239 = vmatpush1.bf16.msra.mxu0 0
        %1240 = vmatprep.subr.bf16.mxu0 0
        %1241 = vmatpush1.bf16.msra.mxu0 0
        %1242 = vmatprep.subr.bf16.mxu0 0
        %1243 = vmatpush1.bf16.msra.mxu0 0
        %1244 = vmatprep.subr.bf16.mxu0 0
        %1245 = vmatpush1.bf16.msra.mxu0 0
        %1246 = vmatprep.subr.bf16.mxu0 0
        %1247 = vmatpush1.bf16.msra.mxu0 0
        %1248 = vmatprep.subr.bf16.mxu0 0
        %1249 = vmatpush1.bf16.msra.mxu0 0
        %1250 = vmatprep.subr.bf16.mxu0 0
        %1251 = vmatpush1.bf16.msra.mxu0 0
        %1252 = vmatprep.subr.bf16.mxu0 0
        %1253 = vmatpush1.bf16.msra.mxu0 0
        %1254 = vmatprep.subr.bf16.mxu0 0
        %1255 = vmatpush1.bf16.msra.mxu0 0
        %1256 = vmatprep.subr.bf16.mxu0 0
        %1257 = vmatpush1.bf16.msra.mxu0 0
        %1258 = vmatprep.subr.bf16.mxu0 0
        %1259 = vmatpush1.bf16.msra.mxu0 0
        %1260 = vmatprep.subr.bf16.mxu0 0
        %1261 = vmatpush1.bf16.msra.mxu0 0
        %1262 = vmatprep.subr.bf16.mxu0 0
        %1263 = vmatpush1.bf16.msra.mxu0 0
        %1264 = vmatprep.mubr.bf16.mxu0 0
        %1265 = vmatmul.mubr.bf16.gmra.mrb[0].mxu0 %v1227
        %v1266 = vpop.f32.mrb[0].mxu0
        %v1267 = vadd.f32 0.0, %v1266
        %v1268 = vpop.f32.mrb[0].mxu0
        %v1269 = vpop.f32.mrb[0].mxu0
        %v1270 = vadd.f32 0.0, %v1269
        %v1271 = vpop.f32.mrb[0].mxu0
        %1272 = vdwg.mxu0
        %1275 = vrot.lane.b32.xlu0 %v1021, 8
        %v1276 = vpop.permute.xlu0 %1275
        %1277 = vrot.lane.b32.xlu0 %v1024, 8
        %v1278 = vpop.permute.xlu0 %1277
        %1283 = vrot.lane.b32.xlu0 %v1144, 16
        %v1284 = vpop.permute.xlu0 %1283
        %1285 = vrot.lane.b32.xlu0 %v1147, 16
        %v1286 = vpop.permute.xlu0 %1285
        %1291 = vrot.lane.b32.xlu0 %v1267, 24
        %v1292 = vpop.permute.xlu0 %1291
        %1293 = vrot.lane.b32.xlu0 %v1270, 24
        %v1294 = vpop.permute.xlu0 %1293
        %v1297 = vsel %vm778, %v898, %v1276
        %v1298 = vsel %vm778, %v901, %v1278
        %vm1299 = vcmask 130048
        %v1300 = vsel %vm1299, %v1297, %v1284
        %v1301 = vsel %vm1299, %v1298, %v1286
        %vm1302 = vcmask 195584
        %v1303 = vsel %vm1302, %v1300, %v1292
        %v1304 = vsel %vm1302, %v1301, %v1294
        %v1305 = vpack.c.bf16 %v1304, %v1303
        %v1306 = vld [vmem:[%s5] sm:$0xf]
        %v1307 = vld [vmem:[%s5 + $0x4] sm:$0xf]
        %v1308 = vld [vmem:[%s5 + $0x8] sm:$0xf]
        %v1309 = vld [vmem:[%s5 + $0xc] sm:$0xf]
        %v1314 = vunpack.c.l.b16 %v1306
        %v1315 = vunpack.c.l.b16 %v1307
        %v1316 = vunpack.c.l.b16 %v1308
        %v1317 = vunpack.c.l.b16 %v1309
        %v1318 = vpack.c.b16 %v1315, %v1314
        %v1319 = vpack.c.b16 %v1317, %v1316
        %v1323 = vsel %vm665, %v1305, 0
        %1325 = vmatprep.subr.bf16.mxu0 0
        %1326 = vmatpush1.bf16.msra.mxu0 %v1318
        %1327 = vmatprep.subr.bf16.mxu0 0
        %1328 = vmatpush1.bf16.msra.mxu0 %v1319
        %1329 = vmatprep.subr.bf16.mxu0 0
        %1330 = vmatpush1.bf16.msra.mxu0 0
        %1331 = vmatprep.subr.bf16.mxu0 0
        %1332 = vmatpush1.bf16.msra.mxu0 0
        %1333 = vmatprep.subr.bf16.mxu0 0
        %1334 = vmatpush1.bf16.msra.mxu0 0
        %1335 = vmatprep.subr.bf16.mxu0 0
        %1336 = vmatpush1.bf16.msra.mxu0 0
        %1337 = vmatprep.subr.bf16.mxu0 0
        %1338 = vmatpush1.bf16.msra.mxu0 0
        %1339 = vmatprep.subr.bf16.mxu0 0
        %1340 = vmatpush1.bf16.msra.mxu0 0
        %1341 = vmatprep.subr.bf16.mxu0 0
        %1342 = vmatpush1.bf16.msra.mxu0 0
        %1343 = vmatprep.subr.bf16.mxu0 0
        %1344 = vmatpush1.bf16.msra.mxu0 0
        %1345 = vmatprep.subr.bf16.mxu0 0
        %1346 = vmatpush1.bf16.msra.mxu0 0
        %1347 = vmatprep.subr.bf16.mxu0 0
        %1348 = vmatpush1.bf16.msra.mxu0 0
        %1349 = vmatprep.subr.bf16.mxu0 0
        %1350 = vmatpush1.bf16.msra.mxu0 0
        %1351 = vmatprep.subr.bf16.mxu0 0
        %1352 = vmatpush1.bf16.msra.mxu0 0
        %1353 = vmatprep.subr.bf16.mxu0 0
        %1354 = vmatpush1.bf16.msra.mxu0 0
        %1355 = vmatprep.subr.bf16.mxu0 0
        %1356 = vmatpush1.bf16.msra.mxu0 0
        %1357 = vmatprep.mubr.bf16.mxu0 0
        %1358 = vmatmul.mubr.bf16.gmra.mrb[0].mxu0 %v1323
        %v1359 = vpop.f32.mrb[0].mxu0
        %v1360 = vadd.f32 0.0, %v1359
        %v1361 = vpop.f32.mrb[0].mxu0
        %v1362 = vpop.f32.mrb[0].mxu0
        %v1363 = vadd.f32 0.0, %v1362
        %v1364 = vpop.f32.mrb[0].mxu0
        %1365 = vdwg.mxu0
        %v1366 = vadd.f32 %v656, %v1360
        %v1367 = vadd.f32 %v661, %v1363
        %v1368 = vld [vmem:[%s6] sm:$0x1]
        %v1370 = vlaneseq
        %v1371 = vshrl.u32 %v1370, 7
        %v1372 = vsub.s32 0, %v1371
        %v1373 = vrot.slane %v1368, %v1372
        %v1375 = vadd.f32 %v1366, %v1373
        %v1376 = vadd.f32 %v1367, %v1373
        %v1377 = vld [vmem:[%s7] sm:$0x3]
        %v1378 = vsel %vm665, %v1375, 0.0
        %1379 = vadd.xlane.f32.xlu0 %v1378
        %v1380 = vpop.xlane.xlu0 %1379
        %v1381 = vsel %vm669, %v1376, 0.0
        %1382 = vadd.xlane.f32.xlu0 %v1381
        %v1383 = vpop.xlane.xlu0 %1382
        %v1384 = vmul.f32 %v1380, %v673
        %v1385 = vmul.f32 %v1383, %v673
        %v1386 = vsub.f32 %v1375, %v1384
        %v1387 = vsub.f32 %v1376, %v1385
        %v1388 = vmul.f32 %v1386, %v1386
        %v1389 = vmul.f32 %v1387, %v1387
        %v1390 = vsel %vm665, %v1388, 0.0
        %1391 = vadd.xlane.f32.xlu0 %v1390
        %v1392 = vpop.xlane.xlu0 %1391
        %v1393 = vsel %vm669, %v1389, 0.0
        %1394 = vadd.xlane.f32.xlu0 %v1393
        %v1395 = vpop.xlane.xlu0 %1394
        %v1396 = vmul.f32 %v1392, %v673
        %v1397 = vmul.f32 %v1395, %v673
        %v1398 = vadd.f32 %v1396, 1e-06
        %v1399 = vadd.f32 %v1397, 1e-06
        %v1400 = vrsqrt.pop %v1398
        %v1401 = vrsqrt.pop %v1399
        %v1402 = vmul.f32 %v1386, %v1400
        %v1403 = vmul.f32 %v1387, %v1401
        %v1404 = vlaneseq
        %v1405 = vshrl.u32 %v1404, 7
        %v1406 = vsub.s32 0, %v1405
        %v1407 = vrot.slane %v1377, %v1406
        %v1408 = vmul.f32 %v1402, %v1407
        %v1409 = vmul.f32 %v1403, %v1407
        %v1410 = vlaneseq
        %v1411 = vshrl.u32 %v1410, 7
        %v1412 = vsub.s32 1, %v1411
        %v1413 = vrot.slane %v1377, %v1412
        %v1414 = vadd.f32 %v1408, %v1413
        %v1415 = vadd.f32 %v1409, %v1413
        %v1416 = vpack.c.bf16 %v1415, %v1414
        %v1417 = vld [vmem:[%s8] sm:$0xf]
        %v1418 = vld [vmem:[%s8 + $0x4] sm:$0xf]
        %v1419 = vld [vmem:[%s8 + $0x8] sm:$0xf]
        %v1420 = vld [vmem:[%s8 + $0xc] sm:$0xf]
        %v1421 = vld [vmem:[%s9] sm:$0x1]
        %v1423 = vlaneseq
        %v1424 = vshrl.u32 %v1423, 7
        %v1425 = vsub.s32 0, %v1424
        %v1426 = vrot.slane %v1421, %v1425
        %v1432 = vunpack.c.l.b16 %v1417
        %v1433 = vunpack.c.l.b16 %v1418
        %v1434 = vunpack.c.l.b16 %v1419
        %v1435 = vunpack.c.l.b16 %v1420
        %v1436 = vpack.c.b16 %v1433, %v1432
        %v1437 = vpack.c.b16 %v1435, %v1434
        %v1441 = vsel %vm665, %v1416, 0
        %1443 = vmatprep.subr.bf16.mxu0 0
        %1444 = vmatpush1.bf16.msra.mxu0 %v1436
        %1445 = vmatprep.subr.bf16.mxu0 0
        %1446 = vmatpush1.bf16.msra.mxu0 %v1437
        %1447 = vmatprep.subr.bf16.mxu0 0
        %1448 = vmatpush1.bf16.msra.mxu0 0
        %1449 = vmatprep.subr.bf16.mxu0 0
        %1450 = vmatpush1.bf16.msra.mxu0 0
        %1451 = vmatprep.subr.bf16.mxu0 0
        %1452 = vmatpush1.bf16.msra.mxu0 0
        %1453 = vmatprep.subr.bf16.mxu0 0
        %1454 = vmatpush1.bf16.msra.mxu0 0
        %1455 = vmatprep.subr.bf16.mxu0 0
        %1456 = vmatpush1.bf16.msra.mxu0 0
        %1457 = vmatprep.subr.bf16.mxu0 0
        %1458 = vmatpush1.bf16.msra.mxu0 0
        %1459 = vmatprep.subr.bf16.mxu0 0
        %1460 = vmatpush1.bf16.msra.mxu0 0
        %1461 = vmatprep.subr.bf16.mxu0 0
        %1462 = vmatpush1.bf16.msra.mxu0 0
        %1463 = vmatprep.subr.bf16.mxu0 0
        %1464 = vmatpush1.bf16.msra.mxu0 0
        %1465 = vmatprep.subr.bf16.mxu0 0
        %1466 = vmatpush1.bf16.msra.mxu0 0
        %1467 = vmatprep.subr.bf16.mxu0 0
        %1468 = vmatpush1.bf16.msra.mxu0 0
        %1469 = vmatprep.subr.bf16.mxu0 0
        %1470 = vmatpush1.bf16.msra.mxu0 0
        %1471 = vmatprep.subr.bf16.mxu0 0
        %1472 = vmatpush1.bf16.msra.mxu0 0
        %1473 = vmatprep.subr.bf16.mxu0 0
        %1474 = vmatpush1.bf16.msra.mxu0 0
        %1475 = vmatprep.mubr.bf16.mxu0 0
        %1476 = vmatmul.mubr.bf16.gmra.mrb[0].mxu0 %v1441
        %v1477 = vpop.f32.mrb[0].mxu0
        %v1478 = vadd.f32 %v1426, %v1477
        %v1479 = vpop.f32.mrb[0].mxu0
        %v1480 = vpop.f32.mrb[0].mxu0
        %v1481 = vadd.f32 %v1426, %v1480
        %v1482 = vpop.f32.mrb[0].mxu0
        %1483 = vdwg.mxu0
        %v1484 = vmul.f32 %v1478, %v1478
        %v1485 = vmul.f32 %v1481, %v1481
        %v1486 = vmul.f32 %v1478, %v1484
        %v1487 = vmul.f32 %v1481, %v1485
        %v1488 = vmul.f32 %v1486, 0.044715
        %v1489 = vmul.f32 %v1487, 0.044715
        %v1490 = vadd.f32 %v1478, %v1488
        %v1491 = vadd.f32 %v1481, %v1489
        %v1492 = vmul.f32 %v1490, 0.7978846
        %v1493 = vmul.f32 %v1491, 0.7978846
        %v1494 = vtanh.pop %v1492
        %v1495 = vtanh.pop %v1493
        %v1496 = vadd.f32 %v1494, 1.0
        %v1497 = vadd.f32 %v1495, 1.0
        %v1498 = vmul.f32 %v1496, 0.5
        %v1499 = vmul.f32 %v1497, 0.5
        %v1500 = vmul.f32 %v1478, %v1498
        %v1501 = vmul.f32 %v1481, %v1499
        %v1502 = vpack.c.bf16 %v1501, %v1500
        %v1503 = vld [vmem:[%s10] sm:$0xf]
        %v1504 = vld [vmem:[%s10 + $0x4] sm:$0xf]
        %v1505 = vld [vmem:[%s10 + $0x8] sm:$0xf]
        %v1506 = vld [vmem:[%s10 + $0xc] sm:$0xf]
        %v1507 = vld [vmem:[%s10 + $0x10] sm:$0xf]
        %v1508 = vld [vmem:[%s10 + $0x14] sm:$0xf]
        %v1509 = vld [vmem:[%s10 + $0x18] sm:$0xf]
        %v1510 = vld [vmem:[%s10 + $0x1c] sm:$0xf]
        %v1511 = vld [vmem:[%s10 + $0x20] sm:$0xf]
        %v1512 = vld [vmem:[%s10 + $0x24] sm:$0xf]
        %v1513 = vld [vmem:[%s10 + $0x28] sm:$0xf]
        %v1514 = vld [vmem:[%s10 + $0x2c] sm:$0xf]
        %v1515 = vld [vmem:[%s10 + $0x30] sm:$0xf]
        %v1516 = vld [vmem:[%s10 + $0x34] sm:$0xf]
        %v1517 = vld [vmem:[%s10 + $0x38] sm:$0xf]
        %v1518 = vld [vmem:[%s10 + $0x3c] sm:$0xf]
        %v1519 = vld [vmem:[%s11] sm:$0x1]
        %v1521 = vlaneseq
        %v1522 = vshrl.u32 %v1521, 7
        %v1523 = vsub.s32 0, %v1522
        %v1524 = vrot.slane %v1519, %v1523
        %v1542 = vunpack.c.l.b16 %v1503
        %v1543 = vunpack.c.l.b16 %v1504
        %v1544 = vunpack.c.l.b16 %v1505
        %v1545 = vunpack.c.l.b16 %v1506
        %v1546 = vunpack.c.l.b16 %v1507
        %v1547 = vunpack.c.l.b16 %v1508
        %v1548 = vunpack.c.l.b16 %v1509
        %v1549 = vunpack.c.l.b16 %v1510
        %v1550 = vunpack.c.l.b16 %v1511
        %v1551 = vunpack.c.l.b16 %v1512
        %v1552 = vunpack.c.l.b16 %v1513
        %v1553 = vunpack.c.l.b16 %v1514
        %v1554 = vunpack.c.l.b16 %v1515
        %v1555 = vunpack.c.l.b16 %v1516
        %v1556 = vunpack.c.l.b16 %v1517
        %v1557 = vunpack.c.l.b16 %v1518
        %v1558 = vpack.c.b16 %v1543, %v1542
        %v1559 = vpack.c.b16 %v1545, %v1544
        %v1560 = vpack.c.b16 %v1547, %v1546
        %v1561 = vpack.c.b16 %v1549, %v1548
        %v1562 = vpack.c.b16 %v1551, %v1550
        %v1563 = vpack.c.b16 %v1553, %v1552
        %v1564 = vpack.c.b16 %v1555, %v1554
        %v1565 = vpack.c.b16 %v1557, %v1556
        %1574 = vmatprep.subr.bf16.mxu0 0
        %1575 = vmatpush1.bf16.msra.mxu0 %v1558
        %1576 = vmatprep.subr.bf16.mxu0 0
        %1577 = vmatpush1.bf16.msra.mxu0 %v1559
        %1578 = vmatprep.subr.bf16.mxu0 0
        %1579 = vmatpush1.bf16.msra.mxu0 %v1560
        %1580 = vmatprep.subr.bf16.mxu0 0
        %1581 = vmatpush1.bf16.msra.mxu0 %v1561
        %1582 = vmatprep.subr.bf16.mxu0 0
        %1583 = vmatpush1.bf16.msra.mxu0 %v1562
        %1584 = vmatprep.subr.bf16.mxu0 0
        %1585 = vmatpush1.bf16.msra.mxu0 %v1563
        %1586 = vmatprep.subr.bf16.mxu0 0
        %1587 = vmatpush1.bf16.msra.mxu0 %v1564
        %1588 = vmatprep.subr.bf16.mxu0 0
        %1589 = vmatpush1.bf16.msra.mxu0 %v1565
        %1590 = vmatprep.subr.bf16.mxu0 0
        %1591 = vmatpush1.bf16.msra.mxu0 0
        %1592 = vmatprep.subr.bf16.mxu0 0
        %1593 = vmatpush1.bf16.msra.mxu0 0
        %1594 = vmatprep.subr.bf16.mxu0 0
        %1595 = vmatpush1.bf16.msra.mxu0 0
        %1596 = vmatprep.subr.bf16.mxu0 0
        %1597 = vmatpush1.bf16.msra.mxu0 0
        %1598 = vmatprep.subr.bf16.mxu0 0
        %1599 = vmatpush1.bf16.msra.mxu0 0
        %1600 = vmatprep.subr.bf16.mxu0 0
        %1601 = vmatpush1.bf16.msra.mxu0 0
        %1602 = vmatprep.subr.bf16.mxu0 0
        %1603 = vmatpush1.bf16.msra.mxu0 0
        %1604 = vmatprep.subr.bf16.mxu0 0
        %1605 = vmatpush1.bf16.msra.mxu0 0
        %1606 = vmatprep.mubr.bf16.mxu0 0
        %1607 = vmatmul.mubr.bf16.gmra.mrb[0].mxu0 %v1502
        %v1608 = vpop.f32.mrb[0].mxu0
        %v1609 = vadd.f32 %v1524, %v1608
        %v1610 = vpop.f32.mrb[0].mxu0
        %v1611 = vpop.f32.mrb[0].mxu0
        %v1612 = vadd.f32 %v1524, %v1611
        %v1613 = vpop.f32.mrb[0].mxu0
        %1614 = vdwg.mxu0
        %v1615 = vadd.f32 %v1375, %v1609
        %v1616 = vadd.f32 %v1376, %v1612
        %s1617 = scalar_lea.vmem %s2, 2
        %v1618 = vld [vmem:[%s1617] sm:$0x3]
        %v1619 = vsel %vm665, %v1615, 0.0
        %1620 = vadd.xlane.f32.xlu0 %v1619
        %v1621 = vpop.xlane.xlu0 %1620
        %v1622 = vsel %vm669, %v1616, 0.0
        %1623 = vadd.xlane.f32.xlu0 %v1622
        %v1624 = vpop.xlane.xlu0 %1623
        %v1625 = vmul.f32 %v1621, %v673
        %v1626 = vmul.f32 %v1624, %v673
        %v1627 = vsub.f32 %v1615, %v1625
        %v1628 = vsub.f32 %v1616, %v1626
        %v1629 = vmul.f32 %v1627, %v1627
        %v1630 = vmul.f32 %v1628, %v1628
        %v1631 = vsel %vm665, %v1629, 0.0
        %1632 = vadd.xlane.f32.xlu0 %v1631
        %v1633 = vpop.xlane.xlu0 %1632
        %v1634 = vsel %vm669, %v1630, 0.0
        %1635 = vadd.xlane.f32.xlu0 %v1634
        %v1636 = vpop.xlane.xlu0 %1635
        %v1637 = vmul.f32 %v1633, %v673
        %v1638 = vmul.f32 %v1636, %v673
        %v1639 = vadd.f32 %v1637, 1e-06
        %v1640 = vadd.f32 %v1638, 1e-06
        %v1641 = vrsqrt.pop %v1639
        %v1642 = vrsqrt.pop %v1640
        %v1643 = vmul.f32 %v1627, %v1641
        %v1644 = vmul.f32 %v1628, %v1642
        %v1645 = vlaneseq
        %v1646 = vshrl.u32 %v1645, 7
        %v1647 = vsub.s32 0, %v1646
        %v1648 = vrot.slane %v1618, %v1647
        %v1649 = vmul.f32 %v1643, %v1648
        %v1650 = vmul.f32 %v1644, %v1648
        %v1651 = vlaneseq
        %v1652 = vshrl.u32 %v1651, 7
        %v1653 = vsub.s32 1, %v1652
        %v1654 = vrot.slane %v1618, %v1653
        %v1655 = vadd.f32 %v1649, %v1654
        %v1656 = vadd.f32 %v1650, %v1654
        %v1657 = vpack.c.bf16 %v1656, %v1655
        %s1658 = scalar_lea.vmem %s3, 16
        %v1659 = vld [vmem:[%s1658] sm:$0xf]
        %v1660 = vld [vmem:[%s1658 + $0x4] sm:$0xf]
        %v1661 = vld [vmem:[%s1658 + $0x8] sm:$0xf]
        %v1662 = vld [vmem:[%s1658 + $0xc] sm:$0xf]
        %s1663 = scalar_lea.vmem %s4, 1
        %v1664 = vld [vmem:[%s1663] sm:$0x1]
        %v1666 = vlaneseq
        %v1667 = vshrl.u32 %v1666, 7
        %v1668 = vsub.s32 0, %v1667
        %v1669 = vrot.slane %v1664, %v1668
        %v1675 = vunpack.c.l.b16 %v1659
        %v1676 = vunpack.c.l.b16 %v1660
        %v1677 = vunpack.c.l.b16 %v1661
        %v1678 = vunpack.c.l.b16 %v1662
        %v1679 = vpack.c.b16 %v1676, %v1675
        %v1680 = vpack.c.b16 %v1678, %v1677
        %v1684 = vsel %vm665, %v1657, 0
        %1686 = vmatprep.subr.bf16.mxu0 0
        %1687 = vmatpush1.bf16.msra.mxu0 %v1679
        %1688 = vmatprep.subr.bf16.mxu0 0
        %1689 = vmatpush1.bf16.msra.mxu0 %v1680
        %1690 = vmatprep.subr.bf16.mxu0 0
        %1691 = vmatpush1.bf16.msra.mxu0 0
        %1692 = vmatprep.subr.bf16.mxu0 0
        %1693 = vmatpush1.bf16.msra.mxu0 0
        %1694 = vmatprep.subr.bf16.mxu0 0
        %1695 = vmatpush1.bf16.msra.mxu0 0
        %1696 = vmatprep.subr.bf16.mxu0 0
        %1697 = vmatpush1.bf16.msra.mxu0 0
        %1698 = vmatprep.subr.bf16.mxu0 0
        %1699 = vmatpush1.bf16.msra.mxu0 0
        %1700 = vmatprep.subr.bf16.mxu0 0
        %1701 = vmatpush1.bf16.msra.mxu0 0
        %1702 = vmatprep.subr.bf16.mxu0 0
        %1703 = vmatpush1.bf16.msra.mxu0 0
        %1704 = vmatprep.subr.bf16.mxu0 0
        %1705 = vmatpush1.bf16.msra.mxu0 0
        %1706 = vmatprep.subr.bf16.mxu0 0
        %1707 = vmatpush1.bf16.msra.mxu0 0
        %1708 = vmatprep.subr.bf16.mxu0 0
        %1709 = vmatpush1.bf16.msra.mxu0 0
        %1710 = vmatprep.subr.bf16.mxu0 0
        %1711 = vmatpush1.bf16.msra.mxu0 0
        %1712 = vmatprep.subr.bf16.mxu0 0
        %1713 = vmatpush1.bf16.msra.mxu0 0
        %1714 = vmatprep.subr.bf16.mxu0 0
        %1715 = vmatpush1.bf16.msra.mxu0 0
        %1716 = vmatprep.subr.bf16.mxu0 0
        %1717 = vmatpush1.bf16.msra.mxu0 0
        %1718 = vmatprep.mubr.bf16.mxu0 0
        %1719 = vmatmul.mubr.bf16.gmra.mrb[0].mxu0 %v1684
        %v1720 = vpop.f32.mrb[0].mxu0
        %v1721 = vadd.f32 %v1669, %v1720
        %v1722 = vpop.f32.mrb[0].mxu0
        %v1723 = vpop.f32.mrb[0].mxu0
        %v1724 = vadd.f32 %v1669, %v1723
        %v1725 = vpop.f32.mrb[0].mxu0
        %1726 = vdwg.mxu0
        %v1727 = vpack.c.bf16 %v1724, %v1721
        %1729 = vrot.lane.b32.xlu0 %v1727, 96
        %v1730 = vpop.permute.xlu0 %1729
        %v1732 = vsel %vm778, %v1727, 0
        %v1735 = vsel %vm778, %v1730, 0
        %1737 = vmatprep.subr.bf16.mxu0 0
        %1738 = vmatpush1.bf16.xpose.msra.mxu0 %v1735
        %1739 = vmatprep.subr.bf16.mxu0 0
        %1740 = vmatpush1.bf16.xpose.msra.mxu0 0
        %1741 = vmatprep.subr.bf16.mxu0 0
        %1742 = vmatpush1.bf16.xpose.msra.mxu0 0
        %1743 = vmatprep.subr.bf16.mxu0 0
        %1744 = vmatpush1.bf16.xpose.msra.mxu0 0
        %1745 = vmatprep.subr.bf16.mxu0 0
        %1746 = vmatpush1.bf16.xpose.msra.mxu0 0
        %1747 = vmatprep.subr.bf16.mxu0 0
        %1748 = vmatpush1.bf16.xpose.msra.mxu0 0
        %1749 = vmatprep.subr.bf16.mxu0 0
        %1750 = vmatpush1.bf16.xpose.msra.mxu0 0
        %1751 = vmatprep.subr.bf16.mxu0 0
        %1752 = vmatpush1.bf16.xpose.msra.mxu0 0
        %1753 = vmatprep.subr.bf16.mxu0 0
        %1754 = vmatpush1.bf16.xpose.msra.mxu0 0
        %1755 = vmatprep.subr.bf16.mxu0 0
        %1756 = vmatpush1.bf16.xpose.msra.mxu0 0
        %1757 = vmatprep.subr.bf16.mxu0 0
        %1758 = vmatpush1.bf16.xpose.msra.mxu0 0
        %1759 = vmatprep.subr.bf16.mxu0 0
        %1760 = vmatpush1.bf16.xpose.msra.mxu0 0
        %1761 = vmatprep.subr.bf16.mxu0 0
        %1762 = vmatpush1.bf16.xpose.msra.mxu0 0
        %1763 = vmatprep.subr.bf16.mxu0 0
        %1764 = vmatpush1.bf16.xpose.msra.mxu0 0
        %1765 = vmatprep.subr.bf16.mxu0 0
        %1766 = vmatpush1.bf16.xpose.msra.mxu0 0
        %1767 = vmatprep.subr.bf16.mxu0 0
        %1768 = vmatpush1.bf16.xpose.msra.mxu0 0
        %1769 = vmatprep.mubr.bf16.mxu0 0
        %1770 = vmatmul.mubr.bf16.gmra.mrb[0].mxu0 %v1732
        %v1771 = vpop.f32.mrb[0].mxu0
        %v1772 = vadd.f32 0.0, %v1771
        %v1773 = vpop.f32.mrb[0].mxu0
        %v1774 = vpop.f32.mrb[0].mxu0
        %v1775 = vadd.f32 0.0, %v1774
        %v1776 = vpop.f32.mrb[0].mxu0
        %1777 = vdwg.mxu0
        %v1778 = vsel %vm826, %v1772, -inf
        %1779 = vmax.xlane.f32.xlu0 %v1778
        %v1780 = vpop.xlane.xlu0 %1779
        %v1781 = vsel %vm830, %v1775, -inf
        %1782 = vmax.xlane.f32.xlu0 %v1781
        %v1783 = vpop.xlane.xlu0 %1782
        %v1784 = vsub.f32 %v1772, %v1780
        %v1785 = vsub.f32 %v1775, %v1783
        %v1786 = vmul.f32 %v1784, 1.442695
        %v1787 = vpow.pop %v1786
        %v1788 = vmul.f32 %v1785, 1.442695
        %v1789 = vpow.pop %v1788
        %v1790 = vsel %vm826, %v1787, 0.0
        %1791 = vadd.xlane.f32.xlu0 %v1790
        %v1792 = vpop.xlane.xlu0 %1791
        %v1793 = vsel %vm830, %v1789, 0.0
        %1794 = vadd.xlane.f32.xlu0 %v1793
        %v1795 = vpop.xlane.xlu0 %1794
        %v1796 = vrcp.pop %v1792
        %v1797 = vrcp.pop %v1795
        %v1798 = vmul.f32 %v1787, %v1796
        %v1799 = vmul.f32 %v1789, %v1797
        %v1800 = vpack.c.bf16 %v1799, %v1798
        %1801 = vrot.lane.b32.xlu0 %v1727, 64
        %v1802 = vpop.permute.xlu0 %1801
        %v1804 = vsel %vm826, %v1800, 0
        %v1807 = vand.u32 %v1802, %v859
        %1809 = vmatprep.subr.bf16.mxu0 0
        %1810 = vmatpush1.bf16.msra.mxu0 %v1807
        %1811 = vmatprep.subr.bf16.mxu0 0
        %1812 = vmatpush1.bf16.msra.mxu0 0
        %1813 = vmatprep.subr.bf16.mxu0 0
        %1814 = vmatpush1.bf16.msra.mxu0 0
        %1815 = vmatprep.subr.bf16.mxu0 0
        %1816 = vmatpush1.bf16.msra.mxu0 0
        %1817 = vmatprep.subr.bf16.mxu0 0
        %1818 = vmatpush1.bf16.msra.mxu0 0
        %1819 = vmatprep.subr.bf16.mxu0 0
        %1820 = vmatpush1.bf16.msra.mxu0 0
        %1821 = vmatprep.subr.bf16.mxu0 0
        %1822 = vmatpush1.bf16.msra.mxu0 0
        %1823 = vmatprep.subr.bf16.mxu0 0
        %1824 = vmatpush1.bf16.msra.mxu0 0
        %1825 = vmatprep.subr.bf16.mxu0 0
        %1826 = vmatpush1.bf16.msra.mxu0 0
        %1827 = vmatprep.subr.bf16.mxu0 0
        %1828 = vmatpush1.bf16.msra.mxu0 0
        %1829 = vmatprep.subr.bf16.mxu0 0
        %1830 = vmatpush1.bf16.msra.mxu0 0
        %1831 = vmatprep.subr.bf16.mxu0 0
        %1832 = vmatpush1.bf16.msra.mxu0 0
        %1833 = vmatprep.subr.bf16.mxu0 0
        %1834 = vmatpush1.bf16.msra.mxu0 0
        %1835 = vmatprep.subr.bf16.mxu0 0
        %1836 = vmatpush1.bf16.msra.mxu0 0
        %1837 = vmatprep.subr.bf16.mxu0 0
        %1838 = vmatpush1.bf16.msra.mxu0 0
        %1839 = vmatprep.subr.bf16.mxu0 0
        %1840 = vmatpush1.bf16.msra.mxu0 0
        %1841 = vmatprep.mubr.bf16.mxu0 0
        %1842 = vmatmul.mubr.bf16.gmra.mrb[0].mxu0 %v1804
        %v1843 = vpop.f32.mrb[0].mxu0
        %v1844 = vadd.f32 0.0, %v1843
        %v1845 = vpop.f32.mrb[0].mxu0
        %v1846 = vpop.f32.mrb[0].mxu0
        %v1847 = vadd.f32 0.0, %v1846
        %v1848 = vpop.f32.mrb[0].mxu0
        %1849 = vdwg.mxu0
        %1850 = vrot.lane.b32.xlu0 %v1727, 120
        %v1851 = vpop.permute.xlu0 %1850
        %1852 = vrot.lane.b32.xlu0 %v1727, 88
        %v1853 = vpop.permute.xlu0 %1852
        %v1855 = vsel %vm778, %v1851, 0
        %v1858 = vsel %vm778, %v1853, 0
        %1860 = vmatprep.subr.bf16.mxu0 0
        %1861 = vmatpush1.bf16.xpose.msra.mxu0 %v1858
        %1862 = vmatprep.subr.bf16.mxu0 0
        %1863 = vmatpush1.bf16.xpose.msra.mxu0 0
        %1864 = vmatprep.subr.bf16.mxu0 0
        %1865 = vmatpush1.bf16.xpose.msra.mxu0 0
        %1866 = vmatprep.subr.bf16.mxu0 0
        %1867 = vmatpush1.bf16.xpose.msra.mxu0 0
        %1868 = vmatprep.subr.bf16.mxu0 0
        %1869 = vmatpush1.bf16.xpose.msra.mxu0 0
        %1870 = vmatprep.subr.bf16.mxu0 0
        %1871 = vmatpush1.bf16.xpose.msra.mxu0 0
        %1872 = vmatprep.subr.bf16.mxu0 0
        %1873 = vmatpush1.bf16.xpose.msra.mxu0 0
        %1874 = vmatprep.subr.bf16.mxu0 0
        %1875 = vmatpush1.bf16.xpose.msra.mxu0 0
        %1876 = vmatprep.subr.bf16.mxu0 0
        %1877 = vmatpush1.bf16.xpose.msra.mxu0 0
        %1878 = vmatprep.subr.bf16.mxu0 0
        %1879 = vmatpush1.bf16.xpose.msra.mxu0 0
        %1880 = vmatprep.subr.bf16.mxu0 0
        %1881 = vmatpush1.bf16.xpose.msra.mxu0 0
        %1882 = vmatprep.subr.bf16.mxu0 0
        %1883 = vmatpush1.bf16.xpose.msra.mxu0 0
        %1884 = vmatprep.subr.bf16.mxu0 0
        %1885 = vmatpush1.bf16.xpose.msra.mxu0 0
        %1886 = vmatprep.subr.bf16.mxu0 0
        %1887 = vmatpush1.bf16.xpose.msra.mxu0 0
        %1888 = vmatprep.subr.bf16.mxu0 0
        %1889 = vmatpush1.bf16.xpose.msra.mxu0 0
        %1890 = vmatprep.subr.bf16.mxu0 0
        %1891 = vmatpush1.bf16.xpose.msra.mxu0 0
        %1892 = vmatprep.mubr.bf16.mxu0 0
        %1893 = vmatmul.mubr.bf16.gmra.mrb[0].mxu0 %v1855
        %v1894 = vpop.f32.mrb[0].mxu0
        %v1895 = vadd.f32 0.0, %v1894
        %v1896 = vpop.f32.mrb[0].mxu0
        %v1897 = vpop.f32.mrb[0].mxu0
        %v1898 = vadd.f32 0.0, %v1897
        %v1899 = vpop.f32.mrb[0].mxu0
        %1900 = vdwg.mxu0
        %v1901 = vsel %vm826, %v1895, -inf
        %1902 = vmax.xlane.f32.xlu0 %v1901
        %v1903 = vpop.xlane.xlu0 %1902
        %v1904 = vsel %vm830, %v1898, -inf
        %1905 = vmax.xlane.f32.xlu0 %v1904
        %v1906 = vpop.xlane.xlu0 %1905
        %v1907 = vsub.f32 %v1895, %v1903
        %v1908 = vsub.f32 %v1898, %v1906
        %v1909 = vmul.f32 %v1907, 1.442695
        %v1910 = vpow.pop %v1909
        %v1911 = vmul.f32 %v1908, 1.442695
        %v1912 = vpow.pop %v1911
        %v1913 = vsel %vm826, %v1910, 0.0
        %1914 = vadd.xlane.f32.xlu0 %v1913
        %v1915 = vpop.xlane.xlu0 %1914
        %v1916 = vsel %vm830, %v1912, 0.0
        %1917 = vadd.xlane.f32.xlu0 %v1916
        %v1918 = vpop.xlane.xlu0 %1917
        %v1919 = vrcp.pop %v1915
        %v1920 = vrcp.pop %v1918
        %v1921 = vmul.f32 %v1910, %v1919
        %v1922 = vmul.f32 %v1912, %v1920
        %v1923 = vpack.c.bf16 %v1922, %v1921
        %1924 = vrot.lane.b32.xlu0 %v1727, 56
        %v1925 = vpop.permute.xlu0 %1924
        %v1927 = vsel %vm826, %v1923, 0
        %v1930 = vand.u32 %v1925, %v859
        %1932 = vmatprep.subr.bf16.mxu0 0
        %1933 = vmatpush1.bf16.msra.mxu0 %v1930
        %1934 = vmatprep.subr.bf16.mxu0 0
        %1935 = vmatpush1.bf16.msra.mxu0 0
        %1936 = vmatprep.subr.bf16.mxu0 0
        %1937 = vmatpush1.bf16.msra.mxu0 0
        %1938 = vmatprep.subr.bf16.mxu0 0
        %1939 = vmatpush1.bf16.msra.mxu0 0
        %1940 = vmatprep.subr.bf16.mxu0 0
        %1941 = vmatpush1.bf16.msra.mxu0 0
        %1942 = vmatprep.subr.bf16.mxu0 0
        %1943 = vmatpush1.bf16.msra.mxu0 0
        %1944 = vmatprep.subr.bf16.mxu0 0
        %1945 = vmatpush1.bf16.msra.mxu0 0
        %1946 = vmatprep.subr.bf16.mxu0 0
        %1947 = vmatpush1.bf16.msra.mxu0 0
        %1948 = vmatprep.subr.bf16.mxu0 0
        %1949 = vmatpush1.bf16.msra.mxu0 0
        %1950 = vmatprep.subr.bf16.mxu0 0
        %1951 = vmatpush1.bf16.msra.mxu0 0
        %1952 = vmatprep.subr.bf16.mxu0 0
        %1953 = vmatpush1.bf16.msra.mxu0 0
        %1954 = vmatprep.subr.bf16.mxu0 0
        %1955 = vmatpush1.bf16.msra.mxu0 0
        %1956 = vmatprep.subr.bf16.mxu0 0
        %1957 = vmatpush1.bf16.msra.mxu0 0
        %1958 = vmatprep.subr.bf16.mxu0 0
        %1959 = vmatpush1.bf16.msra.mxu0 0
        %1960 = vmatprep.subr.bf16.mxu0 0
        %1961 = vmatpush1.bf16.msra.mxu0 0
        %1962 = vmatprep.subr.bf16.mxu0 0
        %1963 = vmatpush1.bf16.msra.mxu0 0
        %1964 = vmatprep.mubr.bf16.mxu0 0
        %1965 = vmatmul.mubr.bf16.gmra.mrb[0].mxu0 %v1927
        %v1966 = vpop.f32.mrb[0].mxu0
        %v1967 = vadd.f32 0.0, %v1966
        %v1968 = vpop.f32.mrb[0].mxu0
        %v1969 = vpop.f32.mrb[0].mxu0
        %v1970 = vadd.f32 0.0, %v1969
        %v1971 = vpop.f32.mrb[0].mxu0
        %1972 = vdwg.mxu0
        %1973 = vrot.lane.b32.xlu0 %v1727, 112
        %v1974 = vpop.permute.xlu0 %1973
        %1975 = vrot.lane.b32.xlu0 %v1727, 80
        %v1976 = vpop.permute.xlu0 %1975
        %v1978 = vsel %vm778, %v1974, 0
        %v1981 = vsel %vm778, %v1976, 0
        %1983 = vmatprep.subr.bf16.mxu0 0
        %1984 = vmatpush1.bf16.xpose.msra.mxu0 %v1981
        %1985 = vmatprep.subr.bf16.mxu0 0
        %1986 = vmatpush1.bf16.xpose.msra.mxu0 0
        %1987 = vmatprep.subr.bf16.mxu0 0
        %1988 = vmatpush1.bf16.xpose.msra.mxu0 0
        %1989 = vmatprep.subr.bf16.mxu0 0
        %1990 = vmatpush1.bf16.xpose.msra.mxu0 0
        %1991 = vmatprep.subr.bf16.mxu0 0
        %1992 = vmatpush1.bf16.xpose.msra.mxu0 0
        %1993 = vmatprep.subr.bf16.mxu0 0
        %1994 = vmatpush1.bf16.xpose.msra.mxu0 0
        %1995 = vmatprep.subr.bf16.mxu0 0
        %1996 = vmatpush1.bf16.xpose.msra.mxu0 0
        %1997 = vmatprep.subr.bf16.mxu0 0
        %1998 = vmatpush1.bf16.xpose.msra.mxu0 0
        %1999 = vmatprep.subr.bf16.mxu0 0
        %2000 = vmatpush1.bf16.xpose.msra.mxu0 0
        %2001 = vmatprep.subr.bf16.mxu0 0
        %2002 = vmatpush1.bf16.xpose.msra.mxu0 0
        %2003 = vmatprep.subr.bf16.mxu0 0
        %2004 = vmatpush1.bf16.xpose.msra.mxu0 0
        %2005 = vmatprep.subr.bf16.mxu0 0
        %2006 = vmatpush1.bf16.xpose.msra.mxu0 0
        %2007 = vmatprep.subr.bf16.mxu0 0
        %2008 = vmatpush1.bf16.xpose.msra.mxu0 0
        %2009 = vmatprep.subr.bf16.mxu0 0
        %2010 = vmatpush1.bf16.xpose.msra.mxu0 0
        %2011 = vmatprep.subr.bf16.mxu0 0
        %2012 = vmatpush1.bf16.xpose.msra.mxu0 0
        %2013 = vmatprep.subr.bf16.mxu0 0
        %2014 = vmatpush1.bf16.xpose.msra.mxu0 0
        %2015 = vmatprep.mubr.bf16.mxu0 0
        %2016 = vmatmul.mubr.bf16.gmra.mrb[0].mxu0 %v1978
        %v2017 = vpop.f32.mrb[0].mxu0
        %v2018 = vadd.f32 0.0, %v2017
        %v2019 = vpop.f32.mrb[0].mxu0
        %v2020 = vpop.f32.mrb[0].mxu0
        %v2021 = vadd.f32 0.0, %v2020
        %v2022 = vpop.f32.mrb[0].mxu0
        %2023 = vdwg.mxu0
        %v2024 = vsel %vm826, %v2018, -inf
        %2025 = vmax.xlane.f32.xlu0 %v2024
        %v2026 = vpop.xlane.xlu0 %2025
        %v2027 = vsel %vm830, %v2021, -inf
        %2028 = vmax.xlane.f32.xlu0 %v2027
        %v2029 = vpop.xlane.xlu0 %2028
        %v2030 = vsub.f32 %v2018, %v2026
        %v2031 = vsub.f32 %v2021, %v2029
        %v2032 = vmul.f32 %v2030, 1.442695
        %v2033 = vpow.pop %v2032
        %v2034 = vmul.f32 %v2031, 1.442695
        %v2035 = vpow.pop %v2034
        %v2036 = vsel %vm826, %v2033, 0.0
        %2037 = vadd.xlane.f32.xlu0 %v2036
        %v2038 = vpop.xlane.xlu0 %2037
        %v2039 = vsel %vm830, %v2035, 0.0
        %2040 = vadd.xlane.f32.xlu0 %v2039
        %v2041 = vpop.xlane.xlu0 %2040
        %v2042 = vrcp.pop %v2038
        %v2043 = vrcp.pop %v2041
        %v2044 = vmul.f32 %v2033, %v2042
        %v2045 = vmul.f32 %v2035, %v2043
        %v2046 = vpack.c.bf16 %v2045, %v2044
        %2047 = vrot.lane.b32.xlu0 %v1727, 48
        %v2048 = vpop.permute.xlu0 %2047
        %v2050 = vsel %vm826, %v2046, 0
        %v2053 = vand.u32 %v2048, %v859
        %2055 = vmatprep.subr.bf16.mxu0 0
        %2056 = vmatpush1.bf16.msra.mxu0 %v2053
        %2057 = vmatprep.subr.bf16.mxu0 0
        %2058 = vmatpush1.bf16.msra.mxu0 0
        %2059 = vmatprep.subr.bf16.mxu0 0
        %2060 = vmatpush1.bf16.msra.mxu0 0
        %2061 = vmatprep.subr.bf16.mxu0 0
        %2062 = vmatpush1.bf16.msra.mxu0 0
        %2063 = vmatprep.subr.bf16.mxu0 0
        %2064 = vmatpush1.bf16.msra.mxu0 0
        %2065 = vmatprep.subr.bf16.mxu0 0
        %2066 = vmatpush1.bf16.msra.mxu0 0
        %2067 = vmatprep.subr.bf16.mxu0 0
        %2068 = vmatpush1.bf16.msra.mxu0 0
        %2069 = vmatprep.subr.bf16.mxu0 0
        %2070 = vmatpush1.bf16.msra.mxu0 0
        %2071 = vmatprep.subr.bf16.mxu0 0
        %2072 = vmatpush1.bf16.msra.mxu0 0
        %2073 = vmatprep.subr.bf16.mxu0 0
        %2074 = vmatpush1.bf16.msra.mxu0 0
        %2075 = vmatprep.subr.bf16.mxu0 0
        %2076 = vmatpush1.bf16.msra.mxu0 0
        %2077 = vmatprep.subr.bf16.mxu0 0
        %2078 = vmatpush1.bf16.msra.mxu0 0
        %2079 = vmatprep.subr.bf16.mxu0 0
        %2080 = vmatpush1.bf16.msra.mxu0 0
        %2081 = vmatprep.subr.bf16.mxu0 0
        %2082 = vmatpush1.bf16.msra.mxu0 0
        %2083 = vmatprep.subr.bf16.mxu0 0
        %2084 = vmatpush1.bf16.msra.mxu0 0
        %2085 = vmatprep.subr.bf16.mxu0 0
        %2086 = vmatpush1.bf16.msra.mxu0 0
        %2087 = vmatprep.mubr.bf16.mxu0 0
        %2088 = vmatmul.mubr.bf16.gmra.mrb[0].mxu0 %v2050
        %v2089 = vpop.f32.mrb[0].mxu0
        %v2090 = vadd.f32 0.0, %v2089
        %v2091 = vpop.f32.mrb[0].mxu0
        %v2092 = vpop.f32.mrb[0].mxu0
        %v2093 = vadd.f32 0.0, %v2092
        %v2094 = vpop.f32.mrb[0].mxu0
        %2095 = vdwg.mxu0
        %2096 = vrot.lane.b32.xlu0 %v1727, 104
        %v2097 = vpop.permute.xlu0 %2096
        %2098 = vrot.lane.b32.xlu0 %v1727, 72
        %v2099 = vpop.permute.xlu0 %2098
        %v2101 = vsel %vm778, %v2097, 0
        %v2104 = vsel %vm778, %v2099, 0
        %2106 = vmatprep.subr.bf16.mxu0 0
        %2107 = vmatpush1.bf16.xpose.msra.mxu0 %v2104
        %2108 = vmatprep.subr.bf16.mxu0 0
        %2109 = vmatpush1.bf16.xpose.msra.mxu0 0
        %2110 = vmatprep.subr.bf16.mxu0 0
        %2111 = vmatpush1.bf16.xpose.msra.mxu0 0
        %2112 = vmatprep.subr.bf16.mxu0 0
        %2113 = vmatpush1.bf16.xpose.msra.mxu0 0
        %2114 = vmatprep.subr.bf16.mxu0 0
        %2115 = vmatpush1.bf16.xpose.msra.mxu0 0
        %2116 = vmatprep.subr.bf16.mxu0 0
        %2117 = vmatpush1.bf16.xpose.msra.mxu0 0
        %2118 = vmatprep.subr.bf16.mxu0 0
        %2119 = vmatpush1.bf16.xpose.msra.mxu0 0
        %2120 = vmatprep.subr.bf16.mxu0 0
        %2121 = vmatpush1.bf16.xpose.msra.mxu0 0
        %2122 = vmatprep.subr.bf16.mxu0 0
        %2123 = vmatpush1.bf16.xpose.msra.mxu0 0
        %2124 = vmatprep.subr.bf16.mxu0 0
        %2125 = vmatpush1.bf16.xpose.msra.mxu0 0
        %2126 = vmatprep.subr.bf16.mxu0 0
        %2127 = vmatpush1.bf16.xpose.msra.mxu0 0
        %2128 = vmatprep.subr.bf16.mxu0 0
        %2129 = vmatpush1.bf16.xpose.msra.mxu0 0
        %2130 = vmatprep.subr.bf16.mxu0 0
        %2131 = vmatpush1.bf16.xpose.msra.mxu0 0
        %2132 = vmatprep.subr.bf16.mxu0 0
        %2133 = vmatpush1.bf16.xpose.msra.mxu0 0
        %2134 = vmatprep.subr.bf16.mxu0 0
        %2135 = vmatpush1.bf16.xpose.msra.mxu0 0
        %2136 = vmatprep.subr.bf16.mxu0 0
        %2137 = vmatpush1.bf16.xpose.msra.mxu0 0
        %2138 = vmatprep.mubr.bf16.mxu0 0
        %2139 = vmatmul.mubr.bf16.gmra.mrb[0].mxu0 %v2101
        %v2140 = vpop.f32.mrb[0].mxu0
        %v2141 = vadd.f32 0.0, %v2140
        %v2142 = vpop.f32.mrb[0].mxu0
        %v2143 = vpop.f32.mrb[0].mxu0
        %v2144 = vadd.f32 0.0, %v2143
        %v2145 = vpop.f32.mrb[0].mxu0
        %2146 = vdwg.mxu0
        %v2147 = vsel %vm826, %v2141, -inf
        %2148 = vmax.xlane.f32.xlu0 %v2147
        %v2149 = vpop.xlane.xlu0 %2148
        %v2150 = vsel %vm830, %v2144, -inf
        %2151 = vmax.xlane.f32.xlu0 %v2150
        %v2152 = vpop.xlane.xlu0 %2151
        %v2153 = vsub.f32 %v2141, %v2149
        %v2154 = vsub.f32 %v2144, %v2152
        %v2155 = vmul.f32 %v2153, 1.442695
        %v2156 = vpow.pop %v2155
        %v2157 = vmul.f32 %v2154, 1.442695
        %v2158 = vpow.pop %v2157
        %v2159 = vsel %vm826, %v2156, 0.0
        %2160 = vadd.xlane.f32.xlu0 %v2159
        %v2161 = vpop.xlane.xlu0 %2160
        %v2162 = vsel %vm830, %v2158, 0.0
        %2163 = vadd.xlane.f32.xlu0 %v2162
        %v2164 = vpop.xlane.xlu0 %2163
        %v2165 = vrcp.pop %v2161
        %v2166 = vrcp.pop %v2164
        %v2167 = vmul.f32 %v2156, %v2165
        %v2168 = vmul.f32 %v2158, %v2166
        %v2169 = vpack.c.bf16 %v2168, %v2167
        %2170 = vrot.lane.b32.xlu0 %v1727, 40
        %v2171 = vpop.permute.xlu0 %2170
        %v2173 = vsel %vm826, %v2169, 0
        %v2176 = vand.u32 %v2171, %v859
        %2178 = vmatprep.subr.bf16.mxu0 0
        %2179 = vmatpush1.bf16.msra.mxu0 %v2176
        %2180 = vmatprep.subr.bf16.mxu0 0
        %2181 = vmatpush1.bf16.msra.mxu0 0
        %2182 = vmatprep.subr.bf16.mxu0 0
        %2183 = vmatpush1.bf16.msra.mxu0 0
        %2184 = vmatprep.subr.bf16.mxu0 0
        %2185 = vmatpush1.bf16.msra.mxu0 0
        %2186 = vmatprep.subr.bf16.mxu0 0
        %2187 = vmatpush1.bf16.msra.mxu0 0
        %2188 = vmatprep.subr.bf16.mxu0 0
        %2189 = vmatpush1.bf16.msra.mxu0 0
        %2190 = vmatprep.subr.bf16.mxu0 0
        %2191 = vmatpush1.bf16.msra.mxu0 0
        %2192 = vmatprep.subr.bf16.mxu0 0
        %2193 = vmatpush1.bf16.msra.mxu0 0
        %2194 = vmatprep.subr.bf16.mxu0 0
        %2195 = vmatpush1.bf16.msra.mxu0 0
        %2196 = vmatprep.subr.bf16.mxu0 0
        %2197 = vmatpush1.bf16.msra.mxu0 0
        %2198 = vmatprep.subr.bf16.mxu0 0
        %2199 = vmatpush1.bf16.msra.mxu0 0
        %2200 = vmatprep.subr.bf16.mxu0 0
        %2201 = vmatpush1.bf16.msra.mxu0 0
        %2202 = vmatprep.subr.bf16.mxu0 0
        %2203 = vmatpush1.bf16.msra.mxu0 0
        %2204 = vmatprep.subr.bf16.mxu0 0
        %2205 = vmatpush1.bf16.msra.mxu0 0
        %2206 = vmatprep.subr.bf16.mxu0 0
        %2207 = vmatpush1.bf16.msra.mxu0 0
        %2208 = vmatprep.subr.bf16.mxu0 0
        %2209 = vmatpush1.bf16.msra.mxu0 0
        %2210 = vmatprep.mubr.bf16.mxu0 0
        %2211 = vmatmul.mubr.bf16.gmra.mrb[0].mxu0 %v2173
        %v2212 = vpop.f32.mrb[0].mxu0
        %v2213 = vadd.f32 0.0, %v2212
        %v2214 = vpop.f32.mrb[0].mxu0
        %v2215 = vpop.f32.mrb[0].mxu0
        %v2216 = vadd.f32 0.0, %v2215
        %v2217 = vpop.f32.mrb[0].mxu0
        %2218 = vdwg.mxu0
        %2221 = vrot.lane.b32.xlu0 %v1967, 8
        %v2222 = vpop.permute.xlu0 %2221
        %2223 = vrot.lane.b32.xlu0 %v1970, 8
        %v2224 = vpop.permute.xlu0 %2223
        %2229 = vrot.lane.b32.xlu0 %v2090, 16
        %v2230 = vpop.permute.xlu0 %2229
        %2231 = vrot.lane.b32.xlu0 %v2093, 16
        %v2232 = vpop.permute.xlu0 %2231
        %2237 = vrot.lane.b32.xlu0 %v2213, 24
        %v2238 = vpop.permute.xlu0 %2237
        %2239 = vrot.lane.b32.xlu0 %v2216, 24
        %v2240 = vpop.permute.xlu0 %2239
        %v2243 = vsel %vm778, %v1844, %v2222
        %v2244 = vsel %vm778, %v1847, %v2224
        %v2245 = vsel %vm1299, %v2243, %v2230
        %v2246 = vsel %vm1299, %v2244, %v2232
        %v2247 = vsel %vm1302, %v2245, %v2238
        %v2248 = vsel %vm1302, %v2246, %v2240
        %v2249 = vpack.c.bf16 %v2248, %v2247
        %s2250 = scalar_lea.vmem %s5, 16
        %v2251 = vld [vmem:[%s2250] sm:$0xf]
        %v2252 = vld [vmem:[%s2250 + $0x4] sm:$0xf]
        %v2253 = vld [vmem:[%s2250 + $0x8] sm:$0xf]
        %v2254 = vld [vmem:[%s2250 + $0xc] sm:$0xf]
        %v2259 = vunpack.c.l.b16 %v2251
        %v2260 = vunpack.c.l.b16 %v2252
        %v2261 = vunpack.c.l.b16 %v2253
        %v2262 = vunpack.c.l.b16 %v2254
        %v2263 = vpack.c.b16 %v2260, %v2259
        %v2264 = vpack.c.b16 %v2262, %v2261
        %v2268 = vsel %vm665, %v2249, 0
        %2270 = vmatprep.subr.bf16.mxu0 0
        %2271 = vmatpush1.bf16.msra.mxu0 %v2263
        %2272 = vmatprep.subr.bf16.mxu0 0
        %2273 = vmatpush1.bf16.msra.mxu0 %v2264
        %2274 = vmatprep.subr.bf16.mxu0 0
        %2275 = vmatpush1.bf16.msra.mxu0 0
        %2276 = vmatprep.subr.bf16.mxu0 0
        %2277 = vmatpush1.bf16.msra.mxu0 0
        %2278 = vmatprep.subr.bf16.mxu0 0
        %2279 = vmatpush1.bf16.msra.mxu0 0
        %2280 = vmatprep.subr.bf16.mxu0 0
        %2281 = vmatpush1.bf16.msra.mxu0 0
        %2282 = vmatprep.subr.bf16.mxu0 0
        %2283 = vmatpush1.bf16.msra.mxu0 0
        %2284 = vmatprep.subr.bf16.mxu0 0
        %2285 = vmatpush1.bf16.msra.mxu0 0
        %2286 = vmatprep.subr.bf16.mxu0 0
        %2287 = vmatpush1.bf16.msra.mxu0 0
        %2288 = vmatprep.subr.bf16.mxu0 0
        %2289 = vmatpush1.bf16.msra.mxu0 0
        %2290 = vmatprep.subr.bf16.mxu0 0
        %2291 = vmatpush1.bf16.msra.mxu0 0
        %2292 = vmatprep.subr.bf16.mxu0 0
        %2293 = vmatpush1.bf16.msra.mxu0 0
        %2294 = vmatprep.subr.bf16.mxu0 0
        %2295 = vmatpush1.bf16.msra.mxu0 0
        %2296 = vmatprep.subr.bf16.mxu0 0
        %2297 = vmatpush1.bf16.msra.mxu0 0
        %2298 = vmatprep.subr.bf16.mxu0 0
        %2299 = vmatpush1.bf16.msra.mxu0 0
        %2300 = vmatprep.subr.bf16.mxu0 0
        %2301 = vmatpush1.bf16.msra.mxu0 0
        %2302 = vmatprep.mubr.bf16.mxu0 0
        %2303 = vmatmul.mubr.bf16.gmra.mrb[0].mxu0 %v2268
        %v2304 = vpop.f32.mrb[0].mxu0
        %v2305 = vadd.f32 0.0, %v2304
        %v2306 = vpop.f32.mrb[0].mxu0
        %v2307 = vpop.f32.mrb[0].mxu0
        %v2308 = vadd.f32 0.0, %v2307
        %v2309 = vpop.f32.mrb[0].mxu0
        %2310 = vdwg.mxu0
        %v2311 = vadd.f32 %v1615, %v2305
        %v2312 = vadd.f32 %v1616, %v2308
        %s2313 = scalar_lea.vmem %s6, 1
        %v2314 = vld [vmem:[%s2313] sm:$0x1]
        %v2316 = vlaneseq
        %v2317 = vshrl.u32 %v2316, 7
        %v2318 = vsub.s32 0, %v2317
        %v2319 = vrot.slane %v2314, %v2318
        %v2321 = vadd.f32 %v2311, %v2319
        %v2322 = vadd.f32 %v2312, %v2319
        %s2323 = scalar_lea.vmem %s7, 2
        %v2324 = vld [vmem:[%s2323] sm:$0x3]
        %v2325 = vsel %vm665, %v2321, 0.0
        %2326 = vadd.xlane.f32.xlu0 %v2325
        %v2327 = vpop.xlane.xlu0 %2326
        %v2328 = vsel %vm669, %v2322, 0.0
        %2329 = vadd.xlane.f32.xlu0 %v2328
        %v2330 = vpop.xlane.xlu0 %2329
        %v2331 = vmul.f32 %v2327, %v673
        %v2332 = vmul.f32 %v2330, %v673
        %v2333 = vsub.f32 %v2321, %v2331
        %v2334 = vsub.f32 %v2322, %v2332
        %v2335 = vmul.f32 %v2333, %v2333
        %v2336 = vmul.f32 %v2334, %v2334
        %v2337 = vsel %vm665, %v2335, 0.0
        %2338 = vadd.xlane.f32.xlu0 %v2337
        %v2339 = vpop.xlane.xlu0 %2338
        %v2340 = vsel %vm669, %v2336, 0.0
        %2341 = vadd.xlane.f32.xlu0 %v2340
        %v2342 = vpop.xlane.xlu0 %2341
        %v2343 = vmul.f32 %v2339, %v673
        %v2344 = vmul.f32 %v2342, %v673
        %v2345 = vadd.f32 %v2343, 1e-06
        %v2346 = vadd.f32 %v2344, 1e-06
        %v2347 = vrsqrt.pop %v2345
        %v2348 = vrsqrt.pop %v2346
        %v2349 = vmul.f32 %v2333, %v2347
        %v2350 = vmul.f32 %v2334, %v2348
        %v2351 = vlaneseq
        %v2352 = vshrl.u32 %v2351, 7
        %v2353 = vsub.s32 0, %v2352
        %v2354 = vrot.slane %v2324, %v2353
        %v2355 = vmul.f32 %v2349, %v2354
        %v2356 = vmul.f32 %v2350, %v2354
        %v2357 = vlaneseq
        %v2358 = vshrl.u32 %v2357, 7
        %v2359 = vsub.s32 1, %v2358
        %v2360 = vrot.slane %v2324, %v2359
        %v2361 = vadd.f32 %v2355, %v2360
        %v2362 = vadd.f32 %v2356, %v2360
        %v2363 = vpack.c.bf16 %v2362, %v2361
        %s2364 = scalar_lea.vmem %s8, 16
        %v2365 = vld [vmem:[%s2364] sm:$0xf]
        %v2366 = vld [vmem:[%s2364 + $0x4] sm:$0xf]
        %v2367 = vld [vmem:[%s2364 + $0x8] sm:$0xf]
        %v2368 = vld [vmem:[%s2364 + $0xc] sm:$0xf]
        %s2369 = scalar_lea.vmem %s9, 1
        %v2370 = vld [vmem:[%s2369] sm:$0x1]
        %v2372 = vlaneseq
        %v2373 = vshrl.u32 %v2372, 7
        %v2374 = vsub.s32 0, %v2373
        %v2375 = vrot.slane %v2370, %v2374
        %v2381 = vunpack.c.l.b16 %v2365
        %v2382 = vunpack.c.l.b16 %v2366
        %v2383 = vunpack.c.l.b16 %v2367
        %v2384 = vunpack.c.l.b16 %v2368
        %v2385 = vpack.c.b16 %v2382, %v2381
        %v2386 = vpack.c.b16 %v2384, %v2383
        %v2390 = vsel %vm665, %v2363, 0
        %2392 = vmatprep.subr.bf16.mxu0 0
        %2393 = vmatpush1.bf16.msra.mxu0 %v2385
        %2394 = vmatprep.subr.bf16.mxu0 0
        %2395 = vmatpush1.bf16.msra.mxu0 %v2386
        %2396 = vmatprep.subr.bf16.mxu0 0
        %2397 = vmatpush1.bf16.msra.mxu0 0
        %2398 = vmatprep.subr.bf16.mxu0 0
        %2399 = vmatpush1.bf16.msra.mxu0 0
        %2400 = vmatprep.subr.bf16.mxu0 0
        %2401 = vmatpush1.bf16.msra.mxu0 0
        %2402 = vmatprep.subr.bf16.mxu0 0
        %2403 = vmatpush1.bf16.msra.mxu0 0
        %2404 = vmatprep.subr.bf16.mxu0 0
        %2405 = vmatpush1.bf16.msra.mxu0 0
        %2406 = vmatprep.subr.bf16.mxu0 0
        %2407 = vmatpush1.bf16.msra.mxu0 0
        %2408 = vmatprep.subr.bf16.mxu0 0
        %2409 = vmatpush1.bf16.msra.mxu0 0
        %2410 = vmatprep.subr.bf16.mxu0 0
        %2411 = vmatpush1.bf16.msra.mxu0 0
        %2412 = vmatprep.subr.bf16.mxu0 0
        %2413 = vmatpush1.bf16.msra.mxu0 0
        %2414 = vmatprep.subr.bf16.mxu0 0
        %2415 = vmatpush1.bf16.msra.mxu0 0
        %2416 = vmatprep.subr.bf16.mxu0 0
        %2417 = vmatpush1.bf16.msra.mxu0 0
        %2418 = vmatprep.subr.bf16.mxu0 0
        %2419 = vmatpush1.bf16.msra.mxu0 0
        %2420 = vmatprep.subr.bf16.mxu0 0
        %2421 = vmatpush1.bf16.msra.mxu0 0
        %2422 = vmatprep.subr.bf16.mxu0 0
        %2423 = vmatpush1.bf16.msra.mxu0 0
        %2424 = vmatprep.mubr.bf16.mxu0 0
        %2425 = vmatmul.mubr.bf16.gmra.mrb[0].mxu0 %v2390
        %v2426 = vpop.f32.mrb[0].mxu0
        %v2427 = vadd.f32 %v2375, %v2426
        %v2428 = vpop.f32.mrb[0].mxu0
        %v2429 = vpop.f32.mrb[0].mxu0
        %v2430 = vadd.f32 %v2375, %v2429
        %v2431 = vpop.f32.mrb[0].mxu0
        %2432 = vdwg.mxu0
        %v2433 = vmul.f32 %v2427, %v2427
        %v2434 = vmul.f32 %v2430, %v2430
        %v2435 = vmul.f32 %v2427, %v2433
        %v2436 = vmul.f32 %v2430, %v2434
        %v2437 = vmul.f32 %v2435, 0.044715
        %v2438 = vmul.f32 %v2436, 0.044715
        %v2439 = vadd.f32 %v2427, %v2437
        %v2440 = vadd.f32 %v2430, %v2438
        %v2441 = vmul.f32 %v2439, 0.7978846
        %v2442 = vmul.f32 %v2440, 0.7978846
        %v2443 = vtanh.pop %v2441
        %v2444 = vtanh.pop %v2442
        %v2445 = vadd.f32 %v2443, 1.0
        %v2446 = vadd.f32 %v2444, 1.0
        %v2447 = vmul.f32 %v2445, 0.5
        %v2448 = vmul.f32 %v2446, 0.5
        %v2449 = vmul.f32 %v2427, %v2447
        %v2450 = vmul.f32 %v2430, %v2448
        %v2451 = vpack.c.bf16 %v2450, %v2449
        %s2452 = scalar_lea.vmem %s10, 64
        %v2453 = vld [vmem:[%s2452] sm:$0xf]
        %v2454 = vld [vmem:[%s2452 + $0x4] sm:$0xf]
        %v2455 = vld [vmem:[%s2452 + $0x8] sm:$0xf]
        %v2456 = vld [vmem:[%s2452 + $0xc] sm:$0xf]
        %v2457 = vld [vmem:[%s2452 + $0x10] sm:$0xf]
        %v2458 = vld [vmem:[%s2452 + $0x14] sm:$0xf]
        %v2459 = vld [vmem:[%s2452 + $0x18] sm:$0xf]
        %v2460 = vld [vmem:[%s2452 + $0x1c] sm:$0xf]
        %v2461 = vld [vmem:[%s2452 + $0x20] sm:$0xf]
        %v2462 = vld [vmem:[%s2452 + $0x24] sm:$0xf]
        %v2463 = vld [vmem:[%s2452 + $0x28] sm:$0xf]
        %v2464 = vld [vmem:[%s2452 + $0x2c] sm:$0xf]
        %v2465 = vld [vmem:[%s2452 + $0x30] sm:$0xf]
        %v2466 = vld [vmem:[%s2452 + $0x34] sm:$0xf]
        %v2467 = vld [vmem:[%s2452 + $0x38] sm:$0xf]
        %v2468 = vld [vmem:[%s2452 + $0x3c] sm:$0xf]
        %s2469 = scalar_lea.vmem %s11, 1
        %v2470 = vld [vmem:[%s2469] sm:$0x1]
        %v2472 = vlaneseq
        %v2473 = vshrl.u32 %v2472, 7
        %v2474 = vsub.s32 0, %v2473
        %v2475 = vrot.slane %v2470, %v2474
        %v2493 = vunpack.c.l.b16 %v2453
        %v2494 = vunpack.c.l.b16 %v2454
        %v2495 = vunpack.c.l.b16 %v2455
        %v2496 = vunpack.c.l.b16 %v2456
        %v2497 = vunpack.c.l.b16 %v2457
        %v2498 = vunpack.c.l.b16 %v2458
        %v2499 = vunpack.c.l.b16 %v2459
        %v2500 = vunpack.c.l.b16 %v2460
        %v2501 = vunpack.c.l.b16 %v2461
        %v2502 = vunpack.c.l.b16 %v2462
        %v2503 = vunpack.c.l.b16 %v2463
        %v2504 = vunpack.c.l.b16 %v2464
        %v2505 = vunpack.c.l.b16 %v2465
        %v2506 = vunpack.c.l.b16 %v2466
        %v2507 = vunpack.c.l.b16 %v2467
        %v2508 = vunpack.c.l.b16 %v2468
        %v2509 = vpack.c.b16 %v2494, %v2493
        %v2510 = vpack.c.b16 %v2496, %v2495
        %v2511 = vpack.c.b16 %v2498, %v2497
        %v2512 = vpack.c.b16 %v2500, %v2499
        %v2513 = vpack.c.b16 %v2502, %v2501
        %v2514 = vpack.c.b16 %v2504, %v2503
        %v2515 = vpack.c.b16 %v2506, %v2505
        %v2516 = vpack.c.b16 %v2508, %v2507
        %2525 = vmatprep.subr.bf16.mxu0 0
        %2526 = vmatpush1.bf16.msra.mxu0 %v2509
        %2527 = vmatprep.subr.bf16.mxu0 0
        %2528 = vmatpush1.bf16.msra.mxu0 %v2510
        %2529 = vmatprep.subr.bf16.mxu0 0
        %2530 = vmatpush1.bf16.msra.mxu0 %v2511
        %2531 = vmatprep.subr.bf16.mxu0 0
        %2532 = vmatpush1.bf16.msra.mxu0 %v2512
        %2533 = vmatprep.subr.bf16.mxu0 0
        %2534 = vmatpush1.bf16.msra.mxu0 %v2513
        %2535 = vmatprep.subr.bf16.mxu0 0
        %2536 = vmatpush1.bf16.msra.mxu0 %v2514
        %2537 = vmatprep.subr.bf16.mxu0 0
        %2538 = vmatpush1.bf16.msra.mxu0 %v2515
        %2539 = vmatprep.subr.bf16.mxu0 0
        %2540 = vmatpush1.bf16.msra.mxu0 %v2516
        %2541 = vmatprep.subr.bf16.mxu0 0
        %2542 = vmatpush1.bf16.msra.mxu0 0
        %2543 = vmatprep.subr.bf16.mxu0 0
        %2544 = vmatpush1.bf16.msra.mxu0 0
        %2545 = vmatprep.subr.bf16.mxu0 0
        %2546 = vmatpush1.bf16.msra.mxu0 0
        %2547 = vmatprep.subr.bf16.mxu0 0
        %2548 = vmatpush1.bf16.msra.mxu0 0
        %2549 = vmatprep.subr.bf16.mxu0 0
        %2550 = vmatpush1.bf16.msra.mxu0 0
        %2551 = vmatprep.subr.bf16.mxu0 0
        %2552 = vmatpush1.bf16.msra.mxu0 0
        %2553 = vmatprep.subr.bf16.mxu0 0
        %2554 = vmatpush1.bf16.msra.mxu0 0
        %2555 = vmatprep.subr.bf16.mxu0 0
        %2556 = vmatpush1.bf16.msra.mxu0 0
        %2557 = vmatprep.mubr.bf16.mxu0 0
        %2558 = vmatmul.mubr.bf16.gmra.mrb[0].mxu0 %v2451
        %v2559 = vpop.f32.mrb[0].mxu0
        %v2560 = vadd.f32 %v2475, %v2559
        %v2561 = vpop.f32.mrb[0].mxu0
        %v2562 = vpop.f32.mrb[0].mxu0
        %v2563 = vpop.f32.mrb[0].mxu0
        %2564 = vdwg.mxu0
        %v2565 = vadd.f32 %v2321, %v2560
        %v2566 = vld [vmem:[%s12] sm:$0x3]
        %v2567 = vsel %vm669, %v2565, 0.0
        %2568 = vadd.xlane.f32.xlu0 %v2567
        %v2569 = vpop.xlane.xlu0 %2568
        %v2570 = vmul.f32 %v2569, %v673
        %v2571 = vsub.f32 %v2565, %v2570
        %v2572 = vmul.f32 %v2571, %v2571
        %v2573 = vsel %vm669, %v2572, 0.0
        %2574 = vadd.xlane.f32.xlu0 %v2573
        %v2575 = vpop.xlane.xlu0 %2574
        %v2576 = vmul.f32 %v2575, %v673
        %v2577 = vadd.f32 %v2576, 1e-06
        %v2578 = vrsqrt.pop %v2577
        %v2579 = vmul.f32 %v2571, %v2578
        %v2580 = vmul.f32 %v2579, %v2566
        %v2582 = vrot.slane %v2566, 1
        %v2584 = vadd.f32 %v2580, %v2582
        %v2585 = vld [vmem:[%s13] sm:$0xf]
        %v2586 = vld [vmem:[%s13 + $0x4] sm:$0xf]
        %v2587 = vld [vmem:[%s13 + $0x8] sm:$0xf]
        %v2588 = vld [vmem:[%s13 + $0xc] sm:$0xf]
        %v2589 = vpack.c.bf16 %v2584, %v2584
        %v2590 = vld [vmem:[%s14] sm:$0x1]
        %v2595 = vunpack.c.l.b16 %v2585
        %v2596 = vunpack.c.l.b16 %v2586
        %v2597 = vunpack.c.l.b16 %v2587
        %v2598 = vunpack.c.l.b16 %v2588
        %v2599 = vpack.c.b16 %v2596, %v2595
        %v2600 = vpack.c.b16 %v2598, %v2597
        %v2604 = vsel %vm665, %v2589, 0
        %2606 = vmatprep.subr.bf16.mxu0 0
        %2607 = vmatpush1.bf16.msra.mxu0 %v2599
        %2608 = vmatprep.subr.bf16.mxu0 0
        %2609 = vmatpush1.bf16.msra.mxu0 %v2600
        %2610 = vmatprep.subr.bf16.mxu0 0
        %2611 = vmatpush1.bf16.msra.mxu0 0
        %2612 = vmatprep.subr.bf16.mxu0 0
        %2613 = vmatpush1.bf16.msra.mxu0 0
        %2614 = vmatprep.subr.bf16.mxu0 0
        %2615 = vmatpush1.bf16.msra.mxu0 0
        %2616 = vmatprep.subr.bf16.mxu0 0
        %2617 = vmatpush1.bf16.msra.mxu0 0
        %2618 = vmatprep.subr.bf16.mxu0 0
        %2619 = vmatpush1.bf16.msra.mxu0 0
        %2620 = vmatprep.subr.bf16.mxu0 0
        %2621 = vmatpush1.bf16.msra.mxu0 0
        %2622 = vmatprep.subr.bf16.mxu0 0
        %2623 = vmatpush1.bf16.msra.mxu0 0
        %2624 = vmatprep.subr.bf16.mxu0 0
        %2625 = vmatpush1.bf16.msra.mxu0 0
        %2626 = vmatprep.subr.bf16.mxu0 0
        %2627 = vmatpush1.bf16.msra.mxu0 0
        %2628 = vmatprep.subr.bf16.mxu0 0
        %2629 = vmatpush1.bf16.msra.mxu0 0
        %2630 = vmatprep.subr.bf16.mxu0 0
        %2631 = vmatpush1.bf16.msra.mxu0 0
        %2632 = vmatprep.subr.bf16.mxu0 0
        %2633 = vmatpush1.bf16.msra.mxu0 0
        %2634 = vmatprep.subr.bf16.mxu0 0
        %2635 = vmatpush1.bf16.msra.mxu0 0
        %2636 = vmatprep.subr.bf16.mxu0 0
        %2637 = vmatpush1.bf16.msra.mxu0 0
        %2638 = vmatprep.mubr.bf16.mxu0 0
        %2639 = vmatmul.mubr.bf16.gmra.mrb[0].mxu0 %v2604
        %v2640 = vpop.f32.mrb[0].mxu0
        %v2641 = vadd.f32 %v2590, %v2640
        %v2642 = vpop.f32.mrb[0].mxu0
        %v2643 = vpop.f32.mrb[0].mxu0
        %v2644 = vpop.f32.mrb[0].mxu0
        %2645 = vdwg.mxu0
        %vm2646 = vcmask 57344
        %2647 = vst.msk [vmem:[%s466] sm:$0x1] %vm2646, %v2641
        %s2648 = sand.u32 %s342, 1
        %s2649 = scalar_lea.sflag [#allocation5], %s2648
        %s2650 = sand.u32 %s342, 1
        %s2651 = scalar_lea.vmem [#allocation4], %s2650
        // Predicated region
        $region77: #{optimal_sampler_forward.3} parent=75 // pred_check
          %p2652 = pneg %p352
        $region78: #{optimal_sampler_forward.3} parent=75 // pred_check_branch
          %2654 = sbr.rel (%p2652) target = $region80
        $region79: #{optimal_sampler_forward.3} parent=75 // pred_region
          %s2656 = ssub.s32 16, 16
          %2657 = vsyncadd %s2649, %s2656
          %s2658 = smul.addr %s35, 16
          %s2659 = scalar_lea.hbm %s15, %s2658
          %s2661 = sshll.u32 %s2651, 4
          %s2662 = int_to_ptr.vmem [resolvable:$true] %s2661
          %2664 = dma.vmem_to_hbm [thread:$0]  %s2662, 16, %s2659, %s2649
        $region80: #{optimal_sampler_forward.3} parent=75 // pred_fallthru
          _
      $region76: #{optimal_sampler_forward.3} parent=5 // pred_fallthru
        _
      %p2665 = scmp.le.s32.totalorder 2, %s30
      // Predicated region
      $region81: #{optimal_sampler_forward.3} parent=5 // pred_check
        %p2666 = pneg %p2665
      $region82: #{optimal_sampler_forward.3} parent=5 // pred_check_branch
        %2668 = sbr.rel (%p2666) target = $region84
      $region83: #{optimal_sampler_forward.3} parent=5 // pred_region
        %s2669 = ssub.s32 %s30, 2
        // Predicated region
        $region85: #{optimal_sampler_forward.3} parent=83 // pred_check
          %p2670 = pneg %p358
        $region86: #{optimal_sampler_forward.3} parent=83 // pred_check_branch
          %2672 = sbr.rel (%p2670) target = $region88
        $region87: #{optimal_sampler_forward.3} parent=83 // pred_region
          %s2673 = sand.u32 %s343, 1
          %s2674 = scalar_lea.sflag [#allocation5], %s2673
          %s2675 = sand.u32 %s343, 1
          %s2676 = scalar_lea.vmem [#allocation4], %s2675
          %2677 = dma.done %s2674, 16
        $region88: #{optimal_sampler_forward.3} parent=83 // pred_fallthru
          _
      $region84: #{optimal_sampler_forward.3} parent=5 // pred_fallthru
        _
    $region6: #{optimal_sampler_forward.3} parent=1 // loop_footer
      %s34 = sadd.s32 1, %s30
    $region7: #{optimal_sampler_forward.3} parent=1 // loop_footer_branch
      %29 = sbr.rel target = $region3
    $region8: #{optimal_sampler_forward.3} parent=1 // loop_exit
      _
    %2678 = vsyncpa [#allocation5], 1
    %s2679 = scalar_lea.sflag [#allocation5], 1
    %2680 = vsyncpa %s2679, 1

</llo_original>
